<compile_context>
chip_gen: v7x
topology: tpu7x:2x2x1
jax: 0.10.0
libtpu: 0.0.40
codegen_flags: <defaults>
</compile_context>

<pallas_src>
from functools import partial

import jax
import jax.numpy as jnp
from jax import lax
from jax.experimental import pallas as pl
from jax.experimental.pallas import tpu as pltpu

LANE = 128
ACT_DTYPE = jnp.float32   # inter-layer activation storage (bf16 on v6e/v7x halves HBM traffic)
MXU_DTYPE = jnp.float32   # matmul operand dtype (bf16 feeds the MXU at native rate on v6e/v7x)


def _round_up(v, m=LANE):
    return ((v + m - 1) // m) * m


def _compiler_params(semantics, need_bytes):
    """Explicit scoped-VMEM budget (double-buffered blocks + scratch + headroom)."""
    limit = int(min(max(need_bytes + (8 << 20), 32 << 20), 64 << 20))
    return pltpu.CompilerParams(dimension_semantics=semantics, vmem_limit_bytes=limit)


# --------------------------------------------------------------------- layout helpers

def to_padded(x_nchw):
    """(N, C, H, W) -> (N, C, Lpad) padded-flat layout (zero ring + zero tail)."""
    N, C, H, W = x_nchw.shape
    Lp = (H + 2) * (W + 2)
    xp = jnp.pad(x_nchw, ((0, 0), (0, 0), (1, 1), (1, 1))).reshape(N, C, Lp)
    return jnp.pad(xp, ((0, 0), (0, 0), (0, _round_up(Lp) - Lp))).astype(ACT_DTYPE)


def from_padded(x_flat, H, W):
    """(N, C, Lpad) -> (N, C, H, W) interior."""
    N, C, _ = x_flat.shape
    Hp, Wp = H + 2, W + 2
    return x_flat[:, :, :Hp * Wp].reshape(N, C, Hp, Wp)[:, :, 1:H + 1, 1:W + 1]


def interior_mask(H, W):
    """(1, Lpad) f32 mask: 1 on true image pixels, 0 on ring/tail padding."""
    m = jnp.pad(jnp.ones((H, W), jnp.float32), ((1, 1), (1, 1)))
    Lp = (H + 2) * (W + 2)
    return jnp.pad(m.reshape(1, Lp), ((0, 0), (0, _round_up(Lp) - Lp)))


# --------------------------------------------------------------------------- kernels

def _conv3x3_kernel(*refs, taps, lpad, cin, norm, relu, sigmoid, eps, inv_count,
                    has_residual):
    """Fused 3x3 conv (+bias, +skip-add, +InstanceNorm, +ReLU / sigmoid) on one sample.

    The conv is ONE MXU matmul: the 9 lane-rolled tap copies of the input tile (plus the
    interior mask acting as the bias "channel") are stacked into a (9*C+1, Lpad) VMEM
    scratch and multiplied by the concatenated weight (Cout_blk, 9*C+1).
    """
    if has_residual:
        x_ref, r_ref, w_ref, m_ref, o_ref, stack_ref = refs
    else:
        x_ref, w_ref, m_ref, o_ref, stack_ref = refs

    xv = x_ref[0].astype(jnp.float32)
    if has_residual:
        xv = xv + r_ref[0].astype(jnp.float32)          # fused decoder skip connection

    for t, d in enumerate(taps):                        # unrolled: 9 static lane shifts
        xs = xv if d == 0 else pltpu.roll(xv, shift=(-d) % lpad, axis=1)
        stack_ref[pl.ds(t * cin, cin), :] = xs.astype(stack_ref.dtype)
    # Bias row: the interior mask, so bias lands only on true pixels.
    stack_ref[pl.ds(9 * cin, 1), :] = m_ref[...].astype(stack_ref.dtype)

    acc = jnp.dot(w_ref[...], stack_ref[...], preferred_element_type=jnp.float32)

    mask = m_ref[...]                                   # (1, Lpad)
    if norm:
        # One-pass InstanceNorm stats over the H*W interior (independent reductions).
        am = acc * mask
        mean = jnp.sum(am, axis=1, keepdims=True) * inv_count
        var = jnp.sum(am * acc, axis=1, keepdims=True) * inv_count - mean * mean
        y = ((acc - mean) * mask) * lax.rsqrt(jnp.maximum(var, 0.0) + eps)
        if relu:
            y = jnp.maximum(y, 0.0)
    else:
        y = acc
        if relu:
            y = jnp.maximum(y, 0.0)
        if sigmoid:
            y = jax.nn.sigmoid(y)           # ring/tail cropped downstream by from_padded
        else:
            y = y * mask                    # keep the zero padding ring/tail invariant
    o_ref[0] = y.astype(o_ref.dtype)


def _pointwise_kernel(*refs, use_bias):
    if use_bias:
        x_ref, w_ref, b_ref, o_ref = refs
    else:
        x_ref, w_ref, o_ref = refs
    acc = jnp.dot(w_ref[...], x_ref[0].astype(w_ref.dtype),
                  preferred_element_type=jnp.float32)
    if use_bias:
        acc = acc + b_ref[...].astype(jnp.float32)
    o_ref[0] = acc.astype(o_ref.dtype)


# ---------------------------------------------------------------------- conv wrappers

def conv3x3_block(x_flat, w, b, H, W, *, norm=False, relu=False, sigmoid=False,
                  residual=None, eps=1e-5):
    """Conv2d(k=3, pad=1, bias) fused with optional skip-add / InstanceNorm / ReLU / sigmoid."""
    N, C, Lpad = x_flat.shape
    Cout = w.shape[0]
    Wp = W + 2
    # Repack PyTorch weights (Cout, Cin, 3, 3) -> (Cout, 9*Cin) with column order (ky, kx, ci),
    # then append the bias as one extra contraction column (against the mask row).
    w_cat = jnp.transpose(w, (0, 2, 3, 1)).reshape(Cout, 9 * C)
    w_cat = jnp.concatenate([w_cat, b.reshape(Cout, 1)], axis=1).astype(MXU_DTYPE)
    taps = tuple((ky - 1) * Wp + (kx - 1) for ky in range(3) for kx in range(3))
    mask = interior_mask(H, W)

    # Output-channel blocking: second "parallel" grid axis (megacore on v7x / VMEM knob).
    cblk = Cout if (Cout <= 128 or Cout % 128 != 0) else 128
    n_cblk = Cout // cblk

    inputs = [x_flat]
    in_specs = [pl.BlockSpec((1, C, Lpad), lambda n, j: (n, 0, 0))]
    if residual is not None:
        inputs.append(residual)
        in_specs.append(pl.BlockSpec((1, C, Lpad), lambda n, j: (n, 0, 0)))
    inputs += [w_cat, mask]
    in_specs += [
        pl.BlockSpec((cblk, 9 * C + 1), lambda n, j: (j, 0)),
        pl.BlockSpec((1, Lpad), lambda n, j: (0, 0)),
    ]

    kernel = partial(_conv3x3_kernel, taps=taps, lpad=Lpad, cin=C,
                     norm=norm, relu=relu, sigmoid=sigmoid, eps=eps,
                     inv_count=1.0 / float(H * W),
                     has_residual=residual is not None)

    act_b = jnp.dtype(ACT_DTYPE).itemsize
    mm_b = jnp.dtype(MXU_DTYPE).itemsize
    block_bytes = (C * Lpad * (2 if residual is not None else 1) + cblk * Lpad) * act_b \
        + cblk * (9 * C + 1) * mm_b + Lpad * 4
    scratch_bytes = (9 * C + 1) * Lpad * mm_b

    return pl.pallas_call(
        kernel,
        out_shape=jax.ShapeDtypeStruct((N, Cout, Lpad), x_flat.dtype),
        grid=(N, n_cblk),
        in_specs=in_specs,
        out_specs=pl.BlockSpec((1, cblk, Lpad), lambda n, j: (n, j, 0)),
        scratch_shapes=[pltpu.VMEM((9 * C + 1, Lpad), MXU_DTYPE)],
        compiler_params=_compiler_params(("parallel", "parallel"),
                                         2 * block_bytes + scratch_bytes),
    )(*inputs)


def pointwise_conv(x_dense, w2d, b=None):
    """(N, Cin, L) x (Cout, Cin) [+ bias] -> (N, Cout, L); lanes padded to a 128 multiple."""
    N, Cin, L = x_dense.shape
    Cout = w2d.shape[0]
    Lp = _round_up(L)
    if Lp != L:
        x_dense = jnp.pad(x_dense, ((0, 0), (0, 0), (0, Lp - L)))
    use_bias = b is not None

    inputs = [x_dense, w2d.astype(MXU_DTYPE)]
    in_specs = [pl.BlockSpec((1, Cin, Lp), lambda n: (n, 0, 0)),
                pl.BlockSpec((Cout, Cin), lambda n: (0, 0))]
    if use_bias:
        inputs.append(b.reshape(Cout, 1).astype(jnp.float32))
        in_specs.append(pl.BlockSpec((Cout, 1), lambda n: (0, 0)))

    block_bytes = (Cin * Lp + Cout * Lp) * jnp.dtype(ACT_DTYPE).itemsize \
        + Cout * (Cin + 1) * 4
    y = pl.pallas_call(
        partial(_pointwise_kernel, use_bias=use_bias),
        out_shape=jax.ShapeDtypeStruct((N, Cout, Lp), x_dense.dtype),
        grid=(N,),
        in_specs=in_specs,
        out_specs=pl.BlockSpec((1, Cout, Lp), lambda n: (n, 0, 0)),
        compiler_params=_compiler_params(("parallel",), 2 * block_bytes),
    )(*inputs)
    return y[:, :, :L] if Lp != L else y


def down_conv2x2(x_flat, w, b, H, W):
    """Conv2d(k=2, s=2, bias): space-to-depth (XLA reshape) + pointwise Pallas matmul."""
    N, C, _ = x_flat.shape
    Cout = w.shape[0]
    Ho, Wo = H // 2, W // 2
    xi = from_padded(x_flat, H, W)                                      # (N, C, H, W)
    xs = xi.reshape(N, C, Ho, 2, Wo, 2).transpose(0, 1, 3, 5, 2, 4)     # (N, C, ky, kx, Ho, Wo)
    xs = xs.reshape(N, C * 4, Ho * Wo)                                  # channel order (ci, ky, kx)
    y = pointwise_conv(xs, w.reshape(Cout, C * 4), b)                   # (N, Cout, Ho*Wo)
    return to_padded(y.reshape(N, Cout, Ho, Wo))


def up_shuffle(x_flat, w1x1, H, W):
    """Conv2d(k=1, bias=False) + PixelShuffle(2): pointwise Pallas matmul + XLA rearrange."""
    N, C, _ = x_flat.shape
    xi = from_padded(x_flat, H, W).reshape(N, C, H * W)
    y = pointwise_conv(xi, w1x1.reshape(2 * C, C), None)                # (N, 2C, H*W)
    Cn = C // 2
    y = y.reshape(N, Cn, 2, 2, H, W).transpose(0, 1, 4, 2, 5, 3).reshape(N, Cn, 2 * H, 2 * W)
    return to_padded(y)


# ----------------------------------------------------------------------------- model

def init_params(key, in_ch, out_ch, width, enc_blk_nums, middle_blk_num, dec_blk_nums):
    params = {}

    def nxt():
        nonlocal key
        key, sub = jax.random.split(key)
        return sub

    def conv_p(cin, cout, k):
        w = 0.1 * jax.random.normal(nxt(), (cout, cin, k, k), jnp.float32)
        b = 0.01 * jax.random.normal(nxt(), (cout,), jnp.float32)
        return w, b

    params["intro_w"], params["intro_b"] = conv_p(in_ch, width, 3)
    chan = width
    for i, num in enumerate(enc_blk_nums):
        for j in range(num):
            w, b = conv_p(chan, chan, 3)
            params[f"enc_{i}_{j}"] = {"w": w, "b": b}
        w, b = conv_p(chan, 2 * chan, 2)
        params[f"down_{i}"] = {"w": w, "b": b}
        chan *= 2
    for i in range(middle_blk_num):
        w, b = conv_p(chan, chan, 3)
        params[f"mid_{i}"] = {"w": w, "b": b}
    for i, num in enumerate(dec_blk_nums):
        params[f"up_{i}"] = {"w": 0.1 * jax.random.normal(nxt(), (chan * 2, chan, 1, 1), jnp.float32)}
        chan //= 2
        for j in range(num):
            w, b = conv_p(chan, chan, 3)
            params[f"dec_{i}_{j}"] = {"w": w, "b": b}
    params["end_w"], params["end_b"] = conv_p(width, out_ch, 3)
    return params


def unet_forward(x, params, enc_blk_nums, middle_blk_num, dec_blk_nums):
    N, _, H, W = x.shape
    down = 2 ** len(enc_blk_nums)
    assert H % down == 0 and W % down == 0, "H, W must be divisible by 2**len(enc_blk_nums)"

    h, w = H, W
    xf = to_padded(x)
    xf = conv3x3_block(xf, params["intro_w"], params["intro_b"], h, w)      # intro conv

    encs = []
    for i, num in enumerate(enc_blk_nums):
        for j in range(num):
            p = params[f"enc_{i}_{j}"]
            xf = conv3x3_block(xf, p["w"], p["b"], h, w, norm=True, relu=True)
        encs.append(xf)
        p = params[f"down_{i}"]
        xf = down_conv2x2(xf, p["w"], p["b"], h, w)
        h, w = h // 2, w // 2

    for i in range(middle_blk_num):
        p = params[f"mid_{i}"]
        xf = conv3x3_block(xf, p["w"], p["b"], h, w, norm=True, relu=True)

    for i, (num, enc) in enumerate(zip(dec_blk_nums, encs[::-1])):
        xf = up_shuffle(xf, params[f"up_{i}"]["w"], h, w)
        h, w = 2 * h, 2 * w
        if num > 0:
            # skip connection fused into the first decoder ConvNormReLU kernel
            p = params[f"dec_{i}_0"]
            xf = conv3x3_block(xf, p["w"], p["b"], h, w, norm=True, relu=True, residual=enc)
            for j in range(1, num):
                p = params[f"dec_{i}_{j}"]
                xf = conv3x3_block(xf, p["w"], p["b"], h, w, norm=True, relu=True)
        else:
            xf = xf + enc

    xf = conv3x3_block(xf, params["end_w"], params["end_b"], h, w, sigmoid=True)
    return from_padded(xf, h, w)


# ------------------------------------------------------------------- pure-XLA reference

def unet_reference(x, params, enc_blk_nums, middle_blk_num, dec_blk_nums, eps=1e-5):
    def conv(x, w, b, stride, pad):
        dn = lax.conv_dimension_numbers(x.shape, w.shape, ("NCHW", "OIHW", "NCHW"))
        y = lax.conv_general_dilated(x, w, (stride, stride), ((pad, pad), (pad, pad)),
                                     dimension_numbers=dn, precision=lax.Precision.HIGHEST)
        return y if b is None else y + b.reshape(1, -1, 1, 1)

    def cnr(x, w, b):
        y = conv(x, w, b, 1, 1)
        m = jnp.mean(y, axis=(2, 3), keepdims=True)
        v = jnp.mean((y - m) ** 2, axis=(2, 3), keepdims=True)
        return jnp.maximum((y - m) * lax.rsqrt(v + eps), 0.0)

    x = conv(x, params["intro_w"], params["intro_b"], 1, 1)
    encs = []
    for i, num in enumerate(enc_blk_nums):
        for j in range(num):
            p = params[f"enc_{i}_{j}"]
            x = cnr(x, p["w"], p["b"])
        encs.append(x)
        p = params[f"down_{i}"]
        x = conv(x, p["w"], p["b"], 2, 0)
    for i in range(middle_blk_num):
        p = params[f"mid_{i}"]
        x = cnr(x, p["w"], p["b"])
    for i, (num, enc) in enumerate(zip(dec_blk_nums, encs[::-1])):
        x = conv(x, params[f"up_{i}"]["w"], None, 1, 0)
        N, C4, H, W = x.shape
        C = C4 // 4
        x = x.reshape(N, C, 2, 2, H, W).transpose(0, 1, 4, 2, 5, 3).reshape(N, C, 2 * H, 2 * W)
        x = x + enc
        for j in range(num):
            p = params[f"dec_{i}_{j}"]
            x = cnr(x, p["w"], p["b"])
    x = conv(x, params["end_w"], params["end_b"], 1, 1)
    return jax.nn.sigmoid(x)


if __name__ == "__main__":
    # small deterministic config: in=3, out=3, width=8, enc=[1,1], middle=1, dec=[1,1]
    in_ch, out_ch, width = 3, 3, 8
    enc_blk_nums, middle_blk_num, dec_blk_nums = [1, 1], 1, [1, 1]

    key = jax.random.PRNGKey(0)
    key, xkey = jax.random.split(key)
    x = jax.random.normal(xkey, (2, in_ch, 16, 16), jnp.float32)   # NCHW input

    params = init_params(key, in_ch, out_ch, width,
                         enc_blk_nums, middle_blk_num, dec_blk_nums)

    fwd = jax.jit(partial(unet_forward,
                          enc_blk_nums=enc_blk_nums,
                          middle_blk_num=middle_blk_num,
                          dec_blk_nums=dec_blk_nums))
    y = fwd(x, params)
    jax.block_until_ready(y)

    assert y.shape == (2, out_ch, 16, 16), y.shape
    assert bool(jnp.all((y >= 0.0) & (y <= 1.0))), "sigmoid output out of range"

    y_ref = unet_reference(x, params, enc_blk_nums, middle_blk_num, dec_blk_nums)
    err = float(jnp.max(jnp.abs(y.astype(jnp.float32) - y_ref)))
    assert err < 2e-2, f"mismatch vs XLA reference, max abs err = {err}"

    print("KERNEL_OK")
</pallas_src>

<mosaic_0001>
module attributes {stable_mosaic.version = 11 : i64} {
  func.func @_conv3x3_kernel(%arg0: i32, %arg1: i32, %arg2: memref<1x3x384xf32, #tpu.memory_space<vmem>>, %arg3: memref<8x28xf32, #tpu.memory_space<vmem>>, %arg4: memref<1x384xf32, #tpu.memory_space<vmem>>, %arg5: memref<1x8x384xf32, #tpu.memory_space<vmem>>, %arg6: memref<28x384xf32, #tpu.memory_space<vmem>>) attributes {dimension_semantics = [#tpu.dimension_semantics<parallel>, #tpu.dimension_semantics<parallel>], iteration_bounds = array<i64: 2, 1>, scalar_prefetch = 0 : i64, scratch_operands = 1 : i64, tpu.core_type = #tpu.core_type<tc>, window_params = [{transform_indices = @transform_0, window_bounds = array<i64: 1, 3, 384>}, {transform_indices = @transform_1, window_bounds = array<i64: 8, 28>}, {pipeline_mode = #tpu.pipeline_mode<synchronous>, transform_indices = @transform_2, window_bounds = array<i64: 1, 384>}, {transform_indices = @transform_3, window_bounds = array<i64: 1, 8, 384>}]} {
    %c0 = arith.constant 0 : index
    %c0_0 = arith.constant 0 : index
    %c0_1 = arith.constant 0 : index
    %0 = vector.load %arg2[%c0, %c0_0, %c0_1] : memref<1x3x384xf32, #tpu.memory_space<vmem>>, vector<1x3x384xf32>
    %1 = vector.shape_cast %0 : vector<1x3x384xf32> to vector<3x384xf32>
    %c19_i32 = arith.constant 19 : i32
    %2 = tpu.dynamic_rotate %1 by %c19_i32 dim 1 : vector<3x384xf32>, i32 -> vector<3x384xf32>
    %c0_2 = arith.constant 0 : index
    %c0_3 = arith.constant 0 : index
    %3 = vector.load %arg6[%c0_2, %c0_3] : memref<28x384xf32, #tpu.memory_space<vmem>>, vector<3x384xf32>
    tpu.vector_store %arg6[%c0_2, %c0_3], %2 {strides = array<i32>} : memref<28x384xf32, #tpu.memory_space<vmem>>, vector<3x384xf32>,
    %c18_i32 = arith.constant 18 : i32
    %4 = tpu.dynamic_rotate %1 by %c18_i32 dim 1 : vector<3x384xf32>, i32 -> vector<3x384xf32>
    %c3 = arith.constant 3 : index
    %c0_4 = arith.constant 0 : index
    %5 = vector.load %arg6[%c3, %c0_4] : memref<28x384xf32, #tpu.memory_space<vmem>>, vector<3x384xf32>
    tpu.vector_store %arg6[%c3, %c0_4], %4 {strides = array<i32>} : memref<28x384xf32, #tpu.memory_space<vmem>>, vector<3x384xf32>,
    %c17_i32 = arith.constant 17 : i32
    %6 = tpu.dynamic_rotate %1 by %c17_i32 dim 1 : vector<3x384xf32>, i32 -> vector<3x384xf32>
    %c6 = arith.constant 6 : index
    %c0_5 = arith.constant 0 : index
    %7 = vector.load %arg6[%c6, %c0_5] : memref<28x384xf32, #tpu.memory_space<vmem>>, vector<3x384xf32>
    tpu.vector_store %arg6[%c6, %c0_5], %6 {strides = array<i32>} : memref<28x384xf32, #tpu.memory_space<vmem>>, vector<3x384xf32>,
    %c1_i32 = arith.constant 1 : i32
    %8 = tpu.dynamic_rotate %1 by %c1_i32 dim 1 : vector<3x384xf32>, i32 -> vector<3x384xf32>
    %c9 = arith.constant 9 : index
    %c0_6 = arith.constant 0 : index
    %9 = vector.load %arg6[%c9, %c0_6] : memref<28x384xf32, #tpu.memory_space<vmem>>, vector<3x384xf32>
    tpu.vector_store %arg6[%c9, %c0_6], %8 {strides = array<i32>} : memref<28x384xf32, #tpu.memory_space<vmem>>, vector<3x384xf32>,
    %c12 = arith.constant 12 : index
    %c0_7 = arith.constant 0 : index
    %10 = vector.load %arg6[%c12, %c0_7] : memref<28x384xf32, #tpu.memory_space<vmem>>, vector<3x384xf32>
    tpu.vector_store %arg6[%c12, %c0_7], %1 {strides = array<i32>} : memref<28x384xf32, #tpu.memory_space<vmem>>, vector<3x384xf32>,
    %c383_i32 = arith.constant 383 : i32
    %11 = tpu.dynamic_rotate %1 by %c383_i32 dim 1 : vector<3x384xf32>, i32 -> vector<3x384xf32>
    %c15 = arith.constant 15 : index
    %c0_8 = arith.constant 0 : index
    %12 = vector.load %arg6[%c15, %c0_8] : memref<28x384xf32, #tpu.memory_space<vmem>>, vector<3x384xf32>
    tpu.vector_store %arg6[%c15, %c0_8], %11 {strides = array<i32>} : memref<28x384xf32, #tpu.memory_space<vmem>>, vector<3x384xf32>,
    %c367_i32 = arith.constant 367 : i32
    %13 = tpu.dynamic_rotate %1 by %c367_i32 dim 1 : vector<3x384xf32>, i32 -> vector<3x384xf32>
    %c18 = arith.constant 18 : index
    %c0_9 = arith.constant 0 : index
    %14 = vector.load %arg6[%c18, %c0_9] : memref<28x384xf32, #tpu.memory_space<vmem>>, vector<3x384xf32>
    tpu.vector_store %arg6[%c18, %c0_9], %13 {strides = array<i32>} : memref<28x384xf32, #tpu.memory_space<vmem>>, vector<3x384xf32>,
    %c366_i32 = arith.constant 366 : i32
    %15 = tpu.dynamic_rotate %1 by %c366_i32 dim 1 : vector<3x384xf32>, i32 -> vector<3x384xf32>
    %c21 = arith.constant 21 : index
    %c0_10 = arith.constant 0 : index
    %16 = vector.load %arg6[%c21, %c0_10] : memref<28x384xf32, #tpu.memory_space<vmem>>, vector<3x384xf32>
    tpu.vector_store %arg6[%c21, %c0_10], %15 {strides = array<i32>} : memref<28x384xf32, #tpu.memory_space<vmem>>, vector<3x384xf32>,
    %c365_i32 = arith.constant 365 : i32
    %17 = tpu.dynamic_rotate %1 by %c365_i32 dim 1 : vector<3x384xf32>, i32 -> vector<3x384xf32>
    %c24 = arith.constant 24 : index
    %c0_11 = arith.constant 0 : index
    %18 = vector.load %arg6[%c24, %c0_11] : memref<28x384xf32, #tpu.memory_space<vmem>>, vector<3x384xf32>
    tpu.vector_store %arg6[%c24, %c0_11], %17 {strides = array<i32>} : memref<28x384xf32, #tpu.memory_space<vmem>>, vector<3x384xf32>,
    %c0_12 = arith.constant 0 : index
    %c0_13 = arith.constant 0 : index
    %19 = vector.load %arg4[%c0_12, %c0_13] : memref<1x384xf32, #tpu.memory_space<vmem>>, vector<1x384xf32>
    %c27 = arith.constant 27 : index
    %c0_14 = arith.constant 0 : index
    %20 = vector.load %arg6[%c27, %c0_14] : memref<28x384xf32, #tpu.memory_space<vmem>>, vector<1x384xf32>
    tpu.vector_store %arg6[%c27, %c0_14], %19 {strides = array<i32>} : memref<28x384xf32, #tpu.memory_space<vmem>>, vector<1x384xf32>,
    %c0_15 = arith.constant 0 : index
    %c0_16 = arith.constant 0 : index
    %21 = vector.load %arg3[%c0_15, %c0_16] : memref<8x28xf32, #tpu.memory_space<vmem>>, vector<8x28xf32>
    %c0_17 = arith.constant 0 : index
    %c0_18 = arith.constant 0 : index
    %22 = vector.load %arg6[%c0_17, %c0_18] : memref<28x384xf32, #tpu.memory_space<vmem>>, vector<28x384xf32>
    %cst = arith.constant dense<0.000000e+00> : vector<8x384xf32>
    %23 = tpu.matmul %21, %22, %cst {dimension_numbers = #tpu.dot_dimension_numbers<[1], [0], [0], [1], [0, 0, 1, 1], [], []>} : vector<8x28xf32>, vector<28x384xf32>, vector<8x384xf32> -> vector<8x384xf32>
    %c0_19 = arith.constant 0 : index
    %c0_20 = arith.constant 0 : index
    %24 = vector.load %arg4[%c0_19, %c0_20] : memref<1x384xf32, #tpu.memory_space<vmem>>, vector<1x384xf32>
    %25 = vector.broadcast %24 : vector<1x384xf32> to vector<8x384xf32>
    %26 = arith.mulf %23, %25 : vector<8x384xf32>
    %c0_21 = arith.constant 0 : index
    %c0_22 = arith.constant 0 : index
    %c0_23 = arith.constant 0 : index
    %27 = vector.load %arg5[%c0_21, %c0_22, %c0_23] : memref<1x8x384xf32, #tpu.memory_space<vmem>>, vector<1x8x384xf32>
    %28 = vector.shape_cast %27 : vector<1x8x384xf32> to vector<8x384xf32>
    %29 = vector.shape_cast %26 : vector<8x384xf32> to vector<1x8x384xf32>
    tpu.vector_store %arg5[%c0_21, %c0_22, %c0_23], %29 {strides = array<i32>} : memref<1x8x384xf32, #tpu.memory_space<vmem>>, vector<1x8x384xf32>,
    return
  }
  func.func @transform_0(%arg0: i32, %arg1: i32) -> (i32, i32, i32) {
    %c0_i32 = arith.constant 0 : i32
    %c0_i32_0 = arith.constant 0 : i32
    %c0_i32_1 = arith.constant 0 : i32
    return %arg0, %c0_i32, %c0_i32_0 : i32, i32, i32
  }
  func.func @transform_1(%arg0: i32, %arg1: i32) -> (i32, i32) {
    %c0_i32 = arith.constant 0 : i32
    %c0_i32_0 = arith.constant 0 : i32
    return %arg1, %c0_i32 : i32, i32
  }
  func.func @transform_2(%arg0: i32, %arg1: i32) -> (i32, i32) {
    %c0_i32 = arith.constant 0 : i32
    %c0_i32_0 = arith.constant 0 : i32
    %c0_i32_1 = arith.constant 0 : i32
    return %c0_i32, %c0_i32_0 : i32, i32
  }
  func.func @transform_3(%arg0: i32, %arg1: i32) -> (i32, i32, i32) {
    %c0_i32 = arith.constant 0 : i32
    %c0_i32_0 = arith.constant 0 : i32
    return %arg0, %arg1, %c0_i32 : i32, i32, i32
  }
}

module attributes {stable_mosaic.version = 11 : i64} {
  func.func @_conv3x3_kernel(%arg0: i32, %arg1: i32, %arg2: memref<1x8x384xf32, #tpu.memory_space<vmem>>, %arg3: memref<8x73xf32, #tpu.memory_space<vmem>>, %arg4: memref<1x384xf32, #tpu.memory_space<vmem>>, %arg5: memref<1x8x384xf32, #tpu.memory_space<vmem>>, %arg6: memref<73x384xf32, #tpu.memory_space<vmem>>) attributes {dimension_semantics = [#tpu.dimension_semantics<parallel>, #tpu.dimension_semantics<parallel>], iteration_bounds = array<i64: 2, 1>, scalar_prefetch = 0 : i64, scratch_operands = 1 : i64, tpu.core_type = #tpu.core_type<tc>, window_params = [{transform_indices = @transform_0, window_bounds = array<i64: 1, 8, 384>}, {transform_indices = @transform_1, window_bounds = array<i64: 8, 73>}, {pipeline_mode = #tpu.pipeline_mode<synchronous>, transform_indices = @transform_2, window_bounds = array<i64: 1, 384>}, {transform_indices = @transform_3, window_bounds = array<i64: 1, 8, 384>}]} {
    %c0 = arith.constant 0 : index
    %c0_0 = arith.constant 0 : index
    %c0_1 = arith.constant 0 : index
    %0 = vector.load %arg2[%c0, %c0_0, %c0_1] : memref<1x8x384xf32, #tpu.memory_space<vmem>>, vector<1x8x384xf32>
    %1 = vector.shape_cast %0 : vector<1x8x384xf32> to vector<8x384xf32>
    %c19_i32 = arith.constant 19 : i32
    %2 = tpu.dynamic_rotate %1 by %c19_i32 dim 1 : vector<8x384xf32>, i32 -> vector<8x384xf32>
    %c0_2 = arith.constant 0 : index
    %c0_3 = arith.constant 0 : index
    %3 = vector.load %arg6[%c0_2, %c0_3] : memref<73x384xf32, #tpu.memory_space<vmem>>, vector<8x384xf32>
    tpu.vector_store %arg6[%c0_2, %c0_3], %2 {strides = array<i32>} : memref<73x384xf32, #tpu.memory_space<vmem>>, vector<8x384xf32>,
    %c18_i32 = arith.constant 18 : i32
    %4 = tpu.dynamic_rotate %1 by %c18_i32 dim 1 : vector<8x384xf32>, i32 -> vector<8x384xf32>
    %c8 = arith.constant 8 : index
    %c0_4 = arith.constant 0 : index
    %5 = vector.load %arg6[%c8, %c0_4] : memref<73x384xf32, #tpu.memory_space<vmem>>, vector<8x384xf32>
    tpu.vector_store %arg6[%c8, %c0_4], %4 {strides = array<i32>} : memref<73x384xf32, #tpu.memory_space<vmem>>, vector<8x384xf32>,
    %c17_i32 = arith.constant 17 : i32
    %6 = tpu.dynamic_rotate %1 by %c17_i32 dim 1 : vector<8x384xf32>, i32 -> vector<8x384xf32>
    %c16 = arith.constant 16 : index
    %c0_5 = arith.constant 0 : index
    %7 = vector.load %arg6[%c16, %c0_5] : memref<73x384xf32, #tpu.memory_space<vmem>>, vector<8x384xf32>
    tpu.vector_store %arg6[%c16, %c0_5], %6 {strides = array<i32>} : memref<73x384xf32, #tpu.memory_space<vmem>>, vector<8x384xf32>,
    %c1_i32 = arith.constant 1 : i32
    %8 = tpu.dynamic_rotate %1 by %c1_i32 dim 1 : vector<8x384xf32>, i32 -> vector<8x384xf32>
    %c24 = arith.constant 24 : index
    %c0_6 = arith.constant 0 : index
    %9 = vector.load %arg6[%c24, %c0_6] : memref<73x384xf32, #tpu.memory_space<vmem>>, vector<8x384xf32>
    tpu.vector_store %arg6[%c24, %c0_6], %8 {strides = array<i32>} : memref<73x384xf32, #tpu.memory_space<vmem>>, vector<8x384xf32>,
    %c32 = arith.constant 32 : index
    %c0_7 = arith.constant 0 : index
    %10 = vector.load %arg6[%c32, %c0_7] : memref<73x384xf32, #tpu.memory_space<vmem>>, vector<8x384xf32>
    tpu.vector_store %arg6[%c32, %c0_7], %1 {strides = array<i32>} : memref<73x384xf32, #tpu.memory_space<vmem>>, vector<8x384xf32>,
    %c383_i32 = arith.constant 383 : i32
    %11 = tpu.dynamic_rotate %1 by %c383_i32 dim 1 : vector<8x384xf32>, i32 -> vector<8x384xf32>
    %c40 = arith.constant 40 : index
    %c0_8 = arith.constant 0 : index
    %12 = vector.load %arg6[%c40, %c0_8] : memref<73x384xf32, #tpu.memory_space<vmem>>, vector<8x384xf32>
    tpu.vector_store %arg6[%c40, %c0_8], %11 {strides = array<i32>} : memref<73x384xf32, #tpu.memory_space<vmem>>, vector<8x384xf32>,
    %c367_i32 = arith.constant 367 : i32
    %13 = tpu.dynamic_rotate %1 by %c367_i32 dim 1 : vector<8x384xf32>, i32 -> vector<8x384xf32>
    %c48 = arith.constant 48 : index
    %c0_9 = arith.constant 0 : index
    %14 = vector.load %arg6[%c48, %c0_9] : memref<73x384xf32, #tpu.memory_space<vmem>>, vector<8x384xf32>
    tpu.vector_store %arg6[%c48, %c0_9], %13 {strides = array<i32>} : memref<73x384xf32, #tpu.memory_space<vmem>>, vector<8x384xf32>,
    %c366_i32 = arith.constant 366 : i32
    %15 = tpu.dynamic_rotate %1 by %c366_i32 dim 1 : vector<8x384xf32>, i32 -> vector<8x384xf32>
    %c56 = arith.constant 56 : index
    %c0_10 = arith.constant 0 : index
    %16 = vector.load %arg6[%c56, %c0_10] : memref<73x384xf32, #tpu.memory_space<vmem>>, vector<8x384xf32>
    tpu.vector_store %arg6[%c56, %c0_10], %15 {strides = array<i32>} : memref<73x384xf32, #tpu.memory_space<vmem>>, vector<8x384xf32>,
    %c365_i32 = arith.constant 365 : i32
    %17 = tpu.dynamic_rotate %1 by %c365_i32 dim 1 : vector<8x384xf32>, i32 -> vector<8x384xf32>
    %c64 = arith.constant 64 : index
    %c0_11 = arith.constant 0 : index
    %18 = vector.load %arg6[%c64, %c0_11] : memref<73x384xf32, #tpu.memory_space<vmem>>, vector<8x384xf32>
    tpu.vector_store %arg6[%c64, %c0_11], %17 {strides = array<i32>} : memref<73x384xf32, #tpu.memory_space<vmem>>, vector<8x384xf32>,
    %c0_12 = arith.constant 0 : index
    %c0_13 = arith.constant 0 : index
    %19 = vector.load %arg4[%c0_12, %c0_13] : memref<1x384xf32, #tpu.memory_space<vmem>>, vector<1x384xf32>
    %c72 = arith.constant 72 : index
    %c0_14 = arith.constant 0 : index
    %20 = vector.load %arg6[%c72, %c0_14] : memref<73x384xf32, #tpu.memory_space<vmem>>, vector<1x384xf32>
    tpu.vector_store %arg6[%c72, %c0_14], %19 {strides = array<i32>} : memref<73x384xf32, #tpu.memory_space<vmem>>, vector<1x384xf32>,
    %c0_15 = arith.constant 0 : index
    %c0_16 = arith.constant 0 : index
    %21 = vector.load %arg3[%c0_15, %c0_16] : memref<8x73xf32, #tpu.memory_space<vmem>>, vector<8x73xf32>
    %c0_17 = arith.constant 0 : index
    %c0_18 = arith.constant 0 : index
    %22 = vector.load %arg6[%c0_17, %c0_18] : memref<73x384xf32, #tpu.memory_space<vmem>>, vector<73x384xf32>
    %cst = arith.constant dense<0.000000e+00> : vector<8x384xf32>
    %23 = tpu.matmul %21, %22, %cst {dimension_numbers = #tpu.dot_dimension_numbers<[1], [0], [0], [1], [0, 0, 1, 1], [], []>} : vector<8x73xf32>, vector<73x384xf32>, vector<8x384xf32> -> vector<8x384xf32>
    %c0_19 = arith.constant 0 : index
    %c0_20 = arith.constant 0 : index
    %24 = vector.load %arg4[%c0_19, %c0_20] : memref<1x384xf32, #tpu.memory_space<vmem>>, vector<1x384xf32>
    %25 = vector.broadcast %24 : vector<1x384xf32> to vector<8x384xf32>
    %26 = arith.mulf %23, %25 : vector<8x384xf32>
    %cst_21 = arith.constant dense<0.000000e+00> : vector<8xf32>
    %27 = vector.multi_reduction <add>, %26, %cst_21 [1] : vector<8x384xf32> to vector<8xf32>
    %28 = vector.shape_cast %27 : vector<8xf32> to vector<8x1xf32>
    %cst_22 = arith.constant 3.906250e-03 : f32
    %29 = vector.broadcast %cst_22 : f32 to vector<8x1xf32>
    %30 = arith.mulf %28, %29 : vector<8x1xf32>
    %31 = arith.mulf %26, %23 : vector<8x384xf32>
    %cst_23 = arith.constant dense<0.000000e+00> : vector<8xf32>
    %32 = vector.multi_reduction <add>, %31, %cst_23 [1] : vector<8x384xf32> to vector<8xf32>
    %33 = vector.shape_cast %32 : vector<8xf32> to vector<8x1xf32>
    %cst_24 = arith.constant 3.906250e-03 : f32
    %34 = vector.broadcast %cst_24 : f32 to vector<8x1xf32>
    %35 = arith.mulf %33, %34 : vector<8x1xf32>
    %36 = arith.mulf %30, %30 : vector<8x1xf32>
    %37 = arith.subf %35, %36 : vector<8x1xf32>
    %38 = vector.broadcast %30 : vector<8x1xf32> to vector<8x384xf32>
    %39 = arith.subf %23, %38 : vector<8x384xf32>
    %40 = vector.broadcast %24 : vector<1x384xf32> to vector<8x384xf32>
    %41 = arith.mulf %39, %40 : vector<8x384xf32>
    %cst_25 = arith.constant 0.000000e+00 : f32
    %42 = vector.broadcast %cst_25 : f32 to vector<8x1xf32>
    %43 = arith.maximumf %37, %42 : vector<8x1xf32>
    %cst_26 = arith.constant 9.99999974E-6 : f32
    %44 = vector.broadcast %cst_26 : f32 to vector<8x1xf32>
    %45 = arith.addf %43, %44 : vector<8x1xf32>
    %46 = math.rsqrt %45 : vector<8x1xf32>
    %47 = vector.broadcast %46 : vector<8x1xf32> to vector<8x384xf32>
    %48 = arith.mulf %41, %47 : vector<8x384xf32>
    %cst_27 = arith.constant 0.000000e+00 : f32
    %49 = vector.broadcast %cst_27 : f32 to vector<8x384xf32>
    %50 = arith.maximumf %48, %49 : vector<8x384xf32>
    %c0_28 = arith.constant 0 : index
    %c0_29 = arith.constant 0 : index
    %c0_30 = arith.constant 0 : index
    %51 = vector.load %arg5[%c0_28, %c0_29, %c0_30] : memref<1x8x384xf32, #tpu.memory_space<vmem>>, vector<1x8x384xf32>
    %52 = vector.shape_cast %51 : vector<1x8x384xf32> to vector<8x384xf32>
    %53 = vector.shape_cast %50 : vector<8x384xf32> to vector<1x8x384xf32>
    tpu.vector_store %arg5[%c0_28, %c0_29, %c0_30], %53 {strides = array<i32>} : memref<1x8x384xf32, #tpu.memory_space<vmem>>, vector<1x8x384xf32>,
    return
  }
  func.func @transform_0(%arg0: i32, %arg1: i32) -> (i32, i32, i32) {
    %c0_i32 = arith.constant 0 : i32
    %c0_i32_0 = arith.constant 0 : i32
    %c0_i32_1 = arith.constant 0 : i32
    return %arg0, %c0_i32, %c0_i32_0 : i32, i32, i32
  }
  func.func @transform_1(%arg0: i32, %arg1: i32) -> (i32, i32) {
    %c0_i32 = arith.constant 0 : i32
    %c0_i32_0 = arith.constant 0 : i32
    return %arg1, %c0_i32 : i32, i32
  }
  func.func @transform_2(%arg0: i32, %arg1: i32) -> (i32, i32) {
    %c0_i32 = arith.constant 0 : i32
    %c0_i32_0 = arith.constant 0 : i32
    %c0_i32_1 = arith.constant 0 : i32
    return %c0_i32, %c0_i32_0 : i32, i32
  }
  func.func @transform_3(%arg0: i32, %arg1: i32) -> (i32, i32, i32) {
    %c0_i32 = arith.constant 0 : i32
    %c0_i32_0 = arith.constant 0 : i32
    return %arg0, %arg1, %c0_i32 : i32, i32, i32
  }
}

module attributes {stable_mosaic.version = 11 : i64} {
  func.func @_pointwise_kernel(%arg0: i32, %arg1: memref<1x32x128xf32, #tpu.memory_space<vmem>>, %arg2: memref<16x32xf32, #tpu.memory_space<vmem>>, %arg3: memref<16x1xf32, #tpu.memory_space<vmem>>, %arg4: memref<1x16x128xf32, #tpu.memory_space<vmem>>) attributes {dimension_semantics = [#tpu.dimension_semantics<parallel>], iteration_bounds = array<i64: 2>, scalar_prefetch = 0 : i64, scratch_operands = 0 : i64, tpu.core_type = #tpu.core_type<tc>, window_params = [{transform_indices = @transform_0, window_bounds = array<i64: 1, 32, 128>}, {pipeline_mode = #tpu.pipeline_mode<synchronous>, transform_indices = @transform_1, window_bounds = array<i64: 16, 32>}, {pipeline_mode = #tpu.pipeline_mode<synchronous>, transform_indices = @transform_2, window_bounds = array<i64: 16, 1>}, {transform_indices = @transform_3, window_bounds = array<i64: 1, 16, 128>}]} {
    %c0 = arith.constant 0 : index
    %c0_0 = arith.constant 0 : index
    %0 = vector.load %arg2[%c0, %c0_0] : memref<16x32xf32, #tpu.memory_space<vmem>>, vector<16x32xf32>
    %c0_1 = arith.constant 0 : index
    %c0_2 = arith.constant 0 : index
    %c0_3 = arith.constant 0 : index
    %1 = vector.load %arg1[%c0_1, %c0_2, %c0_3] : memref<1x32x128xf32, #tpu.memory_space<vmem>>, vector<1x32x128xf32>
    %2 = vector.shape_cast %1 : vector<1x32x128xf32> to vector<32x128xf32>
    %cst = arith.constant dense<0.000000e+00> : vector<16x128xf32>
    %3 = tpu.matmul %0, %2, %cst {dimension_numbers = #tpu.dot_dimension_numbers<[1], [0], [0], [1], [0, 0, 1, 1], [], []>} : vector<16x32xf32>, vector<32x128xf32>, vector<16x128xf32> -> vector<16x128xf32>
    %c0_4 = arith.constant 0 : index
    %c0_5 = arith.constant 0 : index
    %4 = vector.load %arg3[%c0_4, %c0_5] : memref<16x1xf32, #tpu.memory_space<vmem>>, vector<16x1xf32>
    %5 = vector.broadcast %4 : vector<16x1xf32> to vector<16x128xf32>
    %6 = arith.addf %3, %5 : vector<16x128xf32>
    %c0_6 = arith.constant 0 : index
    %c0_7 = arith.constant 0 : index
    %c0_8 = arith.constant 0 : index
    %7 = vector.load %arg4[%c0_6, %c0_7, %c0_8] : memref<1x16x128xf32, #tpu.memory_space<vmem>>, vector<1x16x128xf32>
    %8 = vector.shape_cast %7 : vector<1x16x128xf32> to vector<16x128xf32>
    %9 = vector.shape_cast %6 : vector<16x128xf32> to vector<1x16x128xf32>
    tpu.vector_store %arg4[%c0_6, %c0_7, %c0_8], %9 {strides = array<i32>} : memref<1x16x128xf32, #tpu.memory_space<vmem>>, vector<1x16x128xf32>,
    return
  }
  func.func @transform_0(%arg0: i32) -> (i32, i32, i32) {
    %c0_i32 = arith.constant 0 : i32
    %c0_i32_0 = arith.constant 0 : i32
    %c0_i32_1 = arith.constant 0 : i32
    return %arg0, %c0_i32, %c0_i32_0 : i32, i32, i32
  }
  func.func @transform_1(%arg0: i32) -> (i32, i32) {
    %c0_i32 = arith.constant 0 : i32
    %c0_i32_0 = arith.constant 0 : i32
    %c0_i32_1 = arith.constant 0 : i32
    return %c0_i32, %c0_i32_0 : i32, i32
  }
  func.func @transform_2(%arg0: i32) -> (i32, i32) {
    %c0_i32 = arith.constant 0 : i32
    %c0_i32_0 = arith.constant 0 : i32
    %c0_i32_1 = arith.constant 0 : i32
    return %c0_i32, %c0_i32_0 : i32, i32
  }
  func.func @transform_3(%arg0: i32) -> (i32, i32, i32) {
    %c0_i32 = arith.constant 0 : i32
    %c0_i32_0 = arith.constant 0 : i32
    %c0_i32_1 = arith.constant 0 : i32
    return %arg0, %c0_i32, %c0_i32_0 : i32, i32, i32
  }
}

module attributes {stable_mosaic.version = 11 : i64} {
  func.func @_conv3x3_kernel(%arg0: i32, %arg1: i32, %arg2: memref<1x16x128xf32, #tpu.memory_space<vmem>>, %arg3: memref<16x145xf32, #tpu.memory_space<vmem>>, %arg4: memref<1x128xf32, #tpu.memory_space<vmem>>, %arg5: memref<1x16x128xf32, #tpu.memory_space<vmem>>, %arg6: memref<145x128xf32, #tpu.memory_space<vmem>>) attributes {dimension_semantics = [#tpu.dimension_semantics<parallel>, #tpu.dimension_semantics<parallel>], iteration_bounds = array<i64: 2, 1>, scalar_prefetch = 0 : i64, scratch_operands = 1 : i64, tpu.core_type = #tpu.core_type<tc>, window_params = [{transform_indices = @transform_0, window_bounds = array<i64: 1, 16, 128>}, {transform_indices = @transform_1, window_bounds = array<i64: 16, 145>}, {pipeline_mode = #tpu.pipeline_mode<synchronous>, transform_indices = @transform_2, window_bounds = array<i64: 1, 128>}, {transform_indices = @transform_3, window_bounds = array<i64: 1, 16, 128>}]} {
    %c0 = arith.constant 0 : index
    %c0_0 = arith.constant 0 : index
    %c0_1 = arith.constant 0 : index
    %0 = vector.load %arg2[%c0, %c0_0, %c0_1] : memref<1x16x128xf32, #tpu.memory_space<vmem>>, vector<1x16x128xf32>
    %1 = vector.shape_cast %0 : vector<1x16x128xf32> to vector<16x128xf32>
    %c11_i32 = arith.constant 11 : i32
    %2 = tpu.dynamic_rotate %1 by %c11_i32 dim 1 : vector<16x128xf32>, i32 -> vector<16x128xf32>
    %c0_2 = arith.constant 0 : index
    %c0_3 = arith.constant 0 : index
    %3 = vector.load %arg6[%c0_2, %c0_3] : memref<145x128xf32, #tpu.memory_space<vmem>>, vector<16x128xf32>
    tpu.vector_store %arg6[%c0_2, %c0_3], %2 {strides = array<i32>} : memref<145x128xf32, #tpu.memory_space<vmem>>, vector<16x128xf32>,
    %c10_i32 = arith.constant 10 : i32
    %4 = tpu.dynamic_rotate %1 by %c10_i32 dim 1 : vector<16x128xf32>, i32 -> vector<16x128xf32>
    %c16 = arith.constant 16 : index
    %c0_4 = arith.constant 0 : index
    %5 = vector.load %arg6[%c16, %c0_4] : memref<145x128xf32, #tpu.memory_space<vmem>>, vector<16x128xf32>
    tpu.vector_store %arg6[%c16, %c0_4], %4 {strides = array<i32>} : memref<145x128xf32, #tpu.memory_space<vmem>>, vector<16x128xf32>,
    %c9_i32 = arith.constant 9 : i32
    %6 = tpu.dynamic_rotate %1 by %c9_i32 dim 1 : vector<16x128xf32>, i32 -> vector<16x128xf32>
    %c32 = arith.constant 32 : index
    %c0_5 = arith.constant 0 : index
    %7 = vector.load %arg6[%c32, %c0_5] : memref<145x128xf32, #tpu.memory_space<vmem>>, vector<16x128xf32>
    tpu.vector_store %arg6[%c32, %c0_5], %6 {strides = array<i32>} : memref<145x128xf32, #tpu.memory_space<vmem>>, vector<16x128xf32>,
    %c1_i32 = arith.constant 1 : i32
    %8 = tpu.dynamic_rotate %1 by %c1_i32 dim 1 : vector<16x128xf32>, i32 -> vector<16x128xf32>
    %c48 = arith.constant 48 : index
    %c0_6 = arith.constant 0 : index
    %9 = vector.load %arg6[%c48, %c0_6] : memref<145x128xf32, #tpu.memory_space<vmem>>, vector<16x128xf32>
    tpu.vector_store %arg6[%c48, %c0_6], %8 {strides = array<i32>} : memref<145x128xf32, #tpu.memory_space<vmem>>, vector<16x128xf32>,
    %c64 = arith.constant 64 : index
    %c0_7 = arith.constant 0 : index
    %10 = vector.load %arg6[%c64, %c0_7] : memref<145x128xf32, #tpu.memory_space<vmem>>, vector<16x128xf32>
    tpu.vector_store %arg6[%c64, %c0_7], %1 {strides = array<i32>} : memref<145x128xf32, #tpu.memory_space<vmem>>, vector<16x128xf32>,
    %c127_i32 = arith.constant 127 : i32
    %11 = tpu.dynamic_rotate %1 by %c127_i32 dim 1 : vector<16x128xf32>, i32 -> vector<16x128xf32>
    %c80 = arith.constant 80 : index
    %c0_8 = arith.constant 0 : index
    %12 = vector.load %arg6[%c80, %c0_8] : memref<145x128xf32, #tpu.memory_space<vmem>>, vector<16x128xf32>
    tpu.vector_store %arg6[%c80, %c0_8], %11 {strides = array<i32>} : memref<145x128xf32, #tpu.memory_space<vmem>>, vector<16x128xf32>,
    %c119_i32 = arith.constant 119 : i32
    %13 = tpu.dynamic_rotate %1 by %c119_i32 dim 1 : vector<16x128xf32>, i32 -> vector<16x128xf32>
    %c96 = arith.constant 96 : index
    %c0_9 = arith.constant 0 : index
    %14 = vector.load %arg6[%c96, %c0_9] : memref<145x128xf32, #tpu.memory_space<vmem>>, vector<16x128xf32>
    tpu.vector_store %arg6[%c96, %c0_9], %13 {strides = array<i32>} : memref<145x128xf32, #tpu.memory_space<vmem>>, vector<16x128xf32>,
    %c118_i32 = arith.constant 118 : i32
    %15 = tpu.dynamic_rotate %1 by %c118_i32 dim 1 : vector<16x128xf32>, i32 -> vector<16x128xf32>
    %c112 = arith.constant 112 : index
    %c0_10 = arith.constant 0 : index
    %16 = vector.load %arg6[%c112, %c0_10] : memref<145x128xf32, #tpu.memory_space<vmem>>, vector<16x128xf32>
    tpu.vector_store %arg6[%c112, %c0_10], %15 {strides = array<i32>} : memref<145x128xf32, #tpu.memory_space<vmem>>, vector<16x128xf32>,
    %c117_i32 = arith.constant 117 : i32
    %17 = tpu.dynamic_rotate %1 by %c117_i32 dim 1 : vector<16x128xf32>, i32 -> vector<16x128xf32>
    %c128 = arith.constant 128 : index
    %c0_11 = arith.constant 0 : index
    %18 = vector.load %arg6[%c128, %c0_11] : memref<145x128xf32, #tpu.memory_space<vmem>>, vector<16x128xf32>
    tpu.vector_store %arg6[%c128, %c0_11], %17 {strides = array<i32>} : memref<145x128xf32, #tpu.memory_space<vmem>>, vector<16x128xf32>,
    %c0_12 = arith.constant 0 : index
    %c0_13 = arith.constant 0 : index
    %19 = vector.load %arg4[%c0_12, %c0_13] : memref<1x128xf32, #tpu.memory_space<vmem>>, vector<1x128xf32>
    %c144 = arith.constant 144 : index
    %c0_14 = arith.constant 0 : index
    %20 = vector.load %arg6[%c144, %c0_14] : memref<145x128xf32, #tpu.memory_space<vmem>>, vector<1x128xf32>
    tpu.vector_store %arg6[%c144, %c0_14], %19 {strides = array<i32>} : memref<145x128xf32, #tpu.memory_space<vmem>>, vector<1x128xf32>,
    %c0_15 = arith.constant 0 : index
    %c0_16 = arith.constant 0 : index
    %21 = vector.load %arg3[%c0_15, %c0_16] : memref<16x145xf32, #tpu.memory_space<vmem>>, vector<16x145xf32>
    %c0_17 = arith.constant 0 : index
    %c0_18 = arith.constant 0 : index
    %22 = vector.load %arg6[%c0_17, %c0_18] : memref<145x128xf32, #tpu.memory_space<vmem>>, vector<145x128xf32>
    %cst = arith.constant dense<0.000000e+00> : vector<16x128xf32>
    %23 = tpu.matmul %21, %22, %cst {dimension_numbers = #tpu.dot_dimension_numbers<[1], [0], [0], [1], [0, 0, 1, 1], [], []>} : vector<16x145xf32>, vector<145x128xf32>, vector<16x128xf32> -> vector<16x128xf32>
    %c0_19 = arith.constant 0 : index
    %c0_20 = arith.constant 0 : index
    %24 = vector.load %arg4[%c0_19, %c0_20] : memref<1x128xf32, #tpu.memory_space<vmem>>, vector<1x128xf32>
    %25 = vector.broadcast %24 : vector<1x128xf32> to vector<16x128xf32>
    %26 = arith.mulf %23, %25 : vector<16x128xf32>
    %cst_21 = arith.constant dense<0.000000e+00> : vector<16xf32>
    %27 = vector.multi_reduction <add>, %26, %cst_21 [1] : vector<16x128xf32> to vector<16xf32>
    %28 = vector.shape_cast %27 : vector<16xf32> to vector<16x1xf32>
    %cst_22 = arith.constant 1.562500e-02 : f32
    %29 = vector.broadcast %cst_22 : f32 to vector<16x1xf32>
    %30 = arith.mulf %28, %29 : vector<16x1xf32>
    %31 = arith.mulf %26, %23 : vector<16x128xf32>
    %cst_23 = arith.constant dense<0.000000e+00> : vector<16xf32>
    %32 = vector.multi_reduction <add>, %31, %cst_23 [1] : vector<16x128xf32> to vector<16xf32>
    %33 = vector.shape_cast %32 : vector<16xf32> to vector<16x1xf32>
    %cst_24 = arith.constant 1.562500e-02 : f32
    %34 = vector.broadcast %cst_24 : f32 to vector<16x1xf32>
    %35 = arith.mulf %33, %34 : vector<16x1xf32>
    %36 = arith.mulf %30, %30 : vector<16x1xf32>
    %37 = arith.subf %35, %36 : vector<16x1xf32>
    %38 = vector.broadcast %30 : vector<16x1xf32> to vector<16x128xf32>
    %39 = arith.subf %23, %38 : vector<16x128xf32>
    %40 = vector.broadcast %24 : vector<1x128xf32> to vector<16x128xf32>
    %41 = arith.mulf %39, %40 : vector<16x128xf32>
    %cst_25 = arith.constant 0.000000e+00 : f32
    %42 = vector.broadcast %cst_25 : f32 to vector<16x1xf32>
    %43 = arith.maximumf %37, %42 : vector<16x1xf32>
    %cst_26 = arith.constant 9.99999974E-6 : f32
    %44 = vector.broadcast %cst_26 : f32 to vector<16x1xf32>
    %45 = arith.addf %43, %44 : vector<16x1xf32>
    %46 = math.rsqrt %45 : vector<16x1xf32>
    %47 = vector.broadcast %46 : vector<16x1xf32> to vector<16x128xf32>
    %48 = arith.mulf %41, %47 : vector<16x128xf32>
    %cst_27 = arith.constant 0.000000e+00 : f32
    %49 = vector.broadcast %cst_27 : f32 to vector<16x128xf32>
    %50 = arith.maximumf %48, %49 : vector<16x128xf32>
    %c0_28 = arith.constant 0 : index
    %c0_29 = arith.constant 0 : index
    %c0_30 = arith.constant 0 : index
    %51 = vector.load %arg5[%c0_28, %c0_29, %c0_30] : memref<1x16x128xf32, #tpu.memory_space<vmem>>, vector<1x16x128xf32>
    %52 = vector.shape_cast %51 : vector<1x16x128xf32> to vector<16x128xf32>
    %53 = vector.shape_cast %50 : vector<16x128xf32> to vector<1x16x128xf32>
    tpu.vector_store %arg5[%c0_28, %c0_29, %c0_30], %53 {strides = array<i32>} : memref<1x16x128xf32, #tpu.memory_space<vmem>>, vector<1x16x128xf32>,
    return
  }
  func.func @transform_0(%arg0: i32, %arg1: i32) -> (i32, i32, i32) {
    %c0_i32 = arith.constant 0 : i32
    %c0_i32_0 = arith.constant 0 : i32
    %c0_i32_1 = arith.constant 0 : i32
    return %arg0, %c0_i32, %c0_i32_0 : i32, i32, i32
  }
  func.func @transform_1(%arg0: i32, %arg1: i32) -> (i32, i32) {
    %c0_i32 = arith.constant 0 : i32
    %c0_i32_0 = arith.constant 0 : i32
    return %arg1, %c0_i32 : i32, i32
  }
  func.func @transform_2(%arg0: i32, %arg1: i32) -> (i32, i32) {
    %c0_i32 = arith.constant 0 : i32
    %c0_i32_0 = arith.constant 0 : i32
    %c0_i32_1 = arith.constant 0 : i32
    return %c0_i32, %c0_i32_0 : i32, i32
  }
  func.func @transform_3(%arg0: i32, %arg1: i32) -> (i32, i32, i32) {
    %c0_i32 = arith.constant 0 : i32
    %c0_i32_0 = arith.constant 0 : i32
    return %arg0, %arg1, %c0_i32 : i32, i32, i32
  }
}

module attributes {stable_mosaic.version = 11 : i64} {
  func.func @_pointwise_kernel(%arg0: i32, %arg1: memref<1x64x128xf32, #tpu.memory_space<vmem>>, %arg2: memref<32x64xf32, #tpu.memory_space<vmem>>, %arg3: memref<32x1xf32, #tpu.memory_space<vmem>>, %arg4: memref<1x32x128xf32, #tpu.memory_space<vmem>>) attributes {dimension_semantics = [#tpu.dimension_semantics<parallel>], iteration_bounds = array<i64: 2>, scalar_prefetch = 0 : i64, scratch_operands = 0 : i64, tpu.core_type = #tpu.core_type<tc>, window_params = [{transform_indices = @transform_0, window_bounds = array<i64: 1, 64, 128>}, {pipeline_mode = #tpu.pipeline_mode<synchronous>, transform_indices = @transform_1, window_bounds = array<i64: 32, 64>}, {pipeline_mode = #tpu.pipeline_mode<synchronous>, transform_indices = @transform_2, window_bounds = array<i64: 32, 1>}, {transform_indices = @transform_3, window_bounds = array<i64: 1, 32, 128>}]} {
    %c0 = arith.constant 0 : index
    %c0_0 = arith.constant 0 : index
    %0 = vector.load %arg2[%c0, %c0_0] : memref<32x64xf32, #tpu.memory_space<vmem>>, vector<32x64xf32>
    %c0_1 = arith.constant 0 : index
    %c0_2 = arith.constant 0 : index
    %c0_3 = arith.constant 0 : index
    %1 = vector.load %arg1[%c0_1, %c0_2, %c0_3] : memref<1x64x128xf32, #tpu.memory_space<vmem>>, vector<1x64x128xf32>
    %2 = vector.shape_cast %1 : vector<1x64x128xf32> to vector<64x128xf32>
    %cst = arith.constant dense<0.000000e+00> : vector<32x128xf32>
    %3 = tpu.matmul %0, %2, %cst {dimension_numbers = #tpu.dot_dimension_numbers<[1], [0], [0], [1], [0, 0, 1, 1], [], []>} : vector<32x64xf32>, vector<64x128xf32>, vector<32x128xf32> -> vector<32x128xf32>
    %c0_4 = arith.constant 0 : index
    %c0_5 = arith.constant 0 : index
    %4 = vector.load %arg3[%c0_4, %c0_5] : memref<32x1xf32, #tpu.memory_space<vmem>>, vector<32x1xf32>
    %5 = vector.broadcast %4 : vector<32x1xf32> to vector<32x128xf32>
    %6 = arith.addf %3, %5 : vector<32x128xf32>
    %c0_6 = arith.constant 0 : index
    %c0_7 = arith.constant 0 : index
    %c0_8 = arith.constant 0 : index
    %7 = vector.load %arg4[%c0_6, %c0_7, %c0_8] : memref<1x32x128xf32, #tpu.memory_space<vmem>>, vector<1x32x128xf32>
    %8 = vector.shape_cast %7 : vector<1x32x128xf32> to vector<32x128xf32>
    %9 = vector.shape_cast %6 : vector<32x128xf32> to vector<1x32x128xf32>
    tpu.vector_store %arg4[%c0_6, %c0_7, %c0_8], %9 {strides = array<i32>} : memref<1x32x128xf32, #tpu.memory_space<vmem>>, vector<1x32x128xf32>,
    return
  }
  func.func @transform_0(%arg0: i32) -> (i32, i32, i32) {
    %c0_i32 = arith.constant 0 : i32
    %c0_i32_0 = arith.constant 0 : i32
    %c0_i32_1 = arith.constant 0 : i32
    return %arg0, %c0_i32, %c0_i32_0 : i32, i32, i32
  }
  func.func @transform_1(%arg0: i32) -> (i32, i32) {
    %c0_i32 = arith.constant 0 : i32
    %c0_i32_0 = arith.constant 0 : i32
    %c0_i32_1 = arith.constant 0 : i32
    return %c0_i32, %c0_i32_0 : i32, i32
  }
  func.func @transform_2(%arg0: i32) -> (i32, i32) {
    %c0_i32 = arith.constant 0 : i32
    %c0_i32_0 = arith.constant 0 : i32
    %c0_i32_1 = arith.constant 0 : i32
    return %c0_i32, %c0_i32_0 : i32, i32
  }
  func.func @transform_3(%arg0: i32) -> (i32, i32, i32) {
    %c0_i32 = arith.constant 0 : i32
    %c0_i32_0 = arith.constant 0 : i32
    %c0_i32_1 = arith.constant 0 : i32
    return %arg0, %c0_i32, %c0_i32_0 : i32, i32, i32
  }
}

module attributes {stable_mosaic.version = 11 : i64} {
  func.func @_conv3x3_kernel(%arg0: i32, %arg1: i32, %arg2: memref<1x32x128xf32, #tpu.memory_space<vmem>>, %arg3: memref<32x289xf32, #tpu.memory_space<vmem>>, %arg4: memref<1x128xf32, #tpu.memory_space<vmem>>, %arg5: memref<1x32x128xf32, #tpu.memory_space<vmem>>, %arg6: memref<289x128xf32, #tpu.memory_space<vmem>>) attributes {dimension_semantics = [#tpu.dimension_semantics<parallel>, #tpu.dimension_semantics<parallel>], iteration_bounds = array<i64: 2, 1>, scalar_prefetch = 0 : i64, scratch_operands = 1 : i64, tpu.core_type = #tpu.core_type<tc>, window_params = [{transform_indices = @transform_0, window_bounds = array<i64: 1, 32, 128>}, {transform_indices = @transform_1, window_bounds = array<i64: 32, 289>}, {pipeline_mode = #tpu.pipeline_mode<synchronous>, transform_indices = @transform_2, window_bounds = array<i64: 1, 128>}, {transform_indices = @transform_3, window_bounds = array<i64: 1, 32, 128>}]} {
    %c0 = arith.constant 0 : index
    %c0_0 = arith.constant 0 : index
    %c0_1 = arith.constant 0 : index
    %0 = vector.load %arg2[%c0, %c0_0, %c0_1] : memref<1x32x128xf32, #tpu.memory_space<vmem>>, vector<1x32x128xf32>
    %1 = vector.shape_cast %0 : vector<1x32x128xf32> to vector<32x128xf32>
    %c7_i32 = arith.constant 7 : i32
    %2 = tpu.dynamic_rotate %1 by %c7_i32 dim 1 : vector<32x128xf32>, i32 -> vector<32x128xf32>
    %c0_2 = arith.constant 0 : index
    %c0_3 = arith.constant 0 : index
    %3 = vector.load %arg6[%c0_2, %c0_3] : memref<289x128xf32, #tpu.memory_space<vmem>>, vector<32x128xf32>
    tpu.vector_store %arg6[%c0_2, %c0_3], %2 {strides = array<i32>} : memref<289x128xf32, #tpu.memory_space<vmem>>, vector<32x128xf32>,
    %c6_i32 = arith.constant 6 : i32
    %4 = tpu.dynamic_rotate %1 by %c6_i32 dim 1 : vector<32x128xf32>, i32 -> vector<32x128xf32>
    %c32 = arith.constant 32 : index
    %c0_4 = arith.constant 0 : index
    %5 = vector.load %arg6[%c32, %c0_4] : memref<289x128xf32, #tpu.memory_space<vmem>>, vector<32x128xf32>
    tpu.vector_store %arg6[%c32, %c0_4], %4 {strides = array<i32>} : memref<289x128xf32, #tpu.memory_space<vmem>>, vector<32x128xf32>,
    %c5_i32 = arith.constant 5 : i32
    %6 = tpu.dynamic_rotate %1 by %c5_i32 dim 1 : vector<32x128xf32>, i32 -> vector<32x128xf32>
    %c64 = arith.constant 64 : index
    %c0_5 = arith.constant 0 : index
    %7 = vector.load %arg6[%c64, %c0_5] : memref<289x128xf32, #tpu.memory_space<vmem>>, vector<32x128xf32>
    tpu.vector_store %arg6[%c64, %c0_5], %6 {strides = array<i32>} : memref<289x128xf32, #tpu.memory_space<vmem>>, vector<32x128xf32>,
    %c1_i32 = arith.constant 1 : i32
    %8 = tpu.dynamic_rotate %1 by %c1_i32 dim 1 : vector<32x128xf32>, i32 -> vector<32x128xf32>
    %c96 = arith.constant 96 : index
    %c0_6 = arith.constant 0 : index
    %9 = vector.load %arg6[%c96, %c0_6] : memref<289x128xf32, #tpu.memory_space<vmem>>, vector<32x128xf32>
    tpu.vector_store %arg6[%c96, %c0_6], %8 {strides = array<i32>} : memref<289x128xf32, #tpu.memory_space<vmem>>, vector<32x128xf32>,
    %c128 = arith.constant 128 : index
    %c0_7 = arith.constant 0 : index
    %10 = vector.load %arg6[%c128, %c0_7] : memref<289x128xf32, #tpu.memory_space<vmem>>, vector<32x128xf32>
    tpu.vector_store %arg6[%c128, %c0_7], %1 {strides = array<i32>} : memref<289x128xf32, #tpu.memory_space<vmem>>, vector<32x128xf32>,
    %c127_i32 = arith.constant 127 : i32
    %11 = tpu.dynamic_rotate %1 by %c127_i32 dim 1 : vector<32x128xf32>, i32 -> vector<32x128xf32>
    %c160 = arith.constant 160 : index
    %c0_8 = arith.constant 0 : index
    %12 = vector.load %arg6[%c160, %c0_8] : memref<289x128xf32, #tpu.memory_space<vmem>>, vector<32x128xf32>
    tpu.vector_store %arg6[%c160, %c0_8], %11 {strides = array<i32>} : memref<289x128xf32, #tpu.memory_space<vmem>>, vector<32x128xf32>,
    %c123_i32 = arith.constant 123 : i32
    %13 = tpu.dynamic_rotate %1 by %c123_i32 dim 1 : vector<32x128xf32>, i32 -> vector<32x128xf32>
    %c192 = arith.constant 192 : index
    %c0_9 = arith.constant 0 : index
    %14 = vector.load %arg6[%c192, %c0_9] : memref<289x128xf32, #tpu.memory_space<vmem>>, vector<32x128xf32>
    tpu.vector_store %arg6[%c192, %c0_9], %13 {strides = array<i32>} : memref<289x128xf32, #tpu.memory_space<vmem>>, vector<32x128xf32>,
    %c122_i32 = arith.constant 122 : i32
    %15 = tpu.dynamic_rotate %1 by %c122_i32 dim 1 : vector<32x128xf32>, i32 -> vector<32x128xf32>
    %c224 = arith.constant 224 : index
    %c0_10 = arith.constant 0 : index
    %16 = vector.load %arg6[%c224, %c0_10] : memref<289x128xf32, #tpu.memory_space<vmem>>, vector<32x128xf32>
    tpu.vector_store %arg6[%c224, %c0_10], %15 {strides = array<i32>} : memref<289x128xf32, #tpu.memory_space<vmem>>, vector<32x128xf32>,
    %c121_i32 = arith.constant 121 : i32
    %17 = tpu.dynamic_rotate %1 by %c121_i32 dim 1 : vector<32x128xf32>, i32 -> vector<32x128xf32>
    %c256 = arith.constant 256 : index
    %c0_11 = arith.constant 0 : index
    %18 = vector.load %arg6[%c256, %c0_11] : memref<289x128xf32, #tpu.memory_space<vmem>>, vector<32x128xf32>
    tpu.vector_store %arg6[%c256, %c0_11], %17 {strides = array<i32>} : memref<289x128xf32, #tpu.memory_space<vmem>>, vector<32x128xf32>,
    %c0_12 = arith.constant 0 : index
    %c0_13 = arith.constant 0 : index
    %19 = vector.load %arg4[%c0_12, %c0_13] : memref<1x128xf32, #tpu.memory_space<vmem>>, vector<1x128xf32>
    %c288 = arith.constant 288 : index
    %c0_14 = arith.constant 0 : index
    %20 = vector.load %arg6[%c288, %c0_14] : memref<289x128xf32, #tpu.memory_space<vmem>>, vector<1x128xf32>
    tpu.vector_store %arg6[%c288, %c0_14], %19 {strides = array<i32>} : memref<289x128xf32, #tpu.memory_space<vmem>>, vector<1x128xf32>,
    %c0_15 = arith.constant 0 : index
    %c0_16 = arith.constant 0 : index
    %21 = vector.load %arg3[%c0_15, %c0_16] : memref<32x289xf32, #tpu.memory_space<vmem>>, vector<32x289xf32>
    %c0_17 = arith.constant 0 : index
    %c0_18 = arith.constant 0 : index
    %22 = vector.load %arg6[%c0_17, %c0_18] : memref<289x128xf32, #tpu.memory_space<vmem>>, vector<289x128xf32>
    %cst = arith.constant dense<0.000000e+00> : vector<32x128xf32>
    %23 = tpu.matmul %21, %22, %cst {dimension_numbers = #tpu.dot_dimension_numbers<[1], [0], [0], [1], [0, 0, 1, 1], [], []>} : vector<32x289xf32>, vector<289x128xf32>, vector<32x128xf32> -> vector<32x128xf32>
    %c0_19 = arith.constant 0 : index
    %c0_20 = arith.constant 0 : index
    %24 = vector.load %arg4[%c0_19, %c0_20] : memref<1x128xf32, #tpu.memory_space<vmem>>, vector<1x128xf32>
    %25 = vector.broadcast %24 : vector<1x128xf32> to vector<32x128xf32>
    %26 = arith.mulf %23, %25 : vector<32x128xf32>
    %cst_21 = arith.constant dense<0.000000e+00> : vector<32xf32>
    %27 = vector.multi_reduction <add>, %26, %cst_21 [1] : vector<32x128xf32> to vector<32xf32>
    %28 = vector.shape_cast %27 : vector<32xf32> to vector<32x1xf32>
    %cst_22 = arith.constant 6.250000e-02 : f32
    %29 = vector.broadcast %cst_22 : f32 to vector<32x1xf32>
    %30 = arith.mulf %28, %29 : vector<32x1xf32>
    %31 = arith.mulf %26, %23 : vector<32x128xf32>
    %cst_23 = arith.constant dense<0.000000e+00> : vector<32xf32>
    %32 = vector.multi_reduction <add>, %31, %cst_23 [1] : vector<32x128xf32> to vector<32xf32>
    %33 = vector.shape_cast %32 : vector<32xf32> to vector<32x1xf32>
    %cst_24 = arith.constant 6.250000e-02 : f32
    %34 = vector.broadcast %cst_24 : f32 to vector<32x1xf32>
    %35 = arith.mulf %33, %34 : vector<32x1xf32>
    %36 = arith.mulf %30, %30 : vector<32x1xf32>
    %37 = arith.subf %35, %36 : vector<32x1xf32>
    %38 = vector.broadcast %30 : vector<32x1xf32> to vector<32x128xf32>
    %39 = arith.subf %23, %38 : vector<32x128xf32>
    %40 = vector.broadcast %24 : vector<1x128xf32> to vector<32x128xf32>
    %41 = arith.mulf %39, %40 : vector<32x128xf32>
    %cst_25 = arith.constant 0.000000e+00 : f32
    %42 = vector.broadcast %cst_25 : f32 to vector<32x1xf32>
    %43 = arith.maximumf %37, %42 : vector<32x1xf32>
    %cst_26 = arith.constant 9.99999974E-6 : f32
    %44 = vector.broadcast %cst_26 : f32 to vector<32x1xf32>
    %45 = arith.addf %43, %44 : vector<32x1xf32>
    %46 = math.rsqrt %45 : vector<32x1xf32>
    %47 = vector.broadcast %46 : vector<32x1xf32> to vector<32x128xf32>
    %48 = arith.mulf %41, %47 : vector<32x128xf32>
    %cst_27 = arith.constant 0.000000e+00 : f32
    %49 = vector.broadcast %cst_27 : f32 to vector<32x128xf32>
    %50 = arith.maximumf %48, %49 : vector<32x128xf32>
    %c0_28 = arith.constant 0 : index
    %c0_29 = arith.constant 0 : index
    %c0_30 = arith.constant 0 : index
    %51 = vector.load %arg5[%c0_28, %c0_29, %c0_30] : memref<1x32x128xf32, #tpu.memory_space<vmem>>, vector<1x32x128xf32>
    %52 = vector.shape_cast %51 : vector<1x32x128xf32> to vector<32x128xf32>
    %53 = vector.shape_cast %50 : vector<32x128xf32> to vector<1x32x128xf32>
    tpu.vector_store %arg5[%c0_28, %c0_29, %c0_30], %53 {strides = array<i32>} : memref<1x32x128xf32, #tpu.memory_space<vmem>>, vector<1x32x128xf32>,
    return
  }
  func.func @transform_0(%arg0: i32, %arg1: i32) -> (i32, i32, i32) {
    %c0_i32 = arith.constant 0 : i32
    %c0_i32_0 = arith.constant 0 : i32
    %c0_i32_1 = arith.constant 0 : i32
    return %arg0, %c0_i32, %c0_i32_0 : i32, i32, i32
  }
  func.func @transform_1(%arg0: i32, %arg1: i32) -> (i32, i32) {
    %c0_i32 = arith.constant 0 : i32
    %c0_i32_0 = arith.constant 0 : i32
    return %arg1, %c0_i32 : i32, i32
  }
  func.func @transform_2(%arg0: i32, %arg1: i32) -> (i32, i32) {
    %c0_i32 = arith.constant 0 : i32
    %c0_i32_0 = arith.constant 0 : i32
    %c0_i32_1 = arith.constant 0 : i32
    return %c0_i32, %c0_i32_0 : i32, i32
  }
  func.func @transform_3(%arg0: i32, %arg1: i32) -> (i32, i32, i32) {
    %c0_i32 = arith.constant 0 : i32
    %c0_i32_0 = arith.constant 0 : i32
    return %arg0, %arg1, %c0_i32 : i32, i32, i32
  }
}

module attributes {stable_mosaic.version = 11 : i64} {
  func.func @_pointwise_kernel(%arg0: i32, %arg1: memref<1x32x128xf32, #tpu.memory_space<vmem>>, %arg2: memref<64x32xf32, #tpu.memory_space<vmem>>, %arg3: memref<1x64x128xf32, #tpu.memory_space<vmem>>) attributes {dimension_semantics = [#tpu.dimension_semantics<parallel>], iteration_bounds = array<i64: 2>, scalar_prefetch = 0 : i64, scratch_operands = 0 : i64, tpu.core_type = #tpu.core_type<tc>, window_params = [{transform_indices = @transform_0, window_bounds = array<i64: 1, 32, 128>}, {pipeline_mode = #tpu.pipeline_mode<synchronous>, transform_indices = @transform_1, window_bounds = array<i64: 64, 32>}, {transform_indices = @transform_2, window_bounds = array<i64: 1, 64, 128>}]} {
    %c0 = arith.constant 0 : index
    %c0_0 = arith.constant 0 : index
    %0 = vector.load %arg2[%c0, %c0_0] : memref<64x32xf32, #tpu.memory_space<vmem>>, vector<64x32xf32>
    %c0_1 = arith.constant 0 : index
    %c0_2 = arith.constant 0 : index
    %c0_3 = arith.constant 0 : index
    %1 = vector.load %arg1[%c0_1, %c0_2, %c0_3] : memref<1x32x128xf32, #tpu.memory_space<vmem>>, vector<1x32x128xf32>
    %2 = vector.shape_cast %1 : vector<1x32x128xf32> to vector<32x128xf32>
    %cst = arith.constant dense<0.000000e+00> : vector<64x128xf32>
    %3 = tpu.matmul %0, %2, %cst {dimension_numbers = #tpu.dot_dimension_numbers<[1], [0], [0], [1], [0, 0, 1, 1], [], []>} : vector<64x32xf32>, vector<32x128xf32>, vector<64x128xf32> -> vector<64x128xf32>
    %c0_4 = arith.constant 0 : index
    %c0_5 = arith.constant 0 : index
    %c0_6 = arith.constant 0 : index
    %4 = vector.load %arg3[%c0_4, %c0_5, %c0_6] : memref<1x64x128xf32, #tpu.memory_space<vmem>>, vector<1x64x128xf32>
    %5 = vector.shape_cast %4 : vector<1x64x128xf32> to vector<64x128xf32>
    %6 = vector.shape_cast %3 : vector<64x128xf32> to vector<1x64x128xf32>
    tpu.vector_store %arg3[%c0_4, %c0_5, %c0_6], %6 {strides = array<i32>} : memref<1x64x128xf32, #tpu.memory_space<vmem>>, vector<1x64x128xf32>,
    return
  }
  func.func @transform_0(%arg0: i32) -> (i32, i32, i32) {
    %c0_i32 = arith.constant 0 : i32
    %c0_i32_0 = arith.constant 0 : i32
    %c0_i32_1 = arith.constant 0 : i32
    return %arg0, %c0_i32, %c0_i32_0 : i32, i32, i32
  }
  func.func @transform_1(%arg0: i32) -> (i32, i32) {
    %c0_i32 = arith.constant 0 : i32
    %c0_i32_0 = arith.constant 0 : i32
    %c0_i32_1 = arith.constant 0 : i32
    return %c0_i32, %c0_i32_0 : i32, i32
  }
  func.func @transform_2(%arg0: i32) -> (i32, i32, i32) {
    %c0_i32 = arith.constant 0 : i32
    %c0_i32_0 = arith.constant 0 : i32
    %c0_i32_1 = arith.constant 0 : i32
    return %arg0, %c0_i32, %c0_i32_0 : i32, i32, i32
  }
}

module attributes {stable_mosaic.version = 11 : i64} {
  func.func @_conv3x3_kernel(%arg0: i32, %arg1: i32, %arg2: memref<1x16x128xf32, #tpu.memory_space<vmem>>, %arg3: memref<1x16x128xf32, #tpu.memory_space<vmem>>, %arg4: memref<16x145xf32, #tpu.memory_space<vmem>>, %arg5: memref<1x128xf32, #tpu.memory_space<vmem>>, %arg6: memref<1x16x128xf32, #tpu.memory_space<vmem>>, %arg7: memref<145x128xf32, #tpu.memory_space<vmem>>) attributes {dimension_semantics = [#tpu.dimension_semantics<parallel>, #tpu.dimension_semantics<parallel>], iteration_bounds = array<i64: 2, 1>, scalar_prefetch = 0 : i64, scratch_operands = 1 : i64, tpu.core_type = #tpu.core_type<tc>, window_params = [{transform_indices = @transform_0, window_bounds = array<i64: 1, 16, 128>}, {transform_indices = @transform_1, window_bounds = array<i64: 1, 16, 128>}, {transform_indices = @transform_2, window_bounds = array<i64: 16, 145>}, {pipeline_mode = #tpu.pipeline_mode<synchronous>, transform_indices = @transform_3, window_bounds = array<i64: 1, 128>}, {transform_indices = @transform_4, window_bounds = array<i64: 1, 16, 128>}]} {
    %c0 = arith.constant 0 : index
    %c0_0 = arith.constant 0 : index
    %c0_1 = arith.constant 0 : index
    %0 = vector.load %arg2[%c0, %c0_0, %c0_1] : memref<1x16x128xf32, #tpu.memory_space<vmem>>, vector<1x16x128xf32>
    %1 = vector.shape_cast %0 : vector<1x16x128xf32> to vector<16x128xf32>
    %c0_2 = arith.constant 0 : index
    %c0_3 = arith.constant 0 : index
    %c0_4 = arith.constant 0 : index
    %2 = vector.load %arg3[%c0_2, %c0_3, %c0_4] : memref<1x16x128xf32, #tpu.memory_space<vmem>>, vector<1x16x128xf32>
    %3 = vector.shape_cast %2 : vector<1x16x128xf32> to vector<16x128xf32>
    %4 = arith.addf %1, %3 : vector<16x128xf32>
    %c11_i32 = arith.constant 11 : i32
    %5 = tpu.dynamic_rotate %4 by %c11_i32 dim 1 : vector<16x128xf32>, i32 -> vector<16x128xf32>
    %c0_5 = arith.constant 0 : index
    %c0_6 = arith.constant 0 : index
    %6 = vector.load %arg7[%c0_5, %c0_6] : memref<145x128xf32, #tpu.memory_space<vmem>>, vector<16x128xf32>
    tpu.vector_store %arg7[%c0_5, %c0_6], %5 {strides = array<i32>} : memref<145x128xf32, #tpu.memory_space<vmem>>, vector<16x128xf32>,
    %c10_i32 = arith.constant 10 : i32
    %7 = tpu.dynamic_rotate %4 by %c10_i32 dim 1 : vector<16x128xf32>, i32 -> vector<16x128xf32>
    %c16 = arith.constant 16 : index
    %c0_7 = arith.constant 0 : index
    %8 = vector.load %arg7[%c16, %c0_7] : memref<145x128xf32, #tpu.memory_space<vmem>>, vector<16x128xf32>
    tpu.vector_store %arg7[%c16, %c0_7], %7 {strides = array<i32>} : memref<145x128xf32, #tpu.memory_space<vmem>>, vector<16x128xf32>,
    %c9_i32 = arith.constant 9 : i32
    %9 = tpu.dynamic_rotate %4 by %c9_i32 dim 1 : vector<16x128xf32>, i32 -> vector<16x128xf32>
    %c32 = arith.constant 32 : index
    %c0_8 = arith.constant 0 : index
    %10 = vector.load %arg7[%c32, %c0_8] : memref<145x128xf32, #tpu.memory_space<vmem>>, vector<16x128xf32>
    tpu.vector_store %arg7[%c32, %c0_8], %9 {strides = array<i32>} : memref<145x128xf32, #tpu.memory_space<vmem>>, vector<16x128xf32>,
    %c1_i32 = arith.constant 1 : i32
    %11 = tpu.dynamic_rotate %4 by %c1_i32 dim 1 : vector<16x128xf32>, i32 -> vector<16x128xf32>
    %c48 = arith.constant 48 : index
    %c0_9 = arith.constant 0 : index
    %12 = vector.load %arg7[%c48, %c0_9] : memref<145x128xf32, #tpu.memory_space<vmem>>, vector<16x128xf32>
    tpu.vector_store %arg7[%c48, %c0_9], %11 {strides = array<i32>} : memref<145x128xf32, #tpu.memory_space<vmem>>, vector<16x128xf32>,
    %c64 = arith.constant 64 : index
    %c0_10 = arith.constant 0 : index
    %13 = vector.load %arg7[%c64, %c0_10] : memref<145x128xf32, #tpu.memory_space<vmem>>, vector<16x128xf32>
    tpu.vector_store %arg7[%c64, %c0_10], %4 {strides = array<i32>} : memref<145x128xf32, #tpu.memory_space<vmem>>, vector<16x128xf32>,
    %c127_i32 = arith.constant 127 : i32
    %14 = tpu.dynamic_rotate %4 by %c127_i32 dim 1 : vector<16x128xf32>, i32 -> vector<16x128xf32>
    %c80 = arith.constant 80 : index
    %c0_11 = arith.constant 0 : index
    %15 = vector.load %arg7[%c80, %c0_11] : memref<145x128xf32, #tpu.memory_space<vmem>>, vector<16x128xf32>
    tpu.vector_store %arg7[%c80, %c0_11], %14 {strides = array<i32>} : memref<145x128xf32, #tpu.memory_space<vmem>>, vector<16x128xf32>,
    %c119_i32 = arith.constant 119 : i32
    %16 = tpu.dynamic_rotate %4 by %c119_i32 dim 1 : vector<16x128xf32>, i32 -> vector<16x128xf32>
    %c96 = arith.constant 96 : index
    %c0_12 = arith.constant 0 : index
    %17 = vector.load %arg7[%c96, %c0_12] : memref<145x128xf32, #tpu.memory_space<vmem>>, vector<16x128xf32>
    tpu.vector_store %arg7[%c96, %c0_12], %16 {strides = array<i32>} : memref<145x128xf32, #tpu.memory_space<vmem>>, vector<16x128xf32>,
    %c118_i32 = arith.constant 118 : i32
    %18 = tpu.dynamic_rotate %4 by %c118_i32 dim 1 : vector<16x128xf32>, i32 -> vector<16x128xf32>
    %c112 = arith.constant 112 : index
    %c0_13 = arith.constant 0 : index
    %19 = vector.load %arg7[%c112, %c0_13] : memref<145x128xf32, #tpu.memory_space<vmem>>, vector<16x128xf32>
    tpu.vector_store %arg7[%c112, %c0_13], %18 {strides = array<i32>} : memref<145x128xf32, #tpu.memory_space<vmem>>, vector<16x128xf32>,
    %c117_i32 = arith.constant 117 : i32
    %20 = tpu.dynamic_rotate %4 by %c117_i32 dim 1 : vector<16x128xf32>, i32 -> vector<16x128xf32>
    %c128 = arith.constant 128 : index
    %c0_14 = arith.constant 0 : index
    %21 = vector.load %arg7[%c128, %c0_14] : memref<145x128xf32, #tpu.memory_space<vmem>>, vector<16x128xf32>
    tpu.vector_store %arg7[%c128, %c0_14], %20 {strides = array<i32>} : memref<145x128xf32, #tpu.memory_space<vmem>>, vector<16x128xf32>,
    %c0_15 = arith.constant 0 : index
    %c0_16 = arith.constant 0 : index
    %22 = vector.load %arg5[%c0_15, %c0_16] : memref<1x128xf32, #tpu.memory_space<vmem>>, vector<1x128xf32>
    %c144 = arith.constant 144 : index
    %c0_17 = arith.constant 0 : index
    %23 = vector.load %arg7[%c144, %c0_17] : memref<145x128xf32, #tpu.memory_space<vmem>>, vector<1x128xf32>
    tpu.vector_store %arg7[%c144, %c0_17], %22 {strides = array<i32>} : memref<145x128xf32, #tpu.memory_space<vmem>>, vector<1x128xf32>,
    %c0_18 = arith.constant 0 : index
    %c0_19 = arith.constant 0 : index
    %24 = vector.load %arg4[%c0_18, %c0_19] : memref<16x145xf32, #tpu.memory_space<vmem>>, vector<16x145xf32>
    %c0_20 = arith.constant 0 : index
    %c0_21 = arith.constant 0 : index
    %25 = vector.load %arg7[%c0_20, %c0_21] : memref<145x128xf32, #tpu.memory_space<vmem>>, vector<145x128xf32>
    %cst = arith.constant dense<0.000000e+00> : vector<16x128xf32>
    %26 = tpu.matmul %24, %25, %cst {dimension_numbers = #tpu.dot_dimension_numbers<[1], [0], [0], [1], [0, 0, 1, 1], [], []>} : vector<16x145xf32>, vector<145x128xf32>, vector<16x128xf32> -> vector<16x128xf32>
    %c0_22 = arith.constant 0 : index
    %c0_23 = arith.constant 0 : index
    %27 = vector.load %arg5[%c0_22, %c0_23] : memref<1x128xf32, #tpu.memory_space<vmem>>, vector<1x128xf32>
    %28 = vector.broadcast %27 : vector<1x128xf32> to vector<16x128xf32>
    %29 = arith.mulf %26, %28 : vector<16x128xf32>
    %cst_24 = arith.constant dense<0.000000e+00> : vector<16xf32>
    %30 = vector.multi_reduction <add>, %29, %cst_24 [1] : vector<16x128xf32> to vector<16xf32>
    %31 = vector.shape_cast %30 : vector<16xf32> to vector<16x1xf32>
    %cst_25 = arith.constant 1.562500e-02 : f32
    %32 = vector.broadcast %cst_25 : f32 to vector<16x1xf32>
    %33 = arith.mulf %31, %32 : vector<16x1xf32>
    %34 = arith.mulf %29, %26 : vector<16x128xf32>
    %cst_26 = arith.constant dense<0.000000e+00> : vector<16xf32>
    %35 = vector.multi_reduction <add>, %34, %cst_26 [1] : vector<16x128xf32> to vector<16xf32>
    %36 = vector.shape_cast %35 : vector<16xf32> to vector<16x1xf32>
    %cst_27 = arith.constant 1.562500e-02 : f32
    %37 = vector.broadcast %cst_27 : f32 to vector<16x1xf32>
    %38 = arith.mulf %36, %37 : vector<16x1xf32>
    %39 = arith.mulf %33, %33 : vector<16x1xf32>
    %40 = arith.subf %38, %39 : vector<16x1xf32>
    %41 = vector.broadcast %33 : vector<16x1xf32> to vector<16x128xf32>
    %42 = arith.subf %26, %41 : vector<16x128xf32>
    %43 = vector.broadcast %27 : vector<1x128xf32> to vector<16x128xf32>
    %44 = arith.mulf %42, %43 : vector<16x128xf32>
    %cst_28 = arith.constant 0.000000e+00 : f32
    %45 = vector.broadcast %cst_28 : f32 to vector<16x1xf32>
    %46 = arith.maximumf %40, %45 : vector<16x1xf32>
    %cst_29 = arith.constant 9.99999974E-6 : f32
    %47 = vector.broadcast %cst_29 : f32 to vector<16x1xf32>
    %48 = arith.addf %46, %47 : vector<16x1xf32>
    %49 = math.rsqrt %48 : vector<16x1xf32>
    %50 = vector.broadcast %49 : vector<16x1xf32> to vector<16x128xf32>
    %51 = arith.mulf %44, %50 : vector<16x128xf32>
    %cst_30 = arith.constant 0.000000e+00 : f32
    %52 = vector.broadcast %cst_30 : f32 to vector<16x128xf32>
    %53 = arith.maximumf %51, %52 : vector<16x128xf32>
    %c0_31 = arith.constant 0 : index
    %c0_32 = arith.constant 0 : index
    %c0_33 = arith.constant 0 : index
    %54 = vector.load %arg6[%c0_31, %c0_32, %c0_33] : memref<1x16x128xf32, #tpu.memory_space<vmem>>, vector<1x16x128xf32>
    %55 = vector.shape_cast %54 : vector<1x16x128xf32> to vector<16x128xf32>
    %56 = vector.shape_cast %53 : vector<16x128xf32> to vector<1x16x128xf32>
    tpu.vector_store %arg6[%c0_31, %c0_32, %c0_33], %56 {strides = array<i32>} : memref<1x16x128xf32, #tpu.memory_space<vmem>>, vector<1x16x128xf32>,
    return
  }
  func.func @transform_0(%arg0: i32, %arg1: i32) -> (i32, i32, i32) {
    %c0_i32 = arith.constant 0 : i32
    %c0_i32_0 = arith.constant 0 : i32
    %c0_i32_1 = arith.constant 0 : i32
    return %arg0, %c0_i32, %c0_i32_0 : i32, i32, i32
  }
  func.func @transform_1(%arg0: i32, %arg1: i32) -> (i32, i32, i32) {
    %c0_i32 = arith.constant 0 : i32
    %c0_i32_0 = arith.constant 0 : i32
    %c0_i32_1 = arith.constant 0 : i32
    return %arg0, %c0_i32, %c0_i32_0 : i32, i32, i32
  }
  func.func @transform_2(%arg0: i32, %arg1: i32) -> (i32, i32) {
    %c0_i32 = arith.constant 0 : i32
    %c0_i32_0 = arith.constant 0 : i32
    return %arg1, %c0_i32 : i32, i32
  }
  func.func @transform_3(%arg0: i32, %arg1: i32) -> (i32, i32) {
    %c0_i32 = arith.constant 0 : i32
    %c0_i32_0 = arith.constant 0 : i32
    %c0_i32_1 = arith.constant 0 : i32
    return %c0_i32, %c0_i32_0 : i32, i32
  }
  func.func @transform_4(%arg0: i32, %arg1: i32) -> (i32, i32, i32) {
    %c0_i32 = arith.constant 0 : i32
    %c0_i32_0 = arith.constant 0 : i32
    return %arg0, %arg1, %c0_i32 : i32, i32, i32
  }
}

module attributes {stable_mosaic.version = 11 : i64} {
  func.func @_pointwise_kernel(%arg0: i32, %arg1: memref<1x16x128xf32, #tpu.memory_space<vmem>>, %arg2: memref<32x16xf32, #tpu.memory_space<vmem>>, %arg3: memref<1x32x128xf32, #tpu.memory_space<vmem>>) attributes {dimension_semantics = [#tpu.dimension_semantics<parallel>], iteration_bounds = array<i64: 2>, scalar_prefetch = 0 : i64, scratch_operands = 0 : i64, tpu.core_type = #tpu.core_type<tc>, window_params = [{transform_indices = @transform_0, window_bounds = array<i64: 1, 16, 128>}, {pipeline_mode = #tpu.pipeline_mode<synchronous>, transform_indices = @transform_1, window_bounds = array<i64: 32, 16>}, {transform_indices = @transform_2, window_bounds = array<i64: 1, 32, 128>}]} {
    %c0 = arith.constant 0 : index
    %c0_0 = arith.constant 0 : index
    %0 = vector.load %arg2[%c0, %c0_0] : memref<32x16xf32, #tpu.memory_space<vmem>>, vector<32x16xf32>
    %c0_1 = arith.constant 0 : index
    %c0_2 = arith.constant 0 : index
    %c0_3 = arith.constant 0 : index
    %1 = vector.load %arg1[%c0_1, %c0_2, %c0_3] : memref<1x16x128xf32, #tpu.memory_space<vmem>>, vector<1x16x128xf32>
    %2 = vector.shape_cast %1 : vector<1x16x128xf32> to vector<16x128xf32>
    %cst = arith.constant dense<0.000000e+00> : vector<32x128xf32>
    %3 = tpu.matmul %0, %2, %cst {dimension_numbers = #tpu.dot_dimension_numbers<[1], [0], [0], [1], [0, 0, 1, 1], [], []>} : vector<32x16xf32>, vector<16x128xf32>, vector<32x128xf32> -> vector<32x128xf32>
    %c0_4 = arith.constant 0 : index
    %c0_5 = arith.constant 0 : index
    %c0_6 = arith.constant 0 : index
    %4 = vector.load %arg3[%c0_4, %c0_5, %c0_6] : memref<1x32x128xf32, #tpu.memory_space<vmem>>, vector<1x32x128xf32>
    %5 = vector.shape_cast %4 : vector<1x32x128xf32> to vector<32x128xf32>
    %6 = vector.shape_cast %3 : vector<32x128xf32> to vector<1x32x128xf32>
    tpu.vector_store %arg3[%c0_4, %c0_5, %c0_6], %6 {strides = array<i32>} : memref<1x32x128xf32, #tpu.memory_space<vmem>>, vector<1x32x128xf32>,
    return
  }
  func.func @transform_0(%arg0: i32) -> (i32, i32, i32) {
    %c0_i32 = arith.constant 0 : i32
    %c0_i32_0 = arith.constant 0 : i32
    %c0_i32_1 = arith.constant 0 : i32
    return %arg0, %c0_i32, %c0_i32_0 : i32, i32, i32
  }
  func.func @transform_1(%arg0: i32) -> (i32, i32) {
    %c0_i32 = arith.constant 0 : i32
    %c0_i32_0 = arith.constant 0 : i32
    %c0_i32_1 = arith.constant 0 : i32
    return %c0_i32, %c0_i32_0 : i32, i32
  }
  func.func @transform_2(%arg0: i32) -> (i32, i32, i32) {
    %c0_i32 = arith.constant 0 : i32
    %c0_i32_0 = arith.constant 0 : i32
    %c0_i32_1 = arith.constant 0 : i32
    return %arg0, %c0_i32, %c0_i32_0 : i32, i32, i32
  }
}

module attributes {stable_mosaic.version = 11 : i64} {
  func.func @_conv3x3_kernel(%arg0: i32, %arg1: i32, %arg2: memref<1x8x384xf32, #tpu.memory_space<vmem>>, %arg3: memref<1x8x384xf32, #tpu.memory_space<vmem>>, %arg4: memref<8x73xf32, #tpu.memory_space<vmem>>, %arg5: memref<1x384xf32, #tpu.memory_space<vmem>>, %arg6: memref<1x8x384xf32, #tpu.memory_space<vmem>>, %arg7: memref<73x384xf32, #tpu.memory_space<vmem>>) attributes {dimension_semantics = [#tpu.dimension_semantics<parallel>, #tpu.dimension_semantics<parallel>], iteration_bounds = array<i64: 2, 1>, scalar_prefetch = 0 : i64, scratch_operands = 1 : i64, tpu.core_type = #tpu.core_type<tc>, window_params = [{transform_indices = @transform_0, window_bounds = array<i64: 1, 8, 384>}, {transform_indices = @transform_1, window_bounds = array<i64: 1, 8, 384>}, {transform_indices = @transform_2, window_bounds = array<i64: 8, 73>}, {pipeline_mode = #tpu.pipeline_mode<synchronous>, transform_indices = @transform_3, window_bounds = array<i64: 1, 384>}, {transform_indices = @transform_4, window_bounds = array<i64: 1, 8, 384>}]} {
    %c0 = arith.constant 0 : index
    %c0_0 = arith.constant 0 : index
    %c0_1 = arith.constant 0 : index
    %0 = vector.load %arg2[%c0, %c0_0, %c0_1] : memref<1x8x384xf32, #tpu.memory_space<vmem>>, vector<1x8x384xf32>
    %1 = vector.shape_cast %0 : vector<1x8x384xf32> to vector<8x384xf32>
    %c0_2 = arith.constant 0 : index
    %c0_3 = arith.constant 0 : index
    %c0_4 = arith.constant 0 : index
    %2 = vector.load %arg3[%c0_2, %c0_3, %c0_4] : memref<1x8x384xf32, #tpu.memory_space<vmem>>, vector<1x8x384xf32>
    %3 = vector.shape_cast %2 : vector<1x8x384xf32> to vector<8x384xf32>
    %4 = arith.addf %1, %3 : vector<8x384xf32>
    %c19_i32 = arith.constant 19 : i32
    %5 = tpu.dynamic_rotate %4 by %c19_i32 dim 1 : vector<8x384xf32>, i32 -> vector<8x384xf32>
    %c0_5 = arith.constant 0 : index
    %c0_6 = arith.constant 0 : index
    %6 = vector.load %arg7[%c0_5, %c0_6] : memref<73x384xf32, #tpu.memory_space<vmem>>, vector<8x384xf32>
    tpu.vector_store %arg7[%c0_5, %c0_6], %5 {strides = array<i32>} : memref<73x384xf32, #tpu.memory_space<vmem>>, vector<8x384xf32>,
    %c18_i32 = arith.constant 18 : i32
    %7 = tpu.dynamic_rotate %4 by %c18_i32 dim 1 : vector<8x384xf32>, i32 -> vector<8x384xf32>
    %c8 = arith.constant 8 : index
    %c0_7 = arith.constant 0 : index
    %8 = vector.load %arg7[%c8, %c0_7] : memref<73x384xf32, #tpu.memory_space<vmem>>, vector<8x384xf32>
    tpu.vector_store %arg7[%c8, %c0_7], %7 {strides = array<i32>} : memref<73x384xf32, #tpu.memory_space<vmem>>, vector<8x384xf32>,
    %c17_i32 = arith.constant 17 : i32
    %9 = tpu.dynamic_rotate %4 by %c17_i32 dim 1 : vector<8x384xf32>, i32 -> vector<8x384xf32>
    %c16 = arith.constant 16 : index
    %c0_8 = arith.constant 0 : index
    %10 = vector.load %arg7[%c16, %c0_8] : memref<73x384xf32, #tpu.memory_space<vmem>>, vector<8x384xf32>
    tpu.vector_store %arg7[%c16, %c0_8], %9 {strides = array<i32>} : memref<73x384xf32, #tpu.memory_space<vmem>>, vector<8x384xf32>,
    %c1_i32 = arith.constant 1 : i32
    %11 = tpu.dynamic_rotate %4 by %c1_i32 dim 1 : vector<8x384xf32>, i32 -> vector<8x384xf32>
    %c24 = arith.constant 24 : index
    %c0_9 = arith.constant 0 : index
    %12 = vector.load %arg7[%c24, %c0_9] : memref<73x384xf32, #tpu.memory_space<vmem>>, vector<8x384xf32>
    tpu.vector_store %arg7[%c24, %c0_9], %11 {strides = array<i32>} : memref<73x384xf32, #tpu.memory_space<vmem>>, vector<8x384xf32>,
    %c32 = arith.constant 32 : index
    %c0_10 = arith.constant 0 : index
    %13 = vector.load %arg7[%c32, %c0_10] : memref<73x384xf32, #tpu.memory_space<vmem>>, vector<8x384xf32>
    tpu.vector_store %arg7[%c32, %c0_10], %4 {strides = array<i32>} : memref<73x384xf32, #tpu.memory_space<vmem>>, vector<8x384xf32>,
    %c383_i32 = arith.constant 383 : i32
    %14 = tpu.dynamic_rotate %4 by %c383_i32 dim 1 : vector<8x384xf32>, i32 -> vector<8x384xf32>
    %c40 = arith.constant 40 : index
    %c0_11 = arith.constant 0 : index
    %15 = vector.load %arg7[%c40, %c0_11] : memref<73x384xf32, #tpu.memory_space<vmem>>, vector<8x384xf32>
    tpu.vector_store %arg7[%c40, %c0_11], %14 {strides = array<i32>} : memref<73x384xf32, #tpu.memory_space<vmem>>, vector<8x384xf32>,
    %c367_i32 = arith.constant 367 : i32
    %16 = tpu.dynamic_rotate %4 by %c367_i32 dim 1 : vector<8x384xf32>, i32 -> vector<8x384xf32>
    %c48 = arith.constant 48 : index
    %c0_12 = arith.constant 0 : index
    %17 = vector.load %arg7[%c48, %c0_12] : memref<73x384xf32, #tpu.memory_space<vmem>>, vector<8x384xf32>
    tpu.vector_store %arg7[%c48, %c0_12], %16 {strides = array<i32>} : memref<73x384xf32, #tpu.memory_space<vmem>>, vector<8x384xf32>,
    %c366_i32 = arith.constant 366 : i32
    %18 = tpu.dynamic_rotate %4 by %c366_i32 dim 1 : vector<8x384xf32>, i32 -> vector<8x384xf32>
    %c56 = arith.constant 56 : index
    %c0_13 = arith.constant 0 : index
    %19 = vector.load %arg7[%c56, %c0_13] : memref<73x384xf32, #tpu.memory_space<vmem>>, vector<8x384xf32>
    tpu.vector_store %arg7[%c56, %c0_13], %18 {strides = array<i32>} : memref<73x384xf32, #tpu.memory_space<vmem>>, vector<8x384xf32>,
    %c365_i32 = arith.constant 365 : i32
    %20 = tpu.dynamic_rotate %4 by %c365_i32 dim 1 : vector<8x384xf32>, i32 -> vector<8x384xf32>
    %c64 = arith.constant 64 : index
    %c0_14 = arith.constant 0 : index
    %21 = vector.load %arg7[%c64, %c0_14] : memref<73x384xf32, #tpu.memory_space<vmem>>, vector<8x384xf32>
    tpu.vector_store %arg7[%c64, %c0_14], %20 {strides = array<i32>} : memref<73x384xf32, #tpu.memory_space<vmem>>, vector<8x384xf32>,
    %c0_15 = arith.constant 0 : index
    %c0_16 = arith.constant 0 : index
    %22 = vector.load %arg5[%c0_15, %c0_16] : memref<1x384xf32, #tpu.memory_space<vmem>>, vector<1x384xf32>
    %c72 = arith.constant 72 : index
    %c0_17 = arith.constant 0 : index
    %23 = vector.load %arg7[%c72, %c0_17] : memref<73x384xf32, #tpu.memory_space<vmem>>, vector<1x384xf32>
    tpu.vector_store %arg7[%c72, %c0_17], %22 {strides = array<i32>} : memref<73x384xf32, #tpu.memory_space<vmem>>, vector<1x384xf32>,
    %c0_18 = arith.constant 0 : index
    %c0_19 = arith.constant 0 : index
    %24 = vector.load %arg4[%c0_18, %c0_19] : memref<8x73xf32, #tpu.memory_space<vmem>>, vector<8x73xf32>
    %c0_20 = arith.constant 0 : index
    %c0_21 = arith.constant 0 : index
    %25 = vector.load %arg7[%c0_20, %c0_21] : memref<73x384xf32, #tpu.memory_space<vmem>>, vector<73x384xf32>
    %cst = arith.constant dense<0.000000e+00> : vector<8x384xf32>
    %26 = tpu.matmul %24, %25, %cst {dimension_numbers = #tpu.dot_dimension_numbers<[1], [0], [0], [1], [0, 0, 1, 1], [], []>} : vector<8x73xf32>, vector<73x384xf32>, vector<8x384xf32> -> vector<8x384xf32>
    %c0_22 = arith.constant 0 : index
    %c0_23 = arith.constant 0 : index
    %27 = vector.load %arg5[%c0_22, %c0_23] : memref<1x384xf32, #tpu.memory_space<vmem>>, vector<1x384xf32>
    %28 = vector.broadcast %27 : vector<1x384xf32> to vector<8x384xf32>
    %29 = arith.mulf %26, %28 : vector<8x384xf32>
    %cst_24 = arith.constant dense<0.000000e+00> : vector<8xf32>
    %30 = vector.multi_reduction <add>, %29, %cst_24 [1] : vector<8x384xf32> to vector<8xf32>
    %31 = vector.shape_cast %30 : vector<8xf32> to vector<8x1xf32>
    %cst_25 = arith.constant 3.906250e-03 : f32
    %32 = vector.broadcast %cst_25 : f32 to vector<8x1xf32>
    %33 = arith.mulf %31, %32 : vector<8x1xf32>
    %34 = arith.mulf %29, %26 : vector<8x384xf32>
    %cst_26 = arith.constant dense<0.000000e+00> : vector<8xf32>
    %35 = vector.multi_reduction <add>, %34, %cst_26 [1] : vector<8x384xf32> to vector<8xf32>
    %36 = vector.shape_cast %35 : vector<8xf32> to vector<8x1xf32>
    %cst_27 = arith.constant 3.906250e-03 : f32
    %37 = vector.broadcast %cst_27 : f32 to vector<8x1xf32>
    %38 = arith.mulf %36, %37 : vector<8x1xf32>
    %39 = arith.mulf %33, %33 : vector<8x1xf32>
    %40 = arith.subf %38, %39 : vector<8x1xf32>
    %41 = vector.broadcast %33 : vector<8x1xf32> to vector<8x384xf32>
    %42 = arith.subf %26, %41 : vector<8x384xf32>
    %43 = vector.broadcast %27 : vector<1x384xf32> to vector<8x384xf32>
    %44 = arith.mulf %42, %43 : vector<8x384xf32>
    %cst_28 = arith.constant 0.000000e+00 : f32
    %45 = vector.broadcast %cst_28 : f32 to vector<8x1xf32>
    %46 = arith.maximumf %40, %45 : vector<8x1xf32>
    %cst_29 = arith.constant 9.99999974E-6 : f32
    %47 = vector.broadcast %cst_29 : f32 to vector<8x1xf32>
    %48 = arith.addf %46, %47 : vector<8x1xf32>
    %49 = math.rsqrt %48 : vector<8x1xf32>
    %50 = vector.broadcast %49 : vector<8x1xf32> to vector<8x384xf32>
    %51 = arith.mulf %44, %50 : vector<8x384xf32>
    %cst_30 = arith.constant 0.000000e+00 : f32
    %52 = vector.broadcast %cst_30 : f32 to vector<8x384xf32>
    %53 = arith.maximumf %51, %52 : vector<8x384xf32>
    %c0_31 = arith.constant 0 : index
    %c0_32 = arith.constant 0 : index
    %c0_33 = arith.constant 0 : index
    %54 = vector.load %arg6[%c0_31, %c0_32, %c0_33] : memref<1x8x384xf32, #tpu.memory_space<vmem>>, vector<1x8x384xf32>
    %55 = vector.shape_cast %54 : vector<1x8x384xf32> to vector<8x384xf32>
    %56 = vector.shape_cast %53 : vector<8x384xf32> to vector<1x8x384xf32>
    tpu.vector_store %arg6[%c0_31, %c0_32, %c0_33], %56 {strides = array<i32>} : memref<1x8x384xf32, #tpu.memory_space<vmem>>, vector<1x8x384xf32>,
    return
  }
  func.func @transform_0(%arg0: i32, %arg1: i32) -> (i32, i32, i32) {
    %c0_i32 = arith.constant 0 : i32
    %c0_i32_0 = arith.constant 0 : i32
    %c0_i32_1 = arith.constant 0 : i32
    return %arg0, %c0_i32, %c0_i32_0 : i32, i32, i32
  }
  func.func @transform_1(%arg0: i32, %arg1: i32) -> (i32, i32, i32) {
    %c0_i32 = arith.constant 0 : i32
    %c0_i32_0 = arith.constant 0 : i32
    %c0_i32_1 = arith.constant 0 : i32
    return %arg0, %c0_i32, %c0_i32_0 : i32, i32, i32
  }
  func.func @transform_2(%arg0: i32, %arg1: i32) -> (i32, i32) {
    %c0_i32 = arith.constant 0 : i32
    %c0_i32_0 = arith.constant 0 : i32
    return %arg1, %c0_i32 : i32, i32
  }
  func.func @transform_3(%arg0: i32, %arg1: i32) -> (i32, i32) {
    %c0_i32 = arith.constant 0 : i32
    %c0_i32_0 = arith.constant 0 : i32
    %c0_i32_1 = arith.constant 0 : i32
    return %c0_i32, %c0_i32_0 : i32, i32
  }
  func.func @transform_4(%arg0: i32, %arg1: i32) -> (i32, i32, i32) {
    %c0_i32 = arith.constant 0 : i32
    %c0_i32_0 = arith.constant 0 : i32
    return %arg0, %arg1, %c0_i32 : i32, i32, i32
  }
}

module attributes {stable_mosaic.version = 11 : i64} {
  func.func @_conv3x3_kernel(%arg0: i32, %arg1: i32, %arg2: memref<1x8x384xf32, #tpu.memory_space<vmem>>, %arg3: memref<3x73xf32, #tpu.memory_space<vmem>>, %arg4: memref<1x384xf32, #tpu.memory_space<vmem>>, %arg5: memref<1x3x384xf32, #tpu.memory_space<vmem>>, %arg6: memref<73x384xf32, #tpu.memory_space<vmem>>) attributes {dimension_semantics = [#tpu.dimension_semantics<parallel>, #tpu.dimension_semantics<parallel>], iteration_bounds = array<i64: 2, 1>, scalar_prefetch = 0 : i64, scratch_operands = 1 : i64, tpu.core_type = #tpu.core_type<tc>, window_params = [{transform_indices = @transform_0, window_bounds = array<i64: 1, 8, 384>}, {transform_indices = @transform_1, window_bounds = array<i64: 3, 73>}, {pipeline_mode = #tpu.pipeline_mode<synchronous>, transform_indices = @transform_2, window_bounds = array<i64: 1, 384>}, {transform_indices = @transform_3, window_bounds = array<i64: 1, 3, 384>}]} {
    %c0 = arith.constant 0 : index
    %c0_0 = arith.constant 0 : index
    %c0_1 = arith.constant 0 : index
    %0 = vector.load %arg2[%c0, %c0_0, %c0_1] : memref<1x8x384xf32, #tpu.memory_space<vmem>>, vector<1x8x384xf32>
    %1 = vector.shape_cast %0 : vector<1x8x384xf32> to vector<8x384xf32>
    %c19_i32 = arith.constant 19 : i32
    %2 = tpu.dynamic_rotate %1 by %c19_i32 dim 1 : vector<8x384xf32>, i32 -> vector<8x384xf32>
    %c0_2 = arith.constant 0 : index
    %c0_3 = arith.constant 0 : index
    %3 = vector.load %arg6[%c0_2, %c0_3] : memref<73x384xf32, #tpu.memory_space<vmem>>, vector<8x384xf32>
    tpu.vector_store %arg6[%c0_2, %c0_3], %2 {strides = array<i32>} : memref<73x384xf32, #tpu.memory_space<vmem>>, vector<8x384xf32>,
    %c18_i32 = arith.constant 18 : i32
    %4 = tpu.dynamic_rotate %1 by %c18_i32 dim 1 : vector<8x384xf32>, i32 -> vector<8x384xf32>
    %c8 = arith.constant 8 : index
    %c0_4 = arith.constant 0 : index
    %5 = vector.load %arg6[%c8, %c0_4] : memref<73x384xf32, #tpu.memory_space<vmem>>, vector<8x384xf32>
    tpu.vector_store %arg6[%c8, %c0_4], %4 {strides = array<i32>} : memref<73x384xf32, #tpu.memory_space<vmem>>, vector<8x384xf32>,
    %c17_i32 = arith.constant 17 : i32
    %6 = tpu.dynamic_rotate %1 by %c17_i32 dim 1 : vector<8x384xf32>, i32 -> vector<8x384xf32>
    %c16 = arith.constant 16 : index
    %c0_5 = arith.constant 0 : index
    %7 = vector.load %arg6[%c16, %c0_5] : memref<73x384xf32, #tpu.memory_space<vmem>>, vector<8x384xf32>
    tpu.vector_store %arg6[%c16, %c0_5], %6 {strides = array<i32>} : memref<73x384xf32, #tpu.memory_space<vmem>>, vector<8x384xf32>,
    %c1_i32 = arith.constant 1 : i32
    %8 = tpu.dynamic_rotate %1 by %c1_i32 dim 1 : vector<8x384xf32>, i32 -> vector<8x384xf32>
    %c24 = arith.constant 24 : index
    %c0_6 = arith.constant 0 : index
    %9 = vector.load %arg6[%c24, %c0_6] : memref<73x384xf32, #tpu.memory_space<vmem>>, vector<8x384xf32>
    tpu.vector_store %arg6[%c24, %c0_6], %8 {strides = array<i32>} : memref<73x384xf32, #tpu.memory_space<vmem>>, vector<8x384xf32>,
    %c32 = arith.constant 32 : index
    %c0_7 = arith.constant 0 : index
    %10 = vector.load %arg6[%c32, %c0_7] : memref<73x384xf32, #tpu.memory_space<vmem>>, vector<8x384xf32>
    tpu.vector_store %arg6[%c32, %c0_7], %1 {strides = array<i32>} : memref<73x384xf32, #tpu.memory_space<vmem>>, vector<8x384xf32>,
    %c383_i32 = arith.constant 383 : i32
    %11 = tpu.dynamic_rotate %1 by %c383_i32 dim 1 : vector<8x384xf32>, i32 -> vector<8x384xf32>
    %c40 = arith.constant 40 : index
    %c0_8 = arith.constant 0 : index
    %12 = vector.load %arg6[%c40, %c0_8] : memref<73x384xf32, #tpu.memory_space<vmem>>, vector<8x384xf32>
    tpu.vector_store %arg6[%c40, %c0_8], %11 {strides = array<i32>} : memref<73x384xf32, #tpu.memory_space<vmem>>, vector<8x384xf32>,
    %c367_i32 = arith.constant 367 : i32
    %13 = tpu.dynamic_rotate %1 by %c367_i32 dim 1 : vector<8x384xf32>, i32 -> vector<8x384xf32>
    %c48 = arith.constant 48 : index
    %c0_9 = arith.constant 0 : index
    %14 = vector.load %arg6[%c48, %c0_9] : memref<73x384xf32, #tpu.memory_space<vmem>>, vector<8x384xf32>
    tpu.vector_store %arg6[%c48, %c0_9], %13 {strides = array<i32>} : memref<73x384xf32, #tpu.memory_space<vmem>>, vector<8x384xf32>,
    %c366_i32 = arith.constant 366 : i32
    %15 = tpu.dynamic_rotate %1 by %c366_i32 dim 1 : vector<8x384xf32>, i32 -> vector<8x384xf32>
    %c56 = arith.constant 56 : index
    %c0_10 = arith.constant 0 : index
    %16 = vector.load %arg6[%c56, %c0_10] : memref<73x384xf32, #tpu.memory_space<vmem>>, vector<8x384xf32>
    tpu.vector_store %arg6[%c56, %c0_10], %15 {strides = array<i32>} : memref<73x384xf32, #tpu.memory_space<vmem>>, vector<8x384xf32>,
    %c365_i32 = arith.constant 365 : i32
    %17 = tpu.dynamic_rotate %1 by %c365_i32 dim 1 : vector<8x384xf32>, i32 -> vector<8x384xf32>
    %c64 = arith.constant 64 : index
    %c0_11 = arith.constant 0 : index
    %18 = vector.load %arg6[%c64, %c0_11] : memref<73x384xf32, #tpu.memory_space<vmem>>, vector<8x384xf32>
    tpu.vector_store %arg6[%c64, %c0_11], %17 {strides = array<i32>} : memref<73x384xf32, #tpu.memory_space<vmem>>, vector<8x384xf32>,
    %c0_12 = arith.constant 0 : index
    %c0_13 = arith.constant 0 : index
    %19 = vector.load %arg4[%c0_12, %c0_13] : memref<1x384xf32, #tpu.memory_space<vmem>>, vector<1x384xf32>
    %c72 = arith.constant 72 : index
    %c0_14 = arith.constant 0 : index
    %20 = vector.load %arg6[%c72, %c0_14] : memref<73x384xf32, #tpu.memory_space<vmem>>, vector<1x384xf32>
    tpu.vector_store %arg6[%c72, %c0_14], %19 {strides = array<i32>} : memref<73x384xf32, #tpu.memory_space<vmem>>, vector<1x384xf32>,
    %c0_15 = arith.constant 0 : index
    %c0_16 = arith.constant 0 : index
    %21 = vector.load %arg3[%c0_15, %c0_16] : memref<3x73xf32, #tpu.memory_space<vmem>>, vector<3x73xf32>
    %c0_17 = arith.constant 0 : index
    %c0_18 = arith.constant 0 : index
    %22 = vector.load %arg6[%c0_17, %c0_18] : memref<73x384xf32, #tpu.memory_space<vmem>>, vector<73x384xf32>
    %cst = arith.constant dense<0.000000e+00> : vector<3x384xf32>
    %23 = tpu.matmul %21, %22, %cst {dimension_numbers = #tpu.dot_dimension_numbers<[1], [0], [0], [1], [0, 0, 1, 1], [], []>} : vector<3x73xf32>, vector<73x384xf32>, vector<3x384xf32> -> vector<3x384xf32>
    %24 = arith.negf %23 : vector<3x384xf32>
    %25 = math.exp %24 : vector<3x384xf32>
    %cst_19 = arith.constant 1.000000e+00 : f32
    %26 = vector.broadcast %cst_19 : f32 to vector<3x384xf32>
    %27 = arith.addf %26, %25 : vector<3x384xf32>
    %28 = arith.divf %26, %27 : vector<3x384xf32>
    %c0_20 = arith.constant 0 : index
    %c0_21 = arith.constant 0 : index
    %c0_22 = arith.constant 0 : index
    %29 = vector.load %arg5[%c0_20, %c0_21, %c0_22] : memref<1x3x384xf32, #tpu.memory_space<vmem>>, vector<1x3x384xf32>
    %30 = vector.shape_cast %29 : vector<1x3x384xf32> to vector<3x384xf32>
    %31 = vector.shape_cast %28 : vector<3x384xf32> to vector<1x3x384xf32>
    tpu.vector_store %arg5[%c0_20, %c0_21, %c0_22], %31 {strides = array<i32>} : memref<1x3x384xf32, #tpu.memory_space<vmem>>, vector<1x3x384xf32>,
    return
  }
  func.func @transform_0(%arg0: i32, %arg1: i32) -> (i32, i32, i32) {
    %c0_i32 = arith.constant 0 : i32
    %c0_i32_0 = arith.constant 0 : i32
    %c0_i32_1 = arith.constant 0 : i32
    return %arg0, %c0_i32, %c0_i32_0 : i32, i32, i32
  }
  func.func @transform_1(%arg0: i32, %arg1: i32) -> (i32, i32) {
    %c0_i32 = arith.constant 0 : i32
    %c0_i32_0 = arith.constant 0 : i32
    return %arg1, %c0_i32 : i32, i32
  }
  func.func @transform_2(%arg0: i32, %arg1: i32) -> (i32, i32) {
    %c0_i32 = arith.constant 0 : i32
    %c0_i32_0 = arith.constant 0 : i32
    %c0_i32_1 = arith.constant 0 : i32
    return %c0_i32, %c0_i32_0 : i32, i32
  }
  func.func @transform_3(%arg0: i32, %arg1: i32) -> (i32, i32, i32) {
    %c0_i32 = arith.constant 0 : i32
    %c0_i32_0 = arith.constant 0 : i32
    return %arg0, %arg1, %c0_i32 : i32, i32, i32
  }
}

</mosaic_0001>

<llo_original>
// kernel: unet_forward.11
$region0: #{unet_forward.11}
  #allocation0 [shape = 'u32[]', space=smem, size = 0x4, offset = 0x4, fixed_abs, tag = 'smem constant byte address 0x4 - core index']
  #allocation1 [shape = 'u32[144,128]{1,0:T(1,128)}', space=vmem, size = 0x12000, scoped, tag = 'internal scratch']
  #allocation2 [shape = 'f32[28,384]{1,0:T(8,128)}', space=vmem, size = 0xc000, scoped, tag = 'scratch operand']
  %s0 = inlined_call_operand.vmem [shape: f32[2,3,384], index: 0, kind: input, shape index: {}]
  %s1 = inlined_call_operand.vmem [shape: f32[8,28], index: 1, kind: input, shape index: {}]
  %s2 = inlined_call_operand.vmem [shape: f32[1,384], index: 2, kind: input, shape index: {}]
  %s3 = inlined_call_operand.vmem [shape: f32[2,8,384], index: 3, kind: output, shape index: {}]
  %s4 = sld [smem:[#allocation0]]
  $region45: #{unet_forward.11} parent=0
    _
  %s6 = ssub.s32 1, %s4
  %s7 = scalar_select 0, %s6, %s4
  loop: start=0, step=1, limit=4
  $region2: #{unet_forward.11} parent=0 // loop_pre_header
    _
  $region3: #{unet_forward.11} parent=0 // loop_header
    %s9 = sphi 0, %s13
    %p10 = scmp.ge.s32.totalorder %s9, 4
    %s16 = sphi 0, %s28
    %s17 = sphi 0, %s24
    %s18 = sphi 0, %s16
    %s19 = sphi 0, %s17
    %s20 = sphi 0, %s18
    %s21 = sphi 0, %s19
    %s31 = sphi 0, %s33
    %s34 = sphi 0, %s31
    %s35 = sphi 0, %s34
    %s51 = sphi 0, %s35
    %s57 = sphi 0, %s59
    %s60 = sphi 0, %s57
    %s61 = sphi 0, %s60
    %s77 = sphi 0, %s61
    %s81 = sphi 0, %s81
    %s83 = sphi 0, %s81
    %s84 = sphi 0, %s83
    %s98 = sphi 0, %s84
    %s106 = sphi 0, %s108
    %s109 = sphi 0, %s106
    %s110 = sphi 0, %s109
    %s126 = sphi 0, %s110
  $region4: #{unet_forward.11} parent=0 // loop_header_branch
    %12 = sbr.rel (%p10) target = $region8
  $region5: #{unet_forward.11} parent=0 // loop_body
    %s14 = ssub.s32 %s9, 1
    %s15 = ssub.s32 %s9, 2
    %s22 = sadd.s32 1, %s17
    %p23 = scmp.ge.s32.totalorder %s22, 1
    %s24 = scalar_select %p23, 0, %s22
    %s25 = sadd.s32 1, %s16
    %s26 = scalar_select %p23, %s25, %s16
    %p27 = scmp.ge.s32.totalorder %s26, 2
    %s28 = scalar_select %p27, 0, %s26
    %s29 = ssub.s32 %s16, %s28
    %p30 = scmp.eq.s32.totalorder %s29, 0
    %s32 = sadd.s32 %s31, 1
    %s33 = scalar_select %p30, %s31, %s32
    %p36 = pneg %p30
    %p37 = scmp.eq.s32.totalorder %s9, 1
    %p38 = por %p36, %p37
    %p39 = scmp.ne.s32.totalorder %s31, %s34
    %p40 = scmp.eq.s32.totalorder %s9, 0
    %p41 = por %p39, %p40
    %p42 = scmp.ne.s32.totalorder %s31, %s34
    %p43 = scmp.eq.s32.totalorder %s14, 1
    %p44 = por %p42, %p43
    %p45 = scmp.ne.s32.totalorder %s34, %s35
    %p46 = scmp.eq.s32.totalorder %s14, 0
    %p47 = por %p45, %p46
    %p48 = scmp.ne.s32.totalorder %s34, %s35
    %p49 = scmp.eq.s32.totalorder %s15, 1
    %p50 = por %p48, %p49
    %p52 = scmp.ne.s32.totalorder %s35, %s51
    %p53 = scmp.eq.s32.totalorder %s15, 0
    %p54 = por %p52, %p53
    %s55 = ssub.s32 %s17, %s24
    %p56 = scmp.eq.s32.totalorder %s55, 0
    %s58 = sadd.s32 %s57, 1
    %s59 = scalar_select %p56, %s57, %s58
    %p62 = pneg %p56
    %p63 = scmp.eq.s32.totalorder %s9, 1
    %p64 = por %p62, %p63
    %p65 = scmp.ne.s32.totalorder %s57, %s60
    %p66 = scmp.eq.s32.totalorder %s9, 0
    %p67 = por %p65, %p66
    %p68 = scmp.ne.s32.totalorder %s57, %s60
    %p69 = scmp.eq.s32.totalorder %s14, 1
    %p70 = por %p68, %p69
    %p71 = scmp.ne.s32.totalorder %s60, %s61
    %p72 = scmp.eq.s32.totalorder %s14, 0
    %p73 = por %p71, %p72
    %p74 = scmp.ne.s32.totalorder %s60, %s61
    %p75 = scmp.eq.s32.totalorder %s15, 1
    %p76 = por %p74, %p75
    %p78 = scmp.ne.s32.totalorder %s61, %s77
    %p79 = scmp.eq.s32.totalorder %s15, 0
    %p80 = por %p78, %p79
    %s82 = sadd.s32 %s81, 1
    %p85 = scmp.eq.s32.totalorder %s9, 1
    %p86 = scmp.ne.s32.totalorder %s81, %s83
    %p87 = scmp.eq.s32.totalorder %s9, 0
    %p88 = por %p86, %p87
    %p89 = scmp.ne.s32.totalorder %s81, %s83
    %p90 = scmp.eq.s32.totalorder %s14, 1
    %p91 = por %p89, %p90
    %p92 = scmp.ne.s32.totalorder %s83, %s84
    %p93 = scmp.eq.s32.totalorder %s14, 0
    %p94 = por %p92, %p93
    %p95 = scmp.ne.s32.totalorder %s83, %s84
    %p96 = scmp.eq.s32.totalorder %s15, 1
    %p97 = por %p95, %p96
    %p99 = scmp.ne.s32.totalorder %s84, %s98
    %p100 = scmp.eq.s32.totalorder %s15, 0
    %p101 = por %p99, %p100
    %s102 = ssub.s32 %s16, %s28
    %s103 = ssub.s32 %s17, %s24
    %s104 = sor.u32 %s102, %s103
    %p105 = scmp.eq.s32.totalorder %s104, 0
    %s107 = sadd.s32 %s106, 1
    %s108 = scalar_select %p105, %s106, %s107
    %p111 = pneg %p105
    %p112 = scmp.eq.s32.totalorder %s9, 1
    %p113 = por %p111, %p112
    %p114 = scmp.ne.s32.totalorder %s106, %s109
    %p115 = scmp.eq.s32.totalorder %s9, 0
    %p116 = por %p114, %p115
    %p117 = scmp.ne.s32.totalorder %s106, %s109
    %p118 = scmp.eq.s32.totalorder %s14, 1
    %p119 = por %p117, %p118
    %p120 = scmp.ne.s32.totalorder %s109, %s110
    %p121 = scmp.eq.s32.totalorder %s14, 0
    %p122 = por %p120, %p121
    %p123 = scmp.ne.s32.totalorder %s109, %s110
    %p124 = scmp.eq.s32.totalorder %s15, 1
    %p125 = por %p123, %p124
    %p127 = scmp.ne.s32.totalorder %s110, %s126
    %p128 = scmp.eq.s32.totalorder %s15, 0
    %p129 = por %p127, %p128
    %p130 = scmp.le.s32.totalorder 1, %s9
    %p131 = scmp.lt.s32.totalorder %s9, 3
    %p132 = pnand %p130, %p131
    %p133 = pneg %p132
    // Predicated region
    $region9: #{unet_forward.11} parent=5 // pred_check
      _
    $region10: #{unet_forward.11} parent=5 // pred_check_branch
      %135 = sbr.rel (%p132) target = $region12
    $region11: #{unet_forward.11} parent=5 // pred_region
      %s136 = ssub.s32 %s9, 1
      // Predicated region
      $region13: #{unet_forward.11} parent=11 // pred_check
        %p137 = pneg %p73
      $region14: #{unet_forward.11} parent=11 // pred_check_branch
        %139 = sbr.rel (%p137) target = $region16
      $region15: #{unet_forward.11} parent=11 // pred_region
        %p140 = scmp.lt.s32.totalorder %s19, 0
        %s141 = scalar_select %p140, %s19, 0
        %s142 = smul.addr %s141, 8
        %s143 = scalar_lea.vmem %s1, %s142
      $region16: #{unet_forward.11} parent=11 // pred_fallthru
        _
      // Predicated region
      $region17: #{unet_forward.11} parent=11 // pred_check
        %p144 = pneg %p94
      $region18: #{unet_forward.11} parent=11 // pred_check_branch
        %146 = sbr.rel (%p144) target = $region20
      $region19: #{unet_forward.11} parent=11 // pred_region
        _
      $region20: #{unet_forward.11} parent=11 // pred_fallthru
        _
    $region12: #{unet_forward.11} parent=5 // pred_fallthru
      _
    %p147 = scmp.lt.s32.totalorder %s9, 2
    // Predicated region
    $region21: #{unet_forward.11} parent=5 // pred_check
      %p148 = pneg %p147
    $region22: #{unet_forward.11} parent=5 // pred_check_branch
      %150 = sbr.rel (%p148) target = $region24
    $region23: #{unet_forward.11} parent=5 // pred_region
      // Predicated region
      $region25: #{unet_forward.11} parent=23 // pred_check
        %p151 = pneg %p41
      $region26: #{unet_forward.11} parent=23 // pred_check_branch
        %153 = sbr.rel (%p151) target = $region28
      $region27: #{unet_forward.11} parent=23 // pred_region
        %p154 = scmp.lt.s32.totalorder %s16, 1
        %s155 = scalar_select %p154, %s16, 1
        %s156 = smul.addr %s155, 3
        %s157 = smul.addr %s156, 4
        %s158 = scalar_lea.vmem %s0, %s157
      $region28: #{unet_forward.11} parent=23 // pred_fallthru
        _
    $region24: #{unet_forward.11} parent=5 // pred_fallthru
      _
    %p159 = scmp.le.s32.totalorder 1, %s9
    %p160 = scmp.lt.s32.totalorder %s9, 3
    %p161 = pnand %p159, %p160
    %p162 = pneg %p161
    // Predicated region
    $region29: #{unet_forward.11} parent=5 // pred_check
      _
    $region30: #{unet_forward.11} parent=5 // pred_check_branch
      %164 = sbr.rel (%p161) target = $region32
    $region31: #{unet_forward.11} parent=5 // pred_region
      %s165 = ssub.s32 %s9, 1
      %p166 = scmp.lt.s32.totalorder %s18, 1
      %s167 = scalar_select %p166, %s18, 1
      %s168 = smul.addr %s167, 3
      %s169 = smul.addr %s168, 4
      %s170 = scalar_lea.vmem %s0, %s169
      %p171 = pneg %p47
      %p172 = pneg %p44
      %p173 = scmp.lt.s32.totalorder %s19, 0
      %s174 = scalar_select %p173, %s19, 0
      %s175 = smul.addr %s174, 8
      %s176 = scalar_lea.vmem %s1, %s175
      %p177 = pneg %p73
      %p178 = pneg %p70
      %p179 = pneg %p94
      %p180 = pneg %p91
      %p181 = pneg %p122
      %p182 = pneg %p119
      %p183 = scmp.lt.s32.totalorder %s18, 1
      %s184 = scalar_select %p183, %s18, 1
      %p185 = scmp.lt.s32.totalorder %s19, 0
      %s186 = scalar_select %p185, %s19, 0
      %s187 = smul.addr %s186, 3
      %s188 = smul.addr %s184, 3
      %s189 = sadd.s32 %s187, %s188
      %s190 = smul.addr %s189, 8
      %s191 = scalar_lea.vmem %s3, %s190
      %p192 = scmp.lt.s32.totalorder %s18, 1
      %s193 = scalar_select %p192, %s18, 1
      %s194 = smul.addr %s193, 3
      %s195 = smul.addr %s194, 4
      %s196 = scalar_lea.vmem %s0, %s195
      %p197 = scmp.lt.s32.totalorder %s19, 0
      %s198 = scalar_select %p197, %s19, 0
      %s199 = smul.addr %s198, 8
      %s200 = scalar_lea.vmem %s1, %s199
      %p201 = scmp.lt.s32.totalorder %s18, 1
      %s202 = scalar_select %p201, %s18, 1
      %p203 = scmp.lt.s32.totalorder %s19, 0
      %s204 = scalar_select %p203, %s19, 0
      %s205 = smul.addr %s204, 3
      %s206 = smul.addr %s202, 3
      %s207 = sadd.s32 %s205, %s206
      %s208 = smul.addr %s207, 8
      %s209 = scalar_lea.vmem %s3, %s208
      %v210 = vld [vmem:[%s196] sm:$0x77]
      %v211 = vld [vmem:[%s196 + $0x8] sm:$0x7]
      %v214 = vcombine.high %v210, %v210
      %216 = vrot.lane.b32.xlu0 %v210, 19
      %v217 = vpop.permute.xlu0 %216
      %218 = vrot.lane.b32.xlu0 %v214, 19
      %v219 = vpop.permute.xlu0 %218
      %220 = vrot.lane.b32.xlu0 %v211, 19
      %v221 = vpop.permute.xlu0 %220
      %v222 = vlaneseq
      %v223 = vand.u32 %v222, 127
      %vm224 = vcmp.lt.s32.totalorder %v223, 19
      %v225 = vsel %vm224, %v219, %v221
      %v226 = vsel %vm224, %v217, %v219
      %v227 = vsel %vm224, %v221, %v217
      %228 = vst [vmem:[#allocation2] sm:$0x7] %v227
      %229 = vst [vmem:[#allocation2 + $0x8] sm:$0x7] %v226
      %230 = vst [vmem:[#allocation2 + $0x10] sm:$0x7] %v225
      %231 = vrot.lane.b32.xlu0 %v210, 18
      %v232 = vpop.permute.xlu0 %231
      %233 = vrot.lane.b32.xlu0 %v214, 18
      %v234 = vpop.permute.xlu0 %233
      %235 = vrot.lane.b32.xlu0 %v211, 18
      %v236 = vpop.permute.xlu0 %235
      %vm237 = vcmp.lt.s32.totalorder %v223, 18
      %v238 = vsel %vm237, %v234, %v236
      %v239 = vsel %vm237, %v232, %v234
      %v240 = vsel %vm237, %v236, %v232
      %v244 = vrot.slane %v240, 5
      %v245 = vrot.slane %v239, 5
      %v246 = vrot.slane %v238, 5
      %250 = vst [vmem:[#allocation2] sm:$0x38] %v244
      %251 = vst [vmem:[#allocation2 + $0x8] sm:$0x38] %v245
      %252 = vst [vmem:[#allocation2 + $0x10] sm:$0x38] %v246
      %253 = vrot.lane.b32.xlu0 %v210, 17
      %v254 = vpop.permute.xlu0 %253
      %255 = vrot.lane.b32.xlu0 %v214, 17
      %v256 = vpop.permute.xlu0 %255
      %257 = vrot.lane.b32.xlu0 %v211, 17
      %v258 = vpop.permute.xlu0 %257
      %vm259 = vcmp.lt.s32.totalorder %v223, 17
      %v260 = vsel %vm259, %v256, %v258
      %v261 = vsel %vm259, %v254, %v256
      %v262 = vsel %vm259, %v258, %v254
      %v266 = vrot.slane %v262, 2
      %v267 = vrot.slane %v261, 2
      %v268 = vrot.slane %v260, 2
      %272 = vst [vmem:[#allocation2] sm:$0xc0] %v266
      %273 = vst [vmem:[#allocation2 + $0x8] sm:$0xc0] %v267
      %274 = vst [vmem:[#allocation2 + $0x10] sm:$0xc0] %v268
      %275 = vst [vmem:[#allocation2 + $0x18] sm:$0x1] %v266
      %276 = vst [vmem:[#allocation2 + $0x20] sm:$0x1] %v267
      %277 = vst [vmem:[#allocation2 + $0x28] sm:$0x1] %v268
      %278 = vrot.lane.b32.xlu0 %v210, 1
      %v279 = vpop.permute.xlu0 %278
      %280 = vrot.lane.b32.xlu0 %v214, 1
      %v281 = vpop.permute.xlu0 %280
      %282 = vrot.lane.b32.xlu0 %v211, 1
      %v283 = vpop.permute.xlu0 %282
      %vm284 = vcmp.lt.s32.totalorder %v223, 1
      %v285 = vsel %vm284, %v281, %v283
      %v286 = vsel %vm284, %v279, %v281
      %v287 = vsel %vm284, %v283, %v279
      %v291 = vrot.slane %v287, 7
      %v292 = vrot.slane %v286, 7
      %v293 = vrot.slane %v285, 7
      %297 = vst [vmem:[#allocation2 + $0x18] sm:$0xe] %v291
      %298 = vst [vmem:[#allocation2 + $0x20] sm:$0xe] %v292
      %299 = vst [vmem:[#allocation2 + $0x28] sm:$0xe] %v293
      %v300 = vcombine.low %v210, %v210
      %v301 = vcombine.low %v211, %v211
      %304 = vst [vmem:[#allocation2 + $0x18] sm:$0x70] %v300
      %305 = vst [vmem:[#allocation2 + $0x20] sm:$0x70] %v210
      %306 = vst [vmem:[#allocation2 + $0x28] sm:$0x70] %v301
      %307 = vrot.lane.b32.xlu0 %v210, 127
      %v308 = vpop.permute.xlu0 %307
      %309 = vrot.lane.b32.xlu0 %v214, 127
      %v310 = vpop.permute.xlu0 %309
      %311 = vrot.lane.b32.xlu0 %v211, 127
      %v312 = vpop.permute.xlu0 %311
      %vm313 = vcmp.lt.s32.totalorder %v223, 127
      %v314 = vsel %vm313, %v310, %v312
      %v315 = vsel %vm313, %v308, %v310
      %v316 = vsel %vm313, %v312, %v308
      %v320 = vrot.slane %v315, 1
      %v321 = vrot.slane %v314, 1
      %v322 = vrot.slane %v316, 1
      %326 = vst [vmem:[#allocation2 + $0x18] sm:$0x80] %v320
      %327 = vst [vmem:[#allocation2 + $0x20] sm:$0x80] %v321
      %328 = vst [vmem:[#allocation2 + $0x28] sm:$0x80] %v322
      %329 = vst [vmem:[#allocation2 + $0x30] sm:$0x3] %v320
      %330 = vst [vmem:[#allocation2 + $0x38] sm:$0x3] %v321
      %331 = vst [vmem:[#allocation2 + $0x40] sm:$0x3] %v322
      %332 = vrot.lane.b32.xlu0 %v210, 111
      %v333 = vpop.permute.xlu0 %332
      %334 = vrot.lane.b32.xlu0 %v214, 111
      %v335 = vpop.permute.xlu0 %334
      %336 = vrot.lane.b32.xlu0 %v211, 111
      %v337 = vpop.permute.xlu0 %336
      %vm338 = vcmp.lt.s32.totalorder %v223, 111
      %v339 = vsel %vm338, %v335, %v337
      %v340 = vsel %vm338, %v333, %v335
      %v341 = vsel %vm338, %v337, %v333
      %v345 = vrot.slane %v340, 6
      %v346 = vrot.slane %v339, 6
      %v347 = vrot.slane %v341, 6
      %351 = vst [vmem:[#allocation2 + $0x30] sm:$0x1c] %v345
      %352 = vst [vmem:[#allocation2 + $0x38] sm:$0x1c] %v346
      %353 = vst [vmem:[#allocation2 + $0x40] sm:$0x1c] %v347
      %354 = vrot.lane.b32.xlu0 %v210, 110
      %v355 = vpop.permute.xlu0 %354
      %356 = vrot.lane.b32.xlu0 %v214, 110
      %v357 = vpop.permute.xlu0 %356
      %358 = vrot.lane.b32.xlu0 %v211, 110
      %v359 = vpop.permute.xlu0 %358
      %vm360 = vcmp.lt.s32.totalorder %v223, 110
      %v361 = vsel %vm360, %v357, %v359
      %v362 = vsel %vm360, %v355, %v357
      %v363 = vsel %vm360, %v359, %v355
      %v367 = vrot.slane %v362, 3
      %v368 = vrot.slane %v361, 3
      %v369 = vrot.slane %v363, 3
      %373 = vst [vmem:[#allocation2 + $0x30] sm:$0xe0] %v367
      %374 = vst [vmem:[#allocation2 + $0x38] sm:$0xe0] %v368
      %375 = vst [vmem:[#allocation2 + $0x40] sm:$0xe0] %v369
      %376 = vrot.lane.b32.xlu0 %v210, 109
      %v377 = vpop.permute.xlu0 %376
      %378 = vrot.lane.b32.xlu0 %v214, 109
      %v379 = vpop.permute.xlu0 %378
      %380 = vrot.lane.b32.xlu0 %v211, 109
      %v381 = vpop.permute.xlu0 %380
      %vm382 = vcmp.lt.s32.totalorder %v223, 109
      %v383 = vsel %vm382, %v379, %v381
      %v384 = vsel %vm382, %v377, %v379
      %v385 = vsel %vm382, %v381, %v377
      %386 = vst [vmem:[#allocation2 + $0x48] sm:$0x7] %v384
      %387 = vst [vmem:[#allocation2 + $0x50] sm:$0x7] %v383
      %388 = vst [vmem:[#allocation2 + $0x58] sm:$0x7] %v385
      %v389 = vld [vmem:[%s2] sm:$0x7]
      %v390 = vlaneseq
      %vm391 = vcmp.ge.s32.totalorder %v390, 0
      %vm392 = vcmp.lt.s32.totalorder %v390, 384
      %vm393 = vmand %vm391, %vm392
      %s394 = scalar_lea.vmem [#allocation2], 75
      %395 = vst.msk [vmem:[%s394] ss:$8 sm:$0x7] %vm393, %v389
      %396 = vst.msk [vmem:[%s394] ss:$8 sm:$0x0] %vm393, %v389
      %v397 = vld [vmem:[%s200] sm:$0xff]
      %v398 = vld [vmem:[#allocation2] sm:$0xff]
      %v399 = vld [vmem:[#allocation2 + $0x8] sm:$0xff]
      %v400 = vld [vmem:[#allocation2 + $0x10] sm:$0xff]
      %v401 = vld [vmem:[#allocation2 + $0x18] sm:$0xff]
      %v402 = vld [vmem:[#allocation2 + $0x20] sm:$0xff]
      %v403 = vld [vmem:[#allocation2 + $0x28] sm:$0xff]
      %v404 = vld [vmem:[#allocation2 + $0x30] sm:$0xff]
      %v405 = vld [vmem:[#allocation2 + $0x38] sm:$0xff]
      %v406 = vld [vmem:[#allocation2 + $0x40] sm:$0xff]
      %v407 = vld [vmem:[#allocation2 + $0x48] sm:$0xf]
      %v408 = vld [vmem:[#allocation2 + $0x50] sm:$0xf]
      %v409 = vld [vmem:[#allocation2 + $0x58] sm:$0xf]
      %vm410 = vcmask 228352
      %v412 = vsel %vm410, %v397, 0
      %vm414 = vcmask 1043456
      %v416 = vsel %vm414, %v407, 0
      %v419 = vsel %vm414, %v408, 0
      %v422 = vsel %vm414, %v409, 0
      %424 = vmatprep.subr.mxu0 %v399
      %425 = vmatpush1.msra.mxu0 %v398
      %426 = vmatprep.subr.mxu0 %v402
      %427 = vmatpush1.msra.mxu0 %v401
      %428 = vmatprep.subr.mxu0 %v405
      %429 = vmatpush1.msra.mxu0 %v404
      %430 = vmatprep.subr.mxu0 %v419
      %431 = vmatpush1.msra.mxu0 %v416
      %432 = vmatprep.subr.mxu0 0.0
      %433 = vmatpush1.msra.mxu0 0.0
      %434 = vmatprep.subr.mxu0 0.0
      %435 = vmatpush1.msra.mxu0 0.0
      %436 = vmatprep.subr.mxu0 0.0
      %437 = vmatpush1.msra.mxu0 0.0
      %438 = vmatprep.subr.mxu0 0.0
      %439 = vmatpush1.msra.mxu0 0.0
      %440 = vmatprep.subr.mxu0 0.0
      %441 = vmatpush1.msra.mxu0 0.0
      %442 = vmatprep.subr.mxu0 0.0
      %443 = vmatpush1.msra.mxu0 0.0
      %444 = vmatprep.subr.mxu0 0.0
      %445 = vmatpush1.msra.mxu0 0.0
      %446 = vmatprep.subr.mxu0 0.0
      %447 = vmatpush1.msra.mxu0 0.0
      %448 = vmatprep.subr.mxu0 0.0
      %449 = vmatpush1.msra.mxu0 0.0
      %450 = vmatprep.subr.mxu0 0.0
      %451 = vmatpush1.msra.mxu0 0.0
      %452 = vmatprep.subr.mxu0 0.0
      %453 = vmatpush1.msra.mxu0 0.0
      %454 = vmatprep.subr.mxu0 0.0
      %455 = vmatpush1.msra.mxu0 0.0
      %456 = vmatprep.subr.mxu0 0.0
      %457 = vmatpush1.msra.mxu0 0.0
      %458 = vmatprep.subr.mxu0 0.0
      %459 = vmatpush1.msra.mxu0 0.0
      %460 = vmatprep.subr.mxu0 0.0
      %461 = vmatpush1.msra.mxu0 0.0
      %462 = vmatprep.subr.mxu0 0.0
      %463 = vmatpush1.msra.mxu0 0.0
      %464 = vmatprep.subr.mxu0 0.0
      %465 = vmatpush1.msra.mxu0 0.0
      %466 = vmatprep.subr.mxu0 0.0
      %467 = vmatpush1.msra.mxu0 0.0
      %468 = vmatprep.subr.mxu0 0.0
      %469 = vmatpush1.msra.mxu0 0.0
      %470 = vmatprep.subr.mxu0 0.0
      %471 = vmatpush1.msra.mxu0 0.0
      %472 = vmatprep.subr.mxu0 0.0
      %473 = vmatpush1.msra.mxu0 0.0
      %474 = vmatprep.subr.mxu0 0.0
      %475 = vmatpush1.msra.mxu0 0.0
      %476 = vmatprep.subr.mxu0 0.0
      %477 = vmatpush1.msra.mxu0 0.0
      %478 = vmatprep.subr.mxu0 0.0
      %479 = vmatpush1.msra.mxu0 0.0
      %480 = vmatprep.subr.mxu0 0.0
      %481 = vmatpush1.msra.mxu0 0.0
      %482 = vmatprep.subr.mxu0 0.0
      %483 = vmatpush1.msra.mxu0 0.0
      %484 = vmatprep.subr.mxu0 0.0
      %485 = vmatpush1.msra.mxu0 0.0
      %486 = vmatprep.subr.mxu0 0.0
      %487 = vmatpush1.msra.mxu0 0.0
      %488 = vmatprep.mubr.f32.mxu0 0.0
      %489 = vmatmul.mubr.f32.gmra.mrb[0].mxu0 %v412
      %v490 = vpop.f32.mrb[0].mxu0
      %v491 = vadd.f32 0.0, %v490
      %v492 = vpop.f32.mrb[0].mxu0
      %v493 = vadd.f32 0.0, %v492
      %494 = vdwg.mxu0
      %495 = vmatprep.subr.mxu0 0.0
      %496 = vmatpush1.msra.mxu0 %v400
      %497 = vmatprep.subr.mxu0 0.0
      %498 = vmatpush1.msra.mxu0 %v403
      %499 = vmatprep.subr.mxu0 0.0
      %500 = vmatpush1.msra.mxu0 %v406
      %501 = vmatprep.subr.mxu0 0.0
      %502 = vmatpush1.msra.mxu0 %v422
      %503 = vmatprep.subr.mxu0 0.0
      %504 = vmatpush1.msra.mxu0 0.0
      %505 = vmatprep.subr.mxu0 0.0
      %506 = vmatpush1.msra.mxu0 0.0
      %507 = vmatprep.subr.mxu0 0.0
      %508 = vmatpush1.msra.mxu0 0.0
      %509 = vmatprep.subr.mxu0 0.0
      %510 = vmatpush1.msra.mxu0 0.0
      %511 = vmatprep.subr.mxu0 0.0
      %512 = vmatpush1.msra.mxu0 0.0
      %513 = vmatprep.subr.mxu0 0.0
      %514 = vmatpush1.msra.mxu0 0.0
      %515 = vmatprep.subr.mxu0 0.0
      %516 = vmatpush1.msra.mxu0 0.0
      %517 = vmatprep.subr.mxu0 0.0
      %518 = vmatpush1.msra.mxu0 0.0
      %519 = vmatprep.subr.mxu0 0.0
      %520 = vmatpush1.msra.mxu0 0.0
      %521 = vmatprep.subr.mxu0 0.0
      %522 = vmatpush1.msra.mxu0 0.0
      %523 = vmatprep.subr.mxu0 0.0
      %524 = vmatpush1.msra.mxu0 0.0
      %525 = vmatprep.subr.mxu0 0.0
      %526 = vmatpush1.msra.mxu0 0.0
      %527 = vmatprep.subr.mxu0 0.0
      %528 = vmatpush1.msra.mxu0 0.0
      %529 = vmatprep.subr.mxu0 0.0
      %530 = vmatpush1.msra.mxu0 0.0
      %531 = vmatprep.subr.mxu0 0.0
      %532 = vmatpush1.msra.mxu0 0.0
      %533 = vmatprep.subr.mxu0 0.0
      %534 = vmatpush1.msra.mxu0 0.0
      %535 = vmatprep.subr.mxu0 0.0
      %536 = vmatpush1.msra.mxu0 0.0
      %537 = vmatprep.subr.mxu0 0.0
      %538 = vmatpush1.msra.mxu0 0.0
      %539 = vmatprep.subr.mxu0 0.0
      %540 = vmatpush1.msra.mxu0 0.0
      %541 = vmatprep.subr.mxu0 0.0
      %542 = vmatpush1.msra.mxu0 0.0
      %543 = vmatprep.subr.mxu0 0.0
      %544 = vmatpush1.msra.mxu0 0.0
      %545 = vmatprep.subr.mxu0 0.0
      %546 = vmatpush1.msra.mxu0 0.0
      %547 = vmatprep.subr.mxu0 0.0
      %548 = vmatpush1.msra.mxu0 0.0
      %549 = vmatprep.subr.mxu0 0.0
      %550 = vmatpush1.msra.mxu0 0.0
      %551 = vmatprep.subr.mxu0 0.0
      %552 = vmatpush1.msra.mxu0 0.0
      %553 = vmatprep.subr.mxu0 0.0
      %554 = vmatpush1.msra.mxu0 0.0
      %555 = vmatprep.subr.mxu0 0.0
      %556 = vmatpush1.msra.mxu0 0.0
      %557 = vmatprep.subr.mxu0 0.0
      %558 = vmatpush1.msra.mxu0 0.0
      %559 = vmatprep.mubr.f32.mxu0 0.0
      %560 = vmatmul.mubr.f32.gmra.mrb[0].mxu0 %v412
      %v561 = vpop.f32.mrb[0].mxu0
      %v562 = vadd.f32 0.0, %v561
      %v563 = vpop.f32.mrb[0].mxu0
      %564 = vdwg.mxu0
      %v565 = vld [vmem:[%s2] sm:$0x7]
      %v567 = vlaneseq
      %v568 = vshrl.u32 %v567, 7
      %v569 = vsub.s32 0, %v568
      %v570 = vrot.slane %v565, %v569
      %v571 = vlaneseq
      %v572 = vshrl.u32 %v571, 7
      %v573 = vsub.s32 1, %v572
      %v574 = vrot.slane %v565, %v573
      %v575 = vlaneseq
      %v576 = vshrl.u32 %v575, 7
      %v577 = vsub.s32 2, %v576
      %v578 = vrot.slane %v565, %v577
      %v582 = vmul.f32 %v491, %v570
      %v583 = vmul.f32 %v493, %v574
      %v584 = vmul.f32 %v562, %v578
      %585 = vst [vmem:[%s209] sm:$0xff] %v582
      %586 = vst [vmem:[%s209 + $0x8] sm:$0xff] %v583
      %587 = vst [vmem:[%s209 + $0x10] sm:$0xff] %v584
      %p588 = scmp.lt.s32.totalorder %s18, 1
      %s589 = scalar_select %p588, %s18, 1
      %p590 = scmp.lt.s32.totalorder %s19, 0
      %s591 = scalar_select %p590, %s19, 0
      %s592 = smul.addr %s591, 3
      %s593 = smul.addr %s589, 3
      %s594 = sadd.s32 %s592, %s593
      %s595 = smul.addr %s594, 8
      %s596 = scalar_lea.vmem %s3, %s595
      // Predicated region
      $region33: #{unet_forward.11} parent=31 // pred_check
        %p597 = pneg %p119
      $region34: #{unet_forward.11} parent=31 // pred_check_branch
        %599 = sbr.rel (%p597) target = $region36
      $region35: #{unet_forward.11} parent=31 // pred_region
        _
      $region36: #{unet_forward.11} parent=31 // pred_fallthru
        _
    $region32: #{unet_forward.11} parent=5 // pred_fallthru
      _
    %p600 = scmp.le.s32.totalorder 2, %s9
    // Predicated region
    $region37: #{unet_forward.11} parent=5 // pred_check
      %p601 = pneg %p600
    $region38: #{unet_forward.11} parent=5 // pred_check_branch
      %603 = sbr.rel (%p601) target = $region40
    $region39: #{unet_forward.11} parent=5 // pred_region
      %s604 = ssub.s32 %s9, 2
      // Predicated region
      $region41: #{unet_forward.11} parent=39 // pred_check
        %p605 = pneg %p125
      $region42: #{unet_forward.11} parent=39 // pred_check_branch
        %607 = sbr.rel (%p605) target = $region44
      $region43: #{unet_forward.11} parent=39 // pred_region
        %p608 = scmp.lt.s32.totalorder %s20, 1
        %s609 = scalar_select %p608, %s20, 1
        %p610 = scmp.lt.s32.totalorder %s21, 0
        %s611 = scalar_select %p610, %s21, 0
        %s612 = smul.addr %s611, 3
        %s613 = smul.addr %s609, 3
        %s614 = sadd.s32 %s612, %s613
        %s615 = smul.addr %s614, 8
        %s616 = scalar_lea.vmem %s3, %s615
      $region44: #{unet_forward.11} parent=39 // pred_fallthru
        _
    $region40: #{unet_forward.11} parent=5 // pred_fallthru
      _
  $region6: #{unet_forward.11} parent=0 // loop_footer
    %s13 = sadd.s32 1, %s9
  $region7: #{unet_forward.11} parent=0 // loop_footer_branch
    %8 = sbr.rel target = $region3
  $region8: #{unet_forward.11} parent=0 // loop_exit
    _

// kernel: unet_forward.12
$region0: #{unet_forward.12}
  #allocation0 [shape = 'u32[]', space=smem, size = 0x4, offset = 0x4, fixed_abs, tag = 'smem constant byte address 0x4 - core index']
  #allocation1 [shape = 'u32[144,128]{1,0:T(1,128)}', space=vmem, size = 0x12000, scoped, tag = 'internal scratch']
  #allocation2 [shape = 'f32[73,384]{1,0:T(8,128)}', space=vmem, size = 0x1e000, scoped, tag = 'scratch operand']
  %s0 = inlined_call_operand.vmem [shape: f32[2,8,384], index: 0, kind: input, shape index: {}]
  %s1 = inlined_call_operand.vmem [shape: f32[8,73], index: 1, kind: input, shape index: {}]
  %s2 = inlined_call_operand.vmem [shape: f32[1,384], index: 2, kind: input, shape index: {}]
  %s3 = inlined_call_operand.vmem [shape: f32[2,8,384], index: 3, kind: output, shape index: {}]
  %s4 = sld [smem:[#allocation0]]
  $region45: #{unet_forward.12} parent=0
    _
  %s6 = ssub.s32 1, %s4
  %s7 = scalar_select 0, %s6, %s4
  loop: start=0, step=1, limit=4
  $region2: #{unet_forward.12} parent=0 // loop_pre_header
    _
  $region3: #{unet_forward.12} parent=0 // loop_header
    %s9 = sphi 0, %s13
    %p10 = scmp.ge.s32.totalorder %s9, 4
    %s16 = sphi 0, %s28
    %s17 = sphi 0, %s24
    %s18 = sphi 0, %s16
    %s19 = sphi 0, %s17
    %s20 = sphi 0, %s18
    %s21 = sphi 0, %s19
    %s31 = sphi 0, %s33
    %s34 = sphi 0, %s31
    %s35 = sphi 0, %s34
    %s51 = sphi 0, %s35
    %s57 = sphi 0, %s59
    %s60 = sphi 0, %s57
    %s61 = sphi 0, %s60
    %s77 = sphi 0, %s61
    %s81 = sphi 0, %s81
    %s83 = sphi 0, %s81
    %s84 = sphi 0, %s83
    %s98 = sphi 0, %s84
    %s106 = sphi 0, %s108
    %s109 = sphi 0, %s106
    %s110 = sphi 0, %s109
    %s126 = sphi 0, %s110
  $region4: #{unet_forward.12} parent=0 // loop_header_branch
    %12 = sbr.rel (%p10) target = $region8
  $region5: #{unet_forward.12} parent=0 // loop_body
    %s14 = ssub.s32 %s9, 1
    %s15 = ssub.s32 %s9, 2
    %s22 = sadd.s32 1, %s17
    %p23 = scmp.ge.s32.totalorder %s22, 1
    %s24 = scalar_select %p23, 0, %s22
    %s25 = sadd.s32 1, %s16
    %s26 = scalar_select %p23, %s25, %s16
    %p27 = scmp.ge.s32.totalorder %s26, 2
    %s28 = scalar_select %p27, 0, %s26
    %s29 = ssub.s32 %s16, %s28
    %p30 = scmp.eq.s32.totalorder %s29, 0
    %s32 = sadd.s32 %s31, 1
    %s33 = scalar_select %p30, %s31, %s32
    %p36 = pneg %p30
    %p37 = scmp.eq.s32.totalorder %s9, 1
    %p38 = por %p36, %p37
    %p39 = scmp.ne.s32.totalorder %s31, %s34
    %p40 = scmp.eq.s32.totalorder %s9, 0
    %p41 = por %p39, %p40
    %p42 = scmp.ne.s32.totalorder %s31, %s34
    %p43 = scmp.eq.s32.totalorder %s14, 1
    %p44 = por %p42, %p43
    %p45 = scmp.ne.s32.totalorder %s34, %s35
    %p46 = scmp.eq.s32.totalorder %s14, 0
    %p47 = por %p45, %p46
    %p48 = scmp.ne.s32.totalorder %s34, %s35
    %p49 = scmp.eq.s32.totalorder %s15, 1
    %p50 = por %p48, %p49
    %p52 = scmp.ne.s32.totalorder %s35, %s51
    %p53 = scmp.eq.s32.totalorder %s15, 0
    %p54 = por %p52, %p53
    %s55 = ssub.s32 %s17, %s24
    %p56 = scmp.eq.s32.totalorder %s55, 0
    %s58 = sadd.s32 %s57, 1
    %s59 = scalar_select %p56, %s57, %s58
    %p62 = pneg %p56
    %p63 = scmp.eq.s32.totalorder %s9, 1
    %p64 = por %p62, %p63
    %p65 = scmp.ne.s32.totalorder %s57, %s60
    %p66 = scmp.eq.s32.totalorder %s9, 0
    %p67 = por %p65, %p66
    %p68 = scmp.ne.s32.totalorder %s57, %s60
    %p69 = scmp.eq.s32.totalorder %s14, 1
    %p70 = por %p68, %p69
    %p71 = scmp.ne.s32.totalorder %s60, %s61
    %p72 = scmp.eq.s32.totalorder %s14, 0
    %p73 = por %p71, %p72
    %p74 = scmp.ne.s32.totalorder %s60, %s61
    %p75 = scmp.eq.s32.totalorder %s15, 1
    %p76 = por %p74, %p75
    %p78 = scmp.ne.s32.totalorder %s61, %s77
    %p79 = scmp.eq.s32.totalorder %s15, 0
    %p80 = por %p78, %p79
    %s82 = sadd.s32 %s81, 1
    %p85 = scmp.eq.s32.totalorder %s9, 1
    %p86 = scmp.ne.s32.totalorder %s81, %s83
    %p87 = scmp.eq.s32.totalorder %s9, 0
    %p88 = por %p86, %p87
    %p89 = scmp.ne.s32.totalorder %s81, %s83
    %p90 = scmp.eq.s32.totalorder %s14, 1
    %p91 = por %p89, %p90
    %p92 = scmp.ne.s32.totalorder %s83, %s84
    %p93 = scmp.eq.s32.totalorder %s14, 0
    %p94 = por %p92, %p93
    %p95 = scmp.ne.s32.totalorder %s83, %s84
    %p96 = scmp.eq.s32.totalorder %s15, 1
    %p97 = por %p95, %p96
    %p99 = scmp.ne.s32.totalorder %s84, %s98
    %p100 = scmp.eq.s32.totalorder %s15, 0
    %p101 = por %p99, %p100
    %s102 = ssub.s32 %s16, %s28
    %s103 = ssub.s32 %s17, %s24
    %s104 = sor.u32 %s102, %s103
    %p105 = scmp.eq.s32.totalorder %s104, 0
    %s107 = sadd.s32 %s106, 1
    %s108 = scalar_select %p105, %s106, %s107
    %p111 = pneg %p105
    %p112 = scmp.eq.s32.totalorder %s9, 1
    %p113 = por %p111, %p112
    %p114 = scmp.ne.s32.totalorder %s106, %s109
    %p115 = scmp.eq.s32.totalorder %s9, 0
    %p116 = por %p114, %p115
    %p117 = scmp.ne.s32.totalorder %s106, %s109
    %p118 = scmp.eq.s32.totalorder %s14, 1
    %p119 = por %p117, %p118
    %p120 = scmp.ne.s32.totalorder %s109, %s110
    %p121 = scmp.eq.s32.totalorder %s14, 0
    %p122 = por %p120, %p121
    %p123 = scmp.ne.s32.totalorder %s109, %s110
    %p124 = scmp.eq.s32.totalorder %s15, 1
    %p125 = por %p123, %p124
    %p127 = scmp.ne.s32.totalorder %s110, %s126
    %p128 = scmp.eq.s32.totalorder %s15, 0
    %p129 = por %p127, %p128
    %p130 = scmp.le.s32.totalorder 1, %s9
    %p131 = scmp.lt.s32.totalorder %s9, 3
    %p132 = pnand %p130, %p131
    %p133 = pneg %p132
    // Predicated region
    $region9: #{unet_forward.12} parent=5 // pred_check
      _
    $region10: #{unet_forward.12} parent=5 // pred_check_branch
      %135 = sbr.rel (%p132) target = $region12
    $region11: #{unet_forward.12} parent=5 // pred_region
      %s136 = ssub.s32 %s9, 1
      // Predicated region
      $region13: #{unet_forward.12} parent=11 // pred_check
        %p137 = pneg %p73
      $region14: #{unet_forward.12} parent=11 // pred_check_branch
        %139 = sbr.rel (%p137) target = $region16
      $region15: #{unet_forward.12} parent=11 // pred_region
        %p140 = scmp.lt.s32.totalorder %s19, 0
        %s141 = scalar_select %p140, %s19, 0
        %s142 = smul.addr %s141, 8
        %s143 = scalar_lea.vmem %s1, %s142
      $region16: #{unet_forward.12} parent=11 // pred_fallthru
        _
      // Predicated region
      $region17: #{unet_forward.12} parent=11 // pred_check
        %p144 = pneg %p94
      $region18: #{unet_forward.12} parent=11 // pred_check_branch
        %146 = sbr.rel (%p144) target = $region20
      $region19: #{unet_forward.12} parent=11 // pred_region
        _
      $region20: #{unet_forward.12} parent=11 // pred_fallthru
        _
    $region12: #{unet_forward.12} parent=5 // pred_fallthru
      _
    %p147 = scmp.lt.s32.totalorder %s9, 2
    // Predicated region
    $region21: #{unet_forward.12} parent=5 // pred_check
      %p148 = pneg %p147
    $region22: #{unet_forward.12} parent=5 // pred_check_branch
      %150 = sbr.rel (%p148) target = $region24
    $region23: #{unet_forward.12} parent=5 // pred_region
      // Predicated region
      $region25: #{unet_forward.12} parent=23 // pred_check
        %p151 = pneg %p41
      $region26: #{unet_forward.12} parent=23 // pred_check_branch
        %153 = sbr.rel (%p151) target = $region28
      $region27: #{unet_forward.12} parent=23 // pred_region
        %p154 = scmp.lt.s32.totalorder %s16, 1
        %s155 = scalar_select %p154, %s16, 1
        %s156 = smul.addr %s155, 3
        %s157 = smul.addr %s156, 8
        %s158 = scalar_lea.vmem %s0, %s157
      $region28: #{unet_forward.12} parent=23 // pred_fallthru
        _
    $region24: #{unet_forward.12} parent=5 // pred_fallthru
      _
    %p159 = scmp.le.s32.totalorder 1, %s9
    %p160 = scmp.lt.s32.totalorder %s9, 3
    %p161 = pnand %p159, %p160
    %p162 = pneg %p161
    // Predicated region
    $region29: #{unet_forward.12} parent=5 // pred_check
      _
    $region30: #{unet_forward.12} parent=5 // pred_check_branch
      %164 = sbr.rel (%p161) target = $region32
    $region31: #{unet_forward.12} parent=5 // pred_region
      %s165 = ssub.s32 %s9, 1
      %p166 = scmp.lt.s32.totalorder %s18, 1
      %s167 = scalar_select %p166, %s18, 1
      %s168 = smul.addr %s167, 3
      %s169 = smul.addr %s168, 8
      %s170 = scalar_lea.vmem %s0, %s169
      %p171 = pneg %p47
      %p172 = pneg %p44
      %p173 = scmp.lt.s32.totalorder %s19, 0
      %s174 = scalar_select %p173, %s19, 0
      %s175 = smul.addr %s174, 8
      %s176 = scalar_lea.vmem %s1, %s175
      %p177 = pneg %p73
      %p178 = pneg %p70
      %p179 = pneg %p94
      %p180 = pneg %p91
      %p181 = pneg %p122
      %p182 = pneg %p119
      %p183 = scmp.lt.s32.totalorder %s18, 1
      %s184 = scalar_select %p183, %s18, 1
      %p185 = scmp.lt.s32.totalorder %s19, 0
      %s186 = scalar_select %p185, %s19, 0
      %s187 = smul.addr %s186, 3
      %s188 = smul.addr %s184, 3
      %s189 = sadd.s32 %s187, %s188
      %s190 = smul.addr %s189, 8
      %s191 = scalar_lea.vmem %s3, %s190
      %p192 = scmp.lt.s32.totalorder %s18, 1
      %s193 = scalar_select %p192, %s18, 1
      %s194 = smul.addr %s193, 3
      %s195 = smul.addr %s194, 8
      %s196 = scalar_lea.vmem %s0, %s195
      %p197 = scmp.lt.s32.totalorder %s19, 0
      %s198 = scalar_select %p197, %s19, 0
      %s199 = smul.addr %s198, 8
      %s200 = scalar_lea.vmem %s1, %s199
      %p201 = scmp.lt.s32.totalorder %s18, 1
      %s202 = scalar_select %p201, %s18, 1
      %p203 = scmp.lt.s32.totalorder %s19, 0
      %s204 = scalar_select %p203, %s19, 0
      %s205 = smul.addr %s204, 3
      %s206 = smul.addr %s202, 3
      %s207 = sadd.s32 %s205, %s206
      %s208 = smul.addr %s207, 8
      %s209 = scalar_lea.vmem %s3, %s208
      %v210 = vld [vmem:[%s196] sm:$0xff]
      %v211 = vld [vmem:[%s196 + $0x8] sm:$0xff]
      %v212 = vld [vmem:[%s196 + $0x10] sm:$0xff]
      %213 = vrot.lane.b32.xlu0 %v210, 19
      %v214 = vpop.permute.xlu0 %213
      %215 = vrot.lane.b32.xlu0 %v211, 19
      %v216 = vpop.permute.xlu0 %215
      %217 = vrot.lane.b32.xlu0 %v212, 19
      %v218 = vpop.permute.xlu0 %217
      %v219 = vlaneseq
      %v220 = vand.u32 %v219, 127
      %vm221 = vcmp.lt.s32.totalorder %v220, 19
      %v222 = vsel %vm221, %v216, %v218
      %v223 = vsel %vm221, %v214, %v216
      %v224 = vsel %vm221, %v218, %v214
      %225 = vst [vmem:[#allocation2] sm:$0xff] %v224
      %226 = vst [vmem:[#allocation2 + $0x8] sm:$0xff] %v223
      %227 = vst [vmem:[#allocation2 + $0x10] sm:$0xff] %v222
      %228 = vrot.lane.b32.xlu0 %v210, 18
      %v229 = vpop.permute.xlu0 %228
      %230 = vrot.lane.b32.xlu0 %v211, 18
      %v231 = vpop.permute.xlu0 %230
      %232 = vrot.lane.b32.xlu0 %v212, 18
      %v233 = vpop.permute.xlu0 %232
      %vm234 = vcmp.lt.s32.totalorder %v220, 18
      %v235 = vsel %vm234, %v231, %v233
      %v236 = vsel %vm234, %v229, %v231
      %v237 = vsel %vm234, %v233, %v229
      %238 = vst [vmem:[#allocation2 + $0x18] sm:$0xff] %v237
      %239 = vst [vmem:[#allocation2 + $0x20] sm:$0xff] %v236
      %240 = vst [vmem:[#allocation2 + $0x28] sm:$0xff] %v235
      %241 = vrot.lane.b32.xlu0 %v210, 17
      %v242 = vpop.permute.xlu0 %241
      %243 = vrot.lane.b32.xlu0 %v211, 17
      %v244 = vpop.permute.xlu0 %243
      %245 = vrot.lane.b32.xlu0 %v212, 17
      %v246 = vpop.permute.xlu0 %245
      %vm247 = vcmp.lt.s32.totalorder %v220, 17
      %v248 = vsel %vm247, %v244, %v246
      %v249 = vsel %vm247, %v242, %v244
      %v250 = vsel %vm247, %v246, %v242
      %251 = vst [vmem:[#allocation2 + $0x30] sm:$0xff] %v250
      %252 = vst [vmem:[#allocation2 + $0x38] sm:$0xff] %v249
      %253 = vst [vmem:[#allocation2 + $0x40] sm:$0xff] %v248
      %254 = vrot.lane.b32.xlu0 %v210, 1
      %v255 = vpop.permute.xlu0 %254
      %256 = vrot.lane.b32.xlu0 %v211, 1
      %v257 = vpop.permute.xlu0 %256
      %258 = vrot.lane.b32.xlu0 %v212, 1
      %v259 = vpop.permute.xlu0 %258
      %vm260 = vcmp.lt.s32.totalorder %v220, 1
      %v261 = vsel %vm260, %v257, %v259
      %v262 = vsel %vm260, %v255, %v257
      %v263 = vsel %vm260, %v259, %v255
      %264 = vst [vmem:[#allocation2 + $0x48] sm:$0xff] %v263
      %265 = vst [vmem:[#allocation2 + $0x50] sm:$0xff] %v262
      %266 = vst [vmem:[#allocation2 + $0x58] sm:$0xff] %v261
      %267 = vst [vmem:[#allocation2 + $0x60] sm:$0xff] %v210
      %268 = vst [vmem:[#allocation2 + $0x68] sm:$0xff] %v211
      %269 = vst [vmem:[#allocation2 + $0x70] sm:$0xff] %v212
      %270 = vrot.lane.b32.xlu0 %v210, 127
      %v271 = vpop.permute.xlu0 %270
      %272 = vrot.lane.b32.xlu0 %v211, 127
      %v273 = vpop.permute.xlu0 %272
      %274 = vrot.lane.b32.xlu0 %v212, 127
      %v275 = vpop.permute.xlu0 %274
      %vm276 = vcmp.lt.s32.totalorder %v220, 127
      %v277 = vsel %vm276, %v273, %v275
      %v278 = vsel %vm276, %v271, %v273
      %v279 = vsel %vm276, %v275, %v271
      %280 = vst [vmem:[#allocation2 + $0x78] sm:$0xff] %v278
      %281 = vst [vmem:[#allocation2 + $0x80] sm:$0xff] %v277
      %282 = vst [vmem:[#allocation2 + $0x88] sm:$0xff] %v279
      %283 = vrot.lane.b32.xlu0 %v210, 111
      %v284 = vpop.permute.xlu0 %283
      %285 = vrot.lane.b32.xlu0 %v211, 111
      %v286 = vpop.permute.xlu0 %285
      %287 = vrot.lane.b32.xlu0 %v212, 111
      %v288 = vpop.permute.xlu0 %287
      %vm289 = vcmp.lt.s32.totalorder %v220, 111
      %v290 = vsel %vm289, %v286, %v288
      %v291 = vsel %vm289, %v284, %v286
      %v292 = vsel %vm289, %v288, %v284
      %293 = vst [vmem:[#allocation2 + $0x90] sm:$0xff] %v291
      %294 = vst [vmem:[#allocation2 + $0x98] sm:$0xff] %v290
      %295 = vst [vmem:[#allocation2 + $0xa0] sm:$0xff] %v292
      %296 = vrot.lane.b32.xlu0 %v210, 110
      %v297 = vpop.permute.xlu0 %296
      %298 = vrot.lane.b32.xlu0 %v211, 110
      %v299 = vpop.permute.xlu0 %298
      %300 = vrot.lane.b32.xlu0 %v212, 110
      %v301 = vpop.permute.xlu0 %300
      %vm302 = vcmp.lt.s32.totalorder %v220, 110
      %v303 = vsel %vm302, %v299, %v301
      %v304 = vsel %vm302, %v297, %v299
      %v305 = vsel %vm302, %v301, %v297
      %306 = vst [vmem:[#allocation2 + $0xa8] sm:$0xff] %v304
      %307 = vst [vmem:[#allocation2 + $0xb0] sm:$0xff] %v303
      %308 = vst [vmem:[#allocation2 + $0xb8] sm:$0xff] %v305
      %309 = vrot.lane.b32.xlu0 %v210, 109
      %v310 = vpop.permute.xlu0 %309
      %311 = vrot.lane.b32.xlu0 %v211, 109
      %v312 = vpop.permute.xlu0 %311
      %313 = vrot.lane.b32.xlu0 %v212, 109
      %v314 = vpop.permute.xlu0 %313
      %vm315 = vcmp.lt.s32.totalorder %v220, 109
      %v316 = vsel %vm315, %v312, %v314
      %v317 = vsel %vm315, %v310, %v312
      %v318 = vsel %vm315, %v314, %v310
      %319 = vst [vmem:[#allocation2 + $0xc0] sm:$0xff] %v317
      %320 = vst [vmem:[#allocation2 + $0xc8] sm:$0xff] %v316
      %321 = vst [vmem:[#allocation2 + $0xd0] sm:$0xff] %v318
      %v322 = vld [vmem:[%s2] sm:$0x7]
      %v323 = vlaneseq
      %vm324 = vcmp.ge.s32.totalorder %v323, 0
      %vm325 = vcmp.lt.s32.totalorder %v323, 384
      %vm326 = vmand %vm324, %vm325
      %s327 = scalar_lea.vmem [#allocation2], 216
      %328 = vst.msk [vmem:[%s327] ss:$8 sm:$0x7] %vm326, %v322
      %329 = vst.msk [vmem:[%s327] ss:$8 sm:$0x0] %vm326, %v322
      %v330 = vld [vmem:[%s200] sm:$0xff]
      %v331 = vld [vmem:[#allocation2] sm:$0xff]
      %v332 = vld [vmem:[#allocation2 + $0x8] sm:$0xff]
      %v333 = vld [vmem:[#allocation2 + $0x10] sm:$0xff]
      %v334 = vld [vmem:[#allocation2 + $0x18] sm:$0xff]
      %v335 = vld [vmem:[#allocation2 + $0x20] sm:$0xff]
      %v336 = vld [vmem:[#allocation2 + $0x28] sm:$0xff]
      %v337 = vld [vmem:[#allocation2 + $0x30] sm:$0xff]
      %v338 = vld [vmem:[#allocation2 + $0x38] sm:$0xff]
      %v339 = vld [vmem:[#allocation2 + $0x40] sm:$0xff]
      %v340 = vld [vmem:[#allocation2 + $0x48] sm:$0xff]
      %v341 = vld [vmem:[#allocation2 + $0x50] sm:$0xff]
      %v342 = vld [vmem:[#allocation2 + $0x58] sm:$0xff]
      %v343 = vld [vmem:[#allocation2 + $0x60] sm:$0xff]
      %v344 = vld [vmem:[#allocation2 + $0x68] sm:$0xff]
      %v345 = vld [vmem:[#allocation2 + $0x70] sm:$0xff]
      %v346 = vld [vmem:[#allocation2 + $0x78] sm:$0xff]
      %v347 = vld [vmem:[#allocation2 + $0x80] sm:$0xff]
      %v348 = vld [vmem:[#allocation2 + $0x88] sm:$0xff]
      %v349 = vld [vmem:[#allocation2 + $0x90] sm:$0xff]
      %v350 = vld [vmem:[#allocation2 + $0x98] sm:$0xff]
      %v351 = vld [vmem:[#allocation2 + $0xa0] sm:$0xff]
      %v352 = vld [vmem:[#allocation2 + $0xa8] sm:$0xff]
      %v353 = vld [vmem:[#allocation2 + $0xb0] sm:$0xff]
      %v354 = vld [vmem:[#allocation2 + $0xb8] sm:$0xff]
      %v355 = vld [vmem:[#allocation2 + $0xc0] sm:$0xff]
      %v356 = vld [vmem:[#allocation2 + $0xc8] sm:$0xff]
      %v357 = vld [vmem:[#allocation2 + $0xd0] sm:$0xff]
      %v358 = vld [vmem:[#allocation2 + $0xd8] sm:$0x1]
      %v359 = vld [vmem:[#allocation2 + $0xe0] sm:$0x1]
      %v360 = vld [vmem:[#allocation2 + $0xe8] sm:$0x1]
      %vm361 = vcmask 596992
      %v363 = vsel %vm361, %v330, 0
      %vm365 = vcmask 1040384
      %v367 = vsel %vm365, %v358, 0
      %v370 = vsel %vm365, %v359, 0
      %v373 = vsel %vm365, %v360, 0
      %375 = vmatprep.subr.mxu0 %v332
      %376 = vmatpush1.msra.mxu0 %v331
      %377 = vmatprep.subr.mxu0 %v335
      %378 = vmatpush1.msra.mxu0 %v334
      %379 = vmatprep.subr.mxu0 %v338
      %380 = vmatpush1.msra.mxu0 %v337
      %381 = vmatprep.subr.mxu0 %v341
      %382 = vmatpush1.msra.mxu0 %v340
      %383 = vmatprep.subr.mxu0 %v344
      %384 = vmatpush1.msra.mxu0 %v343
      %385 = vmatprep.subr.mxu0 %v347
      %386 = vmatpush1.msra.mxu0 %v346
      %387 = vmatprep.subr.mxu0 %v350
      %388 = vmatpush1.msra.mxu0 %v349
      %389 = vmatprep.subr.mxu0 %v353
      %390 = vmatpush1.msra.mxu0 %v352
      %391 = vmatprep.subr.mxu0 %v356
      %392 = vmatpush1.msra.mxu0 %v355
      %393 = vmatprep.subr.mxu0 %v370
      %394 = vmatpush1.msra.mxu0 %v367
      %395 = vmatprep.subr.mxu0 0.0
      %396 = vmatpush1.msra.mxu0 0.0
      %397 = vmatprep.subr.mxu0 0.0
      %398 = vmatpush1.msra.mxu0 0.0
      %399 = vmatprep.subr.mxu0 0.0
      %400 = vmatpush1.msra.mxu0 0.0
      %401 = vmatprep.subr.mxu0 0.0
      %402 = vmatpush1.msra.mxu0 0.0
      %403 = vmatprep.subr.mxu0 0.0
      %404 = vmatpush1.msra.mxu0 0.0
      %405 = vmatprep.subr.mxu0 0.0
      %406 = vmatpush1.msra.mxu0 0.0
      %407 = vmatprep.subr.mxu0 0.0
      %408 = vmatpush1.msra.mxu0 0.0
      %409 = vmatprep.subr.mxu0 0.0
      %410 = vmatpush1.msra.mxu0 0.0
      %411 = vmatprep.subr.mxu0 0.0
      %412 = vmatpush1.msra.mxu0 0.0
      %413 = vmatprep.subr.mxu0 0.0
      %414 = vmatpush1.msra.mxu0 0.0
      %415 = vmatprep.subr.mxu0 0.0
      %416 = vmatpush1.msra.mxu0 0.0
      %417 = vmatprep.subr.mxu0 0.0
      %418 = vmatpush1.msra.mxu0 0.0
      %419 = vmatprep.subr.mxu0 0.0
      %420 = vmatpush1.msra.mxu0 0.0
      %421 = vmatprep.subr.mxu0 0.0
      %422 = vmatpush1.msra.mxu0 0.0
      %423 = vmatprep.subr.mxu0 0.0
      %424 = vmatpush1.msra.mxu0 0.0
      %425 = vmatprep.subr.mxu0 0.0
      %426 = vmatpush1.msra.mxu0 0.0
      %427 = vmatprep.subr.mxu0 0.0
      %428 = vmatpush1.msra.mxu0 0.0
      %429 = vmatprep.subr.mxu0 0.0
      %430 = vmatpush1.msra.mxu0 0.0
      %431 = vmatprep.subr.mxu0 0.0
      %432 = vmatpush1.msra.mxu0 0.0
      %433 = vmatprep.subr.mxu0 0.0
      %434 = vmatpush1.msra.mxu0 0.0
      %435 = vmatprep.subr.mxu0 0.0
      %436 = vmatpush1.msra.mxu0 0.0
      %437 = vmatprep.subr.mxu0 0.0
      %438 = vmatpush1.msra.mxu0 0.0
      %439 = vmatprep.mubr.f32.mxu0 0.0
      %440 = vmatmul.mubr.f32.gmra.mrb[0].mxu0 %v363
      %v441 = vpop.f32.mrb[0].mxu0
      %v442 = vadd.f32 0.0, %v441
      %v443 = vpop.f32.mrb[0].mxu0
      %v444 = vadd.f32 0.0, %v443
      %445 = vdwg.mxu0
      %446 = vmatprep.subr.mxu0 0.0
      %447 = vmatpush1.msra.mxu0 %v333
      %448 = vmatprep.subr.mxu0 0.0
      %449 = vmatpush1.msra.mxu0 %v336
      %450 = vmatprep.subr.mxu0 0.0
      %451 = vmatpush1.msra.mxu0 %v339
      %452 = vmatprep.subr.mxu0 0.0
      %453 = vmatpush1.msra.mxu0 %v342
      %454 = vmatprep.subr.mxu0 0.0
      %455 = vmatpush1.msra.mxu0 %v345
      %456 = vmatprep.subr.mxu0 0.0
      %457 = vmatpush1.msra.mxu0 %v348
      %458 = vmatprep.subr.mxu0 0.0
      %459 = vmatpush1.msra.mxu0 %v351
      %460 = vmatprep.subr.mxu0 0.0
      %461 = vmatpush1.msra.mxu0 %v354
      %462 = vmatprep.subr.mxu0 0.0
      %463 = vmatpush1.msra.mxu0 %v357
      %464 = vmatprep.subr.mxu0 0.0
      %465 = vmatpush1.msra.mxu0 %v373
      %466 = vmatprep.subr.mxu0 0.0
      %467 = vmatpush1.msra.mxu0 0.0
      %468 = vmatprep.subr.mxu0 0.0
      %469 = vmatpush1.msra.mxu0 0.0
      %470 = vmatprep.subr.mxu0 0.0
      %471 = vmatpush1.msra.mxu0 0.0
      %472 = vmatprep.subr.mxu0 0.0
      %473 = vmatpush1.msra.mxu0 0.0
      %474 = vmatprep.subr.mxu0 0.0
      %475 = vmatpush1.msra.mxu0 0.0
      %476 = vmatprep.subr.mxu0 0.0
      %477 = vmatpush1.msra.mxu0 0.0
      %478 = vmatprep.subr.mxu0 0.0
      %479 = vmatpush1.msra.mxu0 0.0
      %480 = vmatprep.subr.mxu0 0.0
      %481 = vmatpush1.msra.mxu0 0.0
      %482 = vmatprep.subr.mxu0 0.0
      %483 = vmatpush1.msra.mxu0 0.0
      %484 = vmatprep.subr.mxu0 0.0
      %485 = vmatpush1.msra.mxu0 0.0
      %486 = vmatprep.subr.mxu0 0.0
      %487 = vmatpush1.msra.mxu0 0.0
      %488 = vmatprep.subr.mxu0 0.0
      %489 = vmatpush1.msra.mxu0 0.0
      %490 = vmatprep.subr.mxu0 0.0
      %491 = vmatpush1.msra.mxu0 0.0
      %492 = vmatprep.subr.mxu0 0.0
      %493 = vmatpush1.msra.mxu0 0.0
      %494 = vmatprep.subr.mxu0 0.0
      %495 = vmatpush1.msra.mxu0 0.0
      %496 = vmatprep.subr.mxu0 0.0
      %497 = vmatpush1.msra.mxu0 0.0
      %498 = vmatprep.subr.mxu0 0.0
      %499 = vmatpush1.msra.mxu0 0.0
      %500 = vmatprep.subr.mxu0 0.0
      %501 = vmatpush1.msra.mxu0 0.0
      %502 = vmatprep.subr.mxu0 0.0
      %503 = vmatpush1.msra.mxu0 0.0
      %504 = vmatprep.subr.mxu0 0.0
      %505 = vmatpush1.msra.mxu0 0.0
      %506 = vmatprep.subr.mxu0 0.0
      %507 = vmatpush1.msra.mxu0 0.0
      %508 = vmatprep.subr.mxu0 0.0
      %509 = vmatpush1.msra.mxu0 0.0
      %510 = vmatprep.mubr.f32.mxu0 0.0
      %511 = vmatmul.mubr.f32.gmra.mrb[0].mxu0 %v363
      %v512 = vpop.f32.mrb[0].mxu0
      %v513 = vadd.f32 0.0, %v512
      %v514 = vpop.f32.mrb[0].mxu0
      %515 = vdwg.mxu0
      %v516 = vld [vmem:[%s2] sm:$0x7]
      %v518 = vlaneseq
      %v519 = vshrl.u32 %v518, 7
      %v520 = vsub.s32 0, %v519
      %v521 = vrot.slane %v516, %v520
      %v522 = vlaneseq
      %v523 = vshrl.u32 %v522, 7
      %v524 = vsub.s32 1, %v523
      %v525 = vrot.slane %v516, %v524
      %v526 = vlaneseq
      %v527 = vshrl.u32 %v526, 7
      %v528 = vsub.s32 2, %v527
      %v529 = vrot.slane %v516, %v528
      %v533 = vmul.f32 %v442, %v521
      %v534 = vmul.f32 %v444, %v525
      %v535 = vmul.f32 %v513, %v529
      %v536 = vadd.f32 %v533, %v534
      %v537 = vadd.f32 %v536, %v535
      %538 = vadd.xlane.f32.xlu0 %v537
      %v539 = vpop.xlane.xlu0 %538
      %v540 = vmul.f32 %v539, 0.00390625
      %v541 = vmul.f32 %v533, %v442
      %v542 = vmul.f32 %v534, %v444
      %v543 = vmul.f32 %v535, %v513
      %v544 = vadd.f32 %v541, %v542
      %v545 = vadd.f32 %v544, %v543
      %546 = vadd.xlane.f32.xlu0 %v545
      %v547 = vpop.xlane.xlu0 %546
      %v548 = vmul.f32 %v547, 0.00390625
      %v549 = vmul.f32 %v540, %v540
      %v550 = vsub.f32 %v548, %v549
      %v551 = vsub.f32 %v442, %v540
      %v552 = vsub.f32 %v444, %v540
      %v553 = vsub.f32 %v513, %v540
      %v554 = vmul.f32 %v551, %v521
      %v555 = vmul.f32 %v552, %v525
      %v556 = vmul.f32 %v553, %v529
      %v557 = vmax.f32 %v550, 0.0
      %v558 = vadd.f32 %v557, 1e-05
      %v559 = vrsqrt.pop %v558
      %v560 = vmul.f32 %v554, %v559
      %v561 = vmul.f32 %v555, %v559
      %v562 = vmul.f32 %v556, %v559
      %v563 = vmax.f32 %v560, 0.0
      %v564 = vmax.f32 %v561, 0.0
      %v565 = vmax.f32 %v562, 0.0
      %566 = vst [vmem:[%s209] sm:$0xff] %v563
      %567 = vst [vmem:[%s209 + $0x8] sm:$0xff] %v564
      %568 = vst [vmem:[%s209 + $0x10] sm:$0xff] %v565
      %p569 = scmp.lt.s32.totalorder %s18, 1
      %s570 = scalar_select %p569, %s18, 1
      %p571 = scmp.lt.s32.totalorder %s19, 0
      %s572 = scalar_select %p571, %s19, 0
      %s573 = smul.addr %s572, 3
      %s574 = smul.addr %s570, 3
      %s575 = sadd.s32 %s573, %s574
      %s576 = smul.addr %s575, 8
      %s577 = scalar_lea.vmem %s3, %s576
      // Predicated region
      $region33: #{unet_forward.12} parent=31 // pred_check
        %p578 = pneg %p119
      $region34: #{unet_forward.12} parent=31 // pred_check_branch
        %580 = sbr.rel (%p578) target = $region36
      $region35: #{unet_forward.12} parent=31 // pred_region
        _
      $region36: #{unet_forward.12} parent=31 // pred_fallthru
        _
    $region32: #{unet_forward.12} parent=5 // pred_fallthru
      _
    %p581 = scmp.le.s32.totalorder 2, %s9
    // Predicated region
    $region37: #{unet_forward.12} parent=5 // pred_check
      %p582 = pneg %p581
    $region38: #{unet_forward.12} parent=5 // pred_check_branch
      %584 = sbr.rel (%p582) target = $region40
    $region39: #{unet_forward.12} parent=5 // pred_region
      %s585 = ssub.s32 %s9, 2
      // Predicated region
      $region41: #{unet_forward.12} parent=39 // pred_check
        %p586 = pneg %p125
      $region42: #{unet_forward.12} parent=39 // pred_check_branch
        %588 = sbr.rel (%p586) target = $region44
      $region43: #{unet_forward.12} parent=39 // pred_region
        %p589 = scmp.lt.s32.totalorder %s20, 1
        %s590 = scalar_select %p589, %s20, 1
        %p591 = scmp.lt.s32.totalorder %s21, 0
        %s592 = scalar_select %p591, %s21, 0
        %s593 = smul.addr %s592, 3
        %s594 = smul.addr %s590, 3
        %s595 = sadd.s32 %s593, %s594
        %s596 = smul.addr %s595, 8
        %s597 = scalar_lea.vmem %s3, %s596
      $region44: #{unet_forward.12} parent=39 // pred_fallthru
        _
    $region40: #{unet_forward.12} parent=5 // pred_fallthru
      _
  $region6: #{unet_forward.12} parent=0 // loop_footer
    %s13 = sadd.s32 1, %s9
  $region7: #{unet_forward.12} parent=0 // loop_footer_branch
    %8 = sbr.rel target = $region3
  $region8: #{unet_forward.12} parent=0 // loop_exit
    _

// kernel: unet_forward.13
$region0: #{unet_forward.13}
  #allocation0 [shape = 'u32[]', space=smem, size = 0x4, offset = 0x4, fixed_abs, tag = 'smem constant byte address 0x4 - core index']
  #allocation1 [shape = 'u32[144,128]{1,0:T(1,128)}', space=vmem, size = 0x12000, scoped, tag = 'internal scratch']
  %s0 = inlined_call_operand.vmem [shape: f32[2,32,128], index: 0, kind: input, shape index: {}]
  %s1 = inlined_call_operand.vmem [shape: f32[16,32], index: 1, kind: input, shape index: {}]
  %s2 = inlined_call_operand.vmem [shape: f32[16,1], index: 2, kind: input, shape index: {}]
  %s3 = inlined_call_operand.vmem [shape: f32[2,16,128], index: 3, kind: output, shape index: {}]
  %s4 = sld [smem:[#allocation0]]
  $region45: #{unet_forward.13} parent=0
    _
  %s6 = ssub.s32 1, %s4
  %s7 = scalar_select 0, %s6, %s4
  loop: start=0, step=1, limit=4
  $region2: #{unet_forward.13} parent=0 // loop_pre_header
    _
  $region3: #{unet_forward.13} parent=0 // loop_header
    %s9 = sphi 0, %s13
    %p10 = scmp.ge.s32.totalorder %s9, 4
    %s19 = sphi 0, %s21
    %s22 = sphi 0, %s19
    %s23 = sphi 0, %s22
    %s39 = sphi 0, %s23
    %s43 = sphi 0, %s43
    %s45 = sphi 0, %s43
    %s46 = sphi 0, %s45
    %s60 = sphi 0, %s46
    %s64 = sphi 0, %s64
    %s66 = sphi 0, %s64
    %s67 = sphi 0, %s66
    %s81 = sphi 0, %s67
    %s87 = sphi 0, %s89
    %s90 = sphi 0, %s87
    %s91 = sphi 0, %s90
    %s107 = sphi 0, %s91
  $region4: #{unet_forward.13} parent=0 // loop_header_branch
    %12 = sbr.rel (%p10) target = $region8
  $region5: #{unet_forward.13} parent=0 // loop_body
    %s14 = ssub.s32 %s9, 1
    %s15 = ssub.s32 %s9, 2
    %s16 = sadd.s32 %s9, 1
    %s17 = ssub.s32 %s9, %s16
    %p18 = scmp.eq.s32.totalorder %s17, 0
    %s20 = sadd.s32 %s19, 1
    %s21 = scalar_select %p18, %s19, %s20
    %p24 = pneg %p18
    %p25 = scmp.eq.s32.totalorder %s9, 1
    %p26 = por %p24, %p25
    %p27 = scmp.ne.s32.totalorder %s19, %s22
    %p28 = scmp.eq.s32.totalorder %s9, 0
    %p29 = por %p27, %p28
    %p30 = scmp.ne.s32.totalorder %s19, %s22
    %p31 = scmp.eq.s32.totalorder %s14, 1
    %p32 = por %p30, %p31
    %p33 = scmp.ne.s32.totalorder %s22, %s23
    %p34 = scmp.eq.s32.totalorder %s14, 0
    %p35 = por %p33, %p34
    %p36 = scmp.ne.s32.totalorder %s22, %s23
    %p37 = scmp.eq.s32.totalorder %s15, 1
    %p38 = por %p36, %p37
    %p40 = scmp.ne.s32.totalorder %s23, %s39
    %p41 = scmp.eq.s32.totalorder %s15, 0
    %p42 = por %p40, %p41
    %s44 = sadd.s32 %s43, 1
    %p47 = scmp.eq.s32.totalorder %s9, 1
    %p48 = scmp.ne.s32.totalorder %s43, %s45
    %p49 = scmp.eq.s32.totalorder %s9, 0
    %p50 = por %p48, %p49
    %p51 = scmp.ne.s32.totalorder %s43, %s45
    %p52 = scmp.eq.s32.totalorder %s14, 1
    %p53 = por %p51, %p52
    %p54 = scmp.ne.s32.totalorder %s45, %s46
    %p55 = scmp.eq.s32.totalorder %s14, 0
    %p56 = por %p54, %p55
    %p57 = scmp.ne.s32.totalorder %s45, %s46
    %p58 = scmp.eq.s32.totalorder %s15, 1
    %p59 = por %p57, %p58
    %p61 = scmp.ne.s32.totalorder %s46, %s60
    %p62 = scmp.eq.s32.totalorder %s15, 0
    %p63 = por %p61, %p62
    %s65 = sadd.s32 %s64, 1
    %p68 = scmp.eq.s32.totalorder %s9, 1
    %p69 = scmp.ne.s32.totalorder %s64, %s66
    %p70 = scmp.eq.s32.totalorder %s9, 0
    %p71 = por %p69, %p70
    %p72 = scmp.ne.s32.totalorder %s64, %s66
    %p73 = scmp.eq.s32.totalorder %s14, 1
    %p74 = por %p72, %p73
    %p75 = scmp.ne.s32.totalorder %s66, %s67
    %p76 = scmp.eq.s32.totalorder %s14, 0
    %p77 = por %p75, %p76
    %p78 = scmp.ne.s32.totalorder %s66, %s67
    %p79 = scmp.eq.s32.totalorder %s15, 1
    %p80 = por %p78, %p79
    %p82 = scmp.ne.s32.totalorder %s67, %s81
    %p83 = scmp.eq.s32.totalorder %s15, 0
    %p84 = por %p82, %p83
    %s85 = ssub.s32 %s9, %s16
    %p86 = scmp.eq.s32.totalorder %s85, 0
    %s88 = sadd.s32 %s87, 1
    %s89 = scalar_select %p86, %s87, %s88
    %p92 = pneg %p86
    %p93 = scmp.eq.s32.totalorder %s9, 1
    %p94 = por %p92, %p93
    %p95 = scmp.ne.s32.totalorder %s87, %s90
    %p96 = scmp.eq.s32.totalorder %s9, 0
    %p97 = por %p95, %p96
    %p98 = scmp.ne.s32.totalorder %s87, %s90
    %p99 = scmp.eq.s32.totalorder %s14, 1
    %p100 = por %p98, %p99
    %p101 = scmp.ne.s32.totalorder %s90, %s91
    %p102 = scmp.eq.s32.totalorder %s14, 0
    %p103 = por %p101, %p102
    %p104 = scmp.ne.s32.totalorder %s90, %s91
    %p105 = scmp.eq.s32.totalorder %s15, 1
    %p106 = por %p104, %p105
    %p108 = scmp.ne.s32.totalorder %s91, %s107
    %p109 = scmp.eq.s32.totalorder %s15, 0
    %p110 = por %p108, %p109
    %p111 = scmp.le.s32.totalorder 1, %s9
    %p112 = scmp.lt.s32.totalorder %s9, 3
    %p113 = pnand %p111, %p112
    %p114 = pneg %p113
    // Predicated region
    $region9: #{unet_forward.13} parent=5 // pred_check
      _
    $region10: #{unet_forward.13} parent=5 // pred_check_branch
      %116 = sbr.rel (%p113) target = $region12
    $region11: #{unet_forward.13} parent=5 // pred_region
      %s117 = ssub.s32 %s9, 1
      // Predicated region
      $region13: #{unet_forward.13} parent=11 // pred_check
        %p118 = pneg %p56
      $region14: #{unet_forward.13} parent=11 // pred_check_branch
        %120 = sbr.rel (%p118) target = $region16
      $region15: #{unet_forward.13} parent=11 // pred_region
        _
      $region16: #{unet_forward.13} parent=11 // pred_fallthru
        _
      // Predicated region
      $region17: #{unet_forward.13} parent=11 // pred_check
        %p121 = pneg %p77
      $region18: #{unet_forward.13} parent=11 // pred_check_branch
        %123 = sbr.rel (%p121) target = $region20
      $region19: #{unet_forward.13} parent=11 // pred_region
        _
      $region20: #{unet_forward.13} parent=11 // pred_fallthru
        _
    $region12: #{unet_forward.13} parent=5 // pred_fallthru
      _
    %p124 = scmp.lt.s32.totalorder %s9, 2
    // Predicated region
    $region21: #{unet_forward.13} parent=5 // pred_check
      %p125 = pneg %p124
    $region22: #{unet_forward.13} parent=5 // pred_check_branch
      %127 = sbr.rel (%p125) target = $region24
    $region23: #{unet_forward.13} parent=5 // pred_region
      // Predicated region
      $region25: #{unet_forward.13} parent=23 // pred_check
        %p128 = pneg %p29
      $region26: #{unet_forward.13} parent=23 // pred_check_branch
        %130 = sbr.rel (%p128) target = $region28
      $region27: #{unet_forward.13} parent=23 // pred_region
        %p131 = scmp.lt.s32.totalorder %s9, 1
        %s132 = scalar_select %p131, %s9, 1
        %s133 = smul.addr %s132, 4
        %s134 = smul.addr %s133, 8
        %s135 = scalar_lea.vmem %s0, %s134
      $region28: #{unet_forward.13} parent=23 // pred_fallthru
        _
    $region24: #{unet_forward.13} parent=5 // pred_fallthru
      _
    %p136 = scmp.le.s32.totalorder 1, %s9
    %p137 = scmp.lt.s32.totalorder %s9, 3
    %p138 = pnand %p136, %p137
    %p139 = pneg %p138
    // Predicated region
    $region29: #{unet_forward.13} parent=5 // pred_check
      _
    $region30: #{unet_forward.13} parent=5 // pred_check_branch
      %141 = sbr.rel (%p138) target = $region32
    $region31: #{unet_forward.13} parent=5 // pred_region
      %s142 = ssub.s32 %s9, 1
      %p143 = scmp.lt.s32.totalorder %s14, 1
      %s144 = scalar_select %p143, %s14, 1
      %s145 = smul.addr %s144, 4
      %s146 = smul.addr %s145, 8
      %s147 = scalar_lea.vmem %s0, %s146
      %p148 = pneg %p35
      %p149 = pneg %p32
      %p150 = pneg %p56
      %p151 = pneg %p53
      %p152 = pneg %p77
      %p153 = pneg %p74
      %p154 = pneg %p103
      %p155 = pneg %p100
      %p156 = scmp.lt.s32.totalorder %s14, 1
      %s157 = scalar_select %p156, %s14, 1
      %s158 = smul.addr %s157, 2
      %s159 = smul.addr %s158, 8
      %s160 = scalar_lea.vmem %s3, %s159
      %p161 = scmp.lt.s32.totalorder %s14, 1
      %s162 = scalar_select %p161, %s14, 1
      %s163 = smul.addr %s162, 4
      %s164 = smul.addr %s163, 8
      %s165 = scalar_lea.vmem %s0, %s164
      %p166 = scmp.lt.s32.totalorder %s14, 1
      %s167 = scalar_select %p166, %s14, 1
      %s168 = smul.addr %s167, 2
      %s169 = smul.addr %s168, 8
      %s170 = scalar_lea.vmem %s3, %s169
      %v171 = vld [vmem:[%s1] sm:$0xff]
      %v172 = vld [vmem:[%s1 + $0x8] sm:$0xff]
      %v173 = vld [vmem:[%s165] sm:$0xff]
      %v174 = vld [vmem:[%s165 + $0x8] sm:$0xff]
      %v175 = vld [vmem:[%s165 + $0x10] sm:$0xff]
      %v176 = vld [vmem:[%s165 + $0x18] sm:$0xff]
      %v177 = vld [vmem:[%s2] sm:$0xff]
      %v178 = vld [vmem:[%s2 + $0x8] sm:$0xff]
      %180 = vset.pattern.permute.xlu0 0
      %181 = vperm.xlu0 %180, %v177
      %v182 = vpop.permute.xlu0 %181
      %185 = vset.pattern.permute.xlu0 0
      %186 = vperm.xlu0 %185, %v178
      %v187 = vpop.permute.xlu0 %186
      %vm189 = vcmask 261120
      %v191 = vsel %vm189, %v171, 0
      %v194 = vsel %vm189, %v172, 0
      %196 = vmatprep.subr.mxu0 0.0
      %197 = vmatpush1.msra.mxu0 %v173
      %198 = vmatprep.subr.mxu0 0.0
      %199 = vmatpush1.msra.mxu0 %v174
      %200 = vmatprep.subr.mxu0 0.0
      %201 = vmatpush1.msra.mxu0 %v175
      %202 = vmatprep.subr.mxu0 0.0
      %203 = vmatpush1.msra.mxu0 %v176
      %204 = vmatprep.subr.mxu0 0.0
      %205 = vmatpush1.msra.mxu0 0.0
      %206 = vmatprep.subr.mxu0 0.0
      %207 = vmatpush1.msra.mxu0 0.0
      %208 = vmatprep.subr.mxu0 0.0
      %209 = vmatpush1.msra.mxu0 0.0
      %210 = vmatprep.subr.mxu0 0.0
      %211 = vmatpush1.msra.mxu0 0.0
      %212 = vmatprep.subr.mxu0 0.0
      %213 = vmatpush1.msra.mxu0 0.0
      %214 = vmatprep.subr.mxu0 0.0
      %215 = vmatpush1.msra.mxu0 0.0
      %216 = vmatprep.subr.mxu0 0.0
      %217 = vmatpush1.msra.mxu0 0.0
      %218 = vmatprep.subr.mxu0 0.0
      %219 = vmatpush1.msra.mxu0 0.0
      %220 = vmatprep.subr.mxu0 0.0
      %221 = vmatpush1.msra.mxu0 0.0
      %222 = vmatprep.subr.mxu0 0.0
      %223 = vmatpush1.msra.mxu0 0.0
      %224 = vmatprep.subr.mxu0 0.0
      %225 = vmatpush1.msra.mxu0 0.0
      %226 = vmatprep.subr.mxu0 0.0
      %227 = vmatpush1.msra.mxu0 0.0
      %228 = vmatprep.subr.mxu0 0.0
      %229 = vmatpush1.msra.mxu0 0.0
      %230 = vmatprep.subr.mxu0 0.0
      %231 = vmatpush1.msra.mxu0 0.0
      %232 = vmatprep.subr.mxu0 0.0
      %233 = vmatpush1.msra.mxu0 0.0
      %234 = vmatprep.subr.mxu0 0.0
      %235 = vmatpush1.msra.mxu0 0.0
      %236 = vmatprep.subr.mxu0 0.0
      %237 = vmatpush1.msra.mxu0 0.0
      %238 = vmatprep.subr.mxu0 0.0
      %239 = vmatpush1.msra.mxu0 0.0
      %240 = vmatprep.subr.mxu0 0.0
      %241 = vmatpush1.msra.mxu0 0.0
      %242 = vmatprep.subr.mxu0 0.0
      %243 = vmatpush1.msra.mxu0 0.0
      %244 = vmatprep.subr.mxu0 0.0
      %245 = vmatpush1.msra.mxu0 0.0
      %246 = vmatprep.subr.mxu0 0.0
      %247 = vmatpush1.msra.mxu0 0.0
      %248 = vmatprep.subr.mxu0 0.0
      %249 = vmatpush1.msra.mxu0 0.0
      %250 = vmatprep.subr.mxu0 0.0
      %251 = vmatpush1.msra.mxu0 0.0
      %252 = vmatprep.subr.mxu0 0.0
      %253 = vmatpush1.msra.mxu0 0.0
      %254 = vmatprep.subr.mxu0 0.0
      %255 = vmatpush1.msra.mxu0 0.0
      %256 = vmatprep.subr.mxu0 0.0
      %257 = vmatpush1.msra.mxu0 0.0
      %258 = vmatprep.subr.mxu0 0.0
      %259 = vmatpush1.msra.mxu0 0.0
      %260 = vmatprep.mubr.f32.mxu0 0.0
      %261 = vmatmul.mubr.f32.gmra.mrb[0].mxu0 %v191
      %v262 = vpop.f32.mrb[0].mxu0
      %v263 = vadd.f32 %v182, %v262
      %v264 = vpop.f32.mrb[0].mxu0
      %265 = vmatprep.mubr.f32.mxu0 0.0
      %266 = vmatmul.mubr.f32.gmra.mrb[0].mxu0 %v194
      %v267 = vpop.f32.mrb[0].mxu0
      %v268 = vadd.f32 %v187, %v267
      %v269 = vpop.f32.mrb[0].mxu0
      %270 = vdwg.mxu0
      %271 = vst [vmem:[%s170] sm:$0xff] %v263
      %272 = vst [vmem:[%s170 + $0x8] sm:$0xff] %v268
      %p273 = scmp.lt.s32.totalorder %s14, 1
      %s274 = scalar_select %p273, %s14, 1
      %s275 = smul.addr %s274, 2
      %s276 = smul.addr %s275, 8
      %s277 = scalar_lea.vmem %s3, %s276
      // Predicated region
      $region33: #{unet_forward.13} parent=31 // pred_check
        %p278 = pneg %p100
      $region34: #{unet_forward.13} parent=31 // pred_check_branch
        %280 = sbr.rel (%p278) target = $region36
      $region35: #{unet_forward.13} parent=31 // pred_region
        _
      $region36: #{unet_forward.13} parent=31 // pred_fallthru
        _
    $region32: #{unet_forward.13} parent=5 // pred_fallthru
      _
    %p281 = scmp.le.s32.totalorder 2, %s9
    // Predicated region
    $region37: #{unet_forward.13} parent=5 // pred_check
      %p282 = pneg %p281
    $region38: #{unet_forward.13} parent=5 // pred_check_branch
      %284 = sbr.rel (%p282) target = $region40
    $region39: #{unet_forward.13} parent=5 // pred_region
      %s285 = ssub.s32 %s9, 2
      // Predicated region
      $region41: #{unet_forward.13} parent=39 // pred_check
        %p286 = pneg %p106
      $region42: #{unet_forward.13} parent=39 // pred_check_branch
        %288 = sbr.rel (%p286) target = $region44
      $region43: #{unet_forward.13} parent=39 // pred_region
        %p289 = scmp.lt.s32.totalorder %s15, 1
        %s290 = scalar_select %p289, %s15, 1
        %s291 = smul.addr %s290, 2
        %s292 = smul.addr %s291, 8
        %s293 = scalar_lea.vmem %s3, %s292
      $region44: #{unet_forward.13} parent=39 // pred_fallthru
        _
    $region40: #{unet_forward.13} parent=5 // pred_fallthru
      _
  $region6: #{unet_forward.13} parent=0 // loop_footer
    %s13 = sadd.s32 1, %s9
  $region7: #{unet_forward.13} parent=0 // loop_footer_branch
    %8 = sbr.rel target = $region3
  $region8: #{unet_forward.13} parent=0 // loop_exit
    _

// kernel: unet_forward.14
$region0: #{unet_forward.14}
  #allocation0 [shape = 'u32[]', space=smem, size = 0x4, offset = 0x4, fixed_abs, tag = 'smem constant byte address 0x4 - core index']
  #allocation1 [shape = 'u32[144,128]{1,0:T(1,128)}', space=vmem, size = 0x12000, scoped, tag = 'internal scratch']
  #allocation2 [shape = 'f32[145,128]{1,0:T(8,128)}', space=vmem, size = 0x13000, scoped, tag = 'scratch operand']
  %s0 = inlined_call_operand.vmem [shape: f32[2,16,128], index: 0, kind: input, shape index: {}]
  %s1 = inlined_call_operand.vmem [shape: f32[16,145], index: 1, kind: input, shape index: {}]
  %s2 = inlined_call_operand.vmem [shape: f32[1,128], index: 2, kind: input, shape index: {}]
  %s3 = inlined_call_operand.vmem [shape: f32[2,16,128], index: 3, kind: output, shape index: {}]
  %s4 = sld [smem:[#allocation0]]
  $region45: #{unet_forward.14} parent=0
    _
  %s6 = ssub.s32 1, %s4
  %s7 = scalar_select 0, %s6, %s4
  loop: start=0, step=1, limit=4
  $region2: #{unet_forward.14} parent=0 // loop_pre_header
    _
  $region3: #{unet_forward.14} parent=0 // loop_header
    %s9 = sphi 0, %s13
    %p10 = scmp.ge.s32.totalorder %s9, 4
    %s16 = sphi 0, %s28
    %s17 = sphi 0, %s24
    %s18 = sphi 0, %s16
    %s19 = sphi 0, %s17
    %s20 = sphi 0, %s18
    %s21 = sphi 0, %s19
    %s31 = sphi 0, %s33
    %s34 = sphi 0, %s31
    %s35 = sphi 0, %s34
    %s51 = sphi 0, %s35
    %s57 = sphi 0, %s59
    %s60 = sphi 0, %s57
    %s61 = sphi 0, %s60
    %s77 = sphi 0, %s61
    %s81 = sphi 0, %s81
    %s83 = sphi 0, %s81
    %s84 = sphi 0, %s83
    %s98 = sphi 0, %s84
    %s106 = sphi 0, %s108
    %s109 = sphi 0, %s106
    %s110 = sphi 0, %s109
    %s126 = sphi 0, %s110
  $region4: #{unet_forward.14} parent=0 // loop_header_branch
    %12 = sbr.rel (%p10) target = $region8
  $region5: #{unet_forward.14} parent=0 // loop_body
    %s14 = ssub.s32 %s9, 1
    %s15 = ssub.s32 %s9, 2
    %s22 = sadd.s32 1, %s17
    %p23 = scmp.ge.s32.totalorder %s22, 1
    %s24 = scalar_select %p23, 0, %s22
    %s25 = sadd.s32 1, %s16
    %s26 = scalar_select %p23, %s25, %s16
    %p27 = scmp.ge.s32.totalorder %s26, 2
    %s28 = scalar_select %p27, 0, %s26
    %s29 = ssub.s32 %s16, %s28
    %p30 = scmp.eq.s32.totalorder %s29, 0
    %s32 = sadd.s32 %s31, 1
    %s33 = scalar_select %p30, %s31, %s32
    %p36 = pneg %p30
    %p37 = scmp.eq.s32.totalorder %s9, 1
    %p38 = por %p36, %p37
    %p39 = scmp.ne.s32.totalorder %s31, %s34
    %p40 = scmp.eq.s32.totalorder %s9, 0
    %p41 = por %p39, %p40
    %p42 = scmp.ne.s32.totalorder %s31, %s34
    %p43 = scmp.eq.s32.totalorder %s14, 1
    %p44 = por %p42, %p43
    %p45 = scmp.ne.s32.totalorder %s34, %s35
    %p46 = scmp.eq.s32.totalorder %s14, 0
    %p47 = por %p45, %p46
    %p48 = scmp.ne.s32.totalorder %s34, %s35
    %p49 = scmp.eq.s32.totalorder %s15, 1
    %p50 = por %p48, %p49
    %p52 = scmp.ne.s32.totalorder %s35, %s51
    %p53 = scmp.eq.s32.totalorder %s15, 0
    %p54 = por %p52, %p53
    %s55 = ssub.s32 %s17, %s24
    %p56 = scmp.eq.s32.totalorder %s55, 0
    %s58 = sadd.s32 %s57, 1
    %s59 = scalar_select %p56, %s57, %s58
    %p62 = pneg %p56
    %p63 = scmp.eq.s32.totalorder %s9, 1
    %p64 = por %p62, %p63
    %p65 = scmp.ne.s32.totalorder %s57, %s60
    %p66 = scmp.eq.s32.totalorder %s9, 0
    %p67 = por %p65, %p66
    %p68 = scmp.ne.s32.totalorder %s57, %s60
    %p69 = scmp.eq.s32.totalorder %s14, 1
    %p70 = por %p68, %p69
    %p71 = scmp.ne.s32.totalorder %s60, %s61
    %p72 = scmp.eq.s32.totalorder %s14, 0
    %p73 = por %p71, %p72
    %p74 = scmp.ne.s32.totalorder %s60, %s61
    %p75 = scmp.eq.s32.totalorder %s15, 1
    %p76 = por %p74, %p75
    %p78 = scmp.ne.s32.totalorder %s61, %s77
    %p79 = scmp.eq.s32.totalorder %s15, 0
    %p80 = por %p78, %p79
    %s82 = sadd.s32 %s81, 1
    %p85 = scmp.eq.s32.totalorder %s9, 1
    %p86 = scmp.ne.s32.totalorder %s81, %s83
    %p87 = scmp.eq.s32.totalorder %s9, 0
    %p88 = por %p86, %p87
    %p89 = scmp.ne.s32.totalorder %s81, %s83
    %p90 = scmp.eq.s32.totalorder %s14, 1
    %p91 = por %p89, %p90
    %p92 = scmp.ne.s32.totalorder %s83, %s84
    %p93 = scmp.eq.s32.totalorder %s14, 0
    %p94 = por %p92, %p93
    %p95 = scmp.ne.s32.totalorder %s83, %s84
    %p96 = scmp.eq.s32.totalorder %s15, 1
    %p97 = por %p95, %p96
    %p99 = scmp.ne.s32.totalorder %s84, %s98
    %p100 = scmp.eq.s32.totalorder %s15, 0
    %p101 = por %p99, %p100
    %s102 = ssub.s32 %s16, %s28
    %s103 = ssub.s32 %s17, %s24
    %s104 = sor.u32 %s102, %s103
    %p105 = scmp.eq.s32.totalorder %s104, 0
    %s107 = sadd.s32 %s106, 1
    %s108 = scalar_select %p105, %s106, %s107
    %p111 = pneg %p105
    %p112 = scmp.eq.s32.totalorder %s9, 1
    %p113 = por %p111, %p112
    %p114 = scmp.ne.s32.totalorder %s106, %s109
    %p115 = scmp.eq.s32.totalorder %s9, 0
    %p116 = por %p114, %p115
    %p117 = scmp.ne.s32.totalorder %s106, %s109
    %p118 = scmp.eq.s32.totalorder %s14, 1
    %p119 = por %p117, %p118
    %p120 = scmp.ne.s32.totalorder %s109, %s110
    %p121 = scmp.eq.s32.totalorder %s14, 0
    %p122 = por %p120, %p121
    %p123 = scmp.ne.s32.totalorder %s109, %s110
    %p124 = scmp.eq.s32.totalorder %s15, 1
    %p125 = por %p123, %p124
    %p127 = scmp.ne.s32.totalorder %s110, %s126
    %p128 = scmp.eq.s32.totalorder %s15, 0
    %p129 = por %p127, %p128
    %p130 = scmp.le.s32.totalorder 1, %s9
    %p131 = scmp.lt.s32.totalorder %s9, 3
    %p132 = pnand %p130, %p131
    %p133 = pneg %p132
    // Predicated region
    $region9: #{unet_forward.14} parent=5 // pred_check
      _
    $region10: #{unet_forward.14} parent=5 // pred_check_branch
      %135 = sbr.rel (%p132) target = $region12
    $region11: #{unet_forward.14} parent=5 // pred_region
      %s136 = ssub.s32 %s9, 1
      // Predicated region
      $region13: #{unet_forward.14} parent=11 // pred_check
        %p137 = pneg %p73
      $region14: #{unet_forward.14} parent=11 // pred_check_branch
        %139 = sbr.rel (%p137) target = $region16
      $region15: #{unet_forward.14} parent=11 // pred_region
        %s140 = smul.u32 2, %s19
        %p141 = scmp.lt.s32.totalorder %s140, 1
        %s142 = scalar_select %p141, %s140, 1
        %s143 = smul.addr %s142, 2
        %s144 = smul.addr %s143, 8
        %s145 = scalar_lea.vmem %s1, %s144
        %s146 = smul.u32 2, %s19
      $region16: #{unet_forward.14} parent=11 // pred_fallthru
        _
      // Predicated region
      $region17: #{unet_forward.14} parent=11 // pred_check
        %p147 = pneg %p94
      $region18: #{unet_forward.14} parent=11 // pred_check_branch
        %149 = sbr.rel (%p147) target = $region20
      $region19: #{unet_forward.14} parent=11 // pred_region
        _
      $region20: #{unet_forward.14} parent=11 // pred_fallthru
        _
    $region12: #{unet_forward.14} parent=5 // pred_fallthru
      _
    %p150 = scmp.lt.s32.totalorder %s9, 2
    // Predicated region
    $region21: #{unet_forward.14} parent=5 // pred_check
      %p151 = pneg %p150
    $region22: #{unet_forward.14} parent=5 // pred_check_branch
      %153 = sbr.rel (%p151) target = $region24
    $region23: #{unet_forward.14} parent=5 // pred_region
      // Predicated region
      $region25: #{unet_forward.14} parent=23 // pred_check
        %p154 = pneg %p41
      $region26: #{unet_forward.14} parent=23 // pred_check_branch
        %156 = sbr.rel (%p154) target = $region28
      $region27: #{unet_forward.14} parent=23 // pred_region
        %p157 = scmp.lt.s32.totalorder %s16, 1
        %s158 = scalar_select %p157, %s16, 1
        %s159 = smul.addr %s158, 2
        %s160 = smul.addr %s159, 8
        %s161 = scalar_lea.vmem %s0, %s160
      $region28: #{unet_forward.14} parent=23 // pred_fallthru
        _
    $region24: #{unet_forward.14} parent=5 // pred_fallthru
      _
    %p162 = scmp.le.s32.totalorder 1, %s9
    %p163 = scmp.lt.s32.totalorder %s9, 3
    %p164 = pnand %p162, %p163
    %p165 = pneg %p164
    // Predicated region
    $region29: #{unet_forward.14} parent=5 // pred_check
      _
    $region30: #{unet_forward.14} parent=5 // pred_check_branch
      %167 = sbr.rel (%p164) target = $region32
    $region31: #{unet_forward.14} parent=5 // pred_region
      %s168 = ssub.s32 %s9, 1
      %p169 = scmp.lt.s32.totalorder %s18, 1
      %s170 = scalar_select %p169, %s18, 1
      %s171 = smul.addr %s170, 2
      %s172 = smul.addr %s171, 8
      %s173 = scalar_lea.vmem %s0, %s172
      %p174 = pneg %p47
      %p175 = pneg %p44
      %s176 = smul.u32 2, %s19
      %p177 = scmp.lt.s32.totalorder %s176, 1
      %s178 = scalar_select %p177, %s176, 1
      %s179 = smul.addr %s178, 2
      %s180 = smul.addr %s179, 8
      %s181 = scalar_lea.vmem %s1, %s180
      %p182 = pneg %p73
      %p183 = pneg %p70
      %p184 = pneg %p94
      %p185 = pneg %p91
      %p186 = pneg %p122
      %p187 = pneg %p119
      %s188 = smul.u32 2, %s19
      %p189 = scmp.lt.s32.totalorder %s18, 1
      %s190 = scalar_select %p189, %s18, 1
      %p191 = scmp.lt.s32.totalorder %s188, 1
      %s192 = scalar_select %p191, %s188, 1
      %s193 = smul.addr %s190, 2
      %s194 = sadd.s32 %s192, %s193
      %s195 = smul.addr %s194, 8
      %s196 = scalar_lea.vmem %s3, %s195
      %p197 = scmp.lt.s32.totalorder %s18, 1
      %s198 = scalar_select %p197, %s18, 1
      %s199 = smul.addr %s198, 2
      %s200 = smul.addr %s199, 8
      %s201 = scalar_lea.vmem %s0, %s200
      %s202 = smul.u32 2, %s19
      %p203 = scmp.lt.s32.totalorder %s202, 1
      %s204 = scalar_select %p203, %s202, 1
      %s205 = smul.addr %s204, 2
      %s206 = smul.addr %s205, 8
      %s207 = scalar_lea.vmem %s1, %s206
      %s208 = smul.u32 2, %s19
      %s209 = smul.u32 2, %s19
      %p210 = scmp.lt.s32.totalorder %s18, 1
      %s211 = scalar_select %p210, %s18, 1
      %p212 = scmp.lt.s32.totalorder %s209, 1
      %s213 = scalar_select %p212, %s209, 1
      %s214 = smul.addr %s211, 2
      %s215 = sadd.s32 %s213, %s214
      %s216 = smul.addr %s215, 8
      %s217 = scalar_lea.vmem %s3, %s216
      %s218 = smul.u32 2, %s19
      %v219 = vld [vmem:[%s201] sm:$0xff]
      %v220 = vld [vmem:[%s201 + $0x8] sm:$0xff]
      %221 = vrot.lane.b32.xlu0 %v219, 11
      %v222 = vpop.permute.xlu0 %221
      %223 = vrot.lane.b32.xlu0 %v220, 11
      %v224 = vpop.permute.xlu0 %223
      %225 = vst [vmem:[#allocation2] sm:$0xff] %v222
      %226 = vst [vmem:[#allocation2 + $0x8] sm:$0xff] %v224
      %227 = vrot.lane.b32.xlu0 %v219, 10
      %v228 = vpop.permute.xlu0 %227
      %229 = vrot.lane.b32.xlu0 %v220, 10
      %v230 = vpop.permute.xlu0 %229
      %231 = vst [vmem:[#allocation2 + $0x10] sm:$0xff] %v228
      %232 = vst [vmem:[#allocation2 + $0x18] sm:$0xff] %v230
      %233 = vrot.lane.b32.xlu0 %v219, 9
      %v234 = vpop.permute.xlu0 %233
      %235 = vrot.lane.b32.xlu0 %v220, 9
      %v236 = vpop.permute.xlu0 %235
      %237 = vst [vmem:[#allocation2 + $0x20] sm:$0xff] %v234
      %238 = vst [vmem:[#allocation2 + $0x28] sm:$0xff] %v236
      %239 = vrot.lane.b32.xlu0 %v219, 1
      %v240 = vpop.permute.xlu0 %239
      %241 = vrot.lane.b32.xlu0 %v220, 1
      %v242 = vpop.permute.xlu0 %241
      %243 = vst [vmem:[#allocation2 + $0x30] sm:$0xff] %v240
      %244 = vst [vmem:[#allocation2 + $0x38] sm:$0xff] %v242
      %245 = vst [vmem:[#allocation2 + $0x40] sm:$0xff] %v219
      %246 = vst [vmem:[#allocation2 + $0x48] sm:$0xff] %v220
      %247 = vrot.lane.b32.xlu0 %v219, 127
      %v248 = vpop.permute.xlu0 %247
      %249 = vrot.lane.b32.xlu0 %v220, 127
      %v250 = vpop.permute.xlu0 %249
      %251 = vst [vmem:[#allocation2 + $0x50] sm:$0xff] %v248
      %252 = vst [vmem:[#allocation2 + $0x58] sm:$0xff] %v250
      %253 = vrot.lane.b32.xlu0 %v219, 119
      %v254 = vpop.permute.xlu0 %253
      %255 = vrot.lane.b32.xlu0 %v220, 119
      %v256 = vpop.permute.xlu0 %255
      %257 = vst [vmem:[#allocation2 + $0x60] sm:$0xff] %v254
      %258 = vst [vmem:[#allocation2 + $0x68] sm:$0xff] %v256
      %259 = vrot.lane.b32.xlu0 %v219, 118
      %v260 = vpop.permute.xlu0 %259
      %261 = vrot.lane.b32.xlu0 %v220, 118
      %v262 = vpop.permute.xlu0 %261
      %263 = vst [vmem:[#allocation2 + $0x70] sm:$0xff] %v260
      %264 = vst [vmem:[#allocation2 + $0x78] sm:$0xff] %v262
      %265 = vrot.lane.b32.xlu0 %v219, 117
      %v266 = vpop.permute.xlu0 %265
      %267 = vrot.lane.b32.xlu0 %v220, 117
      %v268 = vpop.permute.xlu0 %267
      %269 = vst [vmem:[#allocation2 + $0x80] sm:$0xff] %v266
      %270 = vst [vmem:[#allocation2 + $0x88] sm:$0xff] %v268
      %v271 = vld [vmem:[%s2] sm:$0x1]
      %272 = vst [vmem:[#allocation2 + $0x90] sm:$0x1] %v271
      %v273 = vld [vmem:[%s207] sm:$0xff]
      %v274 = vld [vmem:[%s207 + $0x8] sm:$0xff]
      %v275 = vld [vmem:[%s207 + $0x10] sm:$0xff]
      %v276 = vld [vmem:[%s207 + $0x18] sm:$0xff]
      %v277 = vld [vmem:[#allocation2] sm:$0xff]
      %v278 = vld [vmem:[#allocation2 + $0x8] sm:$0xff]
      %v279 = vld [vmem:[#allocation2 + $0x10] sm:$0xff]
      %v280 = vld [vmem:[#allocation2 + $0x18] sm:$0xff]
      %v281 = vld [vmem:[#allocation2 + $0x20] sm:$0xff]
      %v282 = vld [vmem:[#allocation2 + $0x28] sm:$0xff]
      %v283 = vld [vmem:[#allocation2 + $0x30] sm:$0xff]
      %v284 = vld [vmem:[#allocation2 + $0x38] sm:$0xff]
      %v285 = vld [vmem:[#allocation2 + $0x40] sm:$0xff]
      %v286 = vld [vmem:[#allocation2 + $0x48] sm:$0xff]
      %v287 = vld [vmem:[#allocation2 + $0x50] sm:$0xff]
      %v288 = vld [vmem:[#allocation2 + $0x58] sm:$0xff]
      %v289 = vld [vmem:[#allocation2 + $0x60] sm:$0xff]
      %v290 = vld [vmem:[#allocation2 + $0x68] sm:$0xff]
      %v291 = vld [vmem:[#allocation2 + $0x70] sm:$0xff]
      %v292 = vld [vmem:[#allocation2 + $0x78] sm:$0xff]
      %v293 = vld [vmem:[#allocation2 + $0x80] sm:$0xff]
      %v294 = vld [vmem:[#allocation2 + $0x88] sm:$0xff]
      %v295 = vld [vmem:[#allocation2 + $0x90] sm:$0x1]
      %vm296 = vcmask 138240
      %v298 = vsel %vm296, %v274, 0
      %v301 = vsel %vm296, %v276, 0
      %vm303 = vcmask 1040384
      %v305 = vsel %vm303, %v295, 0
      %307 = vmatprep.subr.mxu0 0.0
      %308 = vmatpush1.msra.mxu0 %v277
      %309 = vmatprep.subr.mxu0 0.0
      %310 = vmatpush1.msra.mxu0 %v278
      %311 = vmatprep.subr.mxu0 0.0
      %312 = vmatpush1.msra.mxu0 %v279
      %313 = vmatprep.subr.mxu0 0.0
      %314 = vmatpush1.msra.mxu0 %v280
      %315 = vmatprep.subr.mxu0 0.0
      %316 = vmatpush1.msra.mxu0 %v281
      %317 = vmatprep.subr.mxu0 0.0
      %318 = vmatpush1.msra.mxu0 %v282
      %319 = vmatprep.subr.mxu0 0.0
      %320 = vmatpush1.msra.mxu0 %v283
      %321 = vmatprep.subr.mxu0 0.0
      %322 = vmatpush1.msra.mxu0 %v284
      %323 = vmatprep.subr.mxu0 0.0
      %324 = vmatpush1.msra.mxu0 %v285
      %325 = vmatprep.subr.mxu0 0.0
      %326 = vmatpush1.msra.mxu0 %v286
      %327 = vmatprep.subr.mxu0 0.0
      %328 = vmatpush1.msra.mxu0 %v287
      %329 = vmatprep.subr.mxu0 0.0
      %330 = vmatpush1.msra.mxu0 %v288
      %331 = vmatprep.subr.mxu0 0.0
      %332 = vmatpush1.msra.mxu0 %v289
      %333 = vmatprep.subr.mxu0 0.0
      %334 = vmatpush1.msra.mxu0 %v290
      %335 = vmatprep.subr.mxu0 0.0
      %336 = vmatpush1.msra.mxu0 %v291
      %337 = vmatprep.subr.mxu0 0.0
      %338 = vmatpush1.msra.mxu0 %v292
      %339 = vmatprep.subr.mxu0 0.0
      %340 = vmatpush1.msra.mxu0 %v293
      %341 = vmatprep.subr.mxu0 0.0
      %342 = vmatpush1.msra.mxu0 %v294
      %343 = vmatprep.subr.mxu0 0.0
      %344 = vmatpush1.msra.mxu0 %v305
      %345 = vmatprep.subr.mxu0 0.0
      %346 = vmatpush1.msra.mxu0 0.0
      %347 = vmatprep.subr.mxu0 0.0
      %348 = vmatpush1.msra.mxu0 0.0
      %349 = vmatprep.subr.mxu0 0.0
      %350 = vmatpush1.msra.mxu0 0.0
      %351 = vmatprep.subr.mxu0 0.0
      %352 = vmatpush1.msra.mxu0 0.0
      %353 = vmatprep.subr.mxu0 0.0
      %354 = vmatpush1.msra.mxu0 0.0
      %355 = vmatprep.subr.mxu0 0.0
      %356 = vmatpush1.msra.mxu0 0.0
      %357 = vmatprep.subr.mxu0 0.0
      %358 = vmatpush1.msra.mxu0 0.0
      %359 = vmatprep.subr.mxu0 0.0
      %360 = vmatpush1.msra.mxu0 0.0
      %361 = vmatprep.subr.mxu0 0.0
      %362 = vmatpush1.msra.mxu0 0.0
      %363 = vmatprep.subr.mxu0 0.0
      %364 = vmatpush1.msra.mxu0 0.0
      %365 = vmatprep.subr.mxu0 0.0
      %366 = vmatpush1.msra.mxu0 0.0
      %367 = vmatprep.subr.mxu0 0.0
      %368 = vmatpush1.msra.mxu0 0.0
      %369 = vmatprep.subr.mxu0 0.0
      %370 = vmatpush1.msra.mxu0 0.0
      %371 = vmatprep.mubr.f32.mxu0 %v298
      %372 = vmatmul.mubr.f32.gmra.mrb[0].mxu0 %v273
      %v373 = vpop.f32.mrb[0].mxu0
      %v374 = vadd.f32 0.0, %v373
      %v375 = vpop.f32.mrb[0].mxu0
      %376 = vmatprep.mubr.f32.mxu0 %v301
      %377 = vmatmul.mubr.f32.gmra.mrb[0].mxu0 %v275
      %v378 = vpop.f32.mrb[0].mxu0
      %v379 = vadd.f32 0.0, %v378
      %v380 = vpop.f32.mrb[0].mxu0
      %381 = vdwg.mxu0
      %v382 = vld [vmem:[%s2] sm:$0x1]
      %v384 = vlaneseq
      %v385 = vshrl.u32 %v384, 7
      %v386 = vsub.s32 0, %v385
      %v387 = vrot.slane %v382, %v386
      %v389 = vmul.f32 %v374, %v387
      %v390 = vmul.f32 %v379, %v387
      %391 = vadd.xlane.f32.xlu0 %v389
      %v392 = vpop.xlane.xlu0 %391
      %393 = vadd.xlane.f32.xlu0 %v390
      %v394 = vpop.xlane.xlu0 %393
      %v395 = vmul.f32 %v392, 0.015625
      %v396 = vmul.f32 %v394, 0.015625
      %v397 = vmul.f32 %v389, %v374
      %v398 = vmul.f32 %v390, %v379
      %399 = vadd.xlane.f32.xlu0 %v397
      %v400 = vpop.xlane.xlu0 %399
      %401 = vadd.xlane.f32.xlu0 %v398
      %v402 = vpop.xlane.xlu0 %401
      %v403 = vmul.f32 %v400, 0.015625
      %v404 = vmul.f32 %v402, 0.015625
      %v405 = vmul.f32 %v395, %v395
      %v406 = vmul.f32 %v396, %v396
      %v407 = vsub.f32 %v403, %v405
      %v408 = vsub.f32 %v404, %v406
      %v409 = vsub.f32 %v374, %v395
      %v410 = vsub.f32 %v379, %v396
      %v411 = vmul.f32 %v409, %v387
      %v412 = vmul.f32 %v410, %v387
      %v413 = vmax.f32 %v407, 0.0
      %v414 = vmax.f32 %v408, 0.0
      %v415 = vadd.f32 %v413, 1e-05
      %v416 = vadd.f32 %v414, 1e-05
      %v417 = vrsqrt.pop %v415
      %v418 = vrsqrt.pop %v416
      %v419 = vmul.f32 %v411, %v417
      %v420 = vmul.f32 %v412, %v418
      %v421 = vmax.f32 %v419, 0.0
      %v422 = vmax.f32 %v420, 0.0
      %423 = vst [vmem:[%s217] sm:$0xff] %v421
      %424 = vst [vmem:[%s217 + $0x8] sm:$0xff] %v422
      %s425 = smul.u32 2, %s19
      %p426 = scmp.lt.s32.totalorder %s18, 1
      %s427 = scalar_select %p426, %s18, 1
      %p428 = scmp.lt.s32.totalorder %s425, 1
      %s429 = scalar_select %p428, %s425, 1
      %s430 = smul.addr %s427, 2
      %s431 = sadd.s32 %s429, %s430
      %s432 = smul.addr %s431, 8
      %s433 = scalar_lea.vmem %s3, %s432
      // Predicated region
      $region33: #{unet_forward.14} parent=31 // pred_check
        %p434 = pneg %p119
      $region34: #{unet_forward.14} parent=31 // pred_check_branch
        %436 = sbr.rel (%p434) target = $region36
      $region35: #{unet_forward.14} parent=31 // pred_region
        %s437 = smul.u32 2, %s19
      $region36: #{unet_forward.14} parent=31 // pred_fallthru
        _
    $region32: #{unet_forward.14} parent=5 // pred_fallthru
      _
    %p438 = scmp.le.s32.totalorder 2, %s9
    // Predicated region
    $region37: #{unet_forward.14} parent=5 // pred_check
      %p439 = pneg %p438
    $region38: #{unet_forward.14} parent=5 // pred_check_branch
      %441 = sbr.rel (%p439) target = $region40
    $region39: #{unet_forward.14} parent=5 // pred_region
      %s442 = ssub.s32 %s9, 2
      // Predicated region
      $region41: #{unet_forward.14} parent=39 // pred_check
        %p443 = pneg %p125
      $region42: #{unet_forward.14} parent=39 // pred_check_branch
        %445 = sbr.rel (%p443) target = $region44
      $region43: #{unet_forward.14} parent=39 // pred_region
        %s446 = smul.u32 2, %s21
        %p447 = scmp.lt.s32.totalorder %s20, 1
        %s448 = scalar_select %p447, %s20, 1
        %p449 = scmp.lt.s32.totalorder %s446, 1
        %s450 = scalar_select %p449, %s446, 1
        %s451 = smul.addr %s448, 2
        %s452 = sadd.s32 %s450, %s451
        %s453 = smul.addr %s452, 8
        %s454 = scalar_lea.vmem %s3, %s453
      $region44: #{unet_forward.14} parent=39 // pred_fallthru
        _
    $region40: #{unet_forward.14} parent=5 // pred_fallthru
      _
  $region6: #{unet_forward.14} parent=0 // loop_footer
    %s13 = sadd.s32 1, %s9
  $region7: #{unet_forward.14} parent=0 // loop_footer_branch
    %8 = sbr.rel target = $region3
  $region8: #{unet_forward.14} parent=0 // loop_exit
    _

// kernel: unet_forward.15
$region0: #{unet_forward.15}
  #allocation0 [shape = 'u32[]', space=smem, size = 0x4, offset = 0x4, fixed_abs, tag = 'smem constant byte address 0x4 - core index']
  #allocation1 [shape = 'u32[144,128]{1,0:T(1,128)}', space=vmem, size = 0x12000, scoped, tag = 'internal scratch']
  %s0 = inlined_call_operand.vmem [shape: f32[2,64,128], index: 0, kind: input, shape index: {}]
  %s1 = inlined_call_operand.vmem [shape: f32[32,64], index: 1, kind: input, shape index: {}]
  %s2 = inlined_call_operand.vmem [shape: f32[32,1], index: 2, kind: input, shape index: {}]
  %s3 = inlined_call_operand.vmem [shape: f32[2,32,128], index: 3, kind: output, shape index: {}]
  %s4 = sld [smem:[#allocation0]]
  $region45: #{unet_forward.15} parent=0
    _
  %s6 = ssub.s32 1, %s4
  %s7 = scalar_select 0, %s6, %s4
  loop: start=0, step=1, limit=4
  $region2: #{unet_forward.15} parent=0 // loop_pre_header
    _
  $region3: #{unet_forward.15} parent=0 // loop_header
    %s9 = sphi 0, %s13
    %p10 = scmp.ge.s32.totalorder %s9, 4
    %s19 = sphi 0, %s21
    %s22 = sphi 0, %s19
    %s23 = sphi 0, %s22
    %s39 = sphi 0, %s23
    %s43 = sphi 0, %s43
    %s45 = sphi 0, %s43
    %s46 = sphi 0, %s45
    %s60 = sphi 0, %s46
    %s64 = sphi 0, %s64
    %s66 = sphi 0, %s64
    %s67 = sphi 0, %s66
    %s81 = sphi 0, %s67
    %s87 = sphi 0, %s89
    %s90 = sphi 0, %s87
    %s91 = sphi 0, %s90
    %s107 = sphi 0, %s91
  $region4: #{unet_forward.15} parent=0 // loop_header_branch
    %12 = sbr.rel (%p10) target = $region8
  $region5: #{unet_forward.15} parent=0 // loop_body
    %s14 = ssub.s32 %s9, 1
    %s15 = ssub.s32 %s9, 2
    %s16 = sadd.s32 %s9, 1
    %s17 = ssub.s32 %s9, %s16
    %p18 = scmp.eq.s32.totalorder %s17, 0
    %s20 = sadd.s32 %s19, 1
    %s21 = scalar_select %p18, %s19, %s20
    %p24 = pneg %p18
    %p25 = scmp.eq.s32.totalorder %s9, 1
    %p26 = por %p24, %p25
    %p27 = scmp.ne.s32.totalorder %s19, %s22
    %p28 = scmp.eq.s32.totalorder %s9, 0
    %p29 = por %p27, %p28
    %p30 = scmp.ne.s32.totalorder %s19, %s22
    %p31 = scmp.eq.s32.totalorder %s14, 1
    %p32 = por %p30, %p31
    %p33 = scmp.ne.s32.totalorder %s22, %s23
    %p34 = scmp.eq.s32.totalorder %s14, 0
    %p35 = por %p33, %p34
    %p36 = scmp.ne.s32.totalorder %s22, %s23
    %p37 = scmp.eq.s32.totalorder %s15, 1
    %p38 = por %p36, %p37
    %p40 = scmp.ne.s32.totalorder %s23, %s39
    %p41 = scmp.eq.s32.totalorder %s15, 0
    %p42 = por %p40, %p41
    %s44 = sadd.s32 %s43, 1
    %p47 = scmp.eq.s32.totalorder %s9, 1
    %p48 = scmp.ne.s32.totalorder %s43, %s45
    %p49 = scmp.eq.s32.totalorder %s9, 0
    %p50 = por %p48, %p49
    %p51 = scmp.ne.s32.totalorder %s43, %s45
    %p52 = scmp.eq.s32.totalorder %s14, 1
    %p53 = por %p51, %p52
    %p54 = scmp.ne.s32.totalorder %s45, %s46
    %p55 = scmp.eq.s32.totalorder %s14, 0
    %p56 = por %p54, %p55
    %p57 = scmp.ne.s32.totalorder %s45, %s46
    %p58 = scmp.eq.s32.totalorder %s15, 1
    %p59 = por %p57, %p58
    %p61 = scmp.ne.s32.totalorder %s46, %s60
    %p62 = scmp.eq.s32.totalorder %s15, 0
    %p63 = por %p61, %p62
    %s65 = sadd.s32 %s64, 1
    %p68 = scmp.eq.s32.totalorder %s9, 1
    %p69 = scmp.ne.s32.totalorder %s64, %s66
    %p70 = scmp.eq.s32.totalorder %s9, 0
    %p71 = por %p69, %p70
    %p72 = scmp.ne.s32.totalorder %s64, %s66
    %p73 = scmp.eq.s32.totalorder %s14, 1
    %p74 = por %p72, %p73
    %p75 = scmp.ne.s32.totalorder %s66, %s67
    %p76 = scmp.eq.s32.totalorder %s14, 0
    %p77 = por %p75, %p76
    %p78 = scmp.ne.s32.totalorder %s66, %s67
    %p79 = scmp.eq.s32.totalorder %s15, 1
    %p80 = por %p78, %p79
    %p82 = scmp.ne.s32.totalorder %s67, %s81
    %p83 = scmp.eq.s32.totalorder %s15, 0
    %p84 = por %p82, %p83
    %s85 = ssub.s32 %s9, %s16
    %p86 = scmp.eq.s32.totalorder %s85, 0
    %s88 = sadd.s32 %s87, 1
    %s89 = scalar_select %p86, %s87, %s88
    %p92 = pneg %p86
    %p93 = scmp.eq.s32.totalorder %s9, 1
    %p94 = por %p92, %p93
    %p95 = scmp.ne.s32.totalorder %s87, %s90
    %p96 = scmp.eq.s32.totalorder %s9, 0
    %p97 = por %p95, %p96
    %p98 = scmp.ne.s32.totalorder %s87, %s90
    %p99 = scmp.eq.s32.totalorder %s14, 1
    %p100 = por %p98, %p99
    %p101 = scmp.ne.s32.totalorder %s90, %s91
    %p102 = scmp.eq.s32.totalorder %s14, 0
    %p103 = por %p101, %p102
    %p104 = scmp.ne.s32.totalorder %s90, %s91
    %p105 = scmp.eq.s32.totalorder %s15, 1
    %p106 = por %p104, %p105
    %p108 = scmp.ne.s32.totalorder %s91, %s107
    %p109 = scmp.eq.s32.totalorder %s15, 0
    %p110 = por %p108, %p109
    %p111 = scmp.le.s32.totalorder 1, %s9
    %p112 = scmp.lt.s32.totalorder %s9, 3
    %p113 = pnand %p111, %p112
    %p114 = pneg %p113
    // Predicated region
    $region9: #{unet_forward.15} parent=5 // pred_check
      _
    $region10: #{unet_forward.15} parent=5 // pred_check_branch
      %116 = sbr.rel (%p113) target = $region12
    $region11: #{unet_forward.15} parent=5 // pred_region
      %s117 = ssub.s32 %s9, 1
      // Predicated region
      $region13: #{unet_forward.15} parent=11 // pred_check
        %p118 = pneg %p56
      $region14: #{unet_forward.15} parent=11 // pred_check_branch
        %120 = sbr.rel (%p118) target = $region16
      $region15: #{unet_forward.15} parent=11 // pred_region
        _
      $region16: #{unet_forward.15} parent=11 // pred_fallthru
        _
      // Predicated region
      $region17: #{unet_forward.15} parent=11 // pred_check
        %p121 = pneg %p77
      $region18: #{unet_forward.15} parent=11 // pred_check_branch
        %123 = sbr.rel (%p121) target = $region20
      $region19: #{unet_forward.15} parent=11 // pred_region
        _
      $region20: #{unet_forward.15} parent=11 // pred_fallthru
        _
    $region12: #{unet_forward.15} parent=5 // pred_fallthru
      _
    %p124 = scmp.lt.s32.totalorder %s9, 2
    // Predicated region
    $region21: #{unet_forward.15} parent=5 // pred_check
      %p125 = pneg %p124
    $region22: #{unet_forward.15} parent=5 // pred_check_branch
      %127 = sbr.rel (%p125) target = $region24
    $region23: #{unet_forward.15} parent=5 // pred_region
      // Predicated region
      $region25: #{unet_forward.15} parent=23 // pred_check
        %p128 = pneg %p29
      $region26: #{unet_forward.15} parent=23 // pred_check_branch
        %130 = sbr.rel (%p128) target = $region28
      $region27: #{unet_forward.15} parent=23 // pred_region
        %p131 = scmp.lt.s32.totalorder %s9, 1
        %s132 = scalar_select %p131, %s9, 1
        %s133 = smul.addr %s132, 8
        %s134 = smul.addr %s133, 8
        %s135 = scalar_lea.vmem %s0, %s134
      $region28: #{unet_forward.15} parent=23 // pred_fallthru
        _
    $region24: #{unet_forward.15} parent=5 // pred_fallthru
      _
    %p136 = scmp.le.s32.totalorder 1, %s9
    %p137 = scmp.lt.s32.totalorder %s9, 3
    %p138 = pnand %p136, %p137
    %p139 = pneg %p138
    // Predicated region
    $region29: #{unet_forward.15} parent=5 // pred_check
      _
    $region30: #{unet_forward.15} parent=5 // pred_check_branch
      %141 = sbr.rel (%p138) target = $region32
    $region31: #{unet_forward.15} parent=5 // pred_region
      %s142 = ssub.s32 %s9, 1
      %p143 = scmp.lt.s32.totalorder %s14, 1
      %s144 = scalar_select %p143, %s14, 1
      %s145 = smul.addr %s144, 8
      %s146 = smul.addr %s145, 8
      %s147 = scalar_lea.vmem %s0, %s146
      %p148 = pneg %p35
      %p149 = pneg %p32
      %p150 = pneg %p56
      %p151 = pneg %p53
      %p152 = pneg %p77
      %p153 = pneg %p74
      %p154 = pneg %p103
      %p155 = pneg %p100
      %p156 = scmp.lt.s32.totalorder %s14, 1
      %s157 = scalar_select %p156, %s14, 1
      %s158 = smul.addr %s157, 4
      %s159 = smul.addr %s158, 8
      %s160 = scalar_lea.vmem %s3, %s159
      %p161 = scmp.lt.s32.totalorder %s14, 1
      %s162 = scalar_select %p161, %s14, 1
      %s163 = smul.addr %s162, 8
      %s164 = smul.addr %s163, 8
      %s165 = scalar_lea.vmem %s0, %s164
      %p166 = scmp.lt.s32.totalorder %s14, 1
      %s167 = scalar_select %p166, %s14, 1
      %s168 = smul.addr %s167, 4
      %s169 = smul.addr %s168, 8
      %s170 = scalar_lea.vmem %s3, %s169
      %v171 = vld [vmem:[%s1] sm:$0xff]
      %v172 = vld [vmem:[%s1 + $0x8] sm:$0xff]
      %v173 = vld [vmem:[%s1 + $0x10] sm:$0xff]
      %v174 = vld [vmem:[%s1 + $0x18] sm:$0xff]
      %v175 = vld [vmem:[%s165] sm:$0xff]
      %v176 = vld [vmem:[%s165 + $0x8] sm:$0xff]
      %v177 = vld [vmem:[%s165 + $0x10] sm:$0xff]
      %v178 = vld [vmem:[%s165 + $0x18] sm:$0xff]
      %v179 = vld [vmem:[%s165 + $0x20] sm:$0xff]
      %v180 = vld [vmem:[%s165 + $0x28] sm:$0xff]
      %v181 = vld [vmem:[%s165 + $0x30] sm:$0xff]
      %v182 = vld [vmem:[%s165 + $0x38] sm:$0xff]
      %v183 = vld [vmem:[%s2] sm:$0xff]
      %v184 = vld [vmem:[%s2 + $0x8] sm:$0xff]
      %v185 = vld [vmem:[%s2 + $0x10] sm:$0xff]
      %v186 = vld [vmem:[%s2 + $0x18] sm:$0xff]
      %188 = vset.pattern.permute.xlu0 0
      %189 = vperm.xlu0 %188, %v183
      %v190 = vpop.permute.xlu0 %189
      %193 = vset.pattern.permute.xlu0 0
      %194 = vperm.xlu0 %193, %v184
      %v195 = vpop.permute.xlu0 %194
      %198 = vset.pattern.permute.xlu0 0
      %199 = vperm.xlu0 %198, %v185
      %v200 = vpop.permute.xlu0 %199
      %203 = vset.pattern.permute.xlu0 0
      %204 = vperm.xlu0 %203, %v186
      %v205 = vpop.permute.xlu0 %204
      %vm207 = vcmask 523264
      %v209 = vsel %vm207, %v171, 0
      %v212 = vsel %vm207, %v172, 0
      %v215 = vsel %vm207, %v173, 0
      %v218 = vsel %vm207, %v174, 0
      %220 = vmatprep.subr.mxu0 0.0
      %221 = vmatpush1.msra.mxu0 %v175
      %222 = vmatprep.subr.mxu0 0.0
      %223 = vmatpush1.msra.mxu0 %v176
      %224 = vmatprep.subr.mxu0 0.0
      %225 = vmatpush1.msra.mxu0 %v177
      %226 = vmatprep.subr.mxu0 0.0
      %227 = vmatpush1.msra.mxu0 %v178
      %228 = vmatprep.subr.mxu0 0.0
      %229 = vmatpush1.msra.mxu0 %v179
      %230 = vmatprep.subr.mxu0 0.0
      %231 = vmatpush1.msra.mxu0 %v180
      %232 = vmatprep.subr.mxu0 0.0
      %233 = vmatpush1.msra.mxu0 %v181
      %234 = vmatprep.subr.mxu0 0.0
      %235 = vmatpush1.msra.mxu0 %v182
      %236 = vmatprep.subr.mxu0 0.0
      %237 = vmatpush1.msra.mxu0 0.0
      %238 = vmatprep.subr.mxu0 0.0
      %239 = vmatpush1.msra.mxu0 0.0
      %240 = vmatprep.subr.mxu0 0.0
      %241 = vmatpush1.msra.mxu0 0.0
      %242 = vmatprep.subr.mxu0 0.0
      %243 = vmatpush1.msra.mxu0 0.0
      %244 = vmatprep.subr.mxu0 0.0
      %245 = vmatpush1.msra.mxu0 0.0
      %246 = vmatprep.subr.mxu0 0.0
      %247 = vmatpush1.msra.mxu0 0.0
      %248 = vmatprep.subr.mxu0 0.0
      %249 = vmatpush1.msra.mxu0 0.0
      %250 = vmatprep.subr.mxu0 0.0
      %251 = vmatpush1.msra.mxu0 0.0
      %252 = vmatprep.subr.mxu0 0.0
      %253 = vmatpush1.msra.mxu0 0.0
      %254 = vmatprep.subr.mxu0 0.0
      %255 = vmatpush1.msra.mxu0 0.0
      %256 = vmatprep.subr.mxu0 0.0
      %257 = vmatpush1.msra.mxu0 0.0
      %258 = vmatprep.subr.mxu0 0.0
      %259 = vmatpush1.msra.mxu0 0.0
      %260 = vmatprep.subr.mxu0 0.0
      %261 = vmatpush1.msra.mxu0 0.0
      %262 = vmatprep.subr.mxu0 0.0
      %263 = vmatpush1.msra.mxu0 0.0
      %264 = vmatprep.subr.mxu0 0.0
      %265 = vmatpush1.msra.mxu0 0.0
      %266 = vmatprep.subr.mxu0 0.0
      %267 = vmatpush1.msra.mxu0 0.0
      %268 = vmatprep.subr.mxu0 0.0
      %269 = vmatpush1.msra.mxu0 0.0
      %270 = vmatprep.subr.mxu0 0.0
      %271 = vmatpush1.msra.mxu0 0.0
      %272 = vmatprep.subr.mxu0 0.0
      %273 = vmatpush1.msra.mxu0 0.0
      %274 = vmatprep.subr.mxu0 0.0
      %275 = vmatpush1.msra.mxu0 0.0
      %276 = vmatprep.subr.mxu0 0.0
      %277 = vmatpush1.msra.mxu0 0.0
      %278 = vmatprep.subr.mxu0 0.0
      %279 = vmatpush1.msra.mxu0 0.0
      %280 = vmatprep.subr.mxu0 0.0
      %281 = vmatpush1.msra.mxu0 0.0
      %282 = vmatprep.subr.mxu0 0.0
      %283 = vmatpush1.msra.mxu0 0.0
      %284 = vmatprep.mubr.f32.mxu0 0.0
      %285 = vmatmul.mubr.f32.gmra.mrb[0].mxu0 %v209
      %v286 = vpop.f32.mrb[0].mxu0
      %v287 = vadd.f32 %v190, %v286
      %v288 = vpop.f32.mrb[0].mxu0
      %289 = vmatprep.mubr.f32.mxu0 0.0
      %290 = vmatmul.mubr.f32.gmra.mrb[0].mxu0 %v212
      %v291 = vpop.f32.mrb[0].mxu0
      %v292 = vadd.f32 %v195, %v291
      %v293 = vpop.f32.mrb[0].mxu0
      %294 = vmatprep.mubr.f32.mxu0 0.0
      %295 = vmatmul.mubr.f32.gmra.mrb[0].mxu0 %v215
      %v296 = vpop.f32.mrb[0].mxu0
      %v297 = vadd.f32 %v200, %v296
      %v298 = vpop.f32.mrb[0].mxu0
      %299 = vmatprep.mubr.f32.mxu0 0.0
      %300 = vmatmul.mubr.f32.gmra.mrb[0].mxu0 %v218
      %v301 = vpop.f32.mrb[0].mxu0
      %v302 = vadd.f32 %v205, %v301
      %v303 = vpop.f32.mrb[0].mxu0
      %304 = vdwg.mxu0
      %305 = vst [vmem:[%s170] sm:$0xff] %v287
      %306 = vst [vmem:[%s170 + $0x8] sm:$0xff] %v292
      %307 = vst [vmem:[%s170 + $0x10] sm:$0xff] %v297
      %308 = vst [vmem:[%s170 + $0x18] sm:$0xff] %v302
      %p309 = scmp.lt.s32.totalorder %s14, 1
      %s310 = scalar_select %p309, %s14, 1
      %s311 = smul.addr %s310, 4
      %s312 = smul.addr %s311, 8
      %s313 = scalar_lea.vmem %s3, %s312
      // Predicated region
      $region33: #{unet_forward.15} parent=31 // pred_check
        %p314 = pneg %p100
      $region34: #{unet_forward.15} parent=31 // pred_check_branch
        %316 = sbr.rel (%p314) target = $region36
      $region35: #{unet_forward.15} parent=31 // pred_region
        _
      $region36: #{unet_forward.15} parent=31 // pred_fallthru
        _
    $region32: #{unet_forward.15} parent=5 // pred_fallthru
      _
    %p317 = scmp.le.s32.totalorder 2, %s9
    // Predicated region
    $region37: #{unet_forward.15} parent=5 // pred_check
      %p318 = pneg %p317
    $region38: #{unet_forward.15} parent=5 // pred_check_branch
      %320 = sbr.rel (%p318) target = $region40
    $region39: #{unet_forward.15} parent=5 // pred_region
      %s321 = ssub.s32 %s9, 2
      // Predicated region
      $region41: #{unet_forward.15} parent=39 // pred_check
        %p322 = pneg %p106
      $region42: #{unet_forward.15} parent=39 // pred_check_branch
        %324 = sbr.rel (%p322) target = $region44
      $region43: #{unet_forward.15} parent=39 // pred_region
        %p325 = scmp.lt.s32.totalorder %s15, 1
        %s326 = scalar_select %p325, %s15, 1
        %s327 = smul.addr %s326, 4
        %s328 = smul.addr %s327, 8
        %s329 = scalar_lea.vmem %s3, %s328
      $region44: #{unet_forward.15} parent=39 // pred_fallthru
        _
    $region40: #{unet_forward.15} parent=5 // pred_fallthru
      _
  $region6: #{unet_forward.15} parent=0 // loop_footer
    %s13 = sadd.s32 1, %s9
  $region7: #{unet_forward.15} parent=0 // loop_footer_branch
    %8 = sbr.rel target = $region3
  $region8: #{unet_forward.15} parent=0 // loop_exit
    _

// kernel: unet_forward.17
$region0: #{unet_forward.17}
  #allocation0 [shape = 'u32[]', space=smem, size = 0x4, offset = 0x4, fixed_abs, tag = 'smem constant byte address 0x4 - core index']
  #allocation1 [shape = 'u32[144,128]{1,0:T(1,128)}', space=vmem, size = 0x12000, scoped, tag = 'internal scratch']
  %s0 = inlined_call_operand.vmem [shape: f32[2,32,128], index: 0, kind: input, shape index: {}]
  %s1 = inlined_call_operand.vmem [shape: f32[64,32], index: 1, kind: input, shape index: {}]
  %s2 = inlined_call_operand.vmem [shape: f32[2,64,128], index: 2, kind: output, shape index: {}]
  %s3 = sld [smem:[#allocation0]]
  $region41: #{unet_forward.17} parent=0
    _
  %s5 = ssub.s32 1, %s3
  %s6 = scalar_select 0, %s5, %s3
  loop: start=0, step=1, limit=4
  $region2: #{unet_forward.17} parent=0 // loop_pre_header
    _
  $region3: #{unet_forward.17} parent=0 // loop_header
    %s8 = sphi 0, %s12
    %p9 = scmp.ge.s32.totalorder %s8, 4
    %s18 = sphi 0, %s20
    %s21 = sphi 0, %s18
    %s22 = sphi 0, %s21
    %s38 = sphi 0, %s22
    %s42 = sphi 0, %s42
    %s44 = sphi 0, %s42
    %s45 = sphi 0, %s44
    %s59 = sphi 0, %s45
    %s65 = sphi 0, %s67
    %s68 = sphi 0, %s65
    %s69 = sphi 0, %s68
    %s85 = sphi 0, %s69
  $region4: #{unet_forward.17} parent=0 // loop_header_branch
    %11 = sbr.rel (%p9) target = $region8
  $region5: #{unet_forward.17} parent=0 // loop_body
    %s13 = ssub.s32 %s8, 1
    %s14 = ssub.s32 %s8, 2
    %s15 = sadd.s32 %s8, 1
    %s16 = ssub.s32 %s8, %s15
    %p17 = scmp.eq.s32.totalorder %s16, 0
    %s19 = sadd.s32 %s18, 1
    %s20 = scalar_select %p17, %s18, %s19
    %p23 = pneg %p17
    %p24 = scmp.eq.s32.totalorder %s8, 1
    %p25 = por %p23, %p24
    %p26 = scmp.ne.s32.totalorder %s18, %s21
    %p27 = scmp.eq.s32.totalorder %s8, 0
    %p28 = por %p26, %p27
    %p29 = scmp.ne.s32.totalorder %s18, %s21
    %p30 = scmp.eq.s32.totalorder %s13, 1
    %p31 = por %p29, %p30
    %p32 = scmp.ne.s32.totalorder %s21, %s22
    %p33 = scmp.eq.s32.totalorder %s13, 0
    %p34 = por %p32, %p33
    %p35 = scmp.ne.s32.totalorder %s21, %s22
    %p36 = scmp.eq.s32.totalorder %s14, 1
    %p37 = por %p35, %p36
    %p39 = scmp.ne.s32.totalorder %s22, %s38
    %p40 = scmp.eq.s32.totalorder %s14, 0
    %p41 = por %p39, %p40
    %s43 = sadd.s32 %s42, 1
    %p46 = scmp.eq.s32.totalorder %s8, 1
    %p47 = scmp.ne.s32.totalorder %s42, %s44
    %p48 = scmp.eq.s32.totalorder %s8, 0
    %p49 = por %p47, %p48
    %p50 = scmp.ne.s32.totalorder %s42, %s44
    %p51 = scmp.eq.s32.totalorder %s13, 1
    %p52 = por %p50, %p51
    %p53 = scmp.ne.s32.totalorder %s44, %s45
    %p54 = scmp.eq.s32.totalorder %s13, 0
    %p55 = por %p53, %p54
    %p56 = scmp.ne.s32.totalorder %s44, %s45
    %p57 = scmp.eq.s32.totalorder %s14, 1
    %p58 = por %p56, %p57
    %p60 = scmp.ne.s32.totalorder %s45, %s59
    %p61 = scmp.eq.s32.totalorder %s14, 0
    %p62 = por %p60, %p61
    %s63 = ssub.s32 %s8, %s15
    %p64 = scmp.eq.s32.totalorder %s63, 0
    %s66 = sadd.s32 %s65, 1
    %s67 = scalar_select %p64, %s65, %s66
    %p70 = pneg %p64
    %p71 = scmp.eq.s32.totalorder %s8, 1
    %p72 = por %p70, %p71
    %p73 = scmp.ne.s32.totalorder %s65, %s68
    %p74 = scmp.eq.s32.totalorder %s8, 0
    %p75 = por %p73, %p74
    %p76 = scmp.ne.s32.totalorder %s65, %s68
    %p77 = scmp.eq.s32.totalorder %s13, 1
    %p78 = por %p76, %p77
    %p79 = scmp.ne.s32.totalorder %s68, %s69
    %p80 = scmp.eq.s32.totalorder %s13, 0
    %p81 = por %p79, %p80
    %p82 = scmp.ne.s32.totalorder %s68, %s69
    %p83 = scmp.eq.s32.totalorder %s14, 1
    %p84 = por %p82, %p83
    %p86 = scmp.ne.s32.totalorder %s69, %s85
    %p87 = scmp.eq.s32.totalorder %s14, 0
    %p88 = por %p86, %p87
    %p89 = scmp.le.s32.totalorder 1, %s8
    %p90 = scmp.lt.s32.totalorder %s8, 3
    %p91 = pnand %p89, %p90
    %p92 = pneg %p91
    // Predicated region
    $region9: #{unet_forward.17} parent=5 // pred_check
      _
    $region10: #{unet_forward.17} parent=5 // pred_check_branch
      %94 = sbr.rel (%p91) target = $region12
    $region11: #{unet_forward.17} parent=5 // pred_region
      %s95 = ssub.s32 %s8, 1
      // Predicated region
      $region13: #{unet_forward.17} parent=11 // pred_check
        %p96 = pneg %p55
      $region14: #{unet_forward.17} parent=11 // pred_check_branch
        %98 = sbr.rel (%p96) target = $region16
      $region15: #{unet_forward.17} parent=11 // pred_region
        _
      $region16: #{unet_forward.17} parent=11 // pred_fallthru
        _
    $region12: #{unet_forward.17} parent=5 // pred_fallthru
      _
    %p99 = scmp.lt.s32.totalorder %s8, 2
    // Predicated region
    $region17: #{unet_forward.17} parent=5 // pred_check
      %p100 = pneg %p99
    $region18: #{unet_forward.17} parent=5 // pred_check_branch
      %102 = sbr.rel (%p100) target = $region20
    $region19: #{unet_forward.17} parent=5 // pred_region
      // Predicated region
      $region21: #{unet_forward.17} parent=19 // pred_check
        %p103 = pneg %p28
      $region22: #{unet_forward.17} parent=19 // pred_check_branch
        %105 = sbr.rel (%p103) target = $region24
      $region23: #{unet_forward.17} parent=19 // pred_region
        %p106 = scmp.lt.s32.totalorder %s8, 1
        %s107 = scalar_select %p106, %s8, 1
        %s108 = smul.addr %s107, 4
        %s109 = smul.addr %s108, 8
        %s110 = scalar_lea.vmem %s0, %s109
      $region24: #{unet_forward.17} parent=19 // pred_fallthru
        _
    $region20: #{unet_forward.17} parent=5 // pred_fallthru
      _
    %p111 = scmp.le.s32.totalorder 1, %s8
    %p112 = scmp.lt.s32.totalorder %s8, 3
    %p113 = pnand %p111, %p112
    %p114 = pneg %p113
    // Predicated region
    $region25: #{unet_forward.17} parent=5 // pred_check
      _
    $region26: #{unet_forward.17} parent=5 // pred_check_branch
      %116 = sbr.rel (%p113) target = $region28
    $region27: #{unet_forward.17} parent=5 // pred_region
      %s117 = ssub.s32 %s8, 1
      %p118 = scmp.lt.s32.totalorder %s13, 1
      %s119 = scalar_select %p118, %s13, 1
      %s120 = smul.addr %s119, 4
      %s121 = smul.addr %s120, 8
      %s122 = scalar_lea.vmem %s0, %s121
      %p123 = pneg %p34
      %p124 = pneg %p31
      %p125 = pneg %p55
      %p126 = pneg %p52
      %p127 = pneg %p81
      %p128 = pneg %p78
      %p129 = scmp.lt.s32.totalorder %s13, 1
      %s130 = scalar_select %p129, %s13, 1
      %s131 = smul.addr %s130, 8
      %s132 = smul.addr %s131, 8
      %s133 = scalar_lea.vmem %s2, %s132
      %p134 = scmp.lt.s32.totalorder %s13, 1
      %s135 = scalar_select %p134, %s13, 1
      %s136 = smul.addr %s135, 4
      %s137 = smul.addr %s136, 8
      %s138 = scalar_lea.vmem %s0, %s137
      %p139 = scmp.lt.s32.totalorder %s13, 1
      %s140 = scalar_select %p139, %s13, 1
      %s141 = smul.addr %s140, 8
      %s142 = smul.addr %s141, 8
      %s143 = scalar_lea.vmem %s2, %s142
      %v144 = vld [vmem:[%s1] sm:$0xff]
      %v145 = vld [vmem:[%s1 + $0x8] sm:$0xff]
      %v146 = vld [vmem:[%s1 + $0x10] sm:$0xff]
      %v147 = vld [vmem:[%s1 + $0x18] sm:$0xff]
      %v148 = vld [vmem:[%s1 + $0x20] sm:$0xff]
      %v149 = vld [vmem:[%s1 + $0x28] sm:$0xff]
      %v150 = vld [vmem:[%s1 + $0x30] sm:$0xff]
      %v151 = vld [vmem:[%s1 + $0x38] sm:$0xff]
      %v152 = vld [vmem:[%s138] sm:$0xff]
      %v153 = vld [vmem:[%s138 + $0x8] sm:$0xff]
      %v154 = vld [vmem:[%s138 + $0x10] sm:$0xff]
      %v155 = vld [vmem:[%s138 + $0x18] sm:$0xff]
      %vm156 = vcmask 261120
      %v158 = vsel %vm156, %v144, 0
      %v161 = vsel %vm156, %v145, 0
      %v164 = vsel %vm156, %v146, 0
      %v167 = vsel %vm156, %v147, 0
      %v170 = vsel %vm156, %v148, 0
      %v173 = vsel %vm156, %v149, 0
      %v176 = vsel %vm156, %v150, 0
      %v179 = vsel %vm156, %v151, 0
      %181 = vmatprep.subr.mxu0 0.0
      %182 = vmatpush1.msra.mxu0 %v152
      %183 = vmatprep.subr.mxu0 0.0
      %184 = vmatpush1.msra.mxu0 %v153
      %185 = vmatprep.subr.mxu0 0.0
      %186 = vmatpush1.msra.mxu0 %v154
      %187 = vmatprep.subr.mxu0 0.0
      %188 = vmatpush1.msra.mxu0 %v155
      %189 = vmatprep.subr.mxu0 0.0
      %190 = vmatpush1.msra.mxu0 0.0
      %191 = vmatprep.subr.mxu0 0.0
      %192 = vmatpush1.msra.mxu0 0.0
      %193 = vmatprep.subr.mxu0 0.0
      %194 = vmatpush1.msra.mxu0 0.0
      %195 = vmatprep.subr.mxu0 0.0
      %196 = vmatpush1.msra.mxu0 0.0
      %197 = vmatprep.subr.mxu0 0.0
      %198 = vmatpush1.msra.mxu0 0.0
      %199 = vmatprep.subr.mxu0 0.0
      %200 = vmatpush1.msra.mxu0 0.0
      %201 = vmatprep.subr.mxu0 0.0
      %202 = vmatpush1.msra.mxu0 0.0
      %203 = vmatprep.subr.mxu0 0.0
      %204 = vmatpush1.msra.mxu0 0.0
      %205 = vmatprep.subr.mxu0 0.0
      %206 = vmatpush1.msra.mxu0 0.0
      %207 = vmatprep.subr.mxu0 0.0
      %208 = vmatpush1.msra.mxu0 0.0
      %209 = vmatprep.subr.mxu0 0.0
      %210 = vmatpush1.msra.mxu0 0.0
      %211 = vmatprep.subr.mxu0 0.0
      %212 = vmatpush1.msra.mxu0 0.0
      %213 = vmatprep.subr.mxu0 0.0
      %214 = vmatpush1.msra.mxu0 0.0
      %215 = vmatprep.subr.mxu0 0.0
      %216 = vmatpush1.msra.mxu0 0.0
      %217 = vmatprep.subr.mxu0 0.0
      %218 = vmatpush1.msra.mxu0 0.0
      %219 = vmatprep.subr.mxu0 0.0
      %220 = vmatpush1.msra.mxu0 0.0
      %221 = vmatprep.subr.mxu0 0.0
      %222 = vmatpush1.msra.mxu0 0.0
      %223 = vmatprep.subr.mxu0 0.0
      %224 = vmatpush1.msra.mxu0 0.0
      %225 = vmatprep.subr.mxu0 0.0
      %226 = vmatpush1.msra.mxu0 0.0
      %227 = vmatprep.subr.mxu0 0.0
      %228 = vmatpush1.msra.mxu0 0.0
      %229 = vmatprep.subr.mxu0 0.0
      %230 = vmatpush1.msra.mxu0 0.0
      %231 = vmatprep.subr.mxu0 0.0
      %232 = vmatpush1.msra.mxu0 0.0
      %233 = vmatprep.subr.mxu0 0.0
      %234 = vmatpush1.msra.mxu0 0.0
      %235 = vmatprep.subr.mxu0 0.0
      %236 = vmatpush1.msra.mxu0 0.0
      %237 = vmatprep.subr.mxu0 0.0
      %238 = vmatpush1.msra.mxu0 0.0
      %239 = vmatprep.subr.mxu0 0.0
      %240 = vmatpush1.msra.mxu0 0.0
      %241 = vmatprep.subr.mxu0 0.0
      %242 = vmatpush1.msra.mxu0 0.0
      %243 = vmatprep.subr.mxu0 0.0
      %244 = vmatpush1.msra.mxu0 0.0
      %245 = vmatprep.mubr.f32.mxu0 0.0
      %246 = vmatmul.mubr.f32.gmra.mrb[0].mxu0 %v158
      %v247 = vpop.f32.mrb[0].mxu0
      %v248 = vadd.f32 0.0, %v247
      %v249 = vpop.f32.mrb[0].mxu0
      %250 = vmatprep.mubr.f32.mxu0 0.0
      %251 = vmatmul.mubr.f32.gmra.mrb[0].mxu0 %v161
      %v252 = vpop.f32.mrb[0].mxu0
      %v253 = vadd.f32 0.0, %v252
      %v254 = vpop.f32.mrb[0].mxu0
      %255 = vmatprep.mubr.f32.mxu0 0.0
      %256 = vmatmul.mubr.f32.gmra.mrb[0].mxu0 %v164
      %v257 = vpop.f32.mrb[0].mxu0
      %v258 = vadd.f32 0.0, %v257
      %v259 = vpop.f32.mrb[0].mxu0
      %260 = vmatprep.mubr.f32.mxu0 0.0
      %261 = vmatmul.mubr.f32.gmra.mrb[0].mxu0 %v167
      %v262 = vpop.f32.mrb[0].mxu0
      %v263 = vadd.f32 0.0, %v262
      %v264 = vpop.f32.mrb[0].mxu0
      %265 = vmatprep.mubr.f32.mxu0 0.0
      %266 = vmatmul.mubr.f32.gmra.mrb[0].mxu0 %v170
      %v267 = vpop.f32.mrb[0].mxu0
      %v268 = vadd.f32 0.0, %v267
      %v269 = vpop.f32.mrb[0].mxu0
      %270 = vmatprep.mubr.f32.mxu0 0.0
      %271 = vmatmul.mubr.f32.gmra.mrb[0].mxu0 %v173
      %v272 = vpop.f32.mrb[0].mxu0
      %v273 = vadd.f32 0.0, %v272
      %v274 = vpop.f32.mrb[0].mxu0
      %275 = vmatprep.mubr.f32.mxu0 0.0
      %276 = vmatmul.mubr.f32.gmra.mrb[0].mxu0 %v176
      %v277 = vpop.f32.mrb[0].mxu0
      %v278 = vadd.f32 0.0, %v277
      %v279 = vpop.f32.mrb[0].mxu0
      %280 = vmatprep.mubr.f32.mxu0 0.0
      %281 = vmatmul.mubr.f32.gmra.mrb[0].mxu0 %v179
      %v282 = vpop.f32.mrb[0].mxu0
      %v283 = vadd.f32 0.0, %v282
      %v284 = vpop.f32.mrb[0].mxu0
      %285 = vdwg.mxu0
      %286 = vst [vmem:[%s143] sm:$0xff] %v248
      %287 = vst [vmem:[%s143 + $0x8] sm:$0xff] %v253
      %288 = vst [vmem:[%s143 + $0x10] sm:$0xff] %v258
      %289 = vst [vmem:[%s143 + $0x18] sm:$0xff] %v263
      %290 = vst [vmem:[%s143 + $0x20] sm:$0xff] %v268
      %291 = vst [vmem:[%s143 + $0x28] sm:$0xff] %v273
      %292 = vst [vmem:[%s143 + $0x30] sm:$0xff] %v278
      %293 = vst [vmem:[%s143 + $0x38] sm:$0xff] %v283
      %p294 = scmp.lt.s32.totalorder %s13, 1
      %s295 = scalar_select %p294, %s13, 1
      %s296 = smul.addr %s295, 8
      %s297 = smul.addr %s296, 8
      %s298 = scalar_lea.vmem %s2, %s297
      // Predicated region
      $region29: #{unet_forward.17} parent=27 // pred_check
        %p299 = pneg %p78
      $region30: #{unet_forward.17} parent=27 // pred_check_branch
        %301 = sbr.rel (%p299) target = $region32
      $region31: #{unet_forward.17} parent=27 // pred_region
        _
      $region32: #{unet_forward.17} parent=27 // pred_fallthru
        _
    $region28: #{unet_forward.17} parent=5 // pred_fallthru
      _
    %p302 = scmp.le.s32.totalorder 2, %s8
    // Predicated region
    $region33: #{unet_forward.17} parent=5 // pred_check
      %p303 = pneg %p302
    $region34: #{unet_forward.17} parent=5 // pred_check_branch
      %305 = sbr.rel (%p303) target = $region36
    $region35: #{unet_forward.17} parent=5 // pred_region
      %s306 = ssub.s32 %s8, 2
      // Predicated region
      $region37: #{unet_forward.17} parent=35 // pred_check
        %p307 = pneg %p84
      $region38: #{unet_forward.17} parent=35 // pred_check_branch
        %309 = sbr.rel (%p307) target = $region40
      $region39: #{unet_forward.17} parent=35 // pred_region
        %p310 = scmp.lt.s32.totalorder %s14, 1
        %s311 = scalar_select %p310, %s14, 1
        %s312 = smul.addr %s311, 8
        %s313 = smul.addr %s312, 8
        %s314 = scalar_lea.vmem %s2, %s313
      $region40: #{unet_forward.17} parent=35 // pred_fallthru
        _
    $region36: #{unet_forward.17} parent=5 // pred_fallthru
      _
  $region6: #{unet_forward.17} parent=0 // loop_footer
    %s12 = sadd.s32 1, %s8
  $region7: #{unet_forward.17} parent=0 // loop_footer_branch
    %7 = sbr.rel target = $region3
  $region8: #{unet_forward.17} parent=0 // loop_exit
    _

// kernel: unet_forward.16
$region0: #{unet_forward.16}
  #allocation0 [shape = 'u32[]', space=smem, size = 0x4, offset = 0x4, fixed_abs, tag = 'smem constant byte address 0x4 - core index']
  #allocation1 [shape = 'u32[144,128]{1,0:T(1,128)}', space=vmem, size = 0x12000, scoped, tag = 'internal scratch']
  #allocation2 [shape = 'f32[289,128]{1,0:T(8,128)}', space=vmem, size = 0x25000, scoped, tag = 'scratch operand']
  %s0 = inlined_call_operand.vmem [shape: f32[2,32,128], index: 0, kind: input, shape index: {}]
  %s1 = inlined_call_operand.vmem [shape: f32[32,289], index: 1, kind: input, shape index: {}]
  %s2 = inlined_call_operand.vmem [shape: f32[1,128], index: 2, kind: input, shape index: {}]
  %s3 = inlined_call_operand.vmem [shape: f32[2,32,128], index: 3, kind: output, shape index: {}]
  %s4 = sld [smem:[#allocation0]]
  $region45: #{unet_forward.16} parent=0
    _
  %s6 = ssub.s32 1, %s4
  %s7 = scalar_select 0, %s6, %s4
  loop: start=0, step=1, limit=4
  $region2: #{unet_forward.16} parent=0 // loop_pre_header
    _
  $region3: #{unet_forward.16} parent=0 // loop_header
    %s9 = sphi 0, %s13
    %p10 = scmp.ge.s32.totalorder %s9, 4
    %s16 = sphi 0, %s28
    %s17 = sphi 0, %s24
    %s18 = sphi 0, %s16
    %s19 = sphi 0, %s17
    %s20 = sphi 0, %s18
    %s21 = sphi 0, %s19
    %s31 = sphi 0, %s33
    %s34 = sphi 0, %s31
    %s35 = sphi 0, %s34
    %s51 = sphi 0, %s35
    %s57 = sphi 0, %s59
    %s60 = sphi 0, %s57
    %s61 = sphi 0, %s60
    %s77 = sphi 0, %s61
    %s81 = sphi 0, %s81
    %s83 = sphi 0, %s81
    %s84 = sphi 0, %s83
    %s98 = sphi 0, %s84
    %s106 = sphi 0, %s108
    %s109 = sphi 0, %s106
    %s110 = sphi 0, %s109
    %s126 = sphi 0, %s110
  $region4: #{unet_forward.16} parent=0 // loop_header_branch
    %12 = sbr.rel (%p10) target = $region8
  $region5: #{unet_forward.16} parent=0 // loop_body
    %s14 = ssub.s32 %s9, 1
    %s15 = ssub.s32 %s9, 2
    %s22 = sadd.s32 1, %s17
    %p23 = scmp.ge.s32.totalorder %s22, 1
    %s24 = scalar_select %p23, 0, %s22
    %s25 = sadd.s32 1, %s16
    %s26 = scalar_select %p23, %s25, %s16
    %p27 = scmp.ge.s32.totalorder %s26, 2
    %s28 = scalar_select %p27, 0, %s26
    %s29 = ssub.s32 %s16, %s28
    %p30 = scmp.eq.s32.totalorder %s29, 0
    %s32 = sadd.s32 %s31, 1
    %s33 = scalar_select %p30, %s31, %s32
    %p36 = pneg %p30
    %p37 = scmp.eq.s32.totalorder %s9, 1
    %p38 = por %p36, %p37
    %p39 = scmp.ne.s32.totalorder %s31, %s34
    %p40 = scmp.eq.s32.totalorder %s9, 0
    %p41 = por %p39, %p40
    %p42 = scmp.ne.s32.totalorder %s31, %s34
    %p43 = scmp.eq.s32.totalorder %s14, 1
    %p44 = por %p42, %p43
    %p45 = scmp.ne.s32.totalorder %s34, %s35
    %p46 = scmp.eq.s32.totalorder %s14, 0
    %p47 = por %p45, %p46
    %p48 = scmp.ne.s32.totalorder %s34, %s35
    %p49 = scmp.eq.s32.totalorder %s15, 1
    %p50 = por %p48, %p49
    %p52 = scmp.ne.s32.totalorder %s35, %s51
    %p53 = scmp.eq.s32.totalorder %s15, 0
    %p54 = por %p52, %p53
    %s55 = ssub.s32 %s17, %s24
    %p56 = scmp.eq.s32.totalorder %s55, 0
    %s58 = sadd.s32 %s57, 1
    %s59 = scalar_select %p56, %s57, %s58
    %p62 = pneg %p56
    %p63 = scmp.eq.s32.totalorder %s9, 1
    %p64 = por %p62, %p63
    %p65 = scmp.ne.s32.totalorder %s57, %s60
    %p66 = scmp.eq.s32.totalorder %s9, 0
    %p67 = por %p65, %p66
    %p68 = scmp.ne.s32.totalorder %s57, %s60
    %p69 = scmp.eq.s32.totalorder %s14, 1
    %p70 = por %p68, %p69
    %p71 = scmp.ne.s32.totalorder %s60, %s61
    %p72 = scmp.eq.s32.totalorder %s14, 0
    %p73 = por %p71, %p72
    %p74 = scmp.ne.s32.totalorder %s60, %s61
    %p75 = scmp.eq.s32.totalorder %s15, 1
    %p76 = por %p74, %p75
    %p78 = scmp.ne.s32.totalorder %s61, %s77
    %p79 = scmp.eq.s32.totalorder %s15, 0
    %p80 = por %p78, %p79
    %s82 = sadd.s32 %s81, 1
    %p85 = scmp.eq.s32.totalorder %s9, 1
    %p86 = scmp.ne.s32.totalorder %s81, %s83
    %p87 = scmp.eq.s32.totalorder %s9, 0
    %p88 = por %p86, %p87
    %p89 = scmp.ne.s32.totalorder %s81, %s83
    %p90 = scmp.eq.s32.totalorder %s14, 1
    %p91 = por %p89, %p90
    %p92 = scmp.ne.s32.totalorder %s83, %s84
    %p93 = scmp.eq.s32.totalorder %s14, 0
    %p94 = por %p92, %p93
    %p95 = scmp.ne.s32.totalorder %s83, %s84
    %p96 = scmp.eq.s32.totalorder %s15, 1
    %p97 = por %p95, %p96
    %p99 = scmp.ne.s32.totalorder %s84, %s98
    %p100 = scmp.eq.s32.totalorder %s15, 0
    %p101 = por %p99, %p100
    %s102 = ssub.s32 %s16, %s28
    %s103 = ssub.s32 %s17, %s24
    %s104 = sor.u32 %s102, %s103
    %p105 = scmp.eq.s32.totalorder %s104, 0
    %s107 = sadd.s32 %s106, 1
    %s108 = scalar_select %p105, %s106, %s107
    %p111 = pneg %p105
    %p112 = scmp.eq.s32.totalorder %s9, 1
    %p113 = por %p111, %p112
    %p114 = scmp.ne.s32.totalorder %s106, %s109
    %p115 = scmp.eq.s32.totalorder %s9, 0
    %p116 = por %p114, %p115
    %p117 = scmp.ne.s32.totalorder %s106, %s109
    %p118 = scmp.eq.s32.totalorder %s14, 1
    %p119 = por %p117, %p118
    %p120 = scmp.ne.s32.totalorder %s109, %s110
    %p121 = scmp.eq.s32.totalorder %s14, 0
    %p122 = por %p120, %p121
    %p123 = scmp.ne.s32.totalorder %s109, %s110
    %p124 = scmp.eq.s32.totalorder %s15, 1
    %p125 = por %p123, %p124
    %p127 = scmp.ne.s32.totalorder %s110, %s126
    %p128 = scmp.eq.s32.totalorder %s15, 0
    %p129 = por %p127, %p128
    %p130 = scmp.le.s32.totalorder 1, %s9
    %p131 = scmp.lt.s32.totalorder %s9, 3
    %p132 = pnand %p130, %p131
    %p133 = pneg %p132
    // Predicated region
    $region9: #{unet_forward.16} parent=5 // pred_check
      _
    $region10: #{unet_forward.16} parent=5 // pred_check_branch
      %135 = sbr.rel (%p132) target = $region12
    $region11: #{unet_forward.16} parent=5 // pred_region
      %s136 = ssub.s32 %s9, 1
      // Predicated region
      $region13: #{unet_forward.16} parent=11 // pred_check
        %p137 = pneg %p73
      $region14: #{unet_forward.16} parent=11 // pred_check_branch
        %139 = sbr.rel (%p137) target = $region16
      $region15: #{unet_forward.16} parent=11 // pred_region
        %s140 = smul.u32 4, %s19
        %p141 = scmp.lt.s32.totalorder %s140, 3
        %s142 = scalar_select %p141, %s140, 3
        %s143 = smul.addr %s142, 3
        %s144 = smul.addr %s143, 8
        %s145 = scalar_lea.vmem %s1, %s144
        %s146 = smul.u32 4, %s19
      $region16: #{unet_forward.16} parent=11 // pred_fallthru
        _
      // Predicated region
      $region17: #{unet_forward.16} parent=11 // pred_check
        %p147 = pneg %p94
      $region18: #{unet_forward.16} parent=11 // pred_check_branch
        %149 = sbr.rel (%p147) target = $region20
      $region19: #{unet_forward.16} parent=11 // pred_region
        _
      $region20: #{unet_forward.16} parent=11 // pred_fallthru
        _
    $region12: #{unet_forward.16} parent=5 // pred_fallthru
      _
    %p150 = scmp.lt.s32.totalorder %s9, 2
    // Predicated region
    $region21: #{unet_forward.16} parent=5 // pred_check
      %p151 = pneg %p150
    $region22: #{unet_forward.16} parent=5 // pred_check_branch
      %153 = sbr.rel (%p151) target = $region24
    $region23: #{unet_forward.16} parent=5 // pred_region
      // Predicated region
      $region25: #{unet_forward.16} parent=23 // pred_check
        %p154 = pneg %p41
      $region26: #{unet_forward.16} parent=23 // pred_check_branch
        %156 = sbr.rel (%p154) target = $region28
      $region27: #{unet_forward.16} parent=23 // pred_region
        %p157 = scmp.lt.s32.totalorder %s16, 1
        %s158 = scalar_select %p157, %s16, 1
        %s159 = smul.addr %s158, 4
        %s160 = smul.addr %s159, 8
        %s161 = scalar_lea.vmem %s0, %s160
      $region28: #{unet_forward.16} parent=23 // pred_fallthru
        _
    $region24: #{unet_forward.16} parent=5 // pred_fallthru
      _
    %p162 = scmp.le.s32.totalorder 1, %s9
    %p163 = scmp.lt.s32.totalorder %s9, 3
    %p164 = pnand %p162, %p163
    %p165 = pneg %p164
    // Predicated region
    $region29: #{unet_forward.16} parent=5 // pred_check
      _
    $region30: #{unet_forward.16} parent=5 // pred_check_branch
      %167 = sbr.rel (%p164) target = $region32
    $region31: #{unet_forward.16} parent=5 // pred_region
      %s168 = ssub.s32 %s9, 1
      %p169 = scmp.lt.s32.totalorder %s18, 1
      %s170 = scalar_select %p169, %s18, 1
      %s171 = smul.addr %s170, 4
      %s172 = smul.addr %s171, 8
      %s173 = scalar_lea.vmem %s0, %s172
      %p174 = pneg %p47
      %p175 = pneg %p44
      %s176 = smul.u32 4, %s19
      %p177 = scmp.lt.s32.totalorder %s176, 3
      %s178 = scalar_select %p177, %s176, 3
      %s179 = smul.addr %s178, 3
      %s180 = smul.addr %s179, 8
      %s181 = scalar_lea.vmem %s1, %s180
      %p182 = pneg %p73
      %p183 = pneg %p70
      %p184 = pneg %p94
      %p185 = pneg %p91
      %p186 = pneg %p122
      %p187 = pneg %p119
      %s188 = smul.u32 4, %s19
      %p189 = scmp.lt.s32.totalorder %s18, 1
      %s190 = scalar_select %p189, %s18, 1
      %p191 = scmp.lt.s32.totalorder %s188, 3
      %s192 = scalar_select %p191, %s188, 3
      %s193 = smul.addr %s190, 4
      %s194 = sadd.s32 %s192, %s193
      %s195 = smul.addr %s194, 8
      %s196 = scalar_lea.vmem %s3, %s195
      %p197 = scmp.lt.s32.totalorder %s18, 1
      %s198 = scalar_select %p197, %s18, 1
      %s199 = smul.addr %s198, 4
      %s200 = smul.addr %s199, 8
      %s201 = scalar_lea.vmem %s0, %s200
      %s202 = smul.u32 4, %s19
      %p203 = scmp.lt.s32.totalorder %s202, 3
      %s204 = scalar_select %p203, %s202, 3
      %s205 = smul.addr %s204, 3
      %s206 = smul.addr %s205, 8
      %s207 = scalar_lea.vmem %s1, %s206
      %s208 = smul.u32 4, %s19
      %s209 = smul.u32 4, %s19
      %p210 = scmp.lt.s32.totalorder %s18, 1
      %s211 = scalar_select %p210, %s18, 1
      %p212 = scmp.lt.s32.totalorder %s209, 3
      %s213 = scalar_select %p212, %s209, 3
      %s214 = smul.addr %s211, 4
      %s215 = sadd.s32 %s213, %s214
      %s216 = smul.addr %s215, 8
      %s217 = scalar_lea.vmem %s3, %s216
      %s218 = smul.u32 4, %s19
      %v219 = vld [vmem:[%s201] sm:$0xff]
      %v220 = vld [vmem:[%s201 + $0x8] sm:$0xff]
      %v221 = vld [vmem:[%s201 + $0x10] sm:$0xff]
      %v222 = vld [vmem:[%s201 + $0x18] sm:$0xff]
      %223 = vrot.lane.b32.xlu0 %v219, 7
      %v224 = vpop.permute.xlu0 %223
      %225 = vrot.lane.b32.xlu0 %v220, 7
      %v226 = vpop.permute.xlu0 %225
      %227 = vrot.lane.b32.xlu0 %v221, 7
      %v228 = vpop.permute.xlu0 %227
      %229 = vrot.lane.b32.xlu0 %v222, 7
      %v230 = vpop.permute.xlu0 %229
      %231 = vst [vmem:[#allocation2] sm:$0xff] %v224
      %232 = vst [vmem:[#allocation2 + $0x8] sm:$0xff] %v226
      %233 = vst [vmem:[#allocation2 + $0x10] sm:$0xff] %v228
      %234 = vst [vmem:[#allocation2 + $0x18] sm:$0xff] %v230
      %235 = vrot.lane.b32.xlu0 %v219, 6
      %v236 = vpop.permute.xlu0 %235
      %237 = vrot.lane.b32.xlu0 %v220, 6
      %v238 = vpop.permute.xlu0 %237
      %239 = vrot.lane.b32.xlu0 %v221, 6
      %v240 = vpop.permute.xlu0 %239
      %241 = vrot.lane.b32.xlu0 %v222, 6
      %v242 = vpop.permute.xlu0 %241
      %243 = vst [vmem:[#allocation2 + $0x20] sm:$0xff] %v236
      %244 = vst [vmem:[#allocation2 + $0x28] sm:$0xff] %v238
      %245 = vst [vmem:[#allocation2 + $0x30] sm:$0xff] %v240
      %246 = vst [vmem:[#allocation2 + $0x38] sm:$0xff] %v242
      %247 = vrot.lane.b32.xlu0 %v219, 5
      %v248 = vpop.permute.xlu0 %247
      %249 = vrot.lane.b32.xlu0 %v220, 5
      %v250 = vpop.permute.xlu0 %249
      %251 = vrot.lane.b32.xlu0 %v221, 5
      %v252 = vpop.permute.xlu0 %251
      %253 = vrot.lane.b32.xlu0 %v222, 5
      %v254 = vpop.permute.xlu0 %253
      %255 = vst [vmem:[#allocation2 + $0x40] sm:$0xff] %v248
      %256 = vst [vmem:[#allocation2 + $0x48] sm:$0xff] %v250
      %257 = vst [vmem:[#allocation2 + $0x50] sm:$0xff] %v252
      %258 = vst [vmem:[#allocation2 + $0x58] sm:$0xff] %v254
      %259 = vrot.lane.b32.xlu0 %v219, 1
      %v260 = vpop.permute.xlu0 %259
      %261 = vrot.lane.b32.xlu0 %v220, 1
      %v262 = vpop.permute.xlu0 %261
      %263 = vrot.lane.b32.xlu0 %v221, 1
      %v264 = vpop.permute.xlu0 %263
      %265 = vrot.lane.b32.xlu0 %v222, 1
      %v266 = vpop.permute.xlu0 %265
      %267 = vst [vmem:[#allocation2 + $0x60] sm:$0xff] %v260
      %268 = vst [vmem:[#allocation2 + $0x68] sm:$0xff] %v262
      %269 = vst [vmem:[#allocation2 + $0x70] sm:$0xff] %v264
      %270 = vst [vmem:[#allocation2 + $0x78] sm:$0xff] %v266
      %271 = vst [vmem:[#allocation2 + $0x80] sm:$0xff] %v219
      %272 = vst [vmem:[#allocation2 + $0x88] sm:$0xff] %v220
      %273 = vst [vmem:[#allocation2 + $0x90] sm:$0xff] %v221
      %274 = vst [vmem:[#allocation2 + $0x98] sm:$0xff] %v222
      %275 = vrot.lane.b32.xlu0 %v219, 127
      %v276 = vpop.permute.xlu0 %275
      %277 = vrot.lane.b32.xlu0 %v220, 127
      %v278 = vpop.permute.xlu0 %277
      %279 = vrot.lane.b32.xlu0 %v221, 127
      %v280 = vpop.permute.xlu0 %279
      %281 = vrot.lane.b32.xlu0 %v222, 127
      %v282 = vpop.permute.xlu0 %281
      %283 = vst [vmem:[#allocation2 + $0xa0] sm:$0xff] %v276
      %284 = vst [vmem:[#allocation2 + $0xa8] sm:$0xff] %v278
      %285 = vst [vmem:[#allocation2 + $0xb0] sm:$0xff] %v280
      %286 = vst [vmem:[#allocation2 + $0xb8] sm:$0xff] %v282
      %287 = vrot.lane.b32.xlu0 %v219, 123
      %v288 = vpop.permute.xlu0 %287
      %289 = vrot.lane.b32.xlu0 %v220, 123
      %v290 = vpop.permute.xlu0 %289
      %291 = vrot.lane.b32.xlu0 %v221, 123
      %v292 = vpop.permute.xlu0 %291
      %293 = vrot.lane.b32.xlu0 %v222, 123
      %v294 = vpop.permute.xlu0 %293
      %295 = vst [vmem:[#allocation2 + $0xc0] sm:$0xff] %v288
      %296 = vst [vmem:[#allocation2 + $0xc8] sm:$0xff] %v290
      %297 = vst [vmem:[#allocation2 + $0xd0] sm:$0xff] %v292
      %298 = vst [vmem:[#allocation2 + $0xd8] sm:$0xff] %v294
      %299 = vrot.lane.b32.xlu0 %v219, 122
      %v300 = vpop.permute.xlu0 %299
      %301 = vrot.lane.b32.xlu0 %v220, 122
      %v302 = vpop.permute.xlu0 %301
      %303 = vrot.lane.b32.xlu0 %v221, 122
      %v304 = vpop.permute.xlu0 %303
      %305 = vrot.lane.b32.xlu0 %v222, 122
      %v306 = vpop.permute.xlu0 %305
      %307 = vst [vmem:[#allocation2 + $0xe0] sm:$0xff] %v300
      %308 = vst [vmem:[#allocation2 + $0xe8] sm:$0xff] %v302
      %309 = vst [vmem:[#allocation2 + $0xf0] sm:$0xff] %v304
      %310 = vst [vmem:[#allocation2 + $0xf8] sm:$0xff] %v306
      %311 = vrot.lane.b32.xlu0 %v219, 121
      %v312 = vpop.permute.xlu0 %311
      %313 = vrot.lane.b32.xlu0 %v220, 121
      %v314 = vpop.permute.xlu0 %313
      %315 = vrot.lane.b32.xlu0 %v221, 121
      %v316 = vpop.permute.xlu0 %315
      %317 = vrot.lane.b32.xlu0 %v222, 121
      %v318 = vpop.permute.xlu0 %317
      %319 = vst [vmem:[#allocation2 + $0x100] sm:$0xff] %v312
      %320 = vst [vmem:[#allocation2 + $0x108] sm:$0xff] %v314
      %321 = vst [vmem:[#allocation2 + $0x110] sm:$0xff] %v316
      %322 = vst [vmem:[#allocation2 + $0x118] sm:$0xff] %v318
      %v323 = vld [vmem:[%s2] sm:$0x1]
      %324 = vst [vmem:[#allocation2 + $0x120] sm:$0x1] %v323
      %v325 = vld [vmem:[%s207] sm:$0xff]
      %v326 = vld [vmem:[%s207 + $0x8] sm:$0xff]
      %v327 = vld [vmem:[%s207 + $0x10] sm:$0xff]
      %v328 = vld [vmem:[%s207 + $0x18] sm:$0xff]
      %v329 = vld [vmem:[%s207 + $0x20] sm:$0xff]
      %v330 = vld [vmem:[%s207 + $0x28] sm:$0xff]
      %v331 = vld [vmem:[%s207 + $0x30] sm:$0xff]
      %v332 = vld [vmem:[%s207 + $0x38] sm:$0xff]
      %v333 = vld [vmem:[%s207 + $0x40] sm:$0xff]
      %v334 = vld [vmem:[%s207 + $0x48] sm:$0xff]
      %v335 = vld [vmem:[%s207 + $0x50] sm:$0xff]
      %v336 = vld [vmem:[%s207 + $0x58] sm:$0xff]
      %v337 = vld [vmem:[#allocation2] sm:$0xff]
      %v338 = vld [vmem:[#allocation2 + $0x8] sm:$0xff]
      %v339 = vld [vmem:[#allocation2 + $0x10] sm:$0xff]
      %v340 = vld [vmem:[#allocation2 + $0x18] sm:$0xff]
      %v341 = vld [vmem:[#allocation2 + $0x20] sm:$0xff]
      %v342 = vld [vmem:[#allocation2 + $0x28] sm:$0xff]
      %v343 = vld [vmem:[#allocation2 + $0x30] sm:$0xff]
      %v344 = vld [vmem:[#allocation2 + $0x38] sm:$0xff]
      %v345 = vld [vmem:[#allocation2 + $0x40] sm:$0xff]
      %v346 = vld [vmem:[#allocation2 + $0x48] sm:$0xff]
      %v347 = vld [vmem:[#allocation2 + $0x50] sm:$0xff]
      %v348 = vld [vmem:[#allocation2 + $0x58] sm:$0xff]
      %v349 = vld [vmem:[#allocation2 + $0x60] sm:$0xff]
      %v350 = vld [vmem:[#allocation2 + $0x68] sm:$0xff]
      %v351 = vld [vmem:[#allocation2 + $0x70] sm:$0xff]
      %v352 = vld [vmem:[#allocation2 + $0x78] sm:$0xff]
      %v353 = vld [vmem:[#allocation2 + $0x80] sm:$0xff]
      %v354 = vld [vmem:[#allocation2 + $0x88] sm:$0xff]
      %v355 = vld [vmem:[#allocation2 + $0x90] sm:$0xff]
      %v356 = vld [vmem:[#allocation2 + $0x98] sm:$0xff]
      %v357 = vld [vmem:[#allocation2 + $0xa0] sm:$0xff]
      %v358 = vld [vmem:[#allocation2 + $0xa8] sm:$0xff]
      %v359 = vld [vmem:[#allocation2 + $0xb0] sm:$0xff]
      %v360 = vld [vmem:[#allocation2 + $0xb8] sm:$0xff]
      %v361 = vld [vmem:[#allocation2 + $0xc0] sm:$0xff]
      %v362 = vld [vmem:[#allocation2 + $0xc8] sm:$0xff]
      %v363 = vld [vmem:[#allocation2 + $0xd0] sm:$0xff]
      %v364 = vld [vmem:[#allocation2 + $0xd8] sm:$0xff]
      %v365 = vld [vmem:[#allocation2 + $0xe0] sm:$0xff]
      %v366 = vld [vmem:[#allocation2 + $0xe8] sm:$0xff]
      %v367 = vld [vmem:[#allocation2 + $0xf0] sm:$0xff]
      %v368 = vld [vmem:[#allocation2 + $0xf8] sm:$0xff]
      %v369 = vld [vmem:[#allocation2 + $0x100] sm:$0xff]
      %v370 = vld [vmem:[#allocation2 + $0x108] sm:$0xff]
      %v371 = vld [vmem:[#allocation2 + $0x110] sm:$0xff]
      %v372 = vld [vmem:[#allocation2 + $0x118] sm:$0xff]
      %v373 = vld [vmem:[#allocation2 + $0x120] sm:$0x1]
      %vm374 = vcmask 269312
      %v376 = vsel %vm374, %v327, 0
      %v379 = vsel %vm374, %v330, 0
      %v382 = vsel %vm374, %v333, 0
      %v385 = vsel %vm374, %v336, 0
      %vm387 = vcmask 1040384
      %v389 = vsel %vm387, %v373, 0
      %391 = vmatprep.subr.mxu0 0.0
      %392 = vmatpush1.msra.mxu0 %v337
      %393 = vmatprep.subr.mxu0 0.0
      %394 = vmatpush1.msra.mxu0 %v338
      %395 = vmatprep.subr.mxu0 0.0
      %396 = vmatpush1.msra.mxu0 %v339
      %397 = vmatprep.subr.mxu0 0.0
      %398 = vmatpush1.msra.mxu0 %v340
      %399 = vmatprep.subr.mxu0 0.0
      %400 = vmatpush1.msra.mxu0 %v341
      %401 = vmatprep.subr.mxu0 0.0
      %402 = vmatpush1.msra.mxu0 %v342
      %403 = vmatprep.subr.mxu0 0.0
      %404 = vmatpush1.msra.mxu0 %v343
      %405 = vmatprep.subr.mxu0 0.0
      %406 = vmatpush1.msra.mxu0 %v344
      %407 = vmatprep.subr.mxu0 0.0
      %408 = vmatpush1.msra.mxu0 %v345
      %409 = vmatprep.subr.mxu0 0.0
      %410 = vmatpush1.msra.mxu0 %v346
      %411 = vmatprep.subr.mxu0 0.0
      %412 = vmatpush1.msra.mxu0 %v347
      %413 = vmatprep.subr.mxu0 0.0
      %414 = vmatpush1.msra.mxu0 %v348
      %415 = vmatprep.subr.mxu0 0.0
      %416 = vmatpush1.msra.mxu0 %v349
      %417 = vmatprep.subr.mxu0 0.0
      %418 = vmatpush1.msra.mxu0 %v350
      %419 = vmatprep.subr.mxu0 0.0
      %420 = vmatpush1.msra.mxu0 %v351
      %421 = vmatprep.subr.mxu0 0.0
      %422 = vmatpush1.msra.mxu0 %v352
      %423 = vmatprep.subr.mxu0 0.0
      %424 = vmatpush1.msra.mxu0 %v353
      %425 = vmatprep.subr.mxu0 0.0
      %426 = vmatpush1.msra.mxu0 %v354
      %427 = vmatprep.subr.mxu0 0.0
      %428 = vmatpush1.msra.mxu0 %v355
      %429 = vmatprep.subr.mxu0 0.0
      %430 = vmatpush1.msra.mxu0 %v356
      %431 = vmatprep.subr.mxu0 0.0
      %432 = vmatpush1.msra.mxu0 %v357
      %433 = vmatprep.subr.mxu0 0.0
      %434 = vmatpush1.msra.mxu0 %v358
      %435 = vmatprep.subr.mxu0 0.0
      %436 = vmatpush1.msra.mxu0 %v359
      %437 = vmatprep.subr.mxu0 0.0
      %438 = vmatpush1.msra.mxu0 %v360
      %439 = vmatprep.subr.mxu0 0.0
      %440 = vmatpush1.msra.mxu0 %v361
      %441 = vmatprep.subr.mxu0 0.0
      %442 = vmatpush1.msra.mxu0 %v362
      %443 = vmatprep.subr.mxu0 0.0
      %444 = vmatpush1.msra.mxu0 %v363
      %445 = vmatprep.subr.mxu0 0.0
      %446 = vmatpush1.msra.mxu0 %v364
      %447 = vmatprep.subr.mxu0 0.0
      %448 = vmatpush1.msra.mxu0 %v365
      %449 = vmatprep.subr.mxu0 0.0
      %450 = vmatpush1.msra.mxu0 %v366
      %451 = vmatprep.subr.mxu0 0.0
      %452 = vmatpush1.msra.mxu0 %v367
      %453 = vmatprep.subr.mxu0 0.0
      %454 = vmatpush1.msra.mxu0 %v368
      %455 = vmatprep.mubr.f32.mxu0 %v326
      %456 = vmatmul.mubr.f32.gmra.mrb[0].mxu0 %v325
      %v457 = vpop.f32.mrb[0].mxu0
      %v458 = vadd.f32 0.0, %v457
      %v459 = vpop.f32.mrb[0].mxu0
      %460 = vmatprep.mubr.f32.mxu0 %v329
      %461 = vmatmul.mubr.f32.gmra.mrb[0].mxu0 %v328
      %v462 = vpop.f32.mrb[0].mxu0
      %v463 = vadd.f32 0.0, %v462
      %v464 = vpop.f32.mrb[0].mxu0
      %465 = vmatprep.mubr.f32.mxu0 %v332
      %466 = vmatmul.mubr.f32.gmra.mrb[0].mxu0 %v331
      %v467 = vpop.f32.mrb[0].mxu0
      %v468 = vadd.f32 0.0, %v467
      %v469 = vpop.f32.mrb[0].mxu0
      %470 = vmatprep.mubr.f32.mxu0 %v335
      %471 = vmatmul.mubr.f32.gmra.mrb[0].mxu0 %v334
      %v472 = vpop.f32.mrb[0].mxu0
      %v473 = vadd.f32 0.0, %v472
      %v474 = vpop.f32.mrb[0].mxu0
      %475 = vdwg.mxu0
      %476 = vmatprep.subr.mxu0 0.0
      %477 = vmatpush1.msra.mxu0 %v369
      %478 = vmatprep.subr.mxu0 0.0
      %479 = vmatpush1.msra.mxu0 %v370
      %480 = vmatprep.subr.mxu0 0.0
      %481 = vmatpush1.msra.mxu0 %v371
      %482 = vmatprep.subr.mxu0 0.0
      %483 = vmatpush1.msra.mxu0 %v372
      %484 = vmatprep.subr.mxu0 0.0
      %485 = vmatpush1.msra.mxu0 %v389
      %486 = vmatprep.subr.mxu0 0.0
      %487 = vmatpush1.msra.mxu0 0.0
      %488 = vmatprep.subr.mxu0 0.0
      %489 = vmatpush1.msra.mxu0 0.0
      %490 = vmatprep.subr.mxu0 0.0
      %491 = vmatpush1.msra.mxu0 0.0
      %492 = vmatprep.subr.mxu0 0.0
      %493 = vmatpush1.msra.mxu0 0.0
      %494 = vmatprep.subr.mxu0 0.0
      %495 = vmatpush1.msra.mxu0 0.0
      %496 = vmatprep.subr.mxu0 0.0
      %497 = vmatpush1.msra.mxu0 0.0
      %498 = vmatprep.subr.mxu0 0.0
      %499 = vmatpush1.msra.mxu0 0.0
      %500 = vmatprep.subr.mxu0 0.0
      %501 = vmatpush1.msra.mxu0 0.0
      %502 = vmatprep.subr.mxu0 0.0
      %503 = vmatpush1.msra.mxu0 0.0
      %504 = vmatprep.subr.mxu0 0.0
      %505 = vmatpush1.msra.mxu0 0.0
      %506 = vmatprep.subr.mxu0 0.0
      %507 = vmatpush1.msra.mxu0 0.0
      %508 = vmatprep.subr.mxu0 0.0
      %509 = vmatpush1.msra.mxu0 0.0
      %510 = vmatprep.subr.mxu0 0.0
      %511 = vmatpush1.msra.mxu0 0.0
      %512 = vmatprep.subr.mxu0 0.0
      %513 = vmatpush1.msra.mxu0 0.0
      %514 = vmatprep.subr.mxu0 0.0
      %515 = vmatpush1.msra.mxu0 0.0
      %516 = vmatprep.subr.mxu0 0.0
      %517 = vmatpush1.msra.mxu0 0.0
      %518 = vmatprep.subr.mxu0 0.0
      %519 = vmatpush1.msra.mxu0 0.0
      %520 = vmatprep.subr.mxu0 0.0
      %521 = vmatpush1.msra.mxu0 0.0
      %522 = vmatprep.subr.mxu0 0.0
      %523 = vmatpush1.msra.mxu0 0.0
      %524 = vmatprep.subr.mxu0 0.0
      %525 = vmatpush1.msra.mxu0 0.0
      %526 = vmatprep.subr.mxu0 0.0
      %527 = vmatpush1.msra.mxu0 0.0
      %528 = vmatprep.subr.mxu0 0.0
      %529 = vmatpush1.msra.mxu0 0.0
      %530 = vmatprep.subr.mxu0 0.0
      %531 = vmatpush1.msra.mxu0 0.0
      %532 = vmatprep.subr.mxu0 0.0
      %533 = vmatpush1.msra.mxu0 0.0
      %534 = vmatprep.subr.mxu0 0.0
      %535 = vmatpush1.msra.mxu0 0.0
      %536 = vmatprep.subr.mxu0 0.0
      %537 = vmatpush1.msra.mxu0 0.0
      %538 = vmatprep.subr.mxu0 0.0
      %539 = vmatpush1.msra.mxu0 0.0
      %540 = vmatprep.mubr.f32.mxu0 0.0
      %541 = vmatmul.mubr.f32.gmra.mrb[0].mxu0 %v376
      %v542 = vpop.f32.mrb[0].mxu0
      %v543 = vadd.f32 %v458, %v542
      %v544 = vpop.f32.mrb[0].mxu0
      %545 = vmatprep.mubr.f32.mxu0 0.0
      %546 = vmatmul.mubr.f32.gmra.mrb[0].mxu0 %v379
      %v547 = vpop.f32.mrb[0].mxu0
      %v548 = vadd.f32 %v463, %v547
      %v549 = vpop.f32.mrb[0].mxu0
      %550 = vmatprep.mubr.f32.mxu0 0.0
      %551 = vmatmul.mubr.f32.gmra.mrb[0].mxu0 %v382
      %v552 = vpop.f32.mrb[0].mxu0
      %v553 = vadd.f32 %v468, %v552
      %v554 = vpop.f32.mrb[0].mxu0
      %555 = vmatprep.mubr.f32.mxu0 0.0
      %556 = vmatmul.mubr.f32.gmra.mrb[0].mxu0 %v385
      %v557 = vpop.f32.mrb[0].mxu0
      %v558 = vadd.f32 %v473, %v557
      %v559 = vpop.f32.mrb[0].mxu0
      %560 = vdwg.mxu0
      %v561 = vld [vmem:[%s2] sm:$0x1]
      %v563 = vlaneseq
      %v564 = vshrl.u32 %v563, 7
      %v565 = vsub.s32 0, %v564
      %v566 = vrot.slane %v561, %v565
      %v568 = vmul.f32 %v543, %v566
      %v569 = vmul.f32 %v548, %v566
      %v570 = vmul.f32 %v553, %v566
      %v571 = vmul.f32 %v558, %v566
      %572 = vadd.xlane.f32.xlu0 %v568
      %v573 = vpop.xlane.xlu0 %572
      %574 = vadd.xlane.f32.xlu0 %v569
      %v575 = vpop.xlane.xlu0 %574
      %576 = vadd.xlane.f32.xlu0 %v570
      %v577 = vpop.xlane.xlu0 %576
      %578 = vadd.xlane.f32.xlu0 %v571
      %v579 = vpop.xlane.xlu0 %578
      %v580 = vmul.f32 %v573, 0.0625
      %v581 = vmul.f32 %v575, 0.0625
      %v582 = vmul.f32 %v577, 0.0625
      %v583 = vmul.f32 %v579, 0.0625
      %v584 = vmul.f32 %v568, %v543
      %v585 = vmul.f32 %v569, %v548
      %v586 = vmul.f32 %v570, %v553
      %v587 = vmul.f32 %v571, %v558
      %588 = vadd.xlane.f32.xlu0 %v584
      %v589 = vpop.xlane.xlu0 %588
      %590 = vadd.xlane.f32.xlu0 %v585
      %v591 = vpop.xlane.xlu0 %590
      %592 = vadd.xlane.f32.xlu0 %v586
      %v593 = vpop.xlane.xlu0 %592
      %594 = vadd.xlane.f32.xlu0 %v587
      %v595 = vpop.xlane.xlu0 %594
      %v596 = vmul.f32 %v589, 0.0625
      %v597 = vmul.f32 %v591, 0.0625
      %v598 = vmul.f32 %v593, 0.0625
      %v599 = vmul.f32 %v595, 0.0625
      %v600 = vmul.f32 %v580, %v580
      %v601 = vmul.f32 %v581, %v581
      %v602 = vmul.f32 %v582, %v582
      %v603 = vmul.f32 %v583, %v583
      %v604 = vsub.f32 %v596, %v600
      %v605 = vsub.f32 %v597, %v601
      %v606 = vsub.f32 %v598, %v602
      %v607 = vsub.f32 %v599, %v603
      %v608 = vsub.f32 %v543, %v580
      %v609 = vsub.f32 %v548, %v581
      %v610 = vsub.f32 %v553, %v582
      %v611 = vsub.f32 %v558, %v583
      %v612 = vmul.f32 %v608, %v566
      %v613 = vmul.f32 %v609, %v566
      %v614 = vmul.f32 %v610, %v566
      %v615 = vmul.f32 %v611, %v566
      %v616 = vmax.f32 %v604, 0.0
      %v617 = vmax.f32 %v605, 0.0
      %v618 = vmax.f32 %v606, 0.0
      %v619 = vmax.f32 %v607, 0.0
      %v620 = vadd.f32 %v616, 1e-05
      %v621 = vadd.f32 %v617, 1e-05
      %v622 = vadd.f32 %v618, 1e-05
      %v623 = vadd.f32 %v619, 1e-05
      %v624 = vrsqrt.pop %v620
      %v625 = vrsqrt.pop %v621
      %v626 = vrsqrt.pop %v622
      %v627 = vrsqrt.pop %v623
      %v628 = vmul.f32 %v612, %v624
      %v629 = vmul.f32 %v613, %v625
      %v630 = vmul.f32 %v614, %v626
      %v631 = vmul.f32 %v615, %v627
      %v632 = vmax.f32 %v628, 0.0
      %v633 = vmax.f32 %v629, 0.0
      %v634 = vmax.f32 %v630, 0.0
      %v635 = vmax.f32 %v631, 0.0
      %636 = vst [vmem:[%s217] sm:$0xff] %v632
      %637 = vst [vmem:[%s217 + $0x8] sm:$0xff] %v633
      %638 = vst [vmem:[%s217 + $0x10] sm:$0xff] %v634
      %639 = vst [vmem:[%s217 + $0x18] sm:$0xff] %v635
      %s640 = smul.u32 4, %s19
      %p641 = scmp.lt.s32.totalorder %s18, 1
      %s642 = scalar_select %p641, %s18, 1
      %p643 = scmp.lt.s32.totalorder %s640, 3
      %s644 = scalar_select %p643, %s640, 3
      %s645 = smul.addr %s642, 4
      %s646 = sadd.s32 %s644, %s645
      %s647 = smul.addr %s646, 8
      %s648 = scalar_lea.vmem %s3, %s647
      // Predicated region
      $region33: #{unet_forward.16} parent=31 // pred_check
        %p649 = pneg %p119
      $region34: #{unet_forward.16} parent=31 // pred_check_branch
        %651 = sbr.rel (%p649) target = $region36
      $region35: #{unet_forward.16} parent=31 // pred_region
        %s652 = smul.u32 4, %s19
      $region36: #{unet_forward.16} parent=31 // pred_fallthru
        _
    $region32: #{unet_forward.16} parent=5 // pred_fallthru
      _
    %p653 = scmp.le.s32.totalorder 2, %s9
    // Predicated region
    $region37: #{unet_forward.16} parent=5 // pred_check
      %p654 = pneg %p653
    $region38: #{unet_forward.16} parent=5 // pred_check_branch
      %656 = sbr.rel (%p654) target = $region40
    $region39: #{unet_forward.16} parent=5 // pred_region
      %s657 = ssub.s32 %s9, 2
      // Predicated region
      $region41: #{unet_forward.16} parent=39 // pred_check
        %p658 = pneg %p125
      $region42: #{unet_forward.16} parent=39 // pred_check_branch
        %660 = sbr.rel (%p658) target = $region44
      $region43: #{unet_forward.16} parent=39 // pred_region
        %s661 = smul.u32 4, %s21
        %p662 = scmp.lt.s32.totalorder %s20, 1
        %s663 = scalar_select %p662, %s20, 1
        %p664 = scmp.lt.s32.totalorder %s661, 3
        %s665 = scalar_select %p664, %s661, 3
        %s666 = smul.addr %s663, 4
        %s667 = sadd.s32 %s665, %s666
        %s668 = smul.addr %s667, 8
        %s669 = scalar_lea.vmem %s3, %s668
      $region44: #{unet_forward.16} parent=39 // pred_fallthru
        _
    $region40: #{unet_forward.16} parent=5 // pred_fallthru
      _
  $region6: #{unet_forward.16} parent=0 // loop_footer
    %s13 = sadd.s32 1, %s9
  $region7: #{unet_forward.16} parent=0 // loop_footer_branch
    %8 = sbr.rel target = $region3
  $region8: #{unet_forward.16} parent=0 // loop_exit
    _

// kernel: unet_forward.18
$region0: #{unet_forward.18}
  #allocation0 [shape = 'u32[]', space=smem, size = 0x4, offset = 0x4, fixed_abs, tag = 'smem constant byte address 0x4 - core index']
  #allocation1 [shape = 'u32[144,128]{1,0:T(1,128)}', space=vmem, size = 0x12000, scoped, tag = 'internal scratch']
  #allocation2 [shape = 'f32[145,128]{1,0:T(8,128)}', space=vmem, size = 0x13000, scoped, tag = 'scratch operand']
  %s0 = inlined_call_operand.vmem [shape: f32[2,16,128], index: 0, kind: input, shape index: {}]
  %s1 = inlined_call_operand.vmem [shape: f32[2,16,128], index: 1, kind: input, shape index: {}]
  %s2 = inlined_call_operand.vmem [shape: f32[16,145], index: 2, kind: input, shape index: {}]
  %s3 = inlined_call_operand.vmem [shape: f32[1,128], index: 3, kind: input, shape index: {}]
  %s4 = inlined_call_operand.vmem [shape: f32[2,16,128], index: 4, kind: output, shape index: {}]
  %s5 = sld [smem:[#allocation0]]
  $region49: #{unet_forward.18} parent=0
    _
  %s7 = ssub.s32 1, %s5
  %s8 = scalar_select 0, %s7, %s5
  loop: start=0, step=1, limit=4
  $region2: #{unet_forward.18} parent=0 // loop_pre_header
    _
  $region3: #{unet_forward.18} parent=0 // loop_header
    %s10 = sphi 0, %s14
    %p11 = scmp.ge.s32.totalorder %s10, 4
    %s17 = sphi 0, %s29
    %s18 = sphi 0, %s25
    %s19 = sphi 0, %s17
    %s20 = sphi 0, %s18
    %s21 = sphi 0, %s19
    %s22 = sphi 0, %s20
    %s32 = sphi 0, %s34
    %s35 = sphi 0, %s32
    %s36 = sphi 0, %s35
    %s52 = sphi 0, %s36
    %s58 = sphi 0, %s60
    %s61 = sphi 0, %s58
    %s62 = sphi 0, %s61
    %s78 = sphi 0, %s62
    %s84 = sphi 0, %s86
    %s87 = sphi 0, %s84
    %s88 = sphi 0, %s87
    %s104 = sphi 0, %s88
    %s108 = sphi 0, %s108
    %s110 = sphi 0, %s108
    %s111 = sphi 0, %s110
    %s125 = sphi 0, %s111
    %s133 = sphi 0, %s135
    %s136 = sphi 0, %s133
    %s137 = sphi 0, %s136
    %s153 = sphi 0, %s137
  $region4: #{unet_forward.18} parent=0 // loop_header_branch
    %13 = sbr.rel (%p11) target = $region8
  $region5: #{unet_forward.18} parent=0 // loop_body
    %s15 = ssub.s32 %s10, 1
    %s16 = ssub.s32 %s10, 2
    %s23 = sadd.s32 1, %s18
    %p24 = scmp.ge.s32.totalorder %s23, 1
    %s25 = scalar_select %p24, 0, %s23
    %s26 = sadd.s32 1, %s17
    %s27 = scalar_select %p24, %s26, %s17
    %p28 = scmp.ge.s32.totalorder %s27, 2
    %s29 = scalar_select %p28, 0, %s27
    %s30 = ssub.s32 %s17, %s29
    %p31 = scmp.eq.s32.totalorder %s30, 0
    %s33 = sadd.s32 %s32, 1
    %s34 = scalar_select %p31, %s32, %s33
    %p37 = pneg %p31
    %p38 = scmp.eq.s32.totalorder %s10, 1
    %p39 = por %p37, %p38
    %p40 = scmp.ne.s32.totalorder %s32, %s35
    %p41 = scmp.eq.s32.totalorder %s10, 0
    %p42 = por %p40, %p41
    %p43 = scmp.ne.s32.totalorder %s32, %s35
    %p44 = scmp.eq.s32.totalorder %s15, 1
    %p45 = por %p43, %p44
    %p46 = scmp.ne.s32.totalorder %s35, %s36
    %p47 = scmp.eq.s32.totalorder %s15, 0
    %p48 = por %p46, %p47
    %p49 = scmp.ne.s32.totalorder %s35, %s36
    %p50 = scmp.eq.s32.totalorder %s16, 1
    %p51 = por %p49, %p50
    %p53 = scmp.ne.s32.totalorder %s36, %s52
    %p54 = scmp.eq.s32.totalorder %s16, 0
    %p55 = por %p53, %p54
    %s56 = ssub.s32 %s17, %s29
    %p57 = scmp.eq.s32.totalorder %s56, 0
    %s59 = sadd.s32 %s58, 1
    %s60 = scalar_select %p57, %s58, %s59
    %p63 = pneg %p57
    %p64 = scmp.eq.s32.totalorder %s10, 1
    %p65 = por %p63, %p64
    %p66 = scmp.ne.s32.totalorder %s58, %s61
    %p67 = scmp.eq.s32.totalorder %s10, 0
    %p68 = por %p66, %p67
    %p69 = scmp.ne.s32.totalorder %s58, %s61
    %p70 = scmp.eq.s32.totalorder %s15, 1
    %p71 = por %p69, %p70
    %p72 = scmp.ne.s32.totalorder %s61, %s62
    %p73 = scmp.eq.s32.totalorder %s15, 0
    %p74 = por %p72, %p73
    %p75 = scmp.ne.s32.totalorder %s61, %s62
    %p76 = scmp.eq.s32.totalorder %s16, 1
    %p77 = por %p75, %p76
    %p79 = scmp.ne.s32.totalorder %s62, %s78
    %p80 = scmp.eq.s32.totalorder %s16, 0
    %p81 = por %p79, %p80
    %s82 = ssub.s32 %s18, %s25
    %p83 = scmp.eq.s32.totalorder %s82, 0
    %s85 = sadd.s32 %s84, 1
    %s86 = scalar_select %p83, %s84, %s85
    %p89 = pneg %p83
    %p90 = scmp.eq.s32.totalorder %s10, 1
    %p91 = por %p89, %p90
    %p92 = scmp.ne.s32.totalorder %s84, %s87
    %p93 = scmp.eq.s32.totalorder %s10, 0
    %p94 = por %p92, %p93
    %p95 = scmp.ne.s32.totalorder %s84, %s87
    %p96 = scmp.eq.s32.totalorder %s15, 1
    %p97 = por %p95, %p96
    %p98 = scmp.ne.s32.totalorder %s87, %s88
    %p99 = scmp.eq.s32.totalorder %s15, 0
    %p100 = por %p98, %p99
    %p101 = scmp.ne.s32.totalorder %s87, %s88
    %p102 = scmp.eq.s32.totalorder %s16, 1
    %p103 = por %p101, %p102
    %p105 = scmp.ne.s32.totalorder %s88, %s104
    %p106 = scmp.eq.s32.totalorder %s16, 0
    %p107 = por %p105, %p106
    %s109 = sadd.s32 %s108, 1
    %p112 = scmp.eq.s32.totalorder %s10, 1
    %p113 = scmp.ne.s32.totalorder %s108, %s110
    %p114 = scmp.eq.s32.totalorder %s10, 0
    %p115 = por %p113, %p114
    %p116 = scmp.ne.s32.totalorder %s108, %s110
    %p117 = scmp.eq.s32.totalorder %s15, 1
    %p118 = por %p116, %p117
    %p119 = scmp.ne.s32.totalorder %s110, %s111
    %p120 = scmp.eq.s32.totalorder %s15, 0
    %p121 = por %p119, %p120
    %p122 = scmp.ne.s32.totalorder %s110, %s111
    %p123 = scmp.eq.s32.totalorder %s16, 1
    %p124 = por %p122, %p123
    %p126 = scmp.ne.s32.totalorder %s111, %s125
    %p127 = scmp.eq.s32.totalorder %s16, 0
    %p128 = por %p126, %p127
    %s129 = ssub.s32 %s17, %s29
    %s130 = ssub.s32 %s18, %s25
    %s131 = sor.u32 %s129, %s130
    %p132 = scmp.eq.s32.totalorder %s131, 0
    %s134 = sadd.s32 %s133, 1
    %s135 = scalar_select %p132, %s133, %s134
    %p138 = pneg %p132
    %p139 = scmp.eq.s32.totalorder %s10, 1
    %p140 = por %p138, %p139
    %p141 = scmp.ne.s32.totalorder %s133, %s136
    %p142 = scmp.eq.s32.totalorder %s10, 0
    %p143 = por %p141, %p142
    %p144 = scmp.ne.s32.totalorder %s133, %s136
    %p145 = scmp.eq.s32.totalorder %s15, 1
    %p146 = por %p144, %p145
    %p147 = scmp.ne.s32.totalorder %s136, %s137
    %p148 = scmp.eq.s32.totalorder %s15, 0
    %p149 = por %p147, %p148
    %p150 = scmp.ne.s32.totalorder %s136, %s137
    %p151 = scmp.eq.s32.totalorder %s16, 1
    %p152 = por %p150, %p151
    %p154 = scmp.ne.s32.totalorder %s137, %s153
    %p155 = scmp.eq.s32.totalorder %s16, 0
    %p156 = por %p154, %p155
    %p157 = scmp.le.s32.totalorder 1, %s10
    %p158 = scmp.lt.s32.totalorder %s10, 3
    %p159 = pnand %p157, %p158
    %p160 = pneg %p159
    // Predicated region
    $region9: #{unet_forward.18} parent=5 // pred_check
      _
    $region10: #{unet_forward.18} parent=5 // pred_check_branch
      %162 = sbr.rel (%p159) target = $region12
    $region11: #{unet_forward.18} parent=5 // pred_region
      %s163 = ssub.s32 %s10, 1
      // Predicated region
      $region13: #{unet_forward.18} parent=11 // pred_check
        %p164 = pneg %p100
      $region14: #{unet_forward.18} parent=11 // pred_check_branch
        %166 = sbr.rel (%p164) target = $region16
      $region15: #{unet_forward.18} parent=11 // pred_region
        %s167 = smul.u32 2, %s20
        %p168 = scmp.lt.s32.totalorder %s167, 1
        %s169 = scalar_select %p168, %s167, 1
        %s170 = smul.addr %s169, 2
        %s171 = smul.addr %s170, 8
        %s172 = scalar_lea.vmem %s2, %s171
        %s173 = smul.u32 2, %s20
      $region16: #{unet_forward.18} parent=11 // pred_fallthru
        _
      // Predicated region
      $region17: #{unet_forward.18} parent=11 // pred_check
        %p174 = pneg %p121
      $region18: #{unet_forward.18} parent=11 // pred_check_branch
        %176 = sbr.rel (%p174) target = $region20
      $region19: #{unet_forward.18} parent=11 // pred_region
        _
      $region20: #{unet_forward.18} parent=11 // pred_fallthru
        _
    $region12: #{unet_forward.18} parent=5 // pred_fallthru
      _
    %p177 = scmp.lt.s32.totalorder %s10, 2
    // Predicated region
    $region21: #{unet_forward.18} parent=5 // pred_check
      %p178 = pneg %p177
    $region22: #{unet_forward.18} parent=5 // pred_check_branch
      %180 = sbr.rel (%p178) target = $region24
    $region23: #{unet_forward.18} parent=5 // pred_region
      // Predicated region
      $region25: #{unet_forward.18} parent=23 // pred_check
        %p181 = pneg %p42
      $region26: #{unet_forward.18} parent=23 // pred_check_branch
        %183 = sbr.rel (%p181) target = $region28
      $region27: #{unet_forward.18} parent=23 // pred_region
        %p184 = scmp.lt.s32.totalorder %s17, 1
        %s185 = scalar_select %p184, %s17, 1
        %s186 = smul.addr %s185, 2
        %s187 = smul.addr %s186, 8
        %s188 = scalar_lea.vmem %s0, %s187
      $region28: #{unet_forward.18} parent=23 // pred_fallthru
        _
      // Predicated region
      $region29: #{unet_forward.18} parent=23 // pred_check
        %p189 = pneg %p68
      $region30: #{unet_forward.18} parent=23 // pred_check_branch
        %191 = sbr.rel (%p189) target = $region32
      $region31: #{unet_forward.18} parent=23 // pred_region
        %p192 = scmp.lt.s32.totalorder %s17, 1
        %s193 = scalar_select %p192, %s17, 1
        %s194 = smul.addr %s193, 2
        %s195 = smul.addr %s194, 8
        %s196 = scalar_lea.vmem %s1, %s195
      $region32: #{unet_forward.18} parent=23 // pred_fallthru
        _
    $region24: #{unet_forward.18} parent=5 // pred_fallthru
      _
    %p197 = scmp.le.s32.totalorder 1, %s10
    %p198 = scmp.lt.s32.totalorder %s10, 3
    %p199 = pnand %p197, %p198
    %p200 = pneg %p199
    // Predicated region
    $region33: #{unet_forward.18} parent=5 // pred_check
      _
    $region34: #{unet_forward.18} parent=5 // pred_check_branch
      %202 = sbr.rel (%p199) target = $region36
    $region35: #{unet_forward.18} parent=5 // pred_region
      %s203 = ssub.s32 %s10, 1
      %p204 = scmp.lt.s32.totalorder %s19, 1
      %s205 = scalar_select %p204, %s19, 1
      %s206 = smul.addr %s205, 2
      %s207 = smul.addr %s206, 8
      %s208 = scalar_lea.vmem %s0, %s207
      %p209 = pneg %p48
      %p210 = pneg %p45
      %p211 = scmp.lt.s32.totalorder %s19, 1
      %s212 = scalar_select %p211, %s19, 1
      %s213 = smul.addr %s212, 2
      %s214 = smul.addr %s213, 8
      %s215 = scalar_lea.vmem %s1, %s214
      %p216 = pneg %p74
      %p217 = pneg %p71
      %s218 = smul.u32 2, %s20
      %p219 = scmp.lt.s32.totalorder %s218, 1
      %s220 = scalar_select %p219, %s218, 1
      %s221 = smul.addr %s220, 2
      %s222 = smul.addr %s221, 8
      %s223 = scalar_lea.vmem %s2, %s222
      %p224 = pneg %p100
      %p225 = pneg %p97
      %p226 = pneg %p121
      %p227 = pneg %p118
      %p228 = pneg %p149
      %p229 = pneg %p146
      %s230 = smul.u32 2, %s20
      %p231 = scmp.lt.s32.totalorder %s19, 1
      %s232 = scalar_select %p231, %s19, 1
      %p233 = scmp.lt.s32.totalorder %s230, 1
      %s234 = scalar_select %p233, %s230, 1
      %s235 = smul.addr %s232, 2
      %s236 = sadd.s32 %s234, %s235
      %s237 = smul.addr %s236, 8
      %s238 = scalar_lea.vmem %s4, %s237
      %p239 = scmp.lt.s32.totalorder %s19, 1
      %s240 = scalar_select %p239, %s19, 1
      %s241 = smul.addr %s240, 2
      %s242 = smul.addr %s241, 8
      %s243 = scalar_lea.vmem %s0, %s242
      %p244 = scmp.lt.s32.totalorder %s19, 1
      %s245 = scalar_select %p244, %s19, 1
      %s246 = smul.addr %s245, 2
      %s247 = smul.addr %s246, 8
      %s248 = scalar_lea.vmem %s1, %s247
      %s249 = smul.u32 2, %s20
      %p250 = scmp.lt.s32.totalorder %s249, 1
      %s251 = scalar_select %p250, %s249, 1
      %s252 = smul.addr %s251, 2
      %s253 = smul.addr %s252, 8
      %s254 = scalar_lea.vmem %s2, %s253
      %s255 = smul.u32 2, %s20
      %s256 = smul.u32 2, %s20
      %p257 = scmp.lt.s32.totalorder %s19, 1
      %s258 = scalar_select %p257, %s19, 1
      %p259 = scmp.lt.s32.totalorder %s256, 1
      %s260 = scalar_select %p259, %s256, 1
      %s261 = smul.addr %s258, 2
      %s262 = sadd.s32 %s260, %s261
      %s263 = smul.addr %s262, 8
      %s264 = scalar_lea.vmem %s4, %s263
      %s265 = smul.u32 2, %s20
      %v266 = vld [vmem:[%s243] sm:$0xff]
      %v267 = vld [vmem:[%s243 + $0x8] sm:$0xff]
      %v268 = vld [vmem:[%s248] sm:$0xff]
      %v269 = vld [vmem:[%s248 + $0x8] sm:$0xff]
      %v270 = vadd.f32 %v266, %v268
      %v271 = vadd.f32 %v267, %v269
      %272 = vrot.lane.b32.xlu0 %v270, 11
      %v273 = vpop.permute.xlu0 %272
      %274 = vrot.lane.b32.xlu0 %v271, 11
      %v275 = vpop.permute.xlu0 %274
      %276 = vst [vmem:[#allocation2] sm:$0xff] %v273
      %277 = vst [vmem:[#allocation2 + $0x8] sm:$0xff] %v275
      %278 = vrot.lane.b32.xlu0 %v270, 10
      %v279 = vpop.permute.xlu0 %278
      %280 = vrot.lane.b32.xlu0 %v271, 10
      %v281 = vpop.permute.xlu0 %280
      %282 = vst [vmem:[#allocation2 + $0x10] sm:$0xff] %v279
      %283 = vst [vmem:[#allocation2 + $0x18] sm:$0xff] %v281
      %284 = vrot.lane.b32.xlu0 %v270, 9
      %v285 = vpop.permute.xlu0 %284
      %286 = vrot.lane.b32.xlu0 %v271, 9
      %v287 = vpop.permute.xlu0 %286
      %288 = vst [vmem:[#allocation2 + $0x20] sm:$0xff] %v285
      %289 = vst [vmem:[#allocation2 + $0x28] sm:$0xff] %v287
      %290 = vrot.lane.b32.xlu0 %v270, 1
      %v291 = vpop.permute.xlu0 %290
      %292 = vrot.lane.b32.xlu0 %v271, 1
      %v293 = vpop.permute.xlu0 %292
      %294 = vst [vmem:[#allocation2 + $0x30] sm:$0xff] %v291
      %295 = vst [vmem:[#allocation2 + $0x38] sm:$0xff] %v293
      %296 = vst [vmem:[#allocation2 + $0x40] sm:$0xff] %v270
      %297 = vst [vmem:[#allocation2 + $0x48] sm:$0xff] %v271
      %298 = vrot.lane.b32.xlu0 %v270, 127
      %v299 = vpop.permute.xlu0 %298
      %300 = vrot.lane.b32.xlu0 %v271, 127
      %v301 = vpop.permute.xlu0 %300
      %302 = vst [vmem:[#allocation2 + $0x50] sm:$0xff] %v299
      %303 = vst [vmem:[#allocation2 + $0x58] sm:$0xff] %v301
      %304 = vrot.lane.b32.xlu0 %v270, 119
      %v305 = vpop.permute.xlu0 %304
      %306 = vrot.lane.b32.xlu0 %v271, 119
      %v307 = vpop.permute.xlu0 %306
      %308 = vst [vmem:[#allocation2 + $0x60] sm:$0xff] %v305
      %309 = vst [vmem:[#allocation2 + $0x68] sm:$0xff] %v307
      %310 = vrot.lane.b32.xlu0 %v270, 118
      %v311 = vpop.permute.xlu0 %310
      %312 = vrot.lane.b32.xlu0 %v271, 118
      %v313 = vpop.permute.xlu0 %312
      %314 = vst [vmem:[#allocation2 + $0x70] sm:$0xff] %v311
      %315 = vst [vmem:[#allocation2 + $0x78] sm:$0xff] %v313
      %316 = vrot.lane.b32.xlu0 %v270, 117
      %v317 = vpop.permute.xlu0 %316
      %318 = vrot.lane.b32.xlu0 %v271, 117
      %v319 = vpop.permute.xlu0 %318
      %320 = vst [vmem:[#allocation2 + $0x80] sm:$0xff] %v317
      %321 = vst [vmem:[#allocation2 + $0x88] sm:$0xff] %v319
      %v322 = vld [vmem:[%s3] sm:$0x1]
      %323 = vst [vmem:[#allocation2 + $0x90] sm:$0x1] %v322
      %v324 = vld [vmem:[%s254] sm:$0xff]
      %v325 = vld [vmem:[%s254 + $0x8] sm:$0xff]
      %v326 = vld [vmem:[%s254 + $0x10] sm:$0xff]
      %v327 = vld [vmem:[%s254 + $0x18] sm:$0xff]
      %v328 = vld [vmem:[#allocation2] sm:$0xff]
      %v329 = vld [vmem:[#allocation2 + $0x8] sm:$0xff]
      %v330 = vld [vmem:[#allocation2 + $0x10] sm:$0xff]
      %v331 = vld [vmem:[#allocation2 + $0x18] sm:$0xff]
      %v332 = vld [vmem:[#allocation2 + $0x20] sm:$0xff]
      %v333 = vld [vmem:[#allocation2 + $0x28] sm:$0xff]
      %v334 = vld [vmem:[#allocation2 + $0x30] sm:$0xff]
      %v335 = vld [vmem:[#allocation2 + $0x38] sm:$0xff]
      %v336 = vld [vmem:[#allocation2 + $0x40] sm:$0xff]
      %v337 = vld [vmem:[#allocation2 + $0x48] sm:$0xff]
      %v338 = vld [vmem:[#allocation2 + $0x50] sm:$0xff]
      %v339 = vld [vmem:[#allocation2 + $0x58] sm:$0xff]
      %v340 = vld [vmem:[#allocation2 + $0x60] sm:$0xff]
      %v341 = vld [vmem:[#allocation2 + $0x68] sm:$0xff]
      %v342 = vld [vmem:[#allocation2 + $0x70] sm:$0xff]
      %v343 = vld [vmem:[#allocation2 + $0x78] sm:$0xff]
      %v344 = vld [vmem:[#allocation2 + $0x80] sm:$0xff]
      %v345 = vld [vmem:[#allocation2 + $0x88] sm:$0xff]
      %v346 = vld [vmem:[#allocation2 + $0x90] sm:$0x1]
      %vm347 = vcmask 138240
      %v349 = vsel %vm347, %v325, 0
      %v352 = vsel %vm347, %v327, 0
      %vm354 = vcmask 1040384
      %v356 = vsel %vm354, %v346, 0
      %358 = vmatprep.subr.mxu0 0.0
      %359 = vmatpush1.msra.mxu0 %v328
      %360 = vmatprep.subr.mxu0 0.0
      %361 = vmatpush1.msra.mxu0 %v329
      %362 = vmatprep.subr.mxu0 0.0
      %363 = vmatpush1.msra.mxu0 %v330
      %364 = vmatprep.subr.mxu0 0.0
      %365 = vmatpush1.msra.mxu0 %v331
      %366 = vmatprep.subr.mxu0 0.0
      %367 = vmatpush1.msra.mxu0 %v332
      %368 = vmatprep.subr.mxu0 0.0
      %369 = vmatpush1.msra.mxu0 %v333
      %370 = vmatprep.subr.mxu0 0.0
      %371 = vmatpush1.msra.mxu0 %v334
      %372 = vmatprep.subr.mxu0 0.0
      %373 = vmatpush1.msra.mxu0 %v335
      %374 = vmatprep.subr.mxu0 0.0
      %375 = vmatpush1.msra.mxu0 %v336
      %376 = vmatprep.subr.mxu0 0.0
      %377 = vmatpush1.msra.mxu0 %v337
      %378 = vmatprep.subr.mxu0 0.0
      %379 = vmatpush1.msra.mxu0 %v338
      %380 = vmatprep.subr.mxu0 0.0
      %381 = vmatpush1.msra.mxu0 %v339
      %382 = vmatprep.subr.mxu0 0.0
      %383 = vmatpush1.msra.mxu0 %v340
      %384 = vmatprep.subr.mxu0 0.0
      %385 = vmatpush1.msra.mxu0 %v341
      %386 = vmatprep.subr.mxu0 0.0
      %387 = vmatpush1.msra.mxu0 %v342
      %388 = vmatprep.subr.mxu0 0.0
      %389 = vmatpush1.msra.mxu0 %v343
      %390 = vmatprep.subr.mxu0 0.0
      %391 = vmatpush1.msra.mxu0 %v344
      %392 = vmatprep.subr.mxu0 0.0
      %393 = vmatpush1.msra.mxu0 %v345
      %394 = vmatprep.subr.mxu0 0.0
      %395 = vmatpush1.msra.mxu0 %v356
      %396 = vmatprep.subr.mxu0 0.0
      %397 = vmatpush1.msra.mxu0 0.0
      %398 = vmatprep.subr.mxu0 0.0
      %399 = vmatpush1.msra.mxu0 0.0
      %400 = vmatprep.subr.mxu0 0.0
      %401 = vmatpush1.msra.mxu0 0.0
      %402 = vmatprep.subr.mxu0 0.0
      %403 = vmatpush1.msra.mxu0 0.0
      %404 = vmatprep.subr.mxu0 0.0
      %405 = vmatpush1.msra.mxu0 0.0
      %406 = vmatprep.subr.mxu0 0.0
      %407 = vmatpush1.msra.mxu0 0.0
      %408 = vmatprep.subr.mxu0 0.0
      %409 = vmatpush1.msra.mxu0 0.0
      %410 = vmatprep.subr.mxu0 0.0
      %411 = vmatpush1.msra.mxu0 0.0
      %412 = vmatprep.subr.mxu0 0.0
      %413 = vmatpush1.msra.mxu0 0.0
      %414 = vmatprep.subr.mxu0 0.0
      %415 = vmatpush1.msra.mxu0 0.0
      %416 = vmatprep.subr.mxu0 0.0
      %417 = vmatpush1.msra.mxu0 0.0
      %418 = vmatprep.subr.mxu0 0.0
      %419 = vmatpush1.msra.mxu0 0.0
      %420 = vmatprep.subr.mxu0 0.0
      %421 = vmatpush1.msra.mxu0 0.0
      %422 = vmatprep.mubr.f32.mxu0 %v349
      %423 = vmatmul.mubr.f32.gmra.mrb[0].mxu0 %v324
      %v424 = vpop.f32.mrb[0].mxu0
      %v425 = vadd.f32 0.0, %v424
      %v426 = vpop.f32.mrb[0].mxu0
      %427 = vmatprep.mubr.f32.mxu0 %v352
      %428 = vmatmul.mubr.f32.gmra.mrb[0].mxu0 %v326
      %v429 = vpop.f32.mrb[0].mxu0
      %v430 = vadd.f32 0.0, %v429
      %v431 = vpop.f32.mrb[0].mxu0
      %432 = vdwg.mxu0
      %v433 = vld [vmem:[%s3] sm:$0x1]
      %v435 = vlaneseq
      %v436 = vshrl.u32 %v435, 7
      %v437 = vsub.s32 0, %v436
      %v438 = vrot.slane %v433, %v437
      %v440 = vmul.f32 %v425, %v438
      %v441 = vmul.f32 %v430, %v438
      %442 = vadd.xlane.f32.xlu0 %v440
      %v443 = vpop.xlane.xlu0 %442
      %444 = vadd.xlane.f32.xlu0 %v441
      %v445 = vpop.xlane.xlu0 %444
      %v446 = vmul.f32 %v443, 0.015625
      %v447 = vmul.f32 %v445, 0.015625
      %v448 = vmul.f32 %v440, %v425
      %v449 = vmul.f32 %v441, %v430
      %450 = vadd.xlane.f32.xlu0 %v448
      %v451 = vpop.xlane.xlu0 %450
      %452 = vadd.xlane.f32.xlu0 %v449
      %v453 = vpop.xlane.xlu0 %452
      %v454 = vmul.f32 %v451, 0.015625
      %v455 = vmul.f32 %v453, 0.015625
      %v456 = vmul.f32 %v446, %v446
      %v457 = vmul.f32 %v447, %v447
      %v458 = vsub.f32 %v454, %v456
      %v459 = vsub.f32 %v455, %v457
      %v460 = vsub.f32 %v425, %v446
      %v461 = vsub.f32 %v430, %v447
      %v462 = vmul.f32 %v460, %v438
      %v463 = vmul.f32 %v461, %v438
      %v464 = vmax.f32 %v458, 0.0
      %v465 = vmax.f32 %v459, 0.0
      %v466 = vadd.f32 %v464, 1e-05
      %v467 = vadd.f32 %v465, 1e-05
      %v468 = vrsqrt.pop %v466
      %v469 = vrsqrt.pop %v467
      %v470 = vmul.f32 %v462, %v468
      %v471 = vmul.f32 %v463, %v469
      %v472 = vmax.f32 %v470, 0.0
      %v473 = vmax.f32 %v471, 0.0
      %474 = vst [vmem:[%s264] sm:$0xff] %v472
      %475 = vst [vmem:[%s264 + $0x8] sm:$0xff] %v473
      %s476 = smul.u32 2, %s20
      %p477 = scmp.lt.s32.totalorder %s19, 1
      %s478 = scalar_select %p477, %s19, 1
      %p479 = scmp.lt.s32.totalorder %s476, 1
      %s480 = scalar_select %p479, %s476, 1
      %s481 = smul.addr %s478, 2
      %s482 = sadd.s32 %s480, %s481
      %s483 = smul.addr %s482, 8
      %s484 = scalar_lea.vmem %s4, %s483
      // Predicated region
      $region37: #{unet_forward.18} parent=35 // pred_check
        %p485 = pneg %p146
      $region38: #{unet_forward.18} parent=35 // pred_check_branch
        %487 = sbr.rel (%p485) target = $region40
      $region39: #{unet_forward.18} parent=35 // pred_region
        %s488 = smul.u32 2, %s20
      $region40: #{unet_forward.18} parent=35 // pred_fallthru
        _
    $region36: #{unet_forward.18} parent=5 // pred_fallthru
      _
    %p489 = scmp.le.s32.totalorder 2, %s10
    // Predicated region
    $region41: #{unet_forward.18} parent=5 // pred_check
      %p490 = pneg %p489
    $region42: #{unet_forward.18} parent=5 // pred_check_branch
      %492 = sbr.rel (%p490) target = $region44
    $region43: #{unet_forward.18} parent=5 // pred_region
      %s493 = ssub.s32 %s10, 2
      // Predicated region
      $region45: #{unet_forward.18} parent=43 // pred_check
        %p494 = pneg %p152
      $region46: #{unet_forward.18} parent=43 // pred_check_branch
        %496 = sbr.rel (%p494) target = $region48
      $region47: #{unet_forward.18} parent=43 // pred_region
        %s497 = smul.u32 2, %s22
        %p498 = scmp.lt.s32.totalorder %s21, 1
        %s499 = scalar_select %p498, %s21, 1
        %p500 = scmp.lt.s32.totalorder %s497, 1
        %s501 = scalar_select %p500, %s497, 1
        %s502 = smul.addr %s499, 2
        %s503 = sadd.s32 %s501, %s502
        %s504 = smul.addr %s503, 8
        %s505 = scalar_lea.vmem %s4, %s504
      $region48: #{unet_forward.18} parent=43 // pred_fallthru
        _
    $region44: #{unet_forward.18} parent=5 // pred_fallthru
      _
  $region6: #{unet_forward.18} parent=0 // loop_footer
    %s14 = sadd.s32 1, %s10
  $region7: #{unet_forward.18} parent=0 // loop_footer_branch
    %9 = sbr.rel target = $region3
  $region8: #{unet_forward.18} parent=0 // loop_exit
    _

// kernel: unet_forward.19
$region0: #{unet_forward.19}
  #allocation0 [shape = 'u32[]', space=smem, size = 0x4, offset = 0x4, fixed_abs, tag = 'smem constant byte address 0x4 - core index']
  #allocation1 [shape = 'u32[144,128]{1,0:T(1,128)}', space=vmem, size = 0x12000, scoped, tag = 'internal scratch']
  %s0 = inlined_call_operand.vmem [shape: f32[2,16,128], index: 0, kind: input, shape index: {}]
  %s1 = inlined_call_operand.vmem [shape: f32[32,16], index: 1, kind: input, shape index: {}]
  %s2 = inlined_call_operand.vmem [shape: f32[2,32,128], index: 2, kind: output, shape index: {}]
  %s3 = sld [smem:[#allocation0]]
  $region41: #{unet_forward.19} parent=0
    _
  %s5 = ssub.s32 1, %s3
  %s6 = scalar_select 0, %s5, %s3
  loop: start=0, step=1, limit=4
  $region2: #{unet_forward.19} parent=0 // loop_pre_header
    _
  $region3: #{unet_forward.19} parent=0 // loop_header
    %s8 = sphi 0, %s12
    %p9 = scmp.ge.s32.totalorder %s8, 4
    %s18 = sphi 0, %s20
    %s21 = sphi 0, %s18
    %s22 = sphi 0, %s21
    %s38 = sphi 0, %s22
    %s42 = sphi 0, %s42
    %s44 = sphi 0, %s42
    %s45 = sphi 0, %s44
    %s59 = sphi 0, %s45
    %s65 = sphi 0, %s67
    %s68 = sphi 0, %s65
    %s69 = sphi 0, %s68
    %s85 = sphi 0, %s69
  $region4: #{unet_forward.19} parent=0 // loop_header_branch
    %11 = sbr.rel (%p9) target = $region8
  $region5: #{unet_forward.19} parent=0 // loop_body
    %s13 = ssub.s32 %s8, 1
    %s14 = ssub.s32 %s8, 2
    %s15 = sadd.s32 %s8, 1
    %s16 = ssub.s32 %s8, %s15
    %p17 = scmp.eq.s32.totalorder %s16, 0
    %s19 = sadd.s32 %s18, 1
    %s20 = scalar_select %p17, %s18, %s19
    %p23 = pneg %p17
    %p24 = scmp.eq.s32.totalorder %s8, 1
    %p25 = por %p23, %p24
    %p26 = scmp.ne.s32.totalorder %s18, %s21
    %p27 = scmp.eq.s32.totalorder %s8, 0
    %p28 = por %p26, %p27
    %p29 = scmp.ne.s32.totalorder %s18, %s21
    %p30 = scmp.eq.s32.totalorder %s13, 1
    %p31 = por %p29, %p30
    %p32 = scmp.ne.s32.totalorder %s21, %s22
    %p33 = scmp.eq.s32.totalorder %s13, 0
    %p34 = por %p32, %p33
    %p35 = scmp.ne.s32.totalorder %s21, %s22
    %p36 = scmp.eq.s32.totalorder %s14, 1
    %p37 = por %p35, %p36
    %p39 = scmp.ne.s32.totalorder %s22, %s38
    %p40 = scmp.eq.s32.totalorder %s14, 0
    %p41 = por %p39, %p40
    %s43 = sadd.s32 %s42, 1
    %p46 = scmp.eq.s32.totalorder %s8, 1
    %p47 = scmp.ne.s32.totalorder %s42, %s44
    %p48 = scmp.eq.s32.totalorder %s8, 0
    %p49 = por %p47, %p48
    %p50 = scmp.ne.s32.totalorder %s42, %s44
    %p51 = scmp.eq.s32.totalorder %s13, 1
    %p52 = por %p50, %p51
    %p53 = scmp.ne.s32.totalorder %s44, %s45
    %p54 = scmp.eq.s32.totalorder %s13, 0
    %p55 = por %p53, %p54
    %p56 = scmp.ne.s32.totalorder %s44, %s45
    %p57 = scmp.eq.s32.totalorder %s14, 1
    %p58 = por %p56, %p57
    %p60 = scmp.ne.s32.totalorder %s45, %s59
    %p61 = scmp.eq.s32.totalorder %s14, 0
    %p62 = por %p60, %p61
    %s63 = ssub.s32 %s8, %s15
    %p64 = scmp.eq.s32.totalorder %s63, 0
    %s66 = sadd.s32 %s65, 1
    %s67 = scalar_select %p64, %s65, %s66
    %p70 = pneg %p64
    %p71 = scmp.eq.s32.totalorder %s8, 1
    %p72 = por %p70, %p71
    %p73 = scmp.ne.s32.totalorder %s65, %s68
    %p74 = scmp.eq.s32.totalorder %s8, 0
    %p75 = por %p73, %p74
    %p76 = scmp.ne.s32.totalorder %s65, %s68
    %p77 = scmp.eq.s32.totalorder %s13, 1
    %p78 = por %p76, %p77
    %p79 = scmp.ne.s32.totalorder %s68, %s69
    %p80 = scmp.eq.s32.totalorder %s13, 0
    %p81 = por %p79, %p80
    %p82 = scmp.ne.s32.totalorder %s68, %s69
    %p83 = scmp.eq.s32.totalorder %s14, 1
    %p84 = por %p82, %p83
    %p86 = scmp.ne.s32.totalorder %s69, %s85
    %p87 = scmp.eq.s32.totalorder %s14, 0
    %p88 = por %p86, %p87
    %p89 = scmp.le.s32.totalorder 1, %s8
    %p90 = scmp.lt.s32.totalorder %s8, 3
    %p91 = pnand %p89, %p90
    %p92 = pneg %p91
    // Predicated region
    $region9: #{unet_forward.19} parent=5 // pred_check
      _
    $region10: #{unet_forward.19} parent=5 // pred_check_branch
      %94 = sbr.rel (%p91) target = $region12
    $region11: #{unet_forward.19} parent=5 // pred_region
      %s95 = ssub.s32 %s8, 1
      // Predicated region
      $region13: #{unet_forward.19} parent=11 // pred_check
        %p96 = pneg %p55
      $region14: #{unet_forward.19} parent=11 // pred_check_branch
        %98 = sbr.rel (%p96) target = $region16
      $region15: #{unet_forward.19} parent=11 // pred_region
        _
      $region16: #{unet_forward.19} parent=11 // pred_fallthru
        _
    $region12: #{unet_forward.19} parent=5 // pred_fallthru
      _
    %p99 = scmp.lt.s32.totalorder %s8, 2
    // Predicated region
    $region17: #{unet_forward.19} parent=5 // pred_check
      %p100 = pneg %p99
    $region18: #{unet_forward.19} parent=5 // pred_check_branch
      %102 = sbr.rel (%p100) target = $region20
    $region19: #{unet_forward.19} parent=5 // pred_region
      // Predicated region
      $region21: #{unet_forward.19} parent=19 // pred_check
        %p103 = pneg %p28
      $region22: #{unet_forward.19} parent=19 // pred_check_branch
        %105 = sbr.rel (%p103) target = $region24
      $region23: #{unet_forward.19} parent=19 // pred_region
        %p106 = scmp.lt.s32.totalorder %s8, 1
        %s107 = scalar_select %p106, %s8, 1
        %s108 = smul.addr %s107, 2
        %s109 = smul.addr %s108, 8
        %s110 = scalar_lea.vmem %s0, %s109
      $region24: #{unet_forward.19} parent=19 // pred_fallthru
        _
    $region20: #{unet_forward.19} parent=5 // pred_fallthru
      _
    %p111 = scmp.le.s32.totalorder 1, %s8
    %p112 = scmp.lt.s32.totalorder %s8, 3
    %p113 = pnand %p111, %p112
    %p114 = pneg %p113
    // Predicated region
    $region25: #{unet_forward.19} parent=5 // pred_check
      _
    $region26: #{unet_forward.19} parent=5 // pred_check_branch
      %116 = sbr.rel (%p113) target = $region28
    $region27: #{unet_forward.19} parent=5 // pred_region
      %s117 = ssub.s32 %s8, 1
      %p118 = scmp.lt.s32.totalorder %s13, 1
      %s119 = scalar_select %p118, %s13, 1
      %s120 = smul.addr %s119, 2
      %s121 = smul.addr %s120, 8
      %s122 = scalar_lea.vmem %s0, %s121
      %p123 = pneg %p34
      %p124 = pneg %p31
      %p125 = pneg %p55
      %p126 = pneg %p52
      %p127 = pneg %p81
      %p128 = pneg %p78
      %p129 = scmp.lt.s32.totalorder %s13, 1
      %s130 = scalar_select %p129, %s13, 1
      %s131 = smul.addr %s130, 4
      %s132 = smul.addr %s131, 8
      %s133 = scalar_lea.vmem %s2, %s132
      %p134 = scmp.lt.s32.totalorder %s13, 1
      %s135 = scalar_select %p134, %s13, 1
      %s136 = smul.addr %s135, 2
      %s137 = smul.addr %s136, 8
      %s138 = scalar_lea.vmem %s0, %s137
      %p139 = scmp.lt.s32.totalorder %s13, 1
      %s140 = scalar_select %p139, %s13, 1
      %s141 = smul.addr %s140, 4
      %s142 = smul.addr %s141, 8
      %s143 = scalar_lea.vmem %s2, %s142
      %v144 = vld [vmem:[%s1] sm:$0xff]
      %v145 = vld [vmem:[%s1 + $0x8] sm:$0xff]
      %v146 = vld [vmem:[%s1 + $0x10] sm:$0xff]
      %v147 = vld [vmem:[%s1 + $0x18] sm:$0xff]
      %v148 = vld [vmem:[%s138] sm:$0xff]
      %v149 = vld [vmem:[%s138 + $0x8] sm:$0xff]
      %vm150 = vcmask 130048
      %v152 = vsel %vm150, %v144, 0
      %v155 = vsel %vm150, %v145, 0
      %v158 = vsel %vm150, %v146, 0
      %v161 = vsel %vm150, %v147, 0
      %163 = vmatprep.subr.mxu0 0.0
      %164 = vmatpush1.msra.mxu0 %v148
      %165 = vmatprep.subr.mxu0 0.0
      %166 = vmatpush1.msra.mxu0 %v149
      %167 = vmatprep.subr.mxu0 0.0
      %168 = vmatpush1.msra.mxu0 0.0
      %169 = vmatprep.subr.mxu0 0.0
      %170 = vmatpush1.msra.mxu0 0.0
      %171 = vmatprep.subr.mxu0 0.0
      %172 = vmatpush1.msra.mxu0 0.0
      %173 = vmatprep.subr.mxu0 0.0
      %174 = vmatpush1.msra.mxu0 0.0
      %175 = vmatprep.subr.mxu0 0.0
      %176 = vmatpush1.msra.mxu0 0.0
      %177 = vmatprep.subr.mxu0 0.0
      %178 = vmatpush1.msra.mxu0 0.0
      %179 = vmatprep.subr.mxu0 0.0
      %180 = vmatpush1.msra.mxu0 0.0
      %181 = vmatprep.subr.mxu0 0.0
      %182 = vmatpush1.msra.mxu0 0.0
      %183 = vmatprep.subr.mxu0 0.0
      %184 = vmatpush1.msra.mxu0 0.0
      %185 = vmatprep.subr.mxu0 0.0
      %186 = vmatpush1.msra.mxu0 0.0
      %187 = vmatprep.subr.mxu0 0.0
      %188 = vmatpush1.msra.mxu0 0.0
      %189 = vmatprep.subr.mxu0 0.0
      %190 = vmatpush1.msra.mxu0 0.0
      %191 = vmatprep.subr.mxu0 0.0
      %192 = vmatpush1.msra.mxu0 0.0
      %193 = vmatprep.subr.mxu0 0.0
      %194 = vmatpush1.msra.mxu0 0.0
      %195 = vmatprep.subr.mxu0 0.0
      %196 = vmatpush1.msra.mxu0 0.0
      %197 = vmatprep.subr.mxu0 0.0
      %198 = vmatpush1.msra.mxu0 0.0
      %199 = vmatprep.subr.mxu0 0.0
      %200 = vmatpush1.msra.mxu0 0.0
      %201 = vmatprep.subr.mxu0 0.0
      %202 = vmatpush1.msra.mxu0 0.0
      %203 = vmatprep.subr.mxu0 0.0
      %204 = vmatpush1.msra.mxu0 0.0
      %205 = vmatprep.subr.mxu0 0.0
      %206 = vmatpush1.msra.mxu0 0.0
      %207 = vmatprep.subr.mxu0 0.0
      %208 = vmatpush1.msra.mxu0 0.0
      %209 = vmatprep.subr.mxu0 0.0
      %210 = vmatpush1.msra.mxu0 0.0
      %211 = vmatprep.subr.mxu0 0.0
      %212 = vmatpush1.msra.mxu0 0.0
      %213 = vmatprep.subr.mxu0 0.0
      %214 = vmatpush1.msra.mxu0 0.0
      %215 = vmatprep.subr.mxu0 0.0
      %216 = vmatpush1.msra.mxu0 0.0
      %217 = vmatprep.subr.mxu0 0.0
      %218 = vmatpush1.msra.mxu0 0.0
      %219 = vmatprep.subr.mxu0 0.0
      %220 = vmatpush1.msra.mxu0 0.0
      %221 = vmatprep.subr.mxu0 0.0
      %222 = vmatpush1.msra.mxu0 0.0
      %223 = vmatprep.subr.mxu0 0.0
      %224 = vmatpush1.msra.mxu0 0.0
      %225 = vmatprep.subr.mxu0 0.0
      %226 = vmatpush1.msra.mxu0 0.0
      %227 = vmatprep.mubr.f32.mxu0 0.0
      %228 = vmatmul.mubr.f32.gmra.mrb[0].mxu0 %v152
      %v229 = vpop.f32.mrb[0].mxu0
      %v230 = vadd.f32 0.0, %v229
      %v231 = vpop.f32.mrb[0].mxu0
      %232 = vmatprep.mubr.f32.mxu0 0.0
      %233 = vmatmul.mubr.f32.gmra.mrb[0].mxu0 %v155
      %v234 = vpop.f32.mrb[0].mxu0
      %v235 = vadd.f32 0.0, %v234
      %v236 = vpop.f32.mrb[0].mxu0
      %237 = vmatprep.mubr.f32.mxu0 0.0
      %238 = vmatmul.mubr.f32.gmra.mrb[0].mxu0 %v158
      %v239 = vpop.f32.mrb[0].mxu0
      %v240 = vadd.f32 0.0, %v239
      %v241 = vpop.f32.mrb[0].mxu0
      %242 = vmatprep.mubr.f32.mxu0 0.0
      %243 = vmatmul.mubr.f32.gmra.mrb[0].mxu0 %v161
      %v244 = vpop.f32.mrb[0].mxu0
      %v245 = vadd.f32 0.0, %v244
      %v246 = vpop.f32.mrb[0].mxu0
      %247 = vdwg.mxu0
      %248 = vst [vmem:[%s143] sm:$0xff] %v230
      %249 = vst [vmem:[%s143 + $0x8] sm:$0xff] %v235
      %250 = vst [vmem:[%s143 + $0x10] sm:$0xff] %v240
      %251 = vst [vmem:[%s143 + $0x18] sm:$0xff] %v245
      %p252 = scmp.lt.s32.totalorder %s13, 1
      %s253 = scalar_select %p252, %s13, 1
      %s254 = smul.addr %s253, 4
      %s255 = smul.addr %s254, 8
      %s256 = scalar_lea.vmem %s2, %s255
      // Predicated region
      $region29: #{unet_forward.19} parent=27 // pred_check
        %p257 = pneg %p78
      $region30: #{unet_forward.19} parent=27 // pred_check_branch
        %259 = sbr.rel (%p257) target = $region32
      $region31: #{unet_forward.19} parent=27 // pred_region
        _
      $region32: #{unet_forward.19} parent=27 // pred_fallthru
        _
    $region28: #{unet_forward.19} parent=5 // pred_fallthru
      _
    %p260 = scmp.le.s32.totalorder 2, %s8
    // Predicated region
    $region33: #{unet_forward.19} parent=5 // pred_check
      %p261 = pneg %p260
    $region34: #{unet_forward.19} parent=5 // pred_check_branch
      %263 = sbr.rel (%p261) target = $region36
    $region35: #{unet_forward.19} parent=5 // pred_region
      %s264 = ssub.s32 %s8, 2
      // Predicated region
      $region37: #{unet_forward.19} parent=35 // pred_check
        %p265 = pneg %p84
      $region38: #{unet_forward.19} parent=35 // pred_check_branch
        %267 = sbr.rel (%p265) target = $region40
      $region39: #{unet_forward.19} parent=35 // pred_region
        %p268 = scmp.lt.s32.totalorder %s14, 1
        %s269 = scalar_select %p268, %s14, 1
        %s270 = smul.addr %s269, 4
        %s271 = smul.addr %s270, 8
        %s272 = scalar_lea.vmem %s2, %s271
      $region40: #{unet_forward.19} parent=35 // pred_fallthru
        _
    $region36: #{unet_forward.19} parent=5 // pred_fallthru
      _
  $region6: #{unet_forward.19} parent=0 // loop_footer
    %s12 = sadd.s32 1, %s8
  $region7: #{unet_forward.19} parent=0 // loop_footer_branch
    %7 = sbr.rel target = $region3
  $region8: #{unet_forward.19} parent=0 // loop_exit
    _

// kernel: unet_forward.20
$region0: #{unet_forward.20}
  #allocation0 [shape = 'u32[]', space=smem, size = 0x4, offset = 0x4, fixed_abs, tag = 'smem constant byte address 0x4 - core index']
  #allocation1 [shape = 'u32[144,128]{1,0:T(1,128)}', space=vmem, size = 0x12000, scoped, tag = 'internal scratch']
  #allocation2 [shape = 'f32[73,384]{1,0:T(8,128)}', space=vmem, size = 0x1e000, scoped, tag = 'scratch operand']
  %s0 = inlined_call_operand.vmem [shape: f32[2,8,384], index: 0, kind: input, shape index: {}]
  %s1 = inlined_call_operand.vmem [shape: f32[2,8,384], index: 1, kind: input, shape index: {}]
  %s2 = inlined_call_operand.vmem [shape: f32[8,73], index: 2, kind: input, shape index: {}]
  %s3 = inlined_call_operand.vmem [shape: f32[1,384], index: 3, kind: input, shape index: {}]
  %s4 = inlined_call_operand.vmem [shape: f32[2,8,384], index: 4, kind: output, shape index: {}]
  %s5 = sld [smem:[#allocation0]]
  $region49: #{unet_forward.20} parent=0
    _
  %s7 = ssub.s32 1, %s5
  %s8 = scalar_select 0, %s7, %s5
  loop: start=0, step=1, limit=4
  $region2: #{unet_forward.20} parent=0 // loop_pre_header
    _
  $region3: #{unet_forward.20} parent=0 // loop_header
    %s10 = sphi 0, %s14
    %p11 = scmp.ge.s32.totalorder %s10, 4
    %s17 = sphi 0, %s29
    %s18 = sphi 0, %s25
    %s19 = sphi 0, %s17
    %s20 = sphi 0, %s18
    %s21 = sphi 0, %s19
    %s22 = sphi 0, %s20
    %s32 = sphi 0, %s34
    %s35 = sphi 0, %s32
    %s36 = sphi 0, %s35
    %s52 = sphi 0, %s36
    %s58 = sphi 0, %s60
    %s61 = sphi 0, %s58
    %s62 = sphi 0, %s61
    %s78 = sphi 0, %s62
    %s84 = sphi 0, %s86
    %s87 = sphi 0, %s84
    %s88 = sphi 0, %s87
    %s104 = sphi 0, %s88
    %s108 = sphi 0, %s108
    %s110 = sphi 0, %s108
    %s111 = sphi 0, %s110
    %s125 = sphi 0, %s111
    %s133 = sphi 0, %s135
    %s136 = sphi 0, %s133
    %s137 = sphi 0, %s136
    %s153 = sphi 0, %s137
  $region4: #{unet_forward.20} parent=0 // loop_header_branch
    %13 = sbr.rel (%p11) target = $region8
  $region5: #{unet_forward.20} parent=0 // loop_body
    %s15 = ssub.s32 %s10, 1
    %s16 = ssub.s32 %s10, 2
    %s23 = sadd.s32 1, %s18
    %p24 = scmp.ge.s32.totalorder %s23, 1
    %s25 = scalar_select %p24, 0, %s23
    %s26 = sadd.s32 1, %s17
    %s27 = scalar_select %p24, %s26, %s17
    %p28 = scmp.ge.s32.totalorder %s27, 2
    %s29 = scalar_select %p28, 0, %s27
    %s30 = ssub.s32 %s17, %s29
    %p31 = scmp.eq.s32.totalorder %s30, 0
    %s33 = sadd.s32 %s32, 1
    %s34 = scalar_select %p31, %s32, %s33
    %p37 = pneg %p31
    %p38 = scmp.eq.s32.totalorder %s10, 1
    %p39 = por %p37, %p38
    %p40 = scmp.ne.s32.totalorder %s32, %s35
    %p41 = scmp.eq.s32.totalorder %s10, 0
    %p42 = por %p40, %p41
    %p43 = scmp.ne.s32.totalorder %s32, %s35
    %p44 = scmp.eq.s32.totalorder %s15, 1
    %p45 = por %p43, %p44
    %p46 = scmp.ne.s32.totalorder %s35, %s36
    %p47 = scmp.eq.s32.totalorder %s15, 0
    %p48 = por %p46, %p47
    %p49 = scmp.ne.s32.totalorder %s35, %s36
    %p50 = scmp.eq.s32.totalorder %s16, 1
    %p51 = por %p49, %p50
    %p53 = scmp.ne.s32.totalorder %s36, %s52
    %p54 = scmp.eq.s32.totalorder %s16, 0
    %p55 = por %p53, %p54
    %s56 = ssub.s32 %s17, %s29
    %p57 = scmp.eq.s32.totalorder %s56, 0
    %s59 = sadd.s32 %s58, 1
    %s60 = scalar_select %p57, %s58, %s59
    %p63 = pneg %p57
    %p64 = scmp.eq.s32.totalorder %s10, 1
    %p65 = por %p63, %p64
    %p66 = scmp.ne.s32.totalorder %s58, %s61
    %p67 = scmp.eq.s32.totalorder %s10, 0
    %p68 = por %p66, %p67
    %p69 = scmp.ne.s32.totalorder %s58, %s61
    %p70 = scmp.eq.s32.totalorder %s15, 1
    %p71 = por %p69, %p70
    %p72 = scmp.ne.s32.totalorder %s61, %s62
    %p73 = scmp.eq.s32.totalorder %s15, 0
    %p74 = por %p72, %p73
    %p75 = scmp.ne.s32.totalorder %s61, %s62
    %p76 = scmp.eq.s32.totalorder %s16, 1
    %p77 = por %p75, %p76
    %p79 = scmp.ne.s32.totalorder %s62, %s78
    %p80 = scmp.eq.s32.totalorder %s16, 0
    %p81 = por %p79, %p80
    %s82 = ssub.s32 %s18, %s25
    %p83 = scmp.eq.s32.totalorder %s82, 0
    %s85 = sadd.s32 %s84, 1
    %s86 = scalar_select %p83, %s84, %s85
    %p89 = pneg %p83
    %p90 = scmp.eq.s32.totalorder %s10, 1
    %p91 = por %p89, %p90
    %p92 = scmp.ne.s32.totalorder %s84, %s87
    %p93 = scmp.eq.s32.totalorder %s10, 0
    %p94 = por %p92, %p93
    %p95 = scmp.ne.s32.totalorder %s84, %s87
    %p96 = scmp.eq.s32.totalorder %s15, 1
    %p97 = por %p95, %p96
    %p98 = scmp.ne.s32.totalorder %s87, %s88
    %p99 = scmp.eq.s32.totalorder %s15, 0
    %p100 = por %p98, %p99
    %p101 = scmp.ne.s32.totalorder %s87, %s88
    %p102 = scmp.eq.s32.totalorder %s16, 1
    %p103 = por %p101, %p102
    %p105 = scmp.ne.s32.totalorder %s88, %s104
    %p106 = scmp.eq.s32.totalorder %s16, 0
    %p107 = por %p105, %p106
    %s109 = sadd.s32 %s108, 1
    %p112 = scmp.eq.s32.totalorder %s10, 1
    %p113 = scmp.ne.s32.totalorder %s108, %s110
    %p114 = scmp.eq.s32.totalorder %s10, 0
    %p115 = por %p113, %p114
    %p116 = scmp.ne.s32.totalorder %s108, %s110
    %p117 = scmp.eq.s32.totalorder %s15, 1
    %p118 = por %p116, %p117
    %p119 = scmp.ne.s32.totalorder %s110, %s111
    %p120 = scmp.eq.s32.totalorder %s15, 0
    %p121 = por %p119, %p120
    %p122 = scmp.ne.s32.totalorder %s110, %s111
    %p123 = scmp.eq.s32.totalorder %s16, 1
    %p124 = por %p122, %p123
    %p126 = scmp.ne.s32.totalorder %s111, %s125
    %p127 = scmp.eq.s32.totalorder %s16, 0
    %p128 = por %p126, %p127
    %s129 = ssub.s32 %s17, %s29
    %s130 = ssub.s32 %s18, %s25
    %s131 = sor.u32 %s129, %s130
    %p132 = scmp.eq.s32.totalorder %s131, 0
    %s134 = sadd.s32 %s133, 1
    %s135 = scalar_select %p132, %s133, %s134
    %p138 = pneg %p132
    %p139 = scmp.eq.s32.totalorder %s10, 1
    %p140 = por %p138, %p139
    %p141 = scmp.ne.s32.totalorder %s133, %s136
    %p142 = scmp.eq.s32.totalorder %s10, 0
    %p143 = por %p141, %p142
    %p144 = scmp.ne.s32.totalorder %s133, %s136
    %p145 = scmp.eq.s32.totalorder %s15, 1
    %p146 = por %p144, %p145
    %p147 = scmp.ne.s32.totalorder %s136, %s137
    %p148 = scmp.eq.s32.totalorder %s15, 0
    %p149 = por %p147, %p148
    %p150 = scmp.ne.s32.totalorder %s136, %s137
    %p151 = scmp.eq.s32.totalorder %s16, 1
    %p152 = por %p150, %p151
    %p154 = scmp.ne.s32.totalorder %s137, %s153
    %p155 = scmp.eq.s32.totalorder %s16, 0
    %p156 = por %p154, %p155
    %p157 = scmp.le.s32.totalorder 1, %s10
    %p158 = scmp.lt.s32.totalorder %s10, 3
    %p159 = pnand %p157, %p158
    %p160 = pneg %p159
    // Predicated region
    $region9: #{unet_forward.20} parent=5 // pred_check
      _
    $region10: #{unet_forward.20} parent=5 // pred_check_branch
      %162 = sbr.rel (%p159) target = $region12
    $region11: #{unet_forward.20} parent=5 // pred_region
      %s163 = ssub.s32 %s10, 1
      // Predicated region
      $region13: #{unet_forward.20} parent=11 // pred_check
        %p164 = pneg %p100
      $region14: #{unet_forward.20} parent=11 // pred_check_branch
        %166 = sbr.rel (%p164) target = $region16
      $region15: #{unet_forward.20} parent=11 // pred_region
        %p167 = scmp.lt.s32.totalorder %s20, 0
        %s168 = scalar_select %p167, %s20, 0
        %s169 = smul.addr %s168, 8
        %s170 = scalar_lea.vmem %s2, %s169
      $region16: #{unet_forward.20} parent=11 // pred_fallthru
        _
      // Predicated region
      $region17: #{unet_forward.20} parent=11 // pred_check
        %p171 = pneg %p121
      $region18: #{unet_forward.20} parent=11 // pred_check_branch
        %173 = sbr.rel (%p171) target = $region20
      $region19: #{unet_forward.20} parent=11 // pred_region
        _
      $region20: #{unet_forward.20} parent=11 // pred_fallthru
        _
    $region12: #{unet_forward.20} parent=5 // pred_fallthru
      _
    %p174 = scmp.lt.s32.totalorder %s10, 2
    // Predicated region
    $region21: #{unet_forward.20} parent=5 // pred_check
      %p175 = pneg %p174
    $region22: #{unet_forward.20} parent=5 // pred_check_branch
      %177 = sbr.rel (%p175) target = $region24
    $region23: #{unet_forward.20} parent=5 // pred_region
      // Predicated region
      $region25: #{unet_forward.20} parent=23 // pred_check
        %p178 = pneg %p42
      $region26: #{unet_forward.20} parent=23 // pred_check_branch
        %180 = sbr.rel (%p178) target = $region28
      $region27: #{unet_forward.20} parent=23 // pred_region
        %p181 = scmp.lt.s32.totalorder %s17, 1
        %s182 = scalar_select %p181, %s17, 1
        %s183 = smul.addr %s182, 3
        %s184 = smul.addr %s183, 8
        %s185 = scalar_lea.vmem %s0, %s184
      $region28: #{unet_forward.20} parent=23 // pred_fallthru
        _
      // Predicated region
      $region29: #{unet_forward.20} parent=23 // pred_check
        %p186 = pneg %p68
      $region30: #{unet_forward.20} parent=23 // pred_check_branch
        %188 = sbr.rel (%p186) target = $region32
      $region31: #{unet_forward.20} parent=23 // pred_region
        %p189 = scmp.lt.s32.totalorder %s17, 1
        %s190 = scalar_select %p189, %s17, 1
        %s191 = smul.addr %s190, 3
        %s192 = smul.addr %s191, 8
        %s193 = scalar_lea.vmem %s1, %s192
      $region32: #{unet_forward.20} parent=23 // pred_fallthru
        _
    $region24: #{unet_forward.20} parent=5 // pred_fallthru
      _
    %p194 = scmp.le.s32.totalorder 1, %s10
    %p195 = scmp.lt.s32.totalorder %s10, 3
    %p196 = pnand %p194, %p195
    %p197 = pneg %p196
    // Predicated region
    $region33: #{unet_forward.20} parent=5 // pred_check
      _
    $region34: #{unet_forward.20} parent=5 // pred_check_branch
      %199 = sbr.rel (%p196) target = $region36
    $region35: #{unet_forward.20} parent=5 // pred_region
      %s200 = ssub.s32 %s10, 1
      %p201 = scmp.lt.s32.totalorder %s19, 1
      %s202 = scalar_select %p201, %s19, 1
      %s203 = smul.addr %s202, 3
      %s204 = smul.addr %s203, 8
      %s205 = scalar_lea.vmem %s0, %s204
      %p206 = pneg %p48
      %p207 = pneg %p45
      %p208 = scmp.lt.s32.totalorder %s19, 1
      %s209 = scalar_select %p208, %s19, 1
      %s210 = smul.addr %s209, 3
      %s211 = smul.addr %s210, 8
      %s212 = scalar_lea.vmem %s1, %s211
      %p213 = pneg %p74
      %p214 = pneg %p71
      %p215 = scmp.lt.s32.totalorder %s20, 0
      %s216 = scalar_select %p215, %s20, 0
      %s217 = smul.addr %s216, 8
      %s218 = scalar_lea.vmem %s2, %s217
      %p219 = pneg %p100
      %p220 = pneg %p97
      %p221 = pneg %p121
      %p222 = pneg %p118
      %p223 = pneg %p149
      %p224 = pneg %p146
      %p225 = scmp.lt.s32.totalorder %s19, 1
      %s226 = scalar_select %p225, %s19, 1
      %p227 = scmp.lt.s32.totalorder %s20, 0
      %s228 = scalar_select %p227, %s20, 0
      %s229 = smul.addr %s228, 3
      %s230 = smul.addr %s226, 3
      %s231 = sadd.s32 %s229, %s230
      %s232 = smul.addr %s231, 8
      %s233 = scalar_lea.vmem %s4, %s232
      %p234 = scmp.lt.s32.totalorder %s19, 1
      %s235 = scalar_select %p234, %s19, 1
      %s236 = smul.addr %s235, 3
      %s237 = smul.addr %s236, 8
      %s238 = scalar_lea.vmem %s0, %s237
      %p239 = scmp.lt.s32.totalorder %s19, 1
      %s240 = scalar_select %p239, %s19, 1
      %s241 = smul.addr %s240, 3
      %s242 = smul.addr %s241, 8
      %s243 = scalar_lea.vmem %s1, %s242
      %p244 = scmp.lt.s32.totalorder %s20, 0
      %s245 = scalar_select %p244, %s20, 0
      %s246 = smul.addr %s245, 8
      %s247 = scalar_lea.vmem %s2, %s246
      %p248 = scmp.lt.s32.totalorder %s19, 1
      %s249 = scalar_select %p248, %s19, 1
      %p250 = scmp.lt.s32.totalorder %s20, 0
      %s251 = scalar_select %p250, %s20, 0
      %s252 = smul.addr %s251, 3
      %s253 = smul.addr %s249, 3
      %s254 = sadd.s32 %s252, %s253
      %s255 = smul.addr %s254, 8
      %s256 = scalar_lea.vmem %s4, %s255
      %v257 = vld [vmem:[%s238] sm:$0xff]
      %v258 = vld [vmem:[%s238 + $0x8] sm:$0xff]
      %v259 = vld [vmem:[%s238 + $0x10] sm:$0xff]
      %v260 = vld [vmem:[%s243] sm:$0xff]
      %v261 = vld [vmem:[%s243 + $0x8] sm:$0xff]
      %v262 = vld [vmem:[%s243 + $0x10] sm:$0xff]
      %v263 = vadd.f32 %v257, %v260
      %v264 = vadd.f32 %v258, %v261
      %v265 = vadd.f32 %v259, %v262
      %266 = vrot.lane.b32.xlu0 %v263, 19
      %v267 = vpop.permute.xlu0 %266
      %268 = vrot.lane.b32.xlu0 %v264, 19
      %v269 = vpop.permute.xlu0 %268
      %270 = vrot.lane.b32.xlu0 %v265, 19
      %v271 = vpop.permute.xlu0 %270
      %v272 = vlaneseq
      %v273 = vand.u32 %v272, 127
      %vm274 = vcmp.lt.s32.totalorder %v273, 19
      %v275 = vsel %vm274, %v269, %v271
      %v276 = vsel %vm274, %v267, %v269
      %v277 = vsel %vm274, %v271, %v267
      %278 = vst [vmem:[#allocation2] sm:$0xff] %v277
      %279 = vst [vmem:[#allocation2 + $0x8] sm:$0xff] %v276
      %280 = vst [vmem:[#allocation2 + $0x10] sm:$0xff] %v275
      %281 = vrot.lane.b32.xlu0 %v263, 18
      %v282 = vpop.permute.xlu0 %281
      %283 = vrot.lane.b32.xlu0 %v264, 18
      %v284 = vpop.permute.xlu0 %283
      %285 = vrot.lane.b32.xlu0 %v265, 18
      %v286 = vpop.permute.xlu0 %285
      %vm287 = vcmp.lt.s32.totalorder %v273, 18
      %v288 = vsel %vm287, %v284, %v286
      %v289 = vsel %vm287, %v282, %v284
      %v290 = vsel %vm287, %v286, %v282
      %291 = vst [vmem:[#allocation2 + $0x18] sm:$0xff] %v290
      %292 = vst [vmem:[#allocation2 + $0x20] sm:$0xff] %v289
      %293 = vst [vmem:[#allocation2 + $0x28] sm:$0xff] %v288
      %294 = vrot.lane.b32.xlu0 %v263, 17
      %v295 = vpop.permute.xlu0 %294
      %296 = vrot.lane.b32.xlu0 %v264, 17
      %v297 = vpop.permute.xlu0 %296
      %298 = vrot.lane.b32.xlu0 %v265, 17
      %v299 = vpop.permute.xlu0 %298
      %vm300 = vcmp.lt.s32.totalorder %v273, 17
      %v301 = vsel %vm300, %v297, %v299
      %v302 = vsel %vm300, %v295, %v297
      %v303 = vsel %vm300, %v299, %v295
      %304 = vst [vmem:[#allocation2 + $0x30] sm:$0xff] %v303
      %305 = vst [vmem:[#allocation2 + $0x38] sm:$0xff] %v302
      %306 = vst [vmem:[#allocation2 + $0x40] sm:$0xff] %v301
      %307 = vrot.lane.b32.xlu0 %v263, 1
      %v308 = vpop.permute.xlu0 %307
      %309 = vrot.lane.b32.xlu0 %v264, 1
      %v310 = vpop.permute.xlu0 %309
      %311 = vrot.lane.b32.xlu0 %v265, 1
      %v312 = vpop.permute.xlu0 %311
      %vm313 = vcmp.lt.s32.totalorder %v273, 1
      %v314 = vsel %vm313, %v310, %v312
      %v315 = vsel %vm313, %v308, %v310
      %v316 = vsel %vm313, %v312, %v308
      %317 = vst [vmem:[#allocation2 + $0x48] sm:$0xff] %v316
      %318 = vst [vmem:[#allocation2 + $0x50] sm:$0xff] %v315
      %319 = vst [vmem:[#allocation2 + $0x58] sm:$0xff] %v314
      %320 = vst [vmem:[#allocation2 + $0x60] sm:$0xff] %v263
      %321 = vst [vmem:[#allocation2 + $0x68] sm:$0xff] %v264
      %322 = vst [vmem:[#allocation2 + $0x70] sm:$0xff] %v265
      %323 = vrot.lane.b32.xlu0 %v263, 127
      %v324 = vpop.permute.xlu0 %323
      %325 = vrot.lane.b32.xlu0 %v264, 127
      %v326 = vpop.permute.xlu0 %325
      %327 = vrot.lane.b32.xlu0 %v265, 127
      %v328 = vpop.permute.xlu0 %327
      %vm329 = vcmp.lt.s32.totalorder %v273, 127
      %v330 = vsel %vm329, %v326, %v328
      %v331 = vsel %vm329, %v324, %v326
      %v332 = vsel %vm329, %v328, %v324
      %333 = vst [vmem:[#allocation2 + $0x78] sm:$0xff] %v331
      %334 = vst [vmem:[#allocation2 + $0x80] sm:$0xff] %v330
      %335 = vst [vmem:[#allocation2 + $0x88] sm:$0xff] %v332
      %336 = vrot.lane.b32.xlu0 %v263, 111
      %v337 = vpop.permute.xlu0 %336
      %338 = vrot.lane.b32.xlu0 %v264, 111
      %v339 = vpop.permute.xlu0 %338
      %340 = vrot.lane.b32.xlu0 %v265, 111
      %v341 = vpop.permute.xlu0 %340
      %vm342 = vcmp.lt.s32.totalorder %v273, 111
      %v343 = vsel %vm342, %v339, %v341
      %v344 = vsel %vm342, %v337, %v339
      %v345 = vsel %vm342, %v341, %v337
      %346 = vst [vmem:[#allocation2 + $0x90] sm:$0xff] %v344
      %347 = vst [vmem:[#allocation2 + $0x98] sm:$0xff] %v343
      %348 = vst [vmem:[#allocation2 + $0xa0] sm:$0xff] %v345
      %349 = vrot.lane.b32.xlu0 %v263, 110
      %v350 = vpop.permute.xlu0 %349
      %351 = vrot.lane.b32.xlu0 %v264, 110
      %v352 = vpop.permute.xlu0 %351
      %353 = vrot.lane.b32.xlu0 %v265, 110
      %v354 = vpop.permute.xlu0 %353
      %vm355 = vcmp.lt.s32.totalorder %v273, 110
      %v356 = vsel %vm355, %v352, %v354
      %v357 = vsel %vm355, %v350, %v352
      %v358 = vsel %vm355, %v354, %v350
      %359 = vst [vmem:[#allocation2 + $0xa8] sm:$0xff] %v357
      %360 = vst [vmem:[#allocation2 + $0xb0] sm:$0xff] %v356
      %361 = vst [vmem:[#allocation2 + $0xb8] sm:$0xff] %v358
      %362 = vrot.lane.b32.xlu0 %v263, 109
      %v363 = vpop.permute.xlu0 %362
      %364 = vrot.lane.b32.xlu0 %v264, 109
      %v365 = vpop.permute.xlu0 %364
      %366 = vrot.lane.b32.xlu0 %v265, 109
      %v367 = vpop.permute.xlu0 %366
      %vm368 = vcmp.lt.s32.totalorder %v273, 109
      %v369 = vsel %vm368, %v365, %v367
      %v370 = vsel %vm368, %v363, %v365
      %v371 = vsel %vm368, %v367, %v363
      %372 = vst [vmem:[#allocation2 + $0xc0] sm:$0xff] %v370
      %373 = vst [vmem:[#allocation2 + $0xc8] sm:$0xff] %v369
      %374 = vst [vmem:[#allocation2 + $0xd0] sm:$0xff] %v371
      %v375 = vld [vmem:[%s3] sm:$0x7]
      %v376 = vlaneseq
      %vm377 = vcmp.ge.s32.totalorder %v376, 0
      %vm378 = vcmp.lt.s32.totalorder %v376, 384
      %vm379 = vmand %vm377, %vm378
      %s380 = scalar_lea.vmem [#allocation2], 216
      %381 = vst.msk [vmem:[%s380] ss:$8 sm:$0x7] %vm379, %v375
      %382 = vst.msk [vmem:[%s380] ss:$8 sm:$0x0] %vm379, %v375
      %v383 = vld [vmem:[%s247] sm:$0xff]
      %v384 = vld [vmem:[#allocation2] sm:$0xff]
      %v385 = vld [vmem:[#allocation2 + $0x8] sm:$0xff]
      %v386 = vld [vmem:[#allocation2 + $0x10] sm:$0xff]
      %v387 = vld [vmem:[#allocation2 + $0x18] sm:$0xff]
      %v388 = vld [vmem:[#allocation2 + $0x20] sm:$0xff]
      %v389 = vld [vmem:[#allocation2 + $0x28] sm:$0xff]
      %v390 = vld [vmem:[#allocation2 + $0x30] sm:$0xff]
      %v391 = vld [vmem:[#allocation2 + $0x38] sm:$0xff]
      %v392 = vld [vmem:[#allocation2 + $0x40] sm:$0xff]
      %v393 = vld [vmem:[#allocation2 + $0x48] sm:$0xff]
      %v394 = vld [vmem:[#allocation2 + $0x50] sm:$0xff]
      %v395 = vld [vmem:[#allocation2 + $0x58] sm:$0xff]
      %v396 = vld [vmem:[#allocation2 + $0x60] sm:$0xff]
      %v397 = vld [vmem:[#allocation2 + $0x68] sm:$0xff]
      %v398 = vld [vmem:[#allocation2 + $0x70] sm:$0xff]
      %v399 = vld [vmem:[#allocation2 + $0x78] sm:$0xff]
      %v400 = vld [vmem:[#allocation2 + $0x80] sm:$0xff]
      %v401 = vld [vmem:[#allocation2 + $0x88] sm:$0xff]
      %v402 = vld [vmem:[#allocation2 + $0x90] sm:$0xff]
      %v403 = vld [vmem:[#allocation2 + $0x98] sm:$0xff]
      %v404 = vld [vmem:[#allocation2 + $0xa0] sm:$0xff]
      %v405 = vld [vmem:[#allocation2 + $0xa8] sm:$0xff]
      %v406 = vld [vmem:[#allocation2 + $0xb0] sm:$0xff]
      %v407 = vld [vmem:[#allocation2 + $0xb8] sm:$0xff]
      %v408 = vld [vmem:[#allocation2 + $0xc0] sm:$0xff]
      %v409 = vld [vmem:[#allocation2 + $0xc8] sm:$0xff]
      %v410 = vld [vmem:[#allocation2 + $0xd0] sm:$0xff]
      %v411 = vld [vmem:[#allocation2 + $0xd8] sm:$0x1]
      %v412 = vld [vmem:[#allocation2 + $0xe0] sm:$0x1]
      %v413 = vld [vmem:[#allocation2 + $0xe8] sm:$0x1]
      %vm414 = vcmask 596992
      %v416 = vsel %vm414, %v383, 0
      %vm418 = vcmask 1040384
      %v420 = vsel %vm418, %v411, 0
      %v423 = vsel %vm418, %v412, 0
      %v426 = vsel %vm418, %v413, 0
      %428 = vmatprep.subr.mxu0 %v385
      %429 = vmatpush1.msra.mxu0 %v384
      %430 = vmatprep.subr.mxu0 %v388
      %431 = vmatpush1.msra.mxu0 %v387
      %432 = vmatprep.subr.mxu0 %v391
      %433 = vmatpush1.msra.mxu0 %v390
      %434 = vmatprep.subr.mxu0 %v394
      %435 = vmatpush1.msra.mxu0 %v393
      %436 = vmatprep.subr.mxu0 %v397
      %437 = vmatpush1.msra.mxu0 %v396
      %438 = vmatprep.subr.mxu0 %v400
      %439 = vmatpush1.msra.mxu0 %v399
      %440 = vmatprep.subr.mxu0 %v403
      %441 = vmatpush1.msra.mxu0 %v402
      %442 = vmatprep.subr.mxu0 %v406
      %443 = vmatpush1.msra.mxu0 %v405
      %444 = vmatprep.subr.mxu0 %v409
      %445 = vmatpush1.msra.mxu0 %v408
      %446 = vmatprep.subr.mxu0 %v423
      %447 = vmatpush1.msra.mxu0 %v420
      %448 = vmatprep.subr.mxu0 0.0
      %449 = vmatpush1.msra.mxu0 0.0
      %450 = vmatprep.subr.mxu0 0.0
      %451 = vmatpush1.msra.mxu0 0.0
      %452 = vmatprep.subr.mxu0 0.0
      %453 = vmatpush1.msra.mxu0 0.0
      %454 = vmatprep.subr.mxu0 0.0
      %455 = vmatpush1.msra.mxu0 0.0
      %456 = vmatprep.subr.mxu0 0.0
      %457 = vmatpush1.msra.mxu0 0.0
      %458 = vmatprep.subr.mxu0 0.0
      %459 = vmatpush1.msra.mxu0 0.0
      %460 = vmatprep.subr.mxu0 0.0
      %461 = vmatpush1.msra.mxu0 0.0
      %462 = vmatprep.subr.mxu0 0.0
      %463 = vmatpush1.msra.mxu0 0.0
      %464 = vmatprep.subr.mxu0 0.0
      %465 = vmatpush1.msra.mxu0 0.0
      %466 = vmatprep.subr.mxu0 0.0
      %467 = vmatpush1.msra.mxu0 0.0
      %468 = vmatprep.subr.mxu0 0.0
      %469 = vmatpush1.msra.mxu0 0.0
      %470 = vmatprep.subr.mxu0 0.0
      %471 = vmatpush1.msra.mxu0 0.0
      %472 = vmatprep.subr.mxu0 0.0
      %473 = vmatpush1.msra.mxu0 0.0
      %474 = vmatprep.subr.mxu0 0.0
      %475 = vmatpush1.msra.mxu0 0.0
      %476 = vmatprep.subr.mxu0 0.0
      %477 = vmatpush1.msra.mxu0 0.0
      %478 = vmatprep.subr.mxu0 0.0
      %479 = vmatpush1.msra.mxu0 0.0
      %480 = vmatprep.subr.mxu0 0.0
      %481 = vmatpush1.msra.mxu0 0.0
      %482 = vmatprep.subr.mxu0 0.0
      %483 = vmatpush1.msra.mxu0 0.0
      %484 = vmatprep.subr.mxu0 0.0
      %485 = vmatpush1.msra.mxu0 0.0
      %486 = vmatprep.subr.mxu0 0.0
      %487 = vmatpush1.msra.mxu0 0.0
      %488 = vmatprep.subr.mxu0 0.0
      %489 = vmatpush1.msra.mxu0 0.0
      %490 = vmatprep.subr.mxu0 0.0
      %491 = vmatpush1.msra.mxu0 0.0
      %492 = vmatprep.mubr.f32.mxu0 0.0
      %493 = vmatmul.mubr.f32.gmra.mrb[0].mxu0 %v416
      %v494 = vpop.f32.mrb[0].mxu0
      %v495 = vadd.f32 0.0, %v494
      %v496 = vpop.f32.mrb[0].mxu0
      %v497 = vadd.f32 0.0, %v496
      %498 = vdwg.mxu0
      %499 = vmatprep.subr.mxu0 0.0
      %500 = vmatpush1.msra.mxu0 %v386
      %501 = vmatprep.subr.mxu0 0.0
      %502 = vmatpush1.msra.mxu0 %v389
      %503 = vmatprep.subr.mxu0 0.0
      %504 = vmatpush1.msra.mxu0 %v392
      %505 = vmatprep.subr.mxu0 0.0
      %506 = vmatpush1.msra.mxu0 %v395
      %507 = vmatprep.subr.mxu0 0.0
      %508 = vmatpush1.msra.mxu0 %v398
      %509 = vmatprep.subr.mxu0 0.0
      %510 = vmatpush1.msra.mxu0 %v401
      %511 = vmatprep.subr.mxu0 0.0
      %512 = vmatpush1.msra.mxu0 %v404
      %513 = vmatprep.subr.mxu0 0.0
      %514 = vmatpush1.msra.mxu0 %v407
      %515 = vmatprep.subr.mxu0 0.0
      %516 = vmatpush1.msra.mxu0 %v410
      %517 = vmatprep.subr.mxu0 0.0
      %518 = vmatpush1.msra.mxu0 %v426
      %519 = vmatprep.subr.mxu0 0.0
      %520 = vmatpush1.msra.mxu0 0.0
      %521 = vmatprep.subr.mxu0 0.0
      %522 = vmatpush1.msra.mxu0 0.0
      %523 = vmatprep.subr.mxu0 0.0
      %524 = vmatpush1.msra.mxu0 0.0
      %525 = vmatprep.subr.mxu0 0.0
      %526 = vmatpush1.msra.mxu0 0.0
      %527 = vmatprep.subr.mxu0 0.0
      %528 = vmatpush1.msra.mxu0 0.0
      %529 = vmatprep.subr.mxu0 0.0
      %530 = vmatpush1.msra.mxu0 0.0
      %531 = vmatprep.subr.mxu0 0.0
      %532 = vmatpush1.msra.mxu0 0.0
      %533 = vmatprep.subr.mxu0 0.0
      %534 = vmatpush1.msra.mxu0 0.0
      %535 = vmatprep.subr.mxu0 0.0
      %536 = vmatpush1.msra.mxu0 0.0
      %537 = vmatprep.subr.mxu0 0.0
      %538 = vmatpush1.msra.mxu0 0.0
      %539 = vmatprep.subr.mxu0 0.0
      %540 = vmatpush1.msra.mxu0 0.0
      %541 = vmatprep.subr.mxu0 0.0
      %542 = vmatpush1.msra.mxu0 0.0
      %543 = vmatprep.subr.mxu0 0.0
      %544 = vmatpush1.msra.mxu0 0.0
      %545 = vmatprep.subr.mxu0 0.0
      %546 = vmatpush1.msra.mxu0 0.0
      %547 = vmatprep.subr.mxu0 0.0
      %548 = vmatpush1.msra.mxu0 0.0
      %549 = vmatprep.subr.mxu0 0.0
      %550 = vmatpush1.msra.mxu0 0.0
      %551 = vmatprep.subr.mxu0 0.0
      %552 = vmatpush1.msra.mxu0 0.0
      %553 = vmatprep.subr.mxu0 0.0
      %554 = vmatpush1.msra.mxu0 0.0
      %555 = vmatprep.subr.mxu0 0.0
      %556 = vmatpush1.msra.mxu0 0.0
      %557 = vmatprep.subr.mxu0 0.0
      %558 = vmatpush1.msra.mxu0 0.0
      %559 = vmatprep.subr.mxu0 0.0
      %560 = vmatpush1.msra.mxu0 0.0
      %561 = vmatprep.subr.mxu0 0.0
      %562 = vmatpush1.msra.mxu0 0.0
      %563 = vmatprep.mubr.f32.mxu0 0.0
      %564 = vmatmul.mubr.f32.gmra.mrb[0].mxu0 %v416
      %v565 = vpop.f32.mrb[0].mxu0
      %v566 = vadd.f32 0.0, %v565
      %v567 = vpop.f32.mrb[0].mxu0
      %568 = vdwg.mxu0
      %v569 = vld [vmem:[%s3] sm:$0x7]
      %v571 = vlaneseq
      %v572 = vshrl.u32 %v571, 7
      %v573 = vsub.s32 0, %v572
      %v574 = vrot.slane %v569, %v573
      %v575 = vlaneseq
      %v576 = vshrl.u32 %v575, 7
      %v577 = vsub.s32 1, %v576
      %v578 = vrot.slane %v569, %v577
      %v579 = vlaneseq
      %v580 = vshrl.u32 %v579, 7
      %v581 = vsub.s32 2, %v580
      %v582 = vrot.slane %v569, %v581
      %v586 = vmul.f32 %v495, %v574
      %v587 = vmul.f32 %v497, %v578
      %v588 = vmul.f32 %v566, %v582
      %v589 = vadd.f32 %v586, %v587
      %v590 = vadd.f32 %v589, %v588
      %591 = vadd.xlane.f32.xlu0 %v590
      %v592 = vpop.xlane.xlu0 %591
      %v593 = vmul.f32 %v592, 0.00390625
      %v594 = vmul.f32 %v586, %v495
      %v595 = vmul.f32 %v587, %v497
      %v596 = vmul.f32 %v588, %v566
      %v597 = vadd.f32 %v594, %v595
      %v598 = vadd.f32 %v597, %v596
      %599 = vadd.xlane.f32.xlu0 %v598
      %v600 = vpop.xlane.xlu0 %599
      %v601 = vmul.f32 %v600, 0.00390625
      %v602 = vmul.f32 %v593, %v593
      %v603 = vsub.f32 %v601, %v602
      %v604 = vsub.f32 %v495, %v593
      %v605 = vsub.f32 %v497, %v593
      %v606 = vsub.f32 %v566, %v593
      %v607 = vmul.f32 %v604, %v574
      %v608 = vmul.f32 %v605, %v578
      %v609 = vmul.f32 %v606, %v582
      %v610 = vmax.f32 %v603, 0.0
      %v611 = vadd.f32 %v610, 1e-05
      %v612 = vrsqrt.pop %v611
      %v613 = vmul.f32 %v607, %v612
      %v614 = vmul.f32 %v608, %v612
      %v615 = vmul.f32 %v609, %v612
      %v616 = vmax.f32 %v613, 0.0
      %v617 = vmax.f32 %v614, 0.0
      %v618 = vmax.f32 %v615, 0.0
      %619 = vst [vmem:[%s256] sm:$0xff] %v616
      %620 = vst [vmem:[%s256 + $0x8] sm:$0xff] %v617
      %621 = vst [vmem:[%s256 + $0x10] sm:$0xff] %v618
      %p622 = scmp.lt.s32.totalorder %s19, 1
      %s623 = scalar_select %p622, %s19, 1
      %p624 = scmp.lt.s32.totalorder %s20, 0
      %s625 = scalar_select %p624, %s20, 0
      %s626 = smul.addr %s625, 3
      %s627 = smul.addr %s623, 3
      %s628 = sadd.s32 %s626, %s627
      %s629 = smul.addr %s628, 8
      %s630 = scalar_lea.vmem %s4, %s629
      // Predicated region
      $region37: #{unet_forward.20} parent=35 // pred_check
        %p631 = pneg %p146
      $region38: #{unet_forward.20} parent=35 // pred_check_branch
        %633 = sbr.rel (%p631) target = $region40
      $region39: #{unet_forward.20} parent=35 // pred_region
        _
      $region40: #{unet_forward.20} parent=35 // pred_fallthru
        _
    $region36: #{unet_forward.20} parent=5 // pred_fallthru
      _
    %p634 = scmp.le.s32.totalorder 2, %s10
    // Predicated region
    $region41: #{unet_forward.20} parent=5 // pred_check
      %p635 = pneg %p634
    $region42: #{unet_forward.20} parent=5 // pred_check_branch
      %637 = sbr.rel (%p635) target = $region44
    $region43: #{unet_forward.20} parent=5 // pred_region
      %s638 = ssub.s32 %s10, 2
      // Predicated region
      $region45: #{unet_forward.20} parent=43 // pred_check
        %p639 = pneg %p152
      $region46: #{unet_forward.20} parent=43 // pred_check_branch
        %641 = sbr.rel (%p639) target = $region48
      $region47: #{unet_forward.20} parent=43 // pred_region
        %p642 = scmp.lt.s32.totalorder %s21, 1
        %s643 = scalar_select %p642, %s21, 1
        %p644 = scmp.lt.s32.totalorder %s22, 0
        %s645 = scalar_select %p644, %s22, 0
        %s646 = smul.addr %s645, 3
        %s647 = smul.addr %s643, 3
        %s648 = sadd.s32 %s646, %s647
        %s649 = smul.addr %s648, 8
        %s650 = scalar_lea.vmem %s4, %s649
      $region48: #{unet_forward.20} parent=43 // pred_fallthru
        _
    $region44: #{unet_forward.20} parent=5 // pred_fallthru
      _
  $region6: #{unet_forward.20} parent=0 // loop_footer
    %s14 = sadd.s32 1, %s10
  $region7: #{unet_forward.20} parent=0 // loop_footer_branch
    %9 = sbr.rel target = $region3
  $region8: #{unet_forward.20} parent=0 // loop_exit
    _

// kernel: unet_forward.21
$region0: #{unet_forward.21}
  #allocation0 [shape = 'u32[]', space=smem, size = 0x4, offset = 0x4, fixed_abs, tag = 'smem constant byte address 0x4 - core index']
  #allocation1 [shape = 'u32[144,128]{1,0:T(1,128)}', space=vmem, size = 0x12000, scoped, tag = 'internal scratch']
  #allocation2 [shape = 'f32[73,384]{1,0:T(8,128)}', space=vmem, size = 0x1e000, scoped, tag = 'scratch operand']
  %s0 = inlined_call_operand.vmem [shape: f32[2,8,384], index: 0, kind: input, shape index: {}]
  %s1 = inlined_call_operand.vmem [shape: f32[3,73], index: 1, kind: input, shape index: {}]
  %s2 = inlined_call_operand.vmem [shape: f32[1,384], index: 2, kind: input, shape index: {}]
  %s3 = inlined_call_operand.vmem [shape: f32[2,3,384], index: 3, kind: output, shape index: {}]
  %s4 = sld [smem:[#allocation0]]
  $region45: #{unet_forward.21} parent=0
    _
  %s6 = ssub.s32 1, %s4
  %s7 = scalar_select 0, %s6, %s4
  loop: start=0, step=1, limit=4
  $region2: #{unet_forward.21} parent=0 // loop_pre_header
    _
  $region3: #{unet_forward.21} parent=0 // loop_header
    %s9 = sphi 0, %s13
    %p10 = scmp.ge.s32.totalorder %s9, 4
    %s16 = sphi 0, %s28
    %s17 = sphi 0, %s24
    %s18 = sphi 0, %s16
    %s19 = sphi 0, %s17
    %s20 = sphi 0, %s18
    %s21 = sphi 0, %s19
    %s31 = sphi 0, %s33
    %s34 = sphi 0, %s31
    %s35 = sphi 0, %s34
    %s51 = sphi 0, %s35
    %s57 = sphi 0, %s59
    %s60 = sphi 0, %s57
    %s61 = sphi 0, %s60
    %s77 = sphi 0, %s61
    %s81 = sphi 0, %s81
    %s83 = sphi 0, %s81
    %s84 = sphi 0, %s83
    %s98 = sphi 0, %s84
    %s106 = sphi 0, %s108
    %s109 = sphi 0, %s106
    %s110 = sphi 0, %s109
    %s126 = sphi 0, %s110
  $region4: #{unet_forward.21} parent=0 // loop_header_branch
    %12 = sbr.rel (%p10) target = $region8
  $region5: #{unet_forward.21} parent=0 // loop_body
    %s14 = ssub.s32 %s9, 1
    %s15 = ssub.s32 %s9, 2
    %s22 = sadd.s32 1, %s17
    %p23 = scmp.ge.s32.totalorder %s22, 1
    %s24 = scalar_select %p23, 0, %s22
    %s25 = sadd.s32 1, %s16
    %s26 = scalar_select %p23, %s25, %s16
    %p27 = scmp.ge.s32.totalorder %s26, 2
    %s28 = scalar_select %p27, 0, %s26
    %s29 = ssub.s32 %s16, %s28
    %p30 = scmp.eq.s32.totalorder %s29, 0
    %s32 = sadd.s32 %s31, 1
    %s33 = scalar_select %p30, %s31, %s32
    %p36 = pneg %p30
    %p37 = scmp.eq.s32.totalorder %s9, 1
    %p38 = por %p36, %p37
    %p39 = scmp.ne.s32.totalorder %s31, %s34
    %p40 = scmp.eq.s32.totalorder %s9, 0
    %p41 = por %p39, %p40
    %p42 = scmp.ne.s32.totalorder %s31, %s34
    %p43 = scmp.eq.s32.totalorder %s14, 1
    %p44 = por %p42, %p43
    %p45 = scmp.ne.s32.totalorder %s34, %s35
    %p46 = scmp.eq.s32.totalorder %s14, 0
    %p47 = por %p45, %p46
    %p48 = scmp.ne.s32.totalorder %s34, %s35
    %p49 = scmp.eq.s32.totalorder %s15, 1
    %p50 = por %p48, %p49
    %p52 = scmp.ne.s32.totalorder %s35, %s51
    %p53 = scmp.eq.s32.totalorder %s15, 0
    %p54 = por %p52, %p53
    %s55 = ssub.s32 %s17, %s24
    %p56 = scmp.eq.s32.totalorder %s55, 0
    %s58 = sadd.s32 %s57, 1
    %s59 = scalar_select %p56, %s57, %s58
    %p62 = pneg %p56
    %p63 = scmp.eq.s32.totalorder %s9, 1
    %p64 = por %p62, %p63
    %p65 = scmp.ne.s32.totalorder %s57, %s60
    %p66 = scmp.eq.s32.totalorder %s9, 0
    %p67 = por %p65, %p66
    %p68 = scmp.ne.s32.totalorder %s57, %s60
    %p69 = scmp.eq.s32.totalorder %s14, 1
    %p70 = por %p68, %p69
    %p71 = scmp.ne.s32.totalorder %s60, %s61
    %p72 = scmp.eq.s32.totalorder %s14, 0
    %p73 = por %p71, %p72
    %p74 = scmp.ne.s32.totalorder %s60, %s61
    %p75 = scmp.eq.s32.totalorder %s15, 1
    %p76 = por %p74, %p75
    %p78 = scmp.ne.s32.totalorder %s61, %s77
    %p79 = scmp.eq.s32.totalorder %s15, 0
    %p80 = por %p78, %p79
    %s82 = sadd.s32 %s81, 1
    %p85 = scmp.eq.s32.totalorder %s9, 1
    %p86 = scmp.ne.s32.totalorder %s81, %s83
    %p87 = scmp.eq.s32.totalorder %s9, 0
    %p88 = por %p86, %p87
    %p89 = scmp.ne.s32.totalorder %s81, %s83
    %p90 = scmp.eq.s32.totalorder %s14, 1
    %p91 = por %p89, %p90
    %p92 = scmp.ne.s32.totalorder %s83, %s84
    %p93 = scmp.eq.s32.totalorder %s14, 0
    %p94 = por %p92, %p93
    %p95 = scmp.ne.s32.totalorder %s83, %s84
    %p96 = scmp.eq.s32.totalorder %s15, 1
    %p97 = por %p95, %p96
    %p99 = scmp.ne.s32.totalorder %s84, %s98
    %p100 = scmp.eq.s32.totalorder %s15, 0
    %p101 = por %p99, %p100
    %s102 = ssub.s32 %s16, %s28
    %s103 = ssub.s32 %s17, %s24
    %s104 = sor.u32 %s102, %s103
    %p105 = scmp.eq.s32.totalorder %s104, 0
    %s107 = sadd.s32 %s106, 1
    %s108 = scalar_select %p105, %s106, %s107
    %p111 = pneg %p105
    %p112 = scmp.eq.s32.totalorder %s9, 1
    %p113 = por %p111, %p112
    %p114 = scmp.ne.s32.totalorder %s106, %s109
    %p115 = scmp.eq.s32.totalorder %s9, 0
    %p116 = por %p114, %p115
    %p117 = scmp.ne.s32.totalorder %s106, %s109
    %p118 = scmp.eq.s32.totalorder %s14, 1
    %p119 = por %p117, %p118
    %p120 = scmp.ne.s32.totalorder %s109, %s110
    %p121 = scmp.eq.s32.totalorder %s14, 0
    %p122 = por %p120, %p121
    %p123 = scmp.ne.s32.totalorder %s109, %s110
    %p124 = scmp.eq.s32.totalorder %s15, 1
    %p125 = por %p123, %p124
    %p127 = scmp.ne.s32.totalorder %s110, %s126
    %p128 = scmp.eq.s32.totalorder %s15, 0
    %p129 = por %p127, %p128
    %p130 = scmp.le.s32.totalorder 1, %s9
    %p131 = scmp.lt.s32.totalorder %s9, 3
    %p132 = pnand %p130, %p131
    %p133 = pneg %p132
    // Predicated region
    $region9: #{unet_forward.21} parent=5 // pred_check
      _
    $region10: #{unet_forward.21} parent=5 // pred_check_branch
      %135 = sbr.rel (%p132) target = $region12
    $region11: #{unet_forward.21} parent=5 // pred_region
      %s136 = ssub.s32 %s9, 1
      // Predicated region
      $region13: #{unet_forward.21} parent=11 // pred_check
        %p137 = pneg %p73
      $region14: #{unet_forward.21} parent=11 // pred_check_branch
        %139 = sbr.rel (%p137) target = $region16
      $region15: #{unet_forward.21} parent=11 // pred_region
        %p140 = scmp.lt.s32.totalorder %s19, 0
        %s141 = scalar_select %p140, %s19, 0
        %s142 = smul.addr %s141, 4
        %s143 = scalar_lea.vmem %s1, %s142
      $region16: #{unet_forward.21} parent=11 // pred_fallthru
        _
      // Predicated region
      $region17: #{unet_forward.21} parent=11 // pred_check
        %p144 = pneg %p94
      $region18: #{unet_forward.21} parent=11 // pred_check_branch
        %146 = sbr.rel (%p144) target = $region20
      $region19: #{unet_forward.21} parent=11 // pred_region
        _
      $region20: #{unet_forward.21} parent=11 // pred_fallthru
        _
    $region12: #{unet_forward.21} parent=5 // pred_fallthru
      _
    %p147 = scmp.lt.s32.totalorder %s9, 2
    // Predicated region
    $region21: #{unet_forward.21} parent=5 // pred_check
      %p148 = pneg %p147
    $region22: #{unet_forward.21} parent=5 // pred_check_branch
      %150 = sbr.rel (%p148) target = $region24
    $region23: #{unet_forward.21} parent=5 // pred_region
      // Predicated region
      $region25: #{unet_forward.21} parent=23 // pred_check
        %p151 = pneg %p41
      $region26: #{unet_forward.21} parent=23 // pred_check_branch
        %153 = sbr.rel (%p151) target = $region28
      $region27: #{unet_forward.21} parent=23 // pred_region
        %p154 = scmp.lt.s32.totalorder %s16, 1
        %s155 = scalar_select %p154, %s16, 1
        %s156 = smul.addr %s155, 3
        %s157 = smul.addr %s156, 8
        %s158 = scalar_lea.vmem %s0, %s157
      $region28: #{unet_forward.21} parent=23 // pred_fallthru
        _
    $region24: #{unet_forward.21} parent=5 // pred_fallthru
      _
    %p159 = scmp.le.s32.totalorder 1, %s9
    %p160 = scmp.lt.s32.totalorder %s9, 3
    %p161 = pnand %p159, %p160
    %p162 = pneg %p161
    // Predicated region
    $region29: #{unet_forward.21} parent=5 // pred_check
      _
    $region30: #{unet_forward.21} parent=5 // pred_check_branch
      %164 = sbr.rel (%p161) target = $region32
    $region31: #{unet_forward.21} parent=5 // pred_region
      %s165 = ssub.s32 %s9, 1
      %p166 = scmp.lt.s32.totalorder %s18, 1
      %s167 = scalar_select %p166, %s18, 1
      %s168 = smul.addr %s167, 3
      %s169 = smul.addr %s168, 8
      %s170 = scalar_lea.vmem %s0, %s169
      %p171 = pneg %p47
      %p172 = pneg %p44
      %p173 = scmp.lt.s32.totalorder %s19, 0
      %s174 = scalar_select %p173, %s19, 0
      %s175 = smul.addr %s174, 4
      %s176 = scalar_lea.vmem %s1, %s175
      %p177 = pneg %p73
      %p178 = pneg %p70
      %p179 = pneg %p94
      %p180 = pneg %p91
      %p181 = pneg %p122
      %p182 = pneg %p119
      %p183 = scmp.lt.s32.totalorder %s18, 1
      %s184 = scalar_select %p183, %s18, 1
      %p185 = scmp.lt.s32.totalorder %s19, 0
      %s186 = scalar_select %p185, %s19, 0
      %s187 = smul.addr %s186, 3
      %s188 = smul.addr %s184, 3
      %s189 = sadd.s32 %s187, %s188
      %s190 = smul.addr %s189, 4
      %s191 = scalar_lea.vmem %s3, %s190
      %p192 = scmp.lt.s32.totalorder %s18, 1
      %s193 = scalar_select %p192, %s18, 1
      %s194 = smul.addr %s193, 3
      %s195 = smul.addr %s194, 8
      %s196 = scalar_lea.vmem %s0, %s195
      %p197 = scmp.lt.s32.totalorder %s19, 0
      %s198 = scalar_select %p197, %s19, 0
      %s199 = smul.addr %s198, 4
      %s200 = scalar_lea.vmem %s1, %s199
      %p201 = scmp.lt.s32.totalorder %s18, 1
      %s202 = scalar_select %p201, %s18, 1
      %p203 = scmp.lt.s32.totalorder %s19, 0
      %s204 = scalar_select %p203, %s19, 0
      %s205 = smul.addr %s204, 3
      %s206 = smul.addr %s202, 3
      %s207 = sadd.s32 %s205, %s206
      %s208 = smul.addr %s207, 4
      %s209 = scalar_lea.vmem %s3, %s208
      %v210 = vld [vmem:[%s196] sm:$0xff]
      %v211 = vld [vmem:[%s196 + $0x8] sm:$0xff]
      %v212 = vld [vmem:[%s196 + $0x10] sm:$0xff]
      %213 = vrot.lane.b32.xlu0 %v210, 19
      %v214 = vpop.permute.xlu0 %213
      %215 = vrot.lane.b32.xlu0 %v211, 19
      %v216 = vpop.permute.xlu0 %215
      %217 = vrot.lane.b32.xlu0 %v212, 19
      %v218 = vpop.permute.xlu0 %217
      %v219 = vlaneseq
      %v220 = vand.u32 %v219, 127
      %vm221 = vcmp.lt.s32.totalorder %v220, 19
      %v222 = vsel %vm221, %v216, %v218
      %v223 = vsel %vm221, %v214, %v216
      %v224 = vsel %vm221, %v218, %v214
      %225 = vst [vmem:[#allocation2] sm:$0xff] %v224
      %226 = vst [vmem:[#allocation2 + $0x8] sm:$0xff] %v223
      %227 = vst [vmem:[#allocation2 + $0x10] sm:$0xff] %v222
      %228 = vrot.lane.b32.xlu0 %v210, 18
      %v229 = vpop.permute.xlu0 %228
      %230 = vrot.lane.b32.xlu0 %v211, 18
      %v231 = vpop.permute.xlu0 %230
      %232 = vrot.lane.b32.xlu0 %v212, 18
      %v233 = vpop.permute.xlu0 %232
      %vm234 = vcmp.lt.s32.totalorder %v220, 18
      %v235 = vsel %vm234, %v231, %v233
      %v236 = vsel %vm234, %v229, %v231
      %v237 = vsel %vm234, %v233, %v229
      %238 = vst [vmem:[#allocation2 + $0x18] sm:$0xff] %v237
      %239 = vst [vmem:[#allocation2 + $0x20] sm:$0xff] %v236
      %240 = vst [vmem:[#allocation2 + $0x28] sm:$0xff] %v235
      %241 = vrot.lane.b32.xlu0 %v210, 17
      %v242 = vpop.permute.xlu0 %241
      %243 = vrot.lane.b32.xlu0 %v211, 17
      %v244 = vpop.permute.xlu0 %243
      %245 = vrot.lane.b32.xlu0 %v212, 17
      %v246 = vpop.permute.xlu0 %245
      %vm247 = vcmp.lt.s32.totalorder %v220, 17
      %v248 = vsel %vm247, %v244, %v246
      %v249 = vsel %vm247, %v242, %v244
      %v250 = vsel %vm247, %v246, %v242
      %251 = vst [vmem:[#allocation2 + $0x30] sm:$0xff] %v250
      %252 = vst [vmem:[#allocation2 + $0x38] sm:$0xff] %v249
      %253 = vst [vmem:[#allocation2 + $0x40] sm:$0xff] %v248
      %254 = vrot.lane.b32.xlu0 %v210, 1
      %v255 = vpop.permute.xlu0 %254
      %256 = vrot.lane.b32.xlu0 %v211, 1
      %v257 = vpop.permute.xlu0 %256
      %258 = vrot.lane.b32.xlu0 %v212, 1
      %v259 = vpop.permute.xlu0 %258
      %vm260 = vcmp.lt.s32.totalorder %v220, 1
      %v261 = vsel %vm260, %v257, %v259
      %v262 = vsel %vm260, %v255, %v257
      %v263 = vsel %vm260, %v259, %v255
      %264 = vst [vmem:[#allocation2 + $0x48] sm:$0xff] %v263
      %265 = vst [vmem:[#allocation2 + $0x50] sm:$0xff] %v262
      %266 = vst [vmem:[#allocation2 + $0x58] sm:$0xff] %v261
      %267 = vst [vmem:[#allocation2 + $0x60] sm:$0xff] %v210
      %268 = vst [vmem:[#allocation2 + $0x68] sm:$0xff] %v211
      %269 = vst [vmem:[#allocation2 + $0x70] sm:$0xff] %v212
      %270 = vrot.lane.b32.xlu0 %v210, 127
      %v271 = vpop.permute.xlu0 %270
      %272 = vrot.lane.b32.xlu0 %v211, 127
      %v273 = vpop.permute.xlu0 %272
      %274 = vrot.lane.b32.xlu0 %v212, 127
      %v275 = vpop.permute.xlu0 %274
      %vm276 = vcmp.lt.s32.totalorder %v220, 127
      %v277 = vsel %vm276, %v273, %v275
      %v278 = vsel %vm276, %v271, %v273
      %v279 = vsel %vm276, %v275, %v271
      %280 = vst [vmem:[#allocation2 + $0x78] sm:$0xff] %v278
      %281 = vst [vmem:[#allocation2 + $0x80] sm:$0xff] %v277
      %282 = vst [vmem:[#allocation2 + $0x88] sm:$0xff] %v279
      %283 = vrot.lane.b32.xlu0 %v210, 111
      %v284 = vpop.permute.xlu0 %283
      %285 = vrot.lane.b32.xlu0 %v211, 111
      %v286 = vpop.permute.xlu0 %285
      %287 = vrot.lane.b32.xlu0 %v212, 111
      %v288 = vpop.permute.xlu0 %287
      %vm289 = vcmp.lt.s32.totalorder %v220, 111
      %v290 = vsel %vm289, %v286, %v288
      %v291 = vsel %vm289, %v284, %v286
      %v292 = vsel %vm289, %v288, %v284
      %293 = vst [vmem:[#allocation2 + $0x90] sm:$0xff] %v291
      %294 = vst [vmem:[#allocation2 + $0x98] sm:$0xff] %v290
      %295 = vst [vmem:[#allocation2 + $0xa0] sm:$0xff] %v292
      %296 = vrot.lane.b32.xlu0 %v210, 110
      %v297 = vpop.permute.xlu0 %296
      %298 = vrot.lane.b32.xlu0 %v211, 110
      %v299 = vpop.permute.xlu0 %298
      %300 = vrot.lane.b32.xlu0 %v212, 110
      %v301 = vpop.permute.xlu0 %300
      %vm302 = vcmp.lt.s32.totalorder %v220, 110
      %v303 = vsel %vm302, %v299, %v301
      %v304 = vsel %vm302, %v297, %v299
      %v305 = vsel %vm302, %v301, %v297
      %306 = vst [vmem:[#allocation2 + $0xa8] sm:$0xff] %v304
      %307 = vst [vmem:[#allocation2 + $0xb0] sm:$0xff] %v303
      %308 = vst [vmem:[#allocation2 + $0xb8] sm:$0xff] %v305
      %309 = vrot.lane.b32.xlu0 %v210, 109
      %v310 = vpop.permute.xlu0 %309
      %311 = vrot.lane.b32.xlu0 %v211, 109
      %v312 = vpop.permute.xlu0 %311
      %313 = vrot.lane.b32.xlu0 %v212, 109
      %v314 = vpop.permute.xlu0 %313
      %vm315 = vcmp.lt.s32.totalorder %v220, 109
      %v316 = vsel %vm315, %v312, %v314
      %v317 = vsel %vm315, %v310, %v312
      %v318 = vsel %vm315, %v314, %v310
      %319 = vst [vmem:[#allocation2 + $0xc0] sm:$0xff] %v317
      %320 = vst [vmem:[#allocation2 + $0xc8] sm:$0xff] %v316
      %321 = vst [vmem:[#allocation2 + $0xd0] sm:$0xff] %v318
      %v322 = vld [vmem:[%s2] sm:$0x7]
      %v323 = vlaneseq
      %vm324 = vcmp.ge.s32.totalorder %v323, 0
      %vm325 = vcmp.lt.s32.totalorder %v323, 384
      %vm326 = vmand %vm324, %vm325
      %s327 = scalar_lea.vmem [#allocation2], 216
      %328 = vst.msk [vmem:[%s327] ss:$8 sm:$0x7] %vm326, %v322
      %329 = vst.msk [vmem:[%s327] ss:$8 sm:$0x0] %vm326, %v322
      %v330 = vld [vmem:[%s200] sm:$0x7]
      %v331 = vld [vmem:[#allocation2] sm:$0xff]
      %v332 = vld [vmem:[#allocation2 + $0x8] sm:$0xff]
      %v333 = vld [vmem:[#allocation2 + $0x10] sm:$0xff]
      %v334 = vld [vmem:[#allocation2 + $0x18] sm:$0xff]
      %v335 = vld [vmem:[#allocation2 + $0x20] sm:$0xff]
      %v336 = vld [vmem:[#allocation2 + $0x28] sm:$0xff]
      %v337 = vld [vmem:[#allocation2 + $0x30] sm:$0xff]
      %v338 = vld [vmem:[#allocation2 + $0x38] sm:$0xff]
      %v339 = vld [vmem:[#allocation2 + $0x40] sm:$0xff]
      %v340 = vld [vmem:[#allocation2 + $0x48] sm:$0xff]
      %v341 = vld [vmem:[#allocation2 + $0x50] sm:$0xff]
      %v342 = vld [vmem:[#allocation2 + $0x58] sm:$0xff]
      %v343 = vld [vmem:[#allocation2 + $0x60] sm:$0xff]
      %v344 = vld [vmem:[#allocation2 + $0x68] sm:$0xff]
      %v345 = vld [vmem:[#allocation2 + $0x70] sm:$0xff]
      %v346 = vld [vmem:[#allocation2 + $0x78] sm:$0xff]
      %v347 = vld [vmem:[#allocation2 + $0x80] sm:$0xff]
      %v348 = vld [vmem:[#allocation2 + $0x88] sm:$0xff]
      %v349 = vld [vmem:[#allocation2 + $0x90] sm:$0xff]
      %v350 = vld [vmem:[#allocation2 + $0x98] sm:$0xff]
      %v351 = vld [vmem:[#allocation2 + $0xa0] sm:$0xff]
      %v352 = vld [vmem:[#allocation2 + $0xa8] sm:$0xff]
      %v353 = vld [vmem:[#allocation2 + $0xb0] sm:$0xff]
      %v354 = vld [vmem:[#allocation2 + $0xb8] sm:$0xff]
      %v355 = vld [vmem:[#allocation2 + $0xc0] sm:$0xff]
      %v356 = vld [vmem:[#allocation2 + $0xc8] sm:$0xff]
      %v357 = vld [vmem:[#allocation2 + $0xd0] sm:$0xff]
      %v358 = vld [vmem:[#allocation2 + $0xd8] sm:$0x1]
      %v359 = vld [vmem:[#allocation2 + $0xe0] sm:$0x1]
      %v360 = vld [vmem:[#allocation2 + $0xe8] sm:$0x1]
      %vm361 = vcmask 596992
      %v363 = vsel %vm361, %v330, 0
      %vm365 = vcmask 1040384
      %v367 = vsel %vm365, %v358, 0
      %v370 = vsel %vm365, %v359, 0
      %v373 = vsel %vm365, %v360, 0
      %375 = vmatprep.subr.mxu0 %v332
      %376 = vmatpush1.msra.mxu0 %v331
      %377 = vmatprep.subr.mxu0 %v335
      %378 = vmatpush1.msra.mxu0 %v334
      %379 = vmatprep.subr.mxu0 %v338
      %380 = vmatpush1.msra.mxu0 %v337
      %381 = vmatprep.subr.mxu0 %v341
      %382 = vmatpush1.msra.mxu0 %v340
      %383 = vmatprep.subr.mxu0 %v344
      %384 = vmatpush1.msra.mxu0 %v343
      %385 = vmatprep.subr.mxu0 %v347
      %386 = vmatpush1.msra.mxu0 %v346
      %387 = vmatprep.subr.mxu0 %v350
      %388 = vmatpush1.msra.mxu0 %v349
      %389 = vmatprep.subr.mxu0 %v353
      %390 = vmatpush1.msra.mxu0 %v352
      %391 = vmatprep.subr.mxu0 %v356
      %392 = vmatpush1.msra.mxu0 %v355
      %393 = vmatprep.subr.mxu0 %v370
      %394 = vmatpush1.msra.mxu0 %v367
      %395 = vmatprep.subr.mxu0 0.0
      %396 = vmatpush1.msra.mxu0 0.0
      %397 = vmatprep.subr.mxu0 0.0
      %398 = vmatpush1.msra.mxu0 0.0
      %399 = vmatprep.subr.mxu0 0.0
      %400 = vmatpush1.msra.mxu0 0.0
      %401 = vmatprep.subr.mxu0 0.0
      %402 = vmatpush1.msra.mxu0 0.0
      %403 = vmatprep.subr.mxu0 0.0
      %404 = vmatpush1.msra.mxu0 0.0
      %405 = vmatprep.subr.mxu0 0.0
      %406 = vmatpush1.msra.mxu0 0.0
      %407 = vmatprep.subr.mxu0 0.0
      %408 = vmatpush1.msra.mxu0 0.0
      %409 = vmatprep.subr.mxu0 0.0
      %410 = vmatpush1.msra.mxu0 0.0
      %411 = vmatprep.subr.mxu0 0.0
      %412 = vmatpush1.msra.mxu0 0.0
      %413 = vmatprep.subr.mxu0 0.0
      %414 = vmatpush1.msra.mxu0 0.0
      %415 = vmatprep.subr.mxu0 0.0
      %416 = vmatpush1.msra.mxu0 0.0
      %417 = vmatprep.subr.mxu0 0.0
      %418 = vmatpush1.msra.mxu0 0.0
      %419 = vmatprep.subr.mxu0 0.0
      %420 = vmatpush1.msra.mxu0 0.0
      %421 = vmatprep.subr.mxu0 0.0
      %422 = vmatpush1.msra.mxu0 0.0
      %423 = vmatprep.subr.mxu0 0.0
      %424 = vmatpush1.msra.mxu0 0.0
      %425 = vmatprep.subr.mxu0 0.0
      %426 = vmatpush1.msra.mxu0 0.0
      %427 = vmatprep.subr.mxu0 0.0
      %428 = vmatpush1.msra.mxu0 0.0
      %429 = vmatprep.subr.mxu0 0.0
      %430 = vmatpush1.msra.mxu0 0.0
      %431 = vmatprep.subr.mxu0 0.0
      %432 = vmatpush1.msra.mxu0 0.0
      %433 = vmatprep.subr.mxu0 0.0
      %434 = vmatpush1.msra.mxu0 0.0
      %435 = vmatprep.subr.mxu0 0.0
      %436 = vmatpush1.msra.mxu0 0.0
      %437 = vmatprep.subr.mxu0 0.0
      %438 = vmatpush1.msra.mxu0 0.0
      %439 = vmatprep.mubr.f32.mxu0 0.0
      %440 = vmatmul.mubr.f32.gmra.mrb[0].mxu0 %v363
      %v441 = vpop.f32.mrb[0].mxu0
      %v442 = vadd.f32 0.0, %v441
      %v443 = vpop.f32.mrb[0].mxu0
      %v444 = vadd.f32 0.0, %v443
      %445 = vdwg.mxu0
      %446 = vmatprep.subr.mxu0 0.0
      %447 = vmatpush1.msra.mxu0 %v333
      %448 = vmatprep.subr.mxu0 0.0
      %449 = vmatpush1.msra.mxu0 %v336
      %450 = vmatprep.subr.mxu0 0.0
      %451 = vmatpush1.msra.mxu0 %v339
      %452 = vmatprep.subr.mxu0 0.0
      %453 = vmatpush1.msra.mxu0 %v342
      %454 = vmatprep.subr.mxu0 0.0
      %455 = vmatpush1.msra.mxu0 %v345
      %456 = vmatprep.subr.mxu0 0.0
      %457 = vmatpush1.msra.mxu0 %v348
      %458 = vmatprep.subr.mxu0 0.0
      %459 = vmatpush1.msra.mxu0 %v351
      %460 = vmatprep.subr.mxu0 0.0
      %461 = vmatpush1.msra.mxu0 %v354
      %462 = vmatprep.subr.mxu0 0.0
      %463 = vmatpush1.msra.mxu0 %v357
      %464 = vmatprep.subr.mxu0 0.0
      %465 = vmatpush1.msra.mxu0 %v373
      %466 = vmatprep.subr.mxu0 0.0
      %467 = vmatpush1.msra.mxu0 0.0
      %468 = vmatprep.subr.mxu0 0.0
      %469 = vmatpush1.msra.mxu0 0.0
      %470 = vmatprep.subr.mxu0 0.0
      %471 = vmatpush1.msra.mxu0 0.0
      %472 = vmatprep.subr.mxu0 0.0
      %473 = vmatpush1.msra.mxu0 0.0
      %474 = vmatprep.subr.mxu0 0.0
      %475 = vmatpush1.msra.mxu0 0.0
      %476 = vmatprep.subr.mxu0 0.0
      %477 = vmatpush1.msra.mxu0 0.0
      %478 = vmatprep.subr.mxu0 0.0
      %479 = vmatpush1.msra.mxu0 0.0
      %480 = vmatprep.subr.mxu0 0.0
      %481 = vmatpush1.msra.mxu0 0.0
      %482 = vmatprep.subr.mxu0 0.0
      %483 = vmatpush1.msra.mxu0 0.0
      %484 = vmatprep.subr.mxu0 0.0
      %485 = vmatpush1.msra.mxu0 0.0
      %486 = vmatprep.subr.mxu0 0.0
      %487 = vmatpush1.msra.mxu0 0.0
      %488 = vmatprep.subr.mxu0 0.0
      %489 = vmatpush1.msra.mxu0 0.0
      %490 = vmatprep.subr.mxu0 0.0
      %491 = vmatpush1.msra.mxu0 0.0
      %492 = vmatprep.subr.mxu0 0.0
      %493 = vmatpush1.msra.mxu0 0.0
      %494 = vmatprep.subr.mxu0 0.0
      %495 = vmatpush1.msra.mxu0 0.0
      %496 = vmatprep.subr.mxu0 0.0
      %497 = vmatpush1.msra.mxu0 0.0
      %498 = vmatprep.subr.mxu0 0.0
      %499 = vmatpush1.msra.mxu0 0.0
      %500 = vmatprep.subr.mxu0 0.0
      %501 = vmatpush1.msra.mxu0 0.0
      %502 = vmatprep.subr.mxu0 0.0
      %503 = vmatpush1.msra.mxu0 0.0
      %504 = vmatprep.subr.mxu0 0.0
      %505 = vmatpush1.msra.mxu0 0.0
      %506 = vmatprep.subr.mxu0 0.0
      %507 = vmatpush1.msra.mxu0 0.0
      %508 = vmatprep.subr.mxu0 0.0
      %509 = vmatpush1.msra.mxu0 0.0
      %510 = vmatprep.mubr.f32.mxu0 0.0
      %511 = vmatmul.mubr.f32.gmra.mrb[0].mxu0 %v363
      %v512 = vpop.f32.mrb[0].mxu0
      %v513 = vadd.f32 0.0, %v512
      %v514 = vpop.f32.mrb[0].mxu0
      %515 = vdwg.mxu0
      %v516 = vxor.u32 %v442, 2147483648
      %v517 = vxor.u32 %v444, 2147483648
      %v518 = vxor.u32 %v513, 2147483648
      %v519 = vmul.f32 %v516, 1.442695
      %v520 = vpow.pop %v519
      %v521 = vmul.f32 %v517, 1.442695
      %v522 = vpow.pop %v521
      %v523 = vmul.f32 %v518, 1.442695
      %v524 = vpow.pop %v523
      %v525 = vadd.f32 %v520, 1.0
      %v526 = vadd.f32 %v522, 1.0
      %v527 = vadd.f32 %v524, 1.0
      %v528 = vrcp.pop %v525
      %v529 = vmul.f32 1.0, %v528
      %v530 = vrcp.pop %v526
      %v531 = vmul.f32 1.0, %v530
      %v532 = vrcp.pop %v527
      %v533 = vmul.f32 1.0, %v532
      %v536 = vcombine.low %v529, %v531
      %538 = vst [vmem:[%s209] sm:$0x77] %v536
      %539 = vst [vmem:[%s209 + $0x8] sm:$0x7] %v533
      %p540 = scmp.lt.s32.totalorder %s18, 1
      %s541 = scalar_select %p540, %s18, 1
      %p542 = scmp.lt.s32.totalorder %s19, 0
      %s543 = scalar_select %p542, %s19, 0
      %s544 = smul.addr %s543, 3
      %s545 = smul.addr %s541, 3
      %s546 = sadd.s32 %s544, %s545
      %s547 = smul.addr %s546, 4
      %s548 = scalar_lea.vmem %s3, %s547
      // Predicated region
      $region33: #{unet_forward.21} parent=31 // pred_check
        %p549 = pneg %p119
      $region34: #{unet_forward.21} parent=31 // pred_check_branch
        %551 = sbr.rel (%p549) target = $region36
      $region35: #{unet_forward.21} parent=31 // pred_region
        _
      $region36: #{unet_forward.21} parent=31 // pred_fallthru
        _
    $region32: #{unet_forward.21} parent=5 // pred_fallthru
      _
    %p552 = scmp.le.s32.totalorder 2, %s9
    // Predicated region
    $region37: #{unet_forward.21} parent=5 // pred_check
      %p553 = pneg %p552
    $region38: #{unet_forward.21} parent=5 // pred_check_branch
      %555 = sbr.rel (%p553) target = $region40
    $region39: #{unet_forward.21} parent=5 // pred_region
      %s556 = ssub.s32 %s9, 2
      // Predicated region
      $region41: #{unet_forward.21} parent=39 // pred_check
        %p557 = pneg %p125
      $region42: #{unet_forward.21} parent=39 // pred_check_branch
        %559 = sbr.rel (%p557) target = $region44
      $region43: #{unet_forward.21} parent=39 // pred_region
        %p560 = scmp.lt.s32.totalorder %s20, 1
        %s561 = scalar_select %p560, %s20, 1
        %p562 = scmp.lt.s32.totalorder %s21, 0
        %s563 = scalar_select %p562, %s21, 0
        %s564 = smul.addr %s563, 3
        %s565 = smul.addr %s561, 3
        %s566 = sadd.s32 %s564, %s565
        %s567 = smul.addr %s566, 4
        %s568 = scalar_lea.vmem %s3, %s567
      $region44: #{unet_forward.21} parent=39 // pred_fallthru
        _
    $region40: #{unet_forward.21} parent=5 // pred_fallthru
      _
  $region6: #{unet_forward.21} parent=0 // loop_footer
    %s13 = sadd.s32 1, %s9
  $region7: #{unet_forward.21} parent=0 // loop_footer_branch
    %8 = sbr.rel target = $region3
  $region8: #{unet_forward.21} parent=0 // loop_exit
    _

</llo_original>
